<compile_context>
chip_gen: v6e
topology: v6e:2x2x1
jax: 0.10.0
libtpu: 0.0.40
codegen_flags: <defaults>
</compile_context>

<pallas_src>
import jax
import jax.numpy as jnp
from jax.experimental import pallas as pl
from jax.experimental.pallas import tpu as pltpu


# ------------------------------ padding utils -------------------------------

def _round_up(x, m):
    return ((x + m - 1) // m) * m


def _pad2(x, rows, cols):
    r, c = x.shape
    return jnp.pad(x, ((0, rows - r), (0, cols - c)))


_VMEM_SPEC = pl.BlockSpec(memory_space=pltpu.MemorySpace.VMEM)

# Padded layer widths (lane dims padded to 128 multiples; K of a layer always
# equals the padded lane width of whatever feeds it).
_FEAT_P = 1024                        # 1000 -> 1024 feature width
_CLS_DIMS = (1024, 512, 256, 128, 128)        # 1000,500,200,40,3
_MULTI_REST_DIMS = (1024, 256, 128, 128)      # 1000,200,40,3


# ------------------------------ fused Pallas kernel -------------------------

def _fused_multimodal_kernel(
    # activations (bf16, padded)
    text_ref, img_ref,
    # stand-in feature projections (int8 weight, f32 scale, f32 bias)
    wt, st, bt, wi, si, bi,
    # classifier_text: 4 layers x (w, scale, bias)
    t1w, t1s, t1b, t2w, t2s, t2b, t3w, t3s, t3b, t4w, t4s, t4b,
    # classifier_img
    i1w, i1s, i1b, i2w, i2s, i2b, i3w, i3s, i3b, i4w, i4s, i4b,
    # classifier_multi (first weight split text/img halves, shared scale/bias)
    m1wa, m1wb, m1s, m1b, m2w, m2s, m2b, m3w, m3s, m3b, m4w, m4s, m4b,
    # single lane-dense output slab (Bp, 384) f32: [text | img | multi]
    out_ref,
):
    def qdot(x, w_ref, s_ref):
        # int8 weights dequantized on the fly (VPU, free under the weight DMA),
        # bf16 x bf16 on the MXU, f32 accumulation, per-channel scale fused.
        acc = jnp.dot(x, w_ref[...].astype(jnp.bfloat16),
                      preferred_element_type=jnp.float32)
        return acc * s_ref[...]

    def relu_bf16(h):
        return jnp.maximum(h, 0.0).astype(jnp.bfloat16)

    def tail(h1, w2, s2, b2, w3, s3, b3, w4, s4, b4):
        # h1 is the f32 pre-activation of the classifier's first Linear.
        h = relu_bf16(h1)
        h = relu_bf16(qdot(h, w2, s2) + b2[...])
        h = relu_bf16(qdot(h, w3, s3) + b3[...])
        return qdot(h, w4, s4) + b4[...]

    # Stand-in feature extractors -> (Bp, 1024) bf16 features kept in VMEM.
    text_feat = (qdot(text_ref[...], wt, st) + bt[...]).astype(jnp.bfloat16)
    img_feat = (qdot(img_ref[...], wi, si) + bi[...]).astype(jnp.bfloat16)

    # classifier_text / classifier_img
    text_lo = tail(qdot(text_feat, t1w, t1s) + t1b[...],
                   t2w, t2s, t2b, t3w, t3s, t3b, t4w, t4s, t4b)
    img_lo = tail(qdot(img_feat, i1w, i1s) + i1b[...],
                  i2w, i2s, i2b, i3w, i3s, i3b, i4w, i4s, i4b)

    # classifier_multi: torch.cat folded into a split first matmul
    # (shared per-output-channel scale across both row halves).
    h1 = (jnp.dot(text_feat, m1wa[...].astype(jnp.bfloat16),
                  preferred_element_type=jnp.float32)
          + jnp.dot(img_feat, m1wb[...].astype(jnp.bfloat16),
                    preferred_element_type=jnp.float32)) * m1s[...] + m1b[...]
    multi_lo = tail(h1, m2w, m2s, m2b, m3w, m3s, m3b, m4w, m4s, m4b)

    # Packed, lane-aligned stores into the single output slab.
    out_ref[:, 0:128] = text_lo
    out_ref[:, 128:256] = img_lo
    out_ref[:, 256:384] = multi_lo


# ------------------------------ parameter init ------------------------------

def init_linear(key, fan_in, fan_out):
    kw, kb = jax.random.split(key)
    bound = 1.0 / jnp.sqrt(jnp.float32(fan_in))
    w = jax.random.uniform(kw, (fan_in, fan_out), jnp.float32, -bound, bound)
    b = jax.random.uniform(kb, (1, fan_out), jnp.float32, -bound, bound)
    return w, b


def init_mlp(key, dims):
    keys = jax.random.split(key, len(dims) - 1)
    return [init_linear(k, dims[i], dims[i + 1]) for i, k in enumerate(keys)]


def init_params(key, text_dim, img_flat_dim):
    k1, k2, k3, k4, k5 = jax.random.split(key, 5)
    return {
        # stand-in feature extractors -> 1000-d features
        "text_proj": init_linear(k1, text_dim, 1000),
        "img_proj": init_linear(k2, img_flat_dim, 1000),
        # classifiers from the PyTorch module
        "cls_text": init_mlp(k3, (1000, 500, 200, 40, 3)),
        "cls_img": init_mlp(k4, (1000, 500, 200, 40, 3)),
        "cls_multi": init_mlp(k5, (2000, 1000, 200, 40, 3)),
    }


# ------------------------------ quantization --------------------------------

def quantize_per_channel(w):
    """Symmetric int8, per output channel: w ~ w_q * scale."""
    amax = jnp.max(jnp.abs(w), axis=0, keepdims=True)          # (1, N)
    scale = jnp.where(amax > 0, amax / 127.0, 1.0).astype(jnp.float32)
    w_q = jnp.clip(jnp.round(w / scale), -127, 127).astype(jnp.int8)
    return w_q, scale


def quantize_params(params):
    def q(w, b):
        wq, s = quantize_per_channel(w)
        return wq, s, b
    return {
        "text_proj": q(*params["text_proj"]),
        "img_proj": q(*params["img_proj"]),
        "cls_text": [q(w, b) for (w, b) in params["cls_text"]],
        "cls_img": [q(w, b) for (w, b) in params["cls_img"]],
        "cls_multi": [q(w, b) for (w, b) in params["cls_multi"]],
    }


def build_device_params(qparams):
    """Zero-pad to TPU-friendly shapes.

    int8 weights: K padded only as far as the feeding activation's lane width
    (no blanket 128 K-padding); N padded to 128 multiples. Scales / biases
    stay f32, shape (1, Np)."""
    def pad_lin(wq, s, b, Kp, Np):
        return _pad2(wq, Kp, Np), _pad2(s, 1, Np), _pad2(b, 1, Np)

    def pad_mlp(layers, dims):
        return [pad_lin(*layers[i], dims[i], dims[i + 1])
                for i in range(len(layers))]

    wq, s, b = qparams["text_proj"]
    Kt = _round_up(wq.shape[0], 32)          # int8 sublane granule, not 128
    dp = {"text_proj": pad_lin(wq, s, b, Kt, _FEAT_P)}

    wq, s, b = qparams["img_proj"]
    Ki = _round_up(wq.shape[0], 32)
    dp["img_proj"] = pad_lin(wq, s, b, Ki, _FEAT_P)

    dp["cls_text"] = pad_mlp(qparams["cls_text"], _CLS_DIMS)
    dp["cls_img"] = pad_mlp(qparams["cls_img"], _CLS_DIMS)

    # classifier_multi: split the (2000, 1000) first weight into the half that
    # multiplies text_out and the half that multiplies img_out (shared scale).
    w1q, s1, b1 = qparams["cls_multi"][0]
    half = w1q.shape[0] // 2                 # 1000
    dp["cls_multi_first"] = (
        _pad2(w1q[:half], _FEAT_P, 1024),
        _pad2(w1q[half:], _FEAT_P, 1024),
        _pad2(s1, 1, 1024),
        _pad2(b1, 1, 1024),
    )
    dp["cls_multi_rest"] = pad_mlp(qparams["cls_multi"][1:], _MULTI_REST_DIMS)
    return dp


# ------------------------------ forward pass --------------------------------

def multimodal_forward(dev_params, bach_text, bach_img):
    B = bach_text.shape[0]
    Bp = _round_up(max(B, 1), 16)            # bf16 sublane granule

    # TODO(synk): TextOnly / ImgOnly stand-ins (mean-pool / flatten + Linear).
    text_feat = jnp.mean(bach_text, axis=1)          # (B, D_text)
    img_feat = bach_img.reshape(B, -1)               # (B, C*H*W)

    Kt = dev_params["text_proj"][0].shape[0]
    Ki = dev_params["img_proj"][0].shape[0]
    text_in = _pad2(text_feat, Bp, Kt).astype(jnp.bfloat16)
    img_in = _pad2(img_feat, Bp, Ki).astype(jnp.bfloat16)

    args = [text_in, img_in]
    args += list(dev_params["text_proj"]) + list(dev_params["img_proj"])
    for layer in dev_params["cls_text"]:
        args += list(layer)
    for layer in dev_params["cls_img"]:
        args += list(layer)
    args += list(dev_params["cls_multi_first"])
    for layer in dev_params["cls_multi_rest"]:
        args += list(layer)

    # One lane-dense (Bp, 384) logit slab: [text | img | multi], 128 lanes each.
    out_struct = jax.ShapeDtypeStruct((Bp, 3 * 128), jnp.float32)

    slab = pl.pallas_call(
        _fused_multimodal_kernel,
        out_shape=out_struct,
        in_specs=[_VMEM_SPEC] * len(args),
        out_specs=_VMEM_SPEC,
        compiler_params=pltpu.CompilerParams(
            # ~7 MiB footprint (int8 weights + f32 scales/biases) + headroom;
            # stays far under v7x's 64 MiB physical VMEM.
            vmem_limit_bytes=24 * 1024 * 1024),
    )(*args)

    # Slice the packed slab back to the module's three (B, 3) logit tensors.
    return slab[:B, 0:3], slab[:B, 128:131], slab[:B, 256:259]


# ------------------------------ pure-JAX reference --------------------------
# Mirrors the module with the same int8-per-channel weight quantization, bf16
# MXU inputs and f32 accumulation (unpadded, with an explicit concat) so the
# check is tight and validates the padding + split-matmul fusion.

def _q_linear(x, wq, scale, b):
    acc = jnp.dot(x.astype(jnp.bfloat16), wq.astype(jnp.bfloat16),
                  preferred_element_type=jnp.float32)
    return acc * scale + b


def _ref_mlp4(x, layers):
    h = x
    for (wq, s, b) in layers[:-1]:
        h = jnp.maximum(_q_linear(h, wq, s, b), 0.0)
    return _q_linear(h, *layers[-1])


def reference_forward(qparams, bach_text, bach_img):
    B = bach_text.shape[0]
    text_out = _q_linear(jnp.mean(bach_text, axis=1), *qparams["text_proj"])
    img_out = _q_linear(bach_img.reshape(B, -1), *qparams["img_proj"])
    multi_in = jnp.concatenate([text_out, img_out], axis=1)
    return (_ref_mlp4(text_out, qparams["cls_text"]),
            _ref_mlp4(img_out, qparams["cls_img"]),
            _ref_mlp4(multi_in, qparams["cls_multi"]))


# ------------------------------ main -----------------------------------------

if __name__ == "__main__":
    key = jax.random.PRNGKey(0)
    k_text, k_img, k_params = jax.random.split(key, 3)

    B, S, D_TEXT = 2, 8, 32          # text: (batch, seq, hidden)
    C, H, W = 4, 16, 16              # image: NCHW

    bach_text = jax.random.normal(k_text, (B, S, D_TEXT), jnp.float32)
    bach_img = jax.random.normal(k_img, (B, C, H, W), jnp.float32)

    params = init_params(k_params, D_TEXT, C * H * W)
    qparams = quantize_params(params)
    dev_params = build_device_params(qparams)

    fwd = jax.jit(multimodal_forward)
    outs = fwd(dev_params, bach_text, bach_img)
    outs = jax.block_until_ready(outs)

    refs = reference_forward(qparams, bach_text, bach_img)
    for o, r in zip(outs, refs):
        assert o.shape == (B, 3), o.shape
        assert jnp.allclose(o, r, atol=2e-2, rtol=2e-2), (o, r)

    print("KERNEL_OK")
</pallas_src>

<mosaic_0001>
module attributes {stable_mosaic.version = 11 : i64} {
  func.func @_fused_multimodal_kernel(%arg0: memref<16x32xbf16, #tpu.memory_space<vmem>>, %arg1: memref<16x1024xbf16, #tpu.memory_space<vmem>>, %arg2: memref<32x1024xi8, #tpu.memory_space<vmem>>, %arg3: memref<1x1024xf32, #tpu.memory_space<vmem>>, %arg4: memref<1x1024xf32, #tpu.memory_space<vmem>>, %arg5: memref<1024x1024xi8, #tpu.memory_space<vmem>>, %arg6: memref<1x1024xf32, #tpu.memory_space<vmem>>, %arg7: memref<1x1024xf32, #tpu.memory_space<vmem>>, %arg8: memref<1024x512xi8, #tpu.memory_space<vmem>>, %arg9: memref<1x512xf32, #tpu.memory_space<vmem>>, %arg10: memref<1x512xf32, #tpu.memory_space<vmem>>, %arg11: memref<512x256xi8, #tpu.memory_space<vmem>>, %arg12: memref<1x256xf32, #tpu.memory_space<vmem>>, %arg13: memref<1x256xf32, #tpu.memory_space<vmem>>, %arg14: memref<256x128xi8, #tpu.memory_space<vmem>>, %arg15: memref<1x128xf32, #tpu.memory_space<vmem>>, %arg16: memref<1x128xf32, #tpu.memory_space<vmem>>, %arg17: memref<128x128xi8, #tpu.memory_space<vmem>>, %arg18: memref<1x128xf32, #tpu.memory_space<vmem>>, %arg19: memref<1x128xf32, #tpu.memory_space<vmem>>, %arg20: memref<1024x512xi8, #tpu.memory_space<vmem>>, %arg21: memref<1x512xf32, #tpu.memory_space<vmem>>, %arg22: memref<1x512xf32, #tpu.memory_space<vmem>>, %arg23: memref<512x256xi8, #tpu.memory_space<vmem>>, %arg24: memref<1x256xf32, #tpu.memory_space<vmem>>, %arg25: memref<1x256xf32, #tpu.memory_space<vmem>>, %arg26: memref<256x128xi8, #tpu.memory_space<vmem>>, %arg27: memref<1x128xf32, #tpu.memory_space<vmem>>, %arg28: memref<1x128xf32, #tpu.memory_space<vmem>>, %arg29: memref<128x128xi8, #tpu.memory_space<vmem>>, %arg30: memref<1x128xf32, #tpu.memory_space<vmem>>, %arg31: memref<1x128xf32, #tpu.memory_space<vmem>>, %arg32: memref<1024x1024xi8, #tpu.memory_space<vmem>>, %arg33: memref<1024x1024xi8, #tpu.memory_space<vmem>>, %arg34: memref<1x1024xf32, #tpu.memory_space<vmem>>, %arg35: memref<1x1024xf32, #tpu.memory_space<vmem>>, %arg36: memref<1024x256xi8, #tpu.memory_space<vmem>>, %arg37: memref<1x256xf32, #tpu.memory_space<vmem>>, %arg38: memref<1x256xf32, #tpu.memory_space<vmem>>, %arg39: memref<256x128xi8, #tpu.memory_space<vmem>>, %arg40: memref<1x128xf32, #tpu.memory_space<vmem>>, %arg41: memref<1x128xf32, #tpu.memory_space<vmem>>, %arg42: memref<128x128xi8, #tpu.memory_space<vmem>>, %arg43: memref<1x128xf32, #tpu.memory_space<vmem>>, %arg44: memref<1x128xf32, #tpu.memory_space<vmem>>, %arg45: memref<16x384xf32, #tpu.memory_space<vmem>>) attributes {dimension_semantics = [], scalar_prefetch = 0 : i64, scratch_operands = 0 : i64, tpu.core_type = #tpu.core_type<tc>} {
    %c0 = arith.constant 0 : index
    %c0_0 = arith.constant 0 : index
    %0 = vector.load %arg0[%c0, %c0_0] : memref<16x32xbf16, #tpu.memory_space<vmem>>, vector<16x32xbf16>
    %c0_1 = arith.constant 0 : index
    %c0_2 = arith.constant 0 : index
    %1 = vector.load %arg2[%c0_1, %c0_2] : memref<32x1024xi8, #tpu.memory_space<vmem>>, vector<32x1024xi8>
    %2 = arith.sitofp %1 : vector<32x1024xi8> to vector<32x1024xbf16>
    %cst = arith.constant dense<0.000000e+00> : vector<16x1024xf32>
    %3 = tpu.matmul %0, %2, %cst {dimension_numbers = #tpu.dot_dimension_numbers<[1], [0], [0], [1], [0, 0, 1, 1], [], []>} : vector<16x32xbf16>, vector<32x1024xbf16>, vector<16x1024xf32> -> vector<16x1024xf32>
    %c0_3 = arith.constant 0 : index
    %c0_4 = arith.constant 0 : index
    %4 = vector.load %arg3[%c0_3, %c0_4] : memref<1x1024xf32, #tpu.memory_space<vmem>>, vector<1x1024xf32>
    %5 = vector.broadcast %4 : vector<1x1024xf32> to vector<16x1024xf32>
    %6 = arith.mulf %3, %5 : vector<16x1024xf32>
    %c0_5 = arith.constant 0 : index
    %c0_6 = arith.constant 0 : index
    %7 = vector.load %arg4[%c0_5, %c0_6] : memref<1x1024xf32, #tpu.memory_space<vmem>>, vector<1x1024xf32>
    %8 = vector.broadcast %7 : vector<1x1024xf32> to vector<16x1024xf32>
    %9 = arith.addf %6, %8 : vector<16x1024xf32>
    %10 = arith.truncf %9 : vector<16x1024xf32> to vector<16x1024xbf16>
    %c0_7 = arith.constant 0 : index
    %c0_8 = arith.constant 0 : index
    %11 = vector.load %arg1[%c0_7, %c0_8] : memref<16x1024xbf16, #tpu.memory_space<vmem>>, vector<16x1024xbf16>
    %c0_9 = arith.constant 0 : index
    %c0_10 = arith.constant 0 : index
    %12 = vector.load %arg5[%c0_9, %c0_10] : memref<1024x1024xi8, #tpu.memory_space<vmem>>, vector<1024x1024xi8>
    %13 = arith.sitofp %12 : vector<1024x1024xi8> to vector<1024x1024xbf16>
    %cst_11 = arith.constant dense<0.000000e+00> : vector<16x1024xf32>
    %14 = tpu.matmul %11, %13, %cst_11 {dimension_numbers = #tpu.dot_dimension_numbers<[1], [0], [0], [1], [0, 0, 1, 1], [], []>} : vector<16x1024xbf16>, vector<1024x1024xbf16>, vector<16x1024xf32> -> vector<16x1024xf32>
    %c0_12 = arith.constant 0 : index
    %c0_13 = arith.constant 0 : index
    %15 = vector.load %arg6[%c0_12, %c0_13] : memref<1x1024xf32, #tpu.memory_space<vmem>>, vector<1x1024xf32>
    %16 = vector.broadcast %15 : vector<1x1024xf32> to vector<16x1024xf32>
    %17 = arith.mulf %14, %16 : vector<16x1024xf32>
    %c0_14 = arith.constant 0 : index
    %c0_15 = arith.constant 0 : index
    %18 = vector.load %arg7[%c0_14, %c0_15] : memref<1x1024xf32, #tpu.memory_space<vmem>>, vector<1x1024xf32>
    %19 = vector.broadcast %18 : vector<1x1024xf32> to vector<16x1024xf32>
    %20 = arith.addf %17, %19 : vector<16x1024xf32>
    %21 = arith.truncf %20 : vector<16x1024xf32> to vector<16x1024xbf16>
    %c0_16 = arith.constant 0 : index
    %c0_17 = arith.constant 0 : index
    %22 = vector.load %arg8[%c0_16, %c0_17] : memref<1024x512xi8, #tpu.memory_space<vmem>>, vector<1024x512xi8>
    %23 = arith.sitofp %22 : vector<1024x512xi8> to vector<1024x512xbf16>
    %cst_18 = arith.constant dense<0.000000e+00> : vector<16x512xf32>
    %24 = tpu.matmul %10, %23, %cst_18 {dimension_numbers = #tpu.dot_dimension_numbers<[1], [0], [0], [1], [0, 0, 1, 1], [], []>} : vector<16x1024xbf16>, vector<1024x512xbf16>, vector<16x512xf32> -> vector<16x512xf32>
    %c0_19 = arith.constant 0 : index
    %c0_20 = arith.constant 0 : index
    %25 = vector.load %arg9[%c0_19, %c0_20] : memref<1x512xf32, #tpu.memory_space<vmem>>, vector<1x512xf32>
    %26 = vector.broadcast %25 : vector<1x512xf32> to vector<16x512xf32>
    %27 = arith.mulf %24, %26 : vector<16x512xf32>
    %c0_21 = arith.constant 0 : index
    %c0_22 = arith.constant 0 : index
    %28 = vector.load %arg10[%c0_21, %c0_22] : memref<1x512xf32, #tpu.memory_space<vmem>>, vector<1x512xf32>
    %29 = vector.broadcast %28 : vector<1x512xf32> to vector<16x512xf32>
    %30 = arith.addf %27, %29 : vector<16x512xf32>
    %cst_23 = arith.constant 0.000000e+00 : f32
    %31 = vector.broadcast %cst_23 : f32 to vector<16x512xf32>
    %32 = arith.maximumf %30, %31 : vector<16x512xf32>
    %33 = arith.truncf %32 : vector<16x512xf32> to vector<16x512xbf16>
    %c0_24 = arith.constant 0 : index
    %c0_25 = arith.constant 0 : index
    %34 = vector.load %arg11[%c0_24, %c0_25] : memref<512x256xi8, #tpu.memory_space<vmem>>, vector<512x256xi8>
    %35 = arith.sitofp %34 : vector<512x256xi8> to vector<512x256xbf16>
    %cst_26 = arith.constant dense<0.000000e+00> : vector<16x256xf32>
    %36 = tpu.matmul %33, %35, %cst_26 {dimension_numbers = #tpu.dot_dimension_numbers<[1], [0], [0], [1], [0, 0, 1, 1], [], []>} : vector<16x512xbf16>, vector<512x256xbf16>, vector<16x256xf32> -> vector<16x256xf32>
    %c0_27 = arith.constant 0 : index
    %c0_28 = arith.constant 0 : index
    %37 = vector.load %arg12[%c0_27, %c0_28] : memref<1x256xf32, #tpu.memory_space<vmem>>, vector<1x256xf32>
    %38 = vector.broadcast %37 : vector<1x256xf32> to vector<16x256xf32>
    %39 = arith.mulf %36, %38 : vector<16x256xf32>
    %c0_29 = arith.constant 0 : index
    %c0_30 = arith.constant 0 : index
    %40 = vector.load %arg13[%c0_29, %c0_30] : memref<1x256xf32, #tpu.memory_space<vmem>>, vector<1x256xf32>
    %41 = vector.broadcast %40 : vector<1x256xf32> to vector<16x256xf32>
    %42 = arith.addf %39, %41 : vector<16x256xf32>
    %cst_31 = arith.constant 0.000000e+00 : f32
    %43 = vector.broadcast %cst_31 : f32 to vector<16x256xf32>
    %44 = arith.maximumf %42, %43 : vector<16x256xf32>
    %45 = arith.truncf %44 : vector<16x256xf32> to vector<16x256xbf16>
    %c0_32 = arith.constant 0 : index
    %c0_33 = arith.constant 0 : index
    %46 = vector.load %arg14[%c0_32, %c0_33] : memref<256x128xi8, #tpu.memory_space<vmem>>, vector<256x128xi8>
    %47 = arith.sitofp %46 : vector<256x128xi8> to vector<256x128xbf16>
    %cst_34 = arith.constant dense<0.000000e+00> : vector<16x128xf32>
    %48 = tpu.matmul %45, %47, %cst_34 {dimension_numbers = #tpu.dot_dimension_numbers<[1], [0], [0], [1], [0, 0, 1, 1], [], []>} : vector<16x256xbf16>, vector<256x128xbf16>, vector<16x128xf32> -> vector<16x128xf32>
    %c0_35 = arith.constant 0 : index
    %c0_36 = arith.constant 0 : index
    %49 = vector.load %arg15[%c0_35, %c0_36] : memref<1x128xf32, #tpu.memory_space<vmem>>, vector<1x128xf32>
    %50 = vector.broadcast %49 : vector<1x128xf32> to vector<16x128xf32>
    %51 = arith.mulf %48, %50 : vector<16x128xf32>
    %c0_37 = arith.constant 0 : index
    %c0_38 = arith.constant 0 : index
    %52 = vector.load %arg16[%c0_37, %c0_38] : memref<1x128xf32, #tpu.memory_space<vmem>>, vector<1x128xf32>
    %53 = vector.broadcast %52 : vector<1x128xf32> to vector<16x128xf32>
    %54 = arith.addf %51, %53 : vector<16x128xf32>
    %cst_39 = arith.constant 0.000000e+00 : f32
    %55 = vector.broadcast %cst_39 : f32 to vector<16x128xf32>
    %56 = arith.maximumf %54, %55 : vector<16x128xf32>
    %57 = arith.truncf %56 : vector<16x128xf32> to vector<16x128xbf16>
    %c0_40 = arith.constant 0 : index
    %c0_41 = arith.constant 0 : index
    %58 = vector.load %arg17[%c0_40, %c0_41] : memref<128x128xi8, #tpu.memory_space<vmem>>, vector<128x128xi8>
    %59 = arith.sitofp %58 : vector<128x128xi8> to vector<128x128xbf16>
    %cst_42 = arith.constant dense<0.000000e+00> : vector<16x128xf32>
    %60 = tpu.matmul %57, %59, %cst_42 {dimension_numbers = #tpu.dot_dimension_numbers<[1], [0], [0], [1], [0, 0, 1, 1], [], []>} : vector<16x128xbf16>, vector<128x128xbf16>, vector<16x128xf32> -> vector<16x128xf32>
    %c0_43 = arith.constant 0 : index
    %c0_44 = arith.constant 0 : index
    %61 = vector.load %arg18[%c0_43, %c0_44] : memref<1x128xf32, #tpu.memory_space<vmem>>, vector<1x128xf32>
    %62 = vector.broadcast %61 : vector<1x128xf32> to vector<16x128xf32>
    %63 = arith.mulf %60, %62 : vector<16x128xf32>
    %c0_45 = arith.constant 0 : index
    %c0_46 = arith.constant 0 : index
    %64 = vector.load %arg19[%c0_45, %c0_46] : memref<1x128xf32, #tpu.memory_space<vmem>>, vector<1x128xf32>
    %65 = vector.broadcast %64 : vector<1x128xf32> to vector<16x128xf32>
    %66 = arith.addf %63, %65 : vector<16x128xf32>
    %c0_47 = arith.constant 0 : index
    %c0_48 = arith.constant 0 : index
    %67 = vector.load %arg20[%c0_47, %c0_48] : memref<1024x512xi8, #tpu.memory_space<vmem>>, vector<1024x512xi8>
    %68 = arith.sitofp %67 : vector<1024x512xi8> to vector<1024x512xbf16>
    %cst_49 = arith.constant dense<0.000000e+00> : vector<16x512xf32>
    %69 = tpu.matmul %21, %68, %cst_49 {dimension_numbers = #tpu.dot_dimension_numbers<[1], [0], [0], [1], [0, 0, 1, 1], [], []>} : vector<16x1024xbf16>, vector<1024x512xbf16>, vector<16x512xf32> -> vector<16x512xf32>
    %c0_50 = arith.constant 0 : index
    %c0_51 = arith.constant 0 : index
    %70 = vector.load %arg21[%c0_50, %c0_51] : memref<1x512xf32, #tpu.memory_space<vmem>>, vector<1x512xf32>
    %71 = vector.broadcast %70 : vector<1x512xf32> to vector<16x512xf32>
    %72 = arith.mulf %69, %71 : vector<16x512xf32>
    %c0_52 = arith.constant 0 : index
    %c0_53 = arith.constant 0 : index
    %73 = vector.load %arg22[%c0_52, %c0_53] : memref<1x512xf32, #tpu.memory_space<vmem>>, vector<1x512xf32>
    %74 = vector.broadcast %73 : vector<1x512xf32> to vector<16x512xf32>
    %75 = arith.addf %72, %74 : vector<16x512xf32>
    %cst_54 = arith.constant 0.000000e+00 : f32
    %76 = vector.broadcast %cst_54 : f32 to vector<16x512xf32>
    %77 = arith.maximumf %75, %76 : vector<16x512xf32>
    %78 = arith.truncf %77 : vector<16x512xf32> to vector<16x512xbf16>
    %c0_55 = arith.constant 0 : index
    %c0_56 = arith.constant 0 : index
    %79 = vector.load %arg23[%c0_55, %c0_56] : memref<512x256xi8, #tpu.memory_space<vmem>>, vector<512x256xi8>
    %80 = arith.sitofp %79 : vector<512x256xi8> to vector<512x256xbf16>
    %cst_57 = arith.constant dense<0.000000e+00> : vector<16x256xf32>
    %81 = tpu.matmul %78, %80, %cst_57 {dimension_numbers = #tpu.dot_dimension_numbers<[1], [0], [0], [1], [0, 0, 1, 1], [], []>} : vector<16x512xbf16>, vector<512x256xbf16>, vector<16x256xf32> -> vector<16x256xf32>
    %c0_58 = arith.constant 0 : index
    %c0_59 = arith.constant 0 : index
    %82 = vector.load %arg24[%c0_58, %c0_59] : memref<1x256xf32, #tpu.memory_space<vmem>>, vector<1x256xf32>
    %83 = vector.broadcast %82 : vector<1x256xf32> to vector<16x256xf32>
    %84 = arith.mulf %81, %83 : vector<16x256xf32>
    %c0_60 = arith.constant 0 : index
    %c0_61 = arith.constant 0 : index
    %85 = vector.load %arg25[%c0_60, %c0_61] : memref<1x256xf32, #tpu.memory_space<vmem>>, vector<1x256xf32>
    %86 = vector.broadcast %85 : vector<1x256xf32> to vector<16x256xf32>
    %87 = arith.addf %84, %86 : vector<16x256xf32>
    %cst_62 = arith.constant 0.000000e+00 : f32
    %88 = vector.broadcast %cst_62 : f32 to vector<16x256xf32>
    %89 = arith.maximumf %87, %88 : vector<16x256xf32>
    %90 = arith.truncf %89 : vector<16x256xf32> to vector<16x256xbf16>
    %c0_63 = arith.constant 0 : index
    %c0_64 = arith.constant 0 : index
    %91 = vector.load %arg26[%c0_63, %c0_64] : memref<256x128xi8, #tpu.memory_space<vmem>>, vector<256x128xi8>
    %92 = arith.sitofp %91 : vector<256x128xi8> to vector<256x128xbf16>
    %cst_65 = arith.constant dense<0.000000e+00> : vector<16x128xf32>
    %93 = tpu.matmul %90, %92, %cst_65 {dimension_numbers = #tpu.dot_dimension_numbers<[1], [0], [0], [1], [0, 0, 1, 1], [], []>} : vector<16x256xbf16>, vector<256x128xbf16>, vector<16x128xf32> -> vector<16x128xf32>
    %c0_66 = arith.constant 0 : index
    %c0_67 = arith.constant 0 : index
    %94 = vector.load %arg27[%c0_66, %c0_67] : memref<1x128xf32, #tpu.memory_space<vmem>>, vector<1x128xf32>
    %95 = vector.broadcast %94 : vector<1x128xf32> to vector<16x128xf32>
    %96 = arith.mulf %93, %95 : vector<16x128xf32>
    %c0_68 = arith.constant 0 : index
    %c0_69 = arith.constant 0 : index
    %97 = vector.load %arg28[%c0_68, %c0_69] : memref<1x128xf32, #tpu.memory_space<vmem>>, vector<1x128xf32>
    %98 = vector.broadcast %97 : vector<1x128xf32> to vector<16x128xf32>
    %99 = arith.addf %96, %98 : vector<16x128xf32>
    %cst_70 = arith.constant 0.000000e+00 : f32
    %100 = vector.broadcast %cst_70 : f32 to vector<16x128xf32>
    %101 = arith.maximumf %99, %100 : vector<16x128xf32>
    %102 = arith.truncf %101 : vector<16x128xf32> to vector<16x128xbf16>
    %c0_71 = arith.constant 0 : index
    %c0_72 = arith.constant 0 : index
    %103 = vector.load %arg29[%c0_71, %c0_72] : memref<128x128xi8, #tpu.memory_space<vmem>>, vector<128x128xi8>
    %104 = arith.sitofp %103 : vector<128x128xi8> to vector<128x128xbf16>
    %cst_73 = arith.constant dense<0.000000e+00> : vector<16x128xf32>
    %105 = tpu.matmul %102, %104, %cst_73 {dimension_numbers = #tpu.dot_dimension_numbers<[1], [0], [0], [1], [0, 0, 1, 1], [], []>} : vector<16x128xbf16>, vector<128x128xbf16>, vector<16x128xf32> -> vector<16x128xf32>
    %c0_74 = arith.constant 0 : index
    %c0_75 = arith.constant 0 : index
    %106 = vector.load %arg30[%c0_74, %c0_75] : memref<1x128xf32, #tpu.memory_space<vmem>>, vector<1x128xf32>
    %107 = vector.broadcast %106 : vector<1x128xf32> to vector<16x128xf32>
    %108 = arith.mulf %105, %107 : vector<16x128xf32>
    %c0_76 = arith.constant 0 : index
    %c0_77 = arith.constant 0 : index
    %109 = vector.load %arg31[%c0_76, %c0_77] : memref<1x128xf32, #tpu.memory_space<vmem>>, vector<1x128xf32>
    %110 = vector.broadcast %109 : vector<1x128xf32> to vector<16x128xf32>
    %111 = arith.addf %108, %110 : vector<16x128xf32>
    %c0_78 = arith.constant 0 : index
    %c0_79 = arith.constant 0 : index
    %112 = vector.load %arg32[%c0_78, %c0_79] : memref<1024x1024xi8, #tpu.memory_space<vmem>>, vector<1024x1024xi8>
    %113 = arith.sitofp %112 : vector<1024x1024xi8> to vector<1024x1024xbf16>
    %cst_80 = arith.constant dense<0.000000e+00> : vector<16x1024xf32>
    %114 = tpu.matmul %10, %113, %cst_80 {dimension_numbers = #tpu.dot_dimension_numbers<[1], [0], [0], [1], [0, 0, 1, 1], [], []>} : vector<16x1024xbf16>, vector<1024x1024xbf16>, vector<16x1024xf32> -> vector<16x1024xf32>
    %c0_81 = arith.constant 0 : index
    %c0_82 = arith.constant 0 : index
    %115 = vector.load %arg33[%c0_81, %c0_82] : memref<1024x1024xi8, #tpu.memory_space<vmem>>, vector<1024x1024xi8>
    %116 = arith.sitofp %115 : vector<1024x1024xi8> to vector<1024x1024xbf16>
    %cst_83 = arith.constant dense<0.000000e+00> : vector<16x1024xf32>
    %117 = tpu.matmul %21, %116, %cst_83 {dimension_numbers = #tpu.dot_dimension_numbers<[1], [0], [0], [1], [0, 0, 1, 1], [], []>} : vector<16x1024xbf16>, vector<1024x1024xbf16>, vector<16x1024xf32> -> vector<16x1024xf32>
    %118 = arith.addf %114, %117 : vector<16x1024xf32>
    %c0_84 = arith.constant 0 : index
    %c0_85 = arith.constant 0 : index
    %119 = vector.load %arg34[%c0_84, %c0_85] : memref<1x1024xf32, #tpu.memory_space<vmem>>, vector<1x1024xf32>
    %120 = vector.broadcast %119 : vector<1x1024xf32> to vector<16x1024xf32>
    %121 = arith.mulf %118, %120 : vector<16x1024xf32>
    %c0_86 = arith.constant 0 : index
    %c0_87 = arith.constant 0 : index
    %122 = vector.load %arg35[%c0_86, %c0_87] : memref<1x1024xf32, #tpu.memory_space<vmem>>, vector<1x1024xf32>
    %123 = vector.broadcast %122 : vector<1x1024xf32> to vector<16x1024xf32>
    %124 = arith.addf %121, %123 : vector<16x1024xf32>
    %cst_88 = arith.constant 0.000000e+00 : f32
    %125 = vector.broadcast %cst_88 : f32 to vector<16x1024xf32>
    %126 = arith.maximumf %124, %125 : vector<16x1024xf32>
    %127 = arith.truncf %126 : vector<16x1024xf32> to vector<16x1024xbf16>
    %c0_89 = arith.constant 0 : index
    %c0_90 = arith.constant 0 : index
    %128 = vector.load %arg36[%c0_89, %c0_90] : memref<1024x256xi8, #tpu.memory_space<vmem>>, vector<1024x256xi8>
    %129 = arith.sitofp %128 : vector<1024x256xi8> to vector<1024x256xbf16>
    %cst_91 = arith.constant dense<0.000000e+00> : vector<16x256xf32>
    %130 = tpu.matmul %127, %129, %cst_91 {dimension_numbers = #tpu.dot_dimension_numbers<[1], [0], [0], [1], [0, 0, 1, 1], [], []>} : vector<16x1024xbf16>, vector<1024x256xbf16>, vector<16x256xf32> -> vector<16x256xf32>
    %c0_92 = arith.constant 0 : index
    %c0_93 = arith.constant 0 : index
    %131 = vector.load %arg37[%c0_92, %c0_93] : memref<1x256xf32, #tpu.memory_space<vmem>>, vector<1x256xf32>
    %132 = vector.broadcast %131 : vector<1x256xf32> to vector<16x256xf32>
    %133 = arith.mulf %130, %132 : vector<16x256xf32>
    %c0_94 = arith.constant 0 : index
    %c0_95 = arith.constant 0 : index
    %134 = vector.load %arg38[%c0_94, %c0_95] : memref<1x256xf32, #tpu.memory_space<vmem>>, vector<1x256xf32>
    %135 = vector.broadcast %134 : vector<1x256xf32> to vector<16x256xf32>
    %136 = arith.addf %133, %135 : vector<16x256xf32>
    %cst_96 = arith.constant 0.000000e+00 : f32
    %137 = vector.broadcast %cst_96 : f32 to vector<16x256xf32>
    %138 = arith.maximumf %136, %137 : vector<16x256xf32>
    %139 = arith.truncf %138 : vector<16x256xf32> to vector<16x256xbf16>
    %c0_97 = arith.constant 0 : index
    %c0_98 = arith.constant 0 : index
    %140 = vector.load %arg39[%c0_97, %c0_98] : memref<256x128xi8, #tpu.memory_space<vmem>>, vector<256x128xi8>
    %141 = arith.sitofp %140 : vector<256x128xi8> to vector<256x128xbf16>
    %cst_99 = arith.constant dense<0.000000e+00> : vector<16x128xf32>
    %142 = tpu.matmul %139, %141, %cst_99 {dimension_numbers = #tpu.dot_dimension_numbers<[1], [0], [0], [1], [0, 0, 1, 1], [], []>} : vector<16x256xbf16>, vector<256x128xbf16>, vector<16x128xf32> -> vector<16x128xf32>
    %c0_100 = arith.constant 0 : index
    %c0_101 = arith.constant 0 : index
    %143 = vector.load %arg40[%c0_100, %c0_101] : memref<1x128xf32, #tpu.memory_space<vmem>>, vector<1x128xf32>
    %144 = vector.broadcast %143 : vector<1x128xf32> to vector<16x128xf32>
    %145 = arith.mulf %142, %144 : vector<16x128xf32>
    %c0_102 = arith.constant 0 : index
    %c0_103 = arith.constant 0 : index
    %146 = vector.load %arg41[%c0_102, %c0_103] : memref<1x128xf32, #tpu.memory_space<vmem>>, vector<1x128xf32>
    %147 = vector.broadcast %146 : vector<1x128xf32> to vector<16x128xf32>
    %148 = arith.addf %145, %147 : vector<16x128xf32>
    %cst_104 = arith.constant 0.000000e+00 : f32
    %149 = vector.broadcast %cst_104 : f32 to vector<16x128xf32>
    %150 = arith.maximumf %148, %149 : vector<16x128xf32>
    %151 = arith.truncf %150 : vector<16x128xf32> to vector<16x128xbf16>
    %c0_105 = arith.constant 0 : index
    %c0_106 = arith.constant 0 : index
    %152 = vector.load %arg42[%c0_105, %c0_106] : memref<128x128xi8, #tpu.memory_space<vmem>>, vector<128x128xi8>
    %153 = arith.sitofp %152 : vector<128x128xi8> to vector<128x128xbf16>
    %cst_107 = arith.constant dense<0.000000e+00> : vector<16x128xf32>
    %154 = tpu.matmul %151, %153, %cst_107 {dimension_numbers = #tpu.dot_dimension_numbers<[1], [0], [0], [1], [0, 0, 1, 1], [], []>} : vector<16x128xbf16>, vector<128x128xbf16>, vector<16x128xf32> -> vector<16x128xf32>
    %c0_108 = arith.constant 0 : index
    %c0_109 = arith.constant 0 : index
    %155 = vector.load %arg43[%c0_108, %c0_109] : memref<1x128xf32, #tpu.memory_space<vmem>>, vector<1x128xf32>
    %156 = vector.broadcast %155 : vector<1x128xf32> to vector<16x128xf32>
    %157 = arith.mulf %154, %156 : vector<16x128xf32>
    %c0_110 = arith.constant 0 : index
    %c0_111 = arith.constant 0 : index
    %158 = vector.load %arg44[%c0_110, %c0_111] : memref<1x128xf32, #tpu.memory_space<vmem>>, vector<1x128xf32>
    %159 = vector.broadcast %158 : vector<1x128xf32> to vector<16x128xf32>
    %160 = arith.addf %157, %159 : vector<16x128xf32>
    %c0_112 = arith.constant 0 : index
    %c0_113 = arith.constant 0 : index
    %161 = vector.load %arg45[%c0_112, %c0_113] : memref<16x384xf32, #tpu.memory_space<vmem>>, vector<16x128xf32>
    tpu.vector_store %arg45[%c0_112, %c0_113], %66 {strides = array<i32>} : memref<16x384xf32, #tpu.memory_space<vmem>>, vector<16x128xf32>,
    %c0_114 = arith.constant 0 : index
    %c128 = arith.constant 128 : index
    %162 = vector.load %arg45[%c0_114, %c128] : memref<16x384xf32, #tpu.memory_space<vmem>>, vector<16x128xf32>
    tpu.vector_store %arg45[%c0_114, %c128], %111 {strides = array<i32>} : memref<16x384xf32, #tpu.memory_space<vmem>>, vector<16x128xf32>,
    %c0_115 = arith.constant 0 : index
    %c256 = arith.constant 256 : index
    %163 = vector.load %arg45[%c0_115, %c256] : memref<16x384xf32, #tpu.memory_space<vmem>>, vector<16x128xf32>
    tpu.vector_store %arg45[%c0_115, %c256], %160 {strides = array<i32>} : memref<16x384xf32, #tpu.memory_space<vmem>>, vector<16x128xf32>,
    return
  }
}

</mosaic_0001>

<llo_original>
// kernel: multimodal_forward.1
$region0: #{multimodal_forward.1}
  #allocation0 [shape = 'u32[]', space=smem, size = 0x4, offset = 0x4, fixed_abs, tag = 'smem constant byte address 0x4 - core index']
  #allocation1 [shape = 'u32[144,128]{1,0:T(1,128)}', space=vmem, size = 0x12000, scoped, tag = 'internal scratch']
  %s0 = inlined_call_operand.smem [shape: u32[46], index: -1, kind: input, shape index: {}]
  %s1 = sld [smem:[%s0]]
  %s2 = scalar_lea.smem %s0, 1
  %s3 = sld [smem:[%s2]]
  %s4 = scalar_lea.smem %s0, 2
  %s5 = sld [smem:[%s4]]
  %s6 = scalar_lea.smem %s0, 3
  %s7 = sld [smem:[%s6]]
  %s8 = scalar_lea.smem %s0, 4
  %s9 = sld [smem:[%s8]]
  %s10 = scalar_lea.smem %s0, 5
  %s11 = sld [smem:[%s10]]
  %s12 = scalar_lea.smem %s0, 6
  %s13 = sld [smem:[%s12]]
  %s14 = scalar_lea.smem %s0, 7
  %s15 = sld [smem:[%s14]]
  %s16 = scalar_lea.smem %s0, 8
  %s17 = sld [smem:[%s16]]
  %s18 = scalar_lea.smem %s0, 9
  %s19 = sld [smem:[%s18]]
  %s20 = scalar_lea.smem %s0, 10
  %s21 = sld [smem:[%s20]]
  %s22 = scalar_lea.smem %s0, 11
  %s23 = sld [smem:[%s22]]
  %s24 = scalar_lea.smem %s0, 12
  %s25 = sld [smem:[%s24]]
  %s26 = scalar_lea.smem %s0, 13
  %s27 = sld [smem:[%s26]]
  %s28 = scalar_lea.smem %s0, 14
  %s29 = sld [smem:[%s28]]
  %s30 = scalar_lea.smem %s0, 15
  %s31 = sld [smem:[%s30]]
  %s32 = scalar_lea.smem %s0, 16
  %s33 = sld [smem:[%s32]]
  %s34 = scalar_lea.smem %s0, 17
  %s35 = sld [smem:[%s34]]
  %s36 = scalar_lea.smem %s0, 18
  %s37 = sld [smem:[%s36]]
  %s38 = scalar_lea.smem %s0, 19
  %s39 = sld [smem:[%s38]]
  %s40 = scalar_lea.smem %s0, 20
  %s41 = sld [smem:[%s40]]
  %s42 = scalar_lea.smem %s0, 21
  %s43 = sld [smem:[%s42]]
  %s44 = scalar_lea.smem %s0, 22
  %s45 = sld [smem:[%s44]]
  %s46 = scalar_lea.smem %s0, 23
  %s47 = sld [smem:[%s46]]
  %s48 = scalar_lea.smem %s0, 24
  %s49 = sld [smem:[%s48]]
  %s50 = scalar_lea.smem %s0, 25
  %s51 = sld [smem:[%s50]]
  %s52 = scalar_lea.smem %s0, 26
  %s53 = sld [smem:[%s52]]
  %s54 = scalar_lea.smem %s0, 27
  %s55 = sld [smem:[%s54]]
  %s56 = scalar_lea.smem %s0, 28
  %s57 = sld [smem:[%s56]]
  %s58 = scalar_lea.smem %s0, 29
  %s59 = sld [smem:[%s58]]
  %s60 = scalar_lea.smem %s0, 30
  %s61 = sld [smem:[%s60]]
  %s62 = scalar_lea.smem %s0, 31
  %s63 = sld [smem:[%s62]]
  %s64 = scalar_lea.smem %s0, 32
  %s65 = sld [smem:[%s64]]
  %s66 = scalar_lea.smem %s0, 33
  %s67 = sld [smem:[%s66]]
  %s68 = scalar_lea.smem %s0, 34
  %s69 = sld [smem:[%s68]]
  %s70 = scalar_lea.smem %s0, 35
  %s71 = sld [smem:[%s70]]
  %s72 = scalar_lea.smem %s0, 36
  %s73 = sld [smem:[%s72]]
  %s74 = scalar_lea.smem %s0, 37
  %s75 = sld [smem:[%s74]]
  %s76 = scalar_lea.smem %s0, 38
  %s77 = sld [smem:[%s76]]
  %s78 = scalar_lea.smem %s0, 39
  %s79 = sld [smem:[%s78]]
  %s80 = scalar_lea.smem %s0, 40
  %s81 = sld [smem:[%s80]]
  %s82 = scalar_lea.smem %s0, 41
  %s83 = sld [smem:[%s82]]
  %s84 = scalar_lea.smem %s0, 42
  %s85 = sld [smem:[%s84]]
  %s86 = scalar_lea.smem %s0, 43
  %s87 = sld [smem:[%s86]]
  %s88 = scalar_lea.smem %s0, 44
  %s89 = sld [smem:[%s88]]
  %s90 = scalar_lea.smem %s0, 45
  %s91 = sld [smem:[%s90]]
  %s92 = sld [smem:[#allocation0]]
  $region342: #{multimodal_forward.1} parent=0
    _
  %s94 = ssub.s32 1, %s92
  %s95 = scalar_select 0, %s94, %s92
  $region1: #{multimodal_forward.1} parent=0
    #allocation2 [shape = 'u8[4096]{0}', space=vmem, size = 0x1000, scoped, tag = 'input window, operand 4, single buffered']
    #allocation3 [shape = 's32[1]{0}', space=sflag, size = 0x4, scoped, tag = 'scoped memory for multimodal_forward.1']
    #allocation4 [shape = 'u8[1048576]{0}', space=vmem, size = 0x100000, scoped, tag = 'input window, operand 5, single buffered']
    #allocation5 [shape = 's32[1]{0}', space=sflag, size = 0x4, scoped, tag = 'scoped memory for multimodal_forward.1']
    #allocation6 [shape = 'u8[4096]{0}', space=vmem, size = 0x1000, scoped, tag = 'input window, operand 6, single buffered']
    #allocation7 [shape = 'u8[4096]{0}', space=vmem, size = 0x1000, scoped, tag = 'input window, operand 7, single buffered']
    #allocation8 [shape = 's32[1]{0}', space=sflag, size = 0x4, scoped, tag = 'scoped memory for multimodal_forward.1']
    #allocation9 [shape = 'u8[524288]{0}', space=vmem, size = 0x80000, scoped, tag = 'input window, operand 8, single buffered']
    #allocation10 [shape = 'u8[2048]{0}', space=vmem, size = 0x800, scoped, tag = 'input window, operand 9, single buffered']
    #allocation11 [shape = 's32[1]{0}', space=sflag, size = 0x4, scoped, tag = 'scoped memory for multimodal_forward.1']
    #allocation12 [shape = 'u8[2048]{0}', space=vmem, size = 0x800, scoped, tag = 'input window, operand 10, single buffered']
    #allocation13 [shape = 'u8[1024]{0}', space=vmem, size = 0x400, scoped, tag = 'input window, operand 12, single buffered']
    #allocation14 [shape = 's32[1]{0}', space=sflag, size = 0x4, scoped, tag = 'scoped memory for multimodal_forward.1']
    #allocation15 [shape = 'u8[1024]{0}', space=vmem, size = 0x400, scoped, tag = 'input window, operand 13, single buffered']
    #allocation16 [shape = 'u8[512]{0}', space=vmem, size = 0x400, scoped, tag = 'input window, operand 15, single buffered']
    #allocation17 [shape = 's32[1]{0}', space=sflag, size = 0x4, scoped, tag = 'scoped memory for multimodal_forward.1']
    #allocation18 [shape = 'u8[512]{0}', space=vmem, size = 0x400, scoped, tag = 'input window, operand 16, single buffered']
    #allocation19 [shape = 'u8[512]{0}', space=vmem, size = 0x400, scoped, tag = 'input window, operand 18, single buffered']
    #allocation20 [shape = 's32[1]{0}', space=sflag, size = 0x4, scoped, tag = 'scoped memory for multimodal_forward.1']
    #allocation21 [shape = 'u8[512]{0}', space=vmem, size = 0x400, scoped, tag = 'input window, operand 19, single buffered']
    #allocation22 [shape = 'u8[524288]{0}', space=vmem, size = 0x80000, scoped, tag = 'input window, operand 20, single buffered']
    #allocation23 [shape = 's32[1]{0}', space=sflag, size = 0x4, scoped, tag = 'scoped memory for multimodal_forward.1']
    #allocation24 [shape = 'u8[2048]{0}', space=vmem, size = 0x800, scoped, tag = 'input window, operand 21, single buffered']
    #allocation25 [shape = 'u8[2048]{0}', space=vmem, size = 0x800, scoped, tag = 'input window, operand 22, single buffered']
    #allocation26 [shape = 's32[1]{0}', space=sflag, size = 0x4, scoped, tag = 'scoped memory for multimodal_forward.1']
    #allocation27 [shape = 'u8[131072]{0}', space=vmem, size = 0x20000, scoped, tag = 'input window, operand 23, single buffered']
    #allocation28 [shape = 'u8[1024]{0}', space=vmem, size = 0x400, scoped, tag = 'input window, operand 24, single buffered']
    #allocation29 [shape = 's32[1]{0}', space=sflag, size = 0x4, scoped, tag = 'scoped memory for multimodal_forward.1']
    #allocation30 [shape = 'u8[1024]{0}', space=vmem, size = 0x400, scoped, tag = 'input window, operand 25, single buffered']
    #allocation31 [shape = 'u8[32768]{0}', space=vmem, size = 0x8000, scoped, tag = 'input window, operand 26, single buffered']
    #allocation32 [shape = 's32[1]{0}', space=sflag, size = 0x4, scoped, tag = 'scoped memory for multimodal_forward.1']
    #allocation33 [shape = 'u8[512]{0}', space=vmem, size = 0x400, scoped, tag = 'input window, operand 27, single buffered']
    #allocation34 [shape = 'u8[512]{0}', space=vmem, size = 0x400, scoped, tag = 'input window, operand 28, single buffered']
    #allocation35 [shape = 's32[1]{0}', space=sflag, size = 0x4, scoped, tag = 'scoped memory for multimodal_forward.1']
    #allocation36 [shape = 'u8[16384]{0}', space=vmem, size = 0x4000, scoped, tag = 'input window, operand 29, single buffered']
    #allocation37 [shape = 'u8[512]{0}', space=vmem, size = 0x400, scoped, tag = 'input window, operand 30, single buffered']
    #allocation38 [shape = 's32[1]{0}', space=sflag, size = 0x4, scoped, tag = 'scoped memory for multimodal_forward.1']
    #allocation39 [shape = 'u8[512]{0}', space=vmem, size = 0x400, scoped, tag = 'input window, operand 31, single buffered']
    #allocation40 [shape = 'u8[1048576]{0}', space=vmem, size = 0x100000, scoped, tag = 'input window, operand 32, single buffered']
    #allocation41 [shape = 's32[1]{0}', space=sflag, size = 0x4, scoped, tag = 'scoped memory for multimodal_forward.1']
    #allocation42 [shape = 'u8[1048576]{0}', space=vmem, size = 0x100000, scoped, tag = 'input window, operand 33, single buffered']
    #allocation43 [shape = 'u8[4096]{0}', space=vmem, size = 0x1000, scoped, tag = 'input window, operand 34, single buffered']
    #allocation44 [shape = 's32[1]{0}', space=sflag, size = 0x4, scoped, tag = 'scoped memory for multimodal_forward.1']
    #allocation45 [shape = 'u8[4096]{0}', space=vmem, size = 0x1000, scoped, tag = 'input window, operand 35, single buffered']
    #allocation46 [shape = 'u8[262144]{0}', space=vmem, size = 0x40000, scoped, tag = 'input window, operand 36, single buffered']
    #allocation47 [shape = 's32[1]{0}', space=sflag, size = 0x4, scoped, tag = 'scoped memory for multimodal_forward.1']
    #allocation48 [shape = 'u8[1024]{0}', space=vmem, size = 0x400, scoped, tag = 'input window, operand 37, single buffered']
    #allocation49 [shape = 'u8[1024]{0}', space=vmem, size = 0x400, scoped, tag = 'input window, operand 38, single buffered']
    #allocation50 [shape = 's32[1]{0}', space=sflag, size = 0x4, scoped, tag = 'scoped memory for multimodal_forward.1']
    #allocation51 [shape = 'u8[32768]{0}', space=vmem, size = 0x8000, scoped, tag = 'input window, operand 39, single buffered']
    #allocation52 [shape = 'u8[512]{0}', space=vmem, size = 0x400, scoped, tag = 'input window, operand 40, single buffered']
    #allocation53 [shape = 's32[1]{0}', space=sflag, size = 0x4, scoped, tag = 'scoped memory for multimodal_forward.1']
    #allocation54 [shape = 'u8[512]{0}', space=vmem, size = 0x400, scoped, tag = 'input window, operand 41, single buffered']
    #allocation55 [shape = 'u8[16384]{0}', space=vmem, size = 0x4000, scoped, tag = 'input window, operand 42, single buffered']
    #allocation56 [shape = 's32[1]{0}', space=sflag, size = 0x4, scoped, tag = 'scoped memory for multimodal_forward.1']
    #allocation57 [shape = 'u8[512]{0}', space=vmem, size = 0x400, scoped, tag = 'input window, operand 43, single buffered']
    #allocation58 [shape = 'u8[512]{0}', space=vmem, size = 0x400, scoped, tag = 'input window, operand 44, single buffered']
    #allocation59 [shape = 's32[1]{0}', space=sflag, size = 0x4, scoped, tag = 'scoped memory for multimodal_forward.1']
    %96 = vsyncpa [#allocation3], 0
    %97 = vsyncpa [#allocation5], 0
    %98 = vsyncpa [#allocation8], 0
    %99 = vsyncpa [#allocation11], 0
    %100 = vsyncpa [#allocation14], 0
    %101 = vsyncpa [#allocation17], 0
    %102 = vsyncpa [#allocation20], 0
    %103 = vsyncpa [#allocation23], 0
    %104 = vsyncpa [#allocation26], 0
    %105 = vsyncpa [#allocation29], 0
    %106 = vsyncpa [#allocation32], 0
    %107 = vsyncpa [#allocation35], 0
    %108 = vsyncpa [#allocation38], 0
    %109 = vsyncpa [#allocation41], 0
    %110 = vsyncpa [#allocation44], 0
    %111 = vsyncpa [#allocation47], 0
    %112 = vsyncpa [#allocation50], 0
    %113 = vsyncpa [#allocation53], 0
    %114 = vsyncpa [#allocation56], 0
    %115 = vsyncpa [#allocation59], 0
    // Predicated region
    $region2: #{multimodal_forward.1} parent=1 // pred_check
      _
    $region3: #{multimodal_forward.1} parent=1 // pred_check_branch
      %117 = sbr.rel (0) target = $region5
    $region4: #{multimodal_forward.1} parent=1 // pred_region
      _
    $region5: #{multimodal_forward.1} parent=1 // pred_fallthru
      _
    // Predicated region
    $region6: #{multimodal_forward.1} parent=1 // pred_check
      _
    $region7: #{multimodal_forward.1} parent=1 // pred_check_branch
      %119 = sbr.rel (0) target = $region9
    $region8: #{multimodal_forward.1} parent=1 // pred_region
      _
    $region9: #{multimodal_forward.1} parent=1 // pred_fallthru
      _
    // Predicated region
    $region10: #{multimodal_forward.1} parent=1 // pred_check
      _
    $region11: #{multimodal_forward.1} parent=1 // pred_check_branch
      %121 = sbr.rel (0) target = $region13
    $region12: #{multimodal_forward.1} parent=1 // pred_region
      _
    $region13: #{multimodal_forward.1} parent=1 // pred_fallthru
      _
    // Predicated region
    $region14: #{multimodal_forward.1} parent=1 // pred_check
      _
    $region15: #{multimodal_forward.1} parent=1 // pred_check_branch
      %123 = sbr.rel (0) target = $region17
    $region16: #{multimodal_forward.1} parent=1 // pred_region
      _
    $region17: #{multimodal_forward.1} parent=1 // pred_fallthru
      _
    // Predicated region
    $region18: #{multimodal_forward.1} parent=1 // pred_check
      _
    $region19: #{multimodal_forward.1} parent=1 // pred_check_branch
      %125 = sbr.rel (0) target = $region21
    $region20: #{multimodal_forward.1} parent=1 // pred_region
      %s127 = ssub.s32 128, 128
      %128 = vsyncadd [#allocation3], %s127
      %s130 = sshll.u32 [#allocation2], 4
      %s131 = int_to_ptr.vmem [resolvable:$true] %s130
      %133 = dma.hbm_to_vmem [thread:$0]  %s9, 128, %s131, [#allocation3]
    $region21: #{multimodal_forward.1} parent=1 // pred_fallthru
      _
    // Predicated region
    $region22: #{multimodal_forward.1} parent=1 // pred_check
      _
    $region23: #{multimodal_forward.1} parent=1 // pred_check_branch
      %135 = sbr.rel (0) target = $region25
    $region24: #{multimodal_forward.1} parent=1 // pred_region
      %s137 = ssub.s32 32768, 32768
      %138 = vsyncadd [#allocation5], %s137
      %s139 = sshll.u32 [#allocation4], 4
      %s140 = int_to_ptr.vmem [resolvable:$true] %s139
      %145 = dma.hbm_to_vmem [thread:$0]  %s11, 32768, %s140, [#allocation5], 1024, 1024, 64
    $region25: #{multimodal_forward.1} parent=1 // pred_fallthru
      _
    // Predicated region
    $region26: #{multimodal_forward.1} parent=1 // pred_check
      _
    $region27: #{multimodal_forward.1} parent=1 // pred_check_branch
      %147 = sbr.rel (0) target = $region29
    $region28: #{multimodal_forward.1} parent=1 // pred_region
      %s149 = ssub.s32 128, 128
      %150 = vsyncadd [#allocation5], %s149
      %s152 = sshll.u32 [#allocation6], 4
      %s153 = int_to_ptr.vmem [resolvable:$true] %s152
      %155 = dma.hbm_to_vmem [thread:$0]  %s13, 128, %s153, [#allocation5]
    $region29: #{multimodal_forward.1} parent=1 // pred_fallthru
      _
    // Predicated region
    $region30: #{multimodal_forward.1} parent=1 // pred_check
      _
    $region31: #{multimodal_forward.1} parent=1 // pred_check_branch
      %157 = sbr.rel (0) target = $region33
    $region32: #{multimodal_forward.1} parent=1 // pred_region
      %s159 = ssub.s32 128, 128
      %160 = vsyncadd [#allocation8], %s159
      %s162 = sshll.u32 [#allocation7], 4
      %s163 = int_to_ptr.vmem [resolvable:$true] %s162
      %165 = dma.hbm_to_vmem [thread:$0]  %s15, 128, %s163, [#allocation8]
    $region33: #{multimodal_forward.1} parent=1 // pred_fallthru
      _
    // Predicated region
    $region34: #{multimodal_forward.1} parent=1 // pred_check
      _
    $region35: #{multimodal_forward.1} parent=1 // pred_check_branch
      %167 = sbr.rel (0) target = $region37
    $region36: #{multimodal_forward.1} parent=1 // pred_region
      %s169 = ssub.s32 16384, 16384
      %170 = vsyncadd [#allocation8], %s169
      %s171 = sshll.u32 [#allocation9], 4
      %s172 = int_to_ptr.vmem [resolvable:$true] %s171
      %177 = dma.hbm_to_vmem [thread:$0]  %s17, 16384, %s172, [#allocation8], 512, 512, 32
    $region37: #{multimodal_forward.1} parent=1 // pred_fallthru
      _
    // Predicated region
    $region38: #{multimodal_forward.1} parent=1 // pred_check
      _
    $region39: #{multimodal_forward.1} parent=1 // pred_check_branch
      %179 = sbr.rel (0) target = $region41
    $region40: #{multimodal_forward.1} parent=1 // pred_region
      %s181 = ssub.s32 64, 64
      %182 = vsyncadd [#allocation11], %s181
      %s184 = sshll.u32 [#allocation10], 4
      %s185 = int_to_ptr.vmem [resolvable:$true] %s184
      %187 = dma.hbm_to_vmem [thread:$0]  %s19, 64, %s185, [#allocation11]
    $region41: #{multimodal_forward.1} parent=1 // pred_fallthru
      _
    // Predicated region
    $region42: #{multimodal_forward.1} parent=1 // pred_check
      _
    $region43: #{multimodal_forward.1} parent=1 // pred_check_branch
      %189 = sbr.rel (0) target = $region45
    $region44: #{multimodal_forward.1} parent=1 // pred_region
      %s191 = ssub.s32 64, 64
      %192 = vsyncadd [#allocation11], %s191
      %s194 = sshll.u32 [#allocation12], 4
      %s195 = int_to_ptr.vmem [resolvable:$true] %s194
      %197 = dma.hbm_to_vmem [thread:$0]  %s21, 64, %s195, [#allocation11]
    $region45: #{multimodal_forward.1} parent=1 // pred_fallthru
      _
    // Predicated region
    $region46: #{multimodal_forward.1} parent=1 // pred_check
      _
    $region47: #{multimodal_forward.1} parent=1 // pred_check_branch
      %199 = sbr.rel (0) target = $region49
    $region48: #{multimodal_forward.1} parent=1 // pred_region
      _
    $region49: #{multimodal_forward.1} parent=1 // pred_fallthru
      _
    // Predicated region
    $region50: #{multimodal_forward.1} parent=1 // pred_check
      _
    $region51: #{multimodal_forward.1} parent=1 // pred_check_branch
      %201 = sbr.rel (0) target = $region53
    $region52: #{multimodal_forward.1} parent=1 // pred_region
      %s203 = ssub.s32 32, 32
      %204 = vsyncadd [#allocation14], %s203
      %s206 = sshll.u32 [#allocation13], 4
      %s207 = int_to_ptr.vmem [resolvable:$true] %s206
      %209 = dma.hbm_to_vmem [thread:$0]  %s25, 32, %s207, [#allocation14]
    $region53: #{multimodal_forward.1} parent=1 // pred_fallthru
      _
    // Predicated region
    $region54: #{multimodal_forward.1} parent=1 // pred_check
      _
    $region55: #{multimodal_forward.1} parent=1 // pred_check_branch
      %211 = sbr.rel (0) target = $region57
    $region56: #{multimodal_forward.1} parent=1 // pred_region
      %s213 = ssub.s32 32, 32
      %214 = vsyncadd [#allocation14], %s213
      %s216 = sshll.u32 [#allocation15], 4
      %s217 = int_to_ptr.vmem [resolvable:$true] %s216
      %219 = dma.hbm_to_vmem [thread:$0]  %s27, 32, %s217, [#allocation14]
    $region57: #{multimodal_forward.1} parent=1 // pred_fallthru
      _
    // Predicated region
    $region58: #{multimodal_forward.1} parent=1 // pred_check
      _
    $region59: #{multimodal_forward.1} parent=1 // pred_check_branch
      %221 = sbr.rel (0) target = $region61
    $region60: #{multimodal_forward.1} parent=1 // pred_region
      _
    $region61: #{multimodal_forward.1} parent=1 // pred_fallthru
      _
    // Predicated region
    $region62: #{multimodal_forward.1} parent=1 // pred_check
      _
    $region63: #{multimodal_forward.1} parent=1 // pred_check_branch
      %223 = sbr.rel (0) target = $region65
    $region64: #{multimodal_forward.1} parent=1 // pred_region
      %s225 = ssub.s32 16, 16
      %226 = vsyncadd [#allocation17], %s225
      %s228 = sshll.u32 [#allocation16], 4
      %s229 = int_to_ptr.vmem [resolvable:$true] %s228
      %231 = dma.hbm_to_vmem [thread:$0]  %s31, 16, %s229, [#allocation17]
    $region65: #{multimodal_forward.1} parent=1 // pred_fallthru
      _
    // Predicated region
    $region66: #{multimodal_forward.1} parent=1 // pred_check
      _
    $region67: #{multimodal_forward.1} parent=1 // pred_check_branch
      %233 = sbr.rel (0) target = $region69
    $region68: #{multimodal_forward.1} parent=1 // pred_region
      %s235 = ssub.s32 16, 16
      %236 = vsyncadd [#allocation17], %s235
      %s238 = sshll.u32 [#allocation18], 4
      %s239 = int_to_ptr.vmem [resolvable:$true] %s238
      %241 = dma.hbm_to_vmem [thread:$0]  %s33, 16, %s239, [#allocation17]
    $region69: #{multimodal_forward.1} parent=1 // pred_fallthru
      _
    // Predicated region
    $region70: #{multimodal_forward.1} parent=1 // pred_check
      _
    $region71: #{multimodal_forward.1} parent=1 // pred_check_branch
      %243 = sbr.rel (0) target = $region73
    $region72: #{multimodal_forward.1} parent=1 // pred_region
      _
    $region73: #{multimodal_forward.1} parent=1 // pred_fallthru
      _
    // Predicated region
    $region74: #{multimodal_forward.1} parent=1 // pred_check
      _
    $region75: #{multimodal_forward.1} parent=1 // pred_check_branch
      %245 = sbr.rel (0) target = $region77
    $region76: #{multimodal_forward.1} parent=1 // pred_region
      %s247 = ssub.s32 16, 16
      %248 = vsyncadd [#allocation20], %s247
      %s250 = sshll.u32 [#allocation19], 4
      %s251 = int_to_ptr.vmem [resolvable:$true] %s250
      %253 = dma.hbm_to_vmem [thread:$0]  %s37, 16, %s251, [#allocation20]
    $region77: #{multimodal_forward.1} parent=1 // pred_fallthru
      _
    // Predicated region
    $region78: #{multimodal_forward.1} parent=1 // pred_check
      _
    $region79: #{multimodal_forward.1} parent=1 // pred_check_branch
      %255 = sbr.rel (0) target = $region81
    $region80: #{multimodal_forward.1} parent=1 // pred_region
      %s257 = ssub.s32 16, 16
      %258 = vsyncadd [#allocation20], %s257
      %s260 = sshll.u32 [#allocation21], 4
      %s261 = int_to_ptr.vmem [resolvable:$true] %s260
      %263 = dma.hbm_to_vmem [thread:$0]  %s39, 16, %s261, [#allocation20]
    $region81: #{multimodal_forward.1} parent=1 // pred_fallthru
      _
    // Predicated region
    $region82: #{multimodal_forward.1} parent=1 // pred_check
      _
    $region83: #{multimodal_forward.1} parent=1 // pred_check_branch
      %265 = sbr.rel (0) target = $region85
    $region84: #{multimodal_forward.1} parent=1 // pred_region
      %s267 = ssub.s32 16384, 16384
      %268 = vsyncadd [#allocation23], %s267
      %s269 = sshll.u32 [#allocation22], 4
      %s270 = int_to_ptr.vmem [resolvable:$true] %s269
      %275 = dma.hbm_to_vmem [thread:$0]  %s41, 16384, %s270, [#allocation23], 512, 512, 32
    $region85: #{multimodal_forward.1} parent=1 // pred_fallthru
      _
    // Predicated region
    $region86: #{multimodal_forward.1} parent=1 // pred_check
      _
    $region87: #{multimodal_forward.1} parent=1 // pred_check_branch
      %277 = sbr.rel (0) target = $region89
    $region88: #{multimodal_forward.1} parent=1 // pred_region
      %s279 = ssub.s32 64, 64
      %280 = vsyncadd [#allocation23], %s279
      %s282 = sshll.u32 [#allocation24], 4
      %s283 = int_to_ptr.vmem [resolvable:$true] %s282
      %285 = dma.hbm_to_vmem [thread:$0]  %s43, 64, %s283, [#allocation23]
    $region89: #{multimodal_forward.1} parent=1 // pred_fallthru
      _
    // Predicated region
    $region90: #{multimodal_forward.1} parent=1 // pred_check
      _
    $region91: #{multimodal_forward.1} parent=1 // pred_check_branch
      %287 = sbr.rel (0) target = $region93
    $region92: #{multimodal_forward.1} parent=1 // pred_region
      %s289 = ssub.s32 64, 64
      %290 = vsyncadd [#allocation26], %s289
      %s292 = sshll.u32 [#allocation25], 4
      %s293 = int_to_ptr.vmem [resolvable:$true] %s292
      %295 = dma.hbm_to_vmem [thread:$0]  %s45, 64, %s293, [#allocation26]
    $region93: #{multimodal_forward.1} parent=1 // pred_fallthru
      _
    // Predicated region
    $region94: #{multimodal_forward.1} parent=1 // pred_check
      _
    $region95: #{multimodal_forward.1} parent=1 // pred_check_branch
      %297 = sbr.rel (0) target = $region97
    $region96: #{multimodal_forward.1} parent=1 // pred_region
      %s299 = ssub.s32 4096, 4096
      %300 = vsyncadd [#allocation26], %s299
      %s301 = sshll.u32 [#allocation27], 4
      %s302 = int_to_ptr.vmem [resolvable:$true] %s301
      %307 = dma.hbm_to_vmem [thread:$0]  %s47, 4096, %s302, [#allocation26], 256, 256, 16
    $region97: #{multimodal_forward.1} parent=1 // pred_fallthru
      _
    // Predicated region
    $region98: #{multimodal_forward.1} parent=1 // pred_check
      _
    $region99: #{multimodal_forward.1} parent=1 // pred_check_branch
      %309 = sbr.rel (0) target = $region101
    $region100: #{multimodal_forward.1} parent=1 // pred_region
      %s311 = ssub.s32 32, 32
      %312 = vsyncadd [#allocation29], %s311
      %s314 = sshll.u32 [#allocation28], 4
      %s315 = int_to_ptr.vmem [resolvable:$true] %s314
      %317 = dma.hbm_to_vmem [thread:$0]  %s49, 32, %s315, [#allocation29]
    $region101: #{multimodal_forward.1} parent=1 // pred_fallthru
      _
    // Predicated region
    $region102: #{multimodal_forward.1} parent=1 // pred_check
      _
    $region103: #{multimodal_forward.1} parent=1 // pred_check_branch
      %319 = sbr.rel (0) target = $region105
    $region104: #{multimodal_forward.1} parent=1 // pred_region
      %s321 = ssub.s32 32, 32
      %322 = vsyncadd [#allocation29], %s321
      %s324 = sshll.u32 [#allocation30], 4
      %s325 = int_to_ptr.vmem [resolvable:$true] %s324
      %327 = dma.hbm_to_vmem [thread:$0]  %s51, 32, %s325, [#allocation29]
    $region105: #{multimodal_forward.1} parent=1 // pred_fallthru
      _
    // Predicated region
    $region106: #{multimodal_forward.1} parent=1 // pred_check
      _
    $region107: #{multimodal_forward.1} parent=1 // pred_check_branch
      %329 = sbr.rel (0) target = $region109
    $region108: #{multimodal_forward.1} parent=1 // pred_region
      %s331 = ssub.s32 1024, 1024
      %332 = vsyncadd [#allocation32], %s331
      %s333 = sshll.u32 [#allocation31], 4
      %s334 = int_to_ptr.vmem [resolvable:$true] %s333
      %339 = dma.hbm_to_vmem [thread:$0]  %s53, 1024, %s334, [#allocation32], 128, 128, 8
    $region109: #{multimodal_forward.1} parent=1 // pred_fallthru
      _
    // Predicated region
    $region110: #{multimodal_forward.1} parent=1 // pred_check
      _
    $region111: #{multimodal_forward.1} parent=1 // pred_check_branch
      %341 = sbr.rel (0) target = $region113
    $region112: #{multimodal_forward.1} parent=1 // pred_region
      %s343 = ssub.s32 16, 16
      %344 = vsyncadd [#allocation32], %s343
      %s346 = sshll.u32 [#allocation33], 4
      %s347 = int_to_ptr.vmem [resolvable:$true] %s346
      %349 = dma.hbm_to_vmem [thread:$0]  %s55, 16, %s347, [#allocation32]
    $region113: #{multimodal_forward.1} parent=1 // pred_fallthru
      _
    // Predicated region
    $region114: #{multimodal_forward.1} parent=1 // pred_check
      _
    $region115: #{multimodal_forward.1} parent=1 // pred_check_branch
      %351 = sbr.rel (0) target = $region117
    $region116: #{multimodal_forward.1} parent=1 // pred_region
      %s353 = ssub.s32 16, 16
      %354 = vsyncadd [#allocation35], %s353
      %s356 = sshll.u32 [#allocation34], 4
      %s357 = int_to_ptr.vmem [resolvable:$true] %s356
      %359 = dma.hbm_to_vmem [thread:$0]  %s57, 16, %s357, [#allocation35]
    $region117: #{multimodal_forward.1} parent=1 // pred_fallthru
      _
    // Predicated region
    $region118: #{multimodal_forward.1} parent=1 // pred_check
      _
    $region119: #{multimodal_forward.1} parent=1 // pred_check_branch
      %361 = sbr.rel (0) target = $region121
    $region120: #{multimodal_forward.1} parent=1 // pred_region
      %s363 = ssub.s32 512, 512
      %364 = vsyncadd [#allocation35], %s363
      %s365 = sshll.u32 [#allocation36], 4
      %s366 = int_to_ptr.vmem [resolvable:$true] %s365
      %371 = dma.hbm_to_vmem [thread:$0]  %s59, 512, %s366, [#allocation35], 128, 128, 8
    $region121: #{multimodal_forward.1} parent=1 // pred_fallthru
      _
    // Predicated region
    $region122: #{multimodal_forward.1} parent=1 // pred_check
      _
    $region123: #{multimodal_forward.1} parent=1 // pred_check_branch
      %373 = sbr.rel (0) target = $region125
    $region124: #{multimodal_forward.1} parent=1 // pred_region
      %s375 = ssub.s32 16, 16
      %376 = vsyncadd [#allocation38], %s375
      %s378 = sshll.u32 [#allocation37], 4
      %s379 = int_to_ptr.vmem [resolvable:$true] %s378
      %381 = dma.hbm_to_vmem [thread:$0]  %s61, 16, %s379, [#allocation38]
    $region125: #{multimodal_forward.1} parent=1 // pred_fallthru
      _
    // Predicated region
    $region126: #{multimodal_forward.1} parent=1 // pred_check
      _
    $region127: #{multimodal_forward.1} parent=1 // pred_check_branch
      %383 = sbr.rel (0) target = $region129
    $region128: #{multimodal_forward.1} parent=1 // pred_region
      %s385 = ssub.s32 16, 16
      %386 = vsyncadd [#allocation38], %s385
      %s388 = sshll.u32 [#allocation39], 4
      %s389 = int_to_ptr.vmem [resolvable:$true] %s388
      %391 = dma.hbm_to_vmem [thread:$0]  %s63, 16, %s389, [#allocation38]
    $region129: #{multimodal_forward.1} parent=1 // pred_fallthru
      _
    // Predicated region
    $region130: #{multimodal_forward.1} parent=1 // pred_check
      _
    $region131: #{multimodal_forward.1} parent=1 // pred_check_branch
      %393 = sbr.rel (0) target = $region133
    $region132: #{multimodal_forward.1} parent=1 // pred_region
      %s395 = ssub.s32 32768, 32768
      %396 = vsyncadd [#allocation41], %s395
      %s397 = sshll.u32 [#allocation40], 4
      %s398 = int_to_ptr.vmem [resolvable:$true] %s397
      %403 = dma.hbm_to_vmem [thread:$0]  %s65, 32768, %s398, [#allocation41], 1024, 1024, 64
    $region133: #{multimodal_forward.1} parent=1 // pred_fallthru
      _
    // Predicated region
    $region134: #{multimodal_forward.1} parent=1 // pred_check
      _
    $region135: #{multimodal_forward.1} parent=1 // pred_check_branch
      %405 = sbr.rel (0) target = $region137
    $region136: #{multimodal_forward.1} parent=1 // pred_region
      %s407 = ssub.s32 32768, 32768
      %408 = vsyncadd [#allocation41], %s407
      %s409 = sshll.u32 [#allocation42], 4
      %s410 = int_to_ptr.vmem [resolvable:$true] %s409
      %415 = dma.hbm_to_vmem [thread:$0]  %s67, 32768, %s410, [#allocation41], 1024, 1024, 64
    $region137: #{multimodal_forward.1} parent=1 // pred_fallthru
      _
    // Predicated region
    $region138: #{multimodal_forward.1} parent=1 // pred_check
      _
    $region139: #{multimodal_forward.1} parent=1 // pred_check_branch
      %417 = sbr.rel (0) target = $region141
    $region140: #{multimodal_forward.1} parent=1 // pred_region
      %s419 = ssub.s32 128, 128
      %420 = vsyncadd [#allocation44], %s419
      %s422 = sshll.u32 [#allocation43], 4
      %s423 = int_to_ptr.vmem [resolvable:$true] %s422
      %425 = dma.hbm_to_vmem [thread:$0]  %s69, 128, %s423, [#allocation44]
    $region141: #{multimodal_forward.1} parent=1 // pred_fallthru
      _
    // Predicated region
    $region142: #{multimodal_forward.1} parent=1 // pred_check
      _
    $region143: #{multimodal_forward.1} parent=1 // pred_check_branch
      %427 = sbr.rel (0) target = $region145
    $region144: #{multimodal_forward.1} parent=1 // pred_region
      %s429 = ssub.s32 128, 128
      %430 = vsyncadd [#allocation44], %s429
      %s432 = sshll.u32 [#allocation45], 4
      %s433 = int_to_ptr.vmem [resolvable:$true] %s432
      %435 = dma.hbm_to_vmem [thread:$0]  %s71, 128, %s433, [#allocation44]
    $region145: #{multimodal_forward.1} parent=1 // pred_fallthru
      _
    // Predicated region
    $region146: #{multimodal_forward.1} parent=1 // pred_check
      _
    $region147: #{multimodal_forward.1} parent=1 // pred_check_branch
      %437 = sbr.rel (0) target = $region149
    $region148: #{multimodal_forward.1} parent=1 // pred_region
      %s439 = ssub.s32 8192, 8192
      %440 = vsyncadd [#allocation47], %s439
      %s441 = sshll.u32 [#allocation46], 4
      %s442 = int_to_ptr.vmem [resolvable:$true] %s441
      %447 = dma.hbm_to_vmem [thread:$0]  %s73, 8192, %s442, [#allocation47], 256, 256, 16
    $region149: #{multimodal_forward.1} parent=1 // pred_fallthru
      _
    // Predicated region
    $region150: #{multimodal_forward.1} parent=1 // pred_check
      _
    $region151: #{multimodal_forward.1} parent=1 // pred_check_branch
      %449 = sbr.rel (0) target = $region153
    $region152: #{multimodal_forward.1} parent=1 // pred_region
      %s451 = ssub.s32 32, 32
      %452 = vsyncadd [#allocation47], %s451
      %s454 = sshll.u32 [#allocation48], 4
      %s455 = int_to_ptr.vmem [resolvable:$true] %s454
      %457 = dma.hbm_to_vmem [thread:$0]  %s75, 32, %s455, [#allocation47]
    $region153: #{multimodal_forward.1} parent=1 // pred_fallthru
      _
    // Predicated region
    $region154: #{multimodal_forward.1} parent=1 // pred_check
      _
    $region155: #{multimodal_forward.1} parent=1 // pred_check_branch
      %459 = sbr.rel (0) target = $region157
    $region156: #{multimodal_forward.1} parent=1 // pred_region
      %s461 = ssub.s32 32, 32
      %462 = vsyncadd [#allocation50], %s461
      %s464 = sshll.u32 [#allocation49], 4
      %s465 = int_to_ptr.vmem [resolvable:$true] %s464
      %467 = dma.hbm_to_vmem [thread:$0]  %s77, 32, %s465, [#allocation50]
    $region157: #{multimodal_forward.1} parent=1 // pred_fallthru
      _
    // Predicated region
    $region158: #{multimodal_forward.1} parent=1 // pred_check
      _
    $region159: #{multimodal_forward.1} parent=1 // pred_check_branch
      %469 = sbr.rel (0) target = $region161
    $region160: #{multimodal_forward.1} parent=1 // pred_region
      %s471 = ssub.s32 1024, 1024
      %472 = vsyncadd [#allocation50], %s471
      %s473 = sshll.u32 [#allocation51], 4
      %s474 = int_to_ptr.vmem [resolvable:$true] %s473
      %479 = dma.hbm_to_vmem [thread:$0]  %s79, 1024, %s474, [#allocation50], 128, 128, 8
    $region161: #{multimodal_forward.1} parent=1 // pred_fallthru
      _
    // Predicated region
    $region162: #{multimodal_forward.1} parent=1 // pred_check
      _
    $region163: #{multimodal_forward.1} parent=1 // pred_check_branch
      %481 = sbr.rel (0) target = $region165
    $region164: #{multimodal_forward.1} parent=1 // pred_region
      %s483 = ssub.s32 16, 16
      %484 = vsyncadd [#allocation53], %s483
      %s486 = sshll.u32 [#allocation52], 4
      %s487 = int_to_ptr.vmem [resolvable:$true] %s486
      %489 = dma.hbm_to_vmem [thread:$0]  %s81, 16, %s487, [#allocation53]
    $region165: #{multimodal_forward.1} parent=1 // pred_fallthru
      _
    // Predicated region
    $region166: #{multimodal_forward.1} parent=1 // pred_check
      _
    $region167: #{multimodal_forward.1} parent=1 // pred_check_branch
      %491 = sbr.rel (0) target = $region169
    $region168: #{multimodal_forward.1} parent=1 // pred_region
      %s493 = ssub.s32 16, 16
      %494 = vsyncadd [#allocation53], %s493
      %s496 = sshll.u32 [#allocation54], 4
      %s497 = int_to_ptr.vmem [resolvable:$true] %s496
      %499 = dma.hbm_to_vmem [thread:$0]  %s83, 16, %s497, [#allocation53]
    $region169: #{multimodal_forward.1} parent=1 // pred_fallthru
      _
    // Predicated region
    $region170: #{multimodal_forward.1} parent=1 // pred_check
      _
    $region171: #{multimodal_forward.1} parent=1 // pred_check_branch
      %501 = sbr.rel (0) target = $region173
    $region172: #{multimodal_forward.1} parent=1 // pred_region
      %s503 = ssub.s32 512, 512
      %504 = vsyncadd [#allocation56], %s503
      %s505 = sshll.u32 [#allocation55], 4
      %s506 = int_to_ptr.vmem [resolvable:$true] %s505
      %511 = dma.hbm_to_vmem [thread:$0]  %s85, 512, %s506, [#allocation56], 128, 128, 8
    $region173: #{multimodal_forward.1} parent=1 // pred_fallthru
      _
    // Predicated region
    $region174: #{multimodal_forward.1} parent=1 // pred_check
      _
    $region175: #{multimodal_forward.1} parent=1 // pred_check_branch
      %513 = sbr.rel (0) target = $region177
    $region176: #{multimodal_forward.1} parent=1 // pred_region
      %s515 = ssub.s32 16, 16
      %516 = vsyncadd [#allocation56], %s515
      %s518 = sshll.u32 [#allocation57], 4
      %s519 = int_to_ptr.vmem [resolvable:$true] %s518
      %521 = dma.hbm_to_vmem [thread:$0]  %s87, 16, %s519, [#allocation56]
    $region177: #{multimodal_forward.1} parent=1 // pred_fallthru
      _
    // Predicated region
    $region178: #{multimodal_forward.1} parent=1 // pred_check
      _
    $region179: #{multimodal_forward.1} parent=1 // pred_check_branch
      %523 = sbr.rel (0) target = $region181
    $region180: #{multimodal_forward.1} parent=1 // pred_region
      %s525 = ssub.s32 16, 16
      %526 = vsyncadd [#allocation59], %s525
      %s528 = sshll.u32 [#allocation58], 4
      %s529 = int_to_ptr.vmem [resolvable:$true] %s528
      %531 = dma.hbm_to_vmem [thread:$0]  %s89, 16, %s529, [#allocation59]
    $region181: #{multimodal_forward.1} parent=1 // pred_fallthru
      _
    // Predicated region
    $region182: #{multimodal_forward.1} parent=1 // pred_check
      _
    $region183: #{multimodal_forward.1} parent=1 // pred_check_branch
      %533 = sbr.rel (0) target = $region185
    $region184: #{multimodal_forward.1} parent=1 // pred_region
      %534 = dma.done [#allocation3], 128
    $region185: #{multimodal_forward.1} parent=1 // pred_fallthru
      _
    // Predicated region
    $region186: #{multimodal_forward.1} parent=1 // pred_check
      _
    $region187: #{multimodal_forward.1} parent=1 // pred_check_branch
      %536 = sbr.rel (0) target = $region189
    $region188: #{multimodal_forward.1} parent=1 // pred_region
      %537 = dma.done [#allocation5], 32768
    $region189: #{multimodal_forward.1} parent=1 // pred_fallthru
      _
    // Predicated region
    $region190: #{multimodal_forward.1} parent=1 // pred_check
      _
    $region191: #{multimodal_forward.1} parent=1 // pred_check_branch
      %539 = sbr.rel (0) target = $region193
    $region192: #{multimodal_forward.1} parent=1 // pred_region
      %540 = dma.done [#allocation5], 128
    $region193: #{multimodal_forward.1} parent=1 // pred_fallthru
      _
    // Predicated region
    $region194: #{multimodal_forward.1} parent=1 // pred_check
      _
    $region195: #{multimodal_forward.1} parent=1 // pred_check_branch
      %542 = sbr.rel (0) target = $region197
    $region196: #{multimodal_forward.1} parent=1 // pred_region
      %543 = dma.done [#allocation8], 128
    $region197: #{multimodal_forward.1} parent=1 // pred_fallthru
      _
    // Predicated region
    $region198: #{multimodal_forward.1} parent=1 // pred_check
      _
    $region199: #{multimodal_forward.1} parent=1 // pred_check_branch
      %545 = sbr.rel (0) target = $region201
    $region200: #{multimodal_forward.1} parent=1 // pred_region
      %546 = dma.done [#allocation8], 16384
    $region201: #{multimodal_forward.1} parent=1 // pred_fallthru
      _
    // Predicated region
    $region202: #{multimodal_forward.1} parent=1 // pred_check
      _
    $region203: #{multimodal_forward.1} parent=1 // pred_check_branch
      %548 = sbr.rel (0) target = $region205
    $region204: #{multimodal_forward.1} parent=1 // pred_region
      %549 = dma.done [#allocation11], 64
    $region205: #{multimodal_forward.1} parent=1 // pred_fallthru
      _
    // Predicated region
    $region206: #{multimodal_forward.1} parent=1 // pred_check
      _
    $region207: #{multimodal_forward.1} parent=1 // pred_check_branch
      %551 = sbr.rel (0) target = $region209
    $region208: #{multimodal_forward.1} parent=1 // pred_region
      %552 = dma.done [#allocation11], 64
    $region209: #{multimodal_forward.1} parent=1 // pred_fallthru
      _
    // Predicated region
    $region210: #{multimodal_forward.1} parent=1 // pred_check
      _
    $region211: #{multimodal_forward.1} parent=1 // pred_check_branch
      %554 = sbr.rel (0) target = $region213
    $region212: #{multimodal_forward.1} parent=1 // pred_region
      %555 = dma.done [#allocation14], 32
    $region213: #{multimodal_forward.1} parent=1 // pred_fallthru
      _
    // Predicated region
    $region214: #{multimodal_forward.1} parent=1 // pred_check
      _
    $region215: #{multimodal_forward.1} parent=1 // pred_check_branch
      %557 = sbr.rel (0) target = $region217
    $region216: #{multimodal_forward.1} parent=1 // pred_region
      %558 = dma.done [#allocation14], 32
    $region217: #{multimodal_forward.1} parent=1 // pred_fallthru
      _
    // Predicated region
    $region218: #{multimodal_forward.1} parent=1 // pred_check
      _
    $region219: #{multimodal_forward.1} parent=1 // pred_check_branch
      %560 = sbr.rel (0) target = $region221
    $region220: #{multimodal_forward.1} parent=1 // pred_region
      %561 = dma.done [#allocation17], 16
    $region221: #{multimodal_forward.1} parent=1 // pred_fallthru
      _
    // Predicated region
    $region222: #{multimodal_forward.1} parent=1 // pred_check
      _
    $region223: #{multimodal_forward.1} parent=1 // pred_check_branch
      %563 = sbr.rel (0) target = $region225
    $region224: #{multimodal_forward.1} parent=1 // pred_region
      %564 = dma.done [#allocation17], 16
    $region225: #{multimodal_forward.1} parent=1 // pred_fallthru
      _
    // Predicated region
    $region226: #{multimodal_forward.1} parent=1 // pred_check
      _
    $region227: #{multimodal_forward.1} parent=1 // pred_check_branch
      %566 = sbr.rel (0) target = $region229
    $region228: #{multimodal_forward.1} parent=1 // pred_region
      %567 = dma.done [#allocation20], 16
    $region229: #{multimodal_forward.1} parent=1 // pred_fallthru
      _
    // Predicated region
    $region230: #{multimodal_forward.1} parent=1 // pred_check
      _
    $region231: #{multimodal_forward.1} parent=1 // pred_check_branch
      %569 = sbr.rel (0) target = $region233
    $region232: #{multimodal_forward.1} parent=1 // pred_region
      %570 = dma.done [#allocation20], 16
    $region233: #{multimodal_forward.1} parent=1 // pred_fallthru
      _
    // Predicated region
    $region234: #{multimodal_forward.1} parent=1 // pred_check
      _
    $region235: #{multimodal_forward.1} parent=1 // pred_check_branch
      %572 = sbr.rel (0) target = $region237
    $region236: #{multimodal_forward.1} parent=1 // pred_region
      %573 = dma.done [#allocation23], 16384
    $region237: #{multimodal_forward.1} parent=1 // pred_fallthru
      _
    // Predicated region
    $region238: #{multimodal_forward.1} parent=1 // pred_check
      _
    $region239: #{multimodal_forward.1} parent=1 // pred_check_branch
      %575 = sbr.rel (0) target = $region241
    $region240: #{multimodal_forward.1} parent=1 // pred_region
      %576 = dma.done [#allocation23], 64
    $region241: #{multimodal_forward.1} parent=1 // pred_fallthru
      _
    // Predicated region
    $region242: #{multimodal_forward.1} parent=1 // pred_check
      _
    $region243: #{multimodal_forward.1} parent=1 // pred_check_branch
      %578 = sbr.rel (0) target = $region245
    $region244: #{multimodal_forward.1} parent=1 // pred_region
      %579 = dma.done [#allocation26], 64
    $region245: #{multimodal_forward.1} parent=1 // pred_fallthru
      _
    // Predicated region
    $region246: #{multimodal_forward.1} parent=1 // pred_check
      _
    $region247: #{multimodal_forward.1} parent=1 // pred_check_branch
      %581 = sbr.rel (0) target = $region249
    $region248: #{multimodal_forward.1} parent=1 // pred_region
      %582 = dma.done [#allocation26], 4096
    $region249: #{multimodal_forward.1} parent=1 // pred_fallthru
      _
    // Predicated region
    $region250: #{multimodal_forward.1} parent=1 // pred_check
      _
    $region251: #{multimodal_forward.1} parent=1 // pred_check_branch
      %584 = sbr.rel (0) target = $region253
    $region252: #{multimodal_forward.1} parent=1 // pred_region
      %585 = dma.done [#allocation29], 32
    $region253: #{multimodal_forward.1} parent=1 // pred_fallthru
      _
    // Predicated region
    $region254: #{multimodal_forward.1} parent=1 // pred_check
      _
    $region255: #{multimodal_forward.1} parent=1 // pred_check_branch
      %587 = sbr.rel (0) target = $region257
    $region256: #{multimodal_forward.1} parent=1 // pred_region
      %588 = dma.done [#allocation29], 32
    $region257: #{multimodal_forward.1} parent=1 // pred_fallthru
      _
    // Predicated region
    $region258: #{multimodal_forward.1} parent=1 // pred_check
      _
    $region259: #{multimodal_forward.1} parent=1 // pred_check_branch
      %590 = sbr.rel (0) target = $region261
    $region260: #{multimodal_forward.1} parent=1 // pred_region
      %591 = dma.done [#allocation32], 1024
    $region261: #{multimodal_forward.1} parent=1 // pred_fallthru
      _
    // Predicated region
    $region262: #{multimodal_forward.1} parent=1 // pred_check
      _
    $region263: #{multimodal_forward.1} parent=1 // pred_check_branch
      %593 = sbr.rel (0) target = $region265
    $region264: #{multimodal_forward.1} parent=1 // pred_region
      %594 = dma.done [#allocation32], 16
    $region265: #{multimodal_forward.1} parent=1 // pred_fallthru
      _
    // Predicated region
    $region266: #{multimodal_forward.1} parent=1 // pred_check
      _
    $region267: #{multimodal_forward.1} parent=1 // pred_check_branch
      %596 = sbr.rel (0) target = $region269
    $region268: #{multimodal_forward.1} parent=1 // pred_region
      %597 = dma.done [#allocation35], 16
    $region269: #{multimodal_forward.1} parent=1 // pred_fallthru
      _
    // Predicated region
    $region270: #{multimodal_forward.1} parent=1 // pred_check
      _
    $region271: #{multimodal_forward.1} parent=1 // pred_check_branch
      %599 = sbr.rel (0) target = $region273
    $region272: #{multimodal_forward.1} parent=1 // pred_region
      %600 = dma.done [#allocation35], 512
    $region273: #{multimodal_forward.1} parent=1 // pred_fallthru
      _
    // Predicated region
    $region274: #{multimodal_forward.1} parent=1 // pred_check
      _
    $region275: #{multimodal_forward.1} parent=1 // pred_check_branch
      %602 = sbr.rel (0) target = $region277
    $region276: #{multimodal_forward.1} parent=1 // pred_region
      %603 = dma.done [#allocation38], 16
    $region277: #{multimodal_forward.1} parent=1 // pred_fallthru
      _
    // Predicated region
    $region278: #{multimodal_forward.1} parent=1 // pred_check
      _
    $region279: #{multimodal_forward.1} parent=1 // pred_check_branch
      %605 = sbr.rel (0) target = $region281
    $region280: #{multimodal_forward.1} parent=1 // pred_region
      %606 = dma.done [#allocation38], 16
    $region281: #{multimodal_forward.1} parent=1 // pred_fallthru
      _
    // Predicated region
    $region282: #{multimodal_forward.1} parent=1 // pred_check
      _
    $region283: #{multimodal_forward.1} parent=1 // pred_check_branch
      %608 = sbr.rel (0) target = $region285
    $region284: #{multimodal_forward.1} parent=1 // pred_region
      %609 = dma.done [#allocation41], 32768
    $region285: #{multimodal_forward.1} parent=1 // pred_fallthru
      _
    // Predicated region
    $region286: #{multimodal_forward.1} parent=1 // pred_check
      _
    $region287: #{multimodal_forward.1} parent=1 // pred_check_branch
      %611 = sbr.rel (0) target = $region289
    $region288: #{multimodal_forward.1} parent=1 // pred_region
      %612 = dma.done [#allocation41], 32768
    $region289: #{multimodal_forward.1} parent=1 // pred_fallthru
      _
    // Predicated region
    $region290: #{multimodal_forward.1} parent=1 // pred_check
      _
    $region291: #{multimodal_forward.1} parent=1 // pred_check_branch
      %614 = sbr.rel (0) target = $region293
    $region292: #{multimodal_forward.1} parent=1 // pred_region
      %615 = dma.done [#allocation44], 128
    $region293: #{multimodal_forward.1} parent=1 // pred_fallthru
      _
    // Predicated region
    $region294: #{multimodal_forward.1} parent=1 // pred_check
      _
    $region295: #{multimodal_forward.1} parent=1 // pred_check_branch
      %617 = sbr.rel (0) target = $region297
    $region296: #{multimodal_forward.1} parent=1 // pred_region
      %618 = dma.done [#allocation44], 128
    $region297: #{multimodal_forward.1} parent=1 // pred_fallthru
      _
    // Predicated region
    $region298: #{multimodal_forward.1} parent=1 // pred_check
      _
    $region299: #{multimodal_forward.1} parent=1 // pred_check_branch
      %620 = sbr.rel (0) target = $region301
    $region300: #{multimodal_forward.1} parent=1 // pred_region
      %621 = dma.done [#allocation47], 8192
    $region301: #{multimodal_forward.1} parent=1 // pred_fallthru
      _
    // Predicated region
    $region302: #{multimodal_forward.1} parent=1 // pred_check
      _
    $region303: #{multimodal_forward.1} parent=1 // pred_check_branch
      %623 = sbr.rel (0) target = $region305
    $region304: #{multimodal_forward.1} parent=1 // pred_region
      %624 = dma.done [#allocation47], 32
    $region305: #{multimodal_forward.1} parent=1 // pred_fallthru
      _
    // Predicated region
    $region306: #{multimodal_forward.1} parent=1 // pred_check
      _
    $region307: #{multimodal_forward.1} parent=1 // pred_check_branch
      %626 = sbr.rel (0) target = $region309
    $region308: #{multimodal_forward.1} parent=1 // pred_region
      %627 = dma.done [#allocation50], 32
    $region309: #{multimodal_forward.1} parent=1 // pred_fallthru
      _
    // Predicated region
    $region310: #{multimodal_forward.1} parent=1 // pred_check
      _
    $region311: #{multimodal_forward.1} parent=1 // pred_check_branch
      %629 = sbr.rel (0) target = $region313
    $region312: #{multimodal_forward.1} parent=1 // pred_region
      %630 = dma.done [#allocation50], 1024
    $region313: #{multimodal_forward.1} parent=1 // pred_fallthru
      _
    // Predicated region
    $region314: #{multimodal_forward.1} parent=1 // pred_check
      _
    $region315: #{multimodal_forward.1} parent=1 // pred_check_branch
      %632 = sbr.rel (0) target = $region317
    $region316: #{multimodal_forward.1} parent=1 // pred_region
      %633 = dma.done [#allocation53], 16
    $region317: #{multimodal_forward.1} parent=1 // pred_fallthru
      _
    // Predicated region
    $region318: #{multimodal_forward.1} parent=1 // pred_check
      _
    $region319: #{multimodal_forward.1} parent=1 // pred_check_branch
      %635 = sbr.rel (0) target = $region321
    $region320: #{multimodal_forward.1} parent=1 // pred_region
      %636 = dma.done [#allocation53], 16
    $region321: #{multimodal_forward.1} parent=1 // pred_fallthru
      _
    // Predicated region
    $region322: #{multimodal_forward.1} parent=1 // pred_check
      _
    $region323: #{multimodal_forward.1} parent=1 // pred_check_branch
      %638 = sbr.rel (0) target = $region325
    $region324: #{multimodal_forward.1} parent=1 // pred_region
      %639 = dma.done [#allocation56], 512
    $region325: #{multimodal_forward.1} parent=1 // pred_fallthru
      _
    // Predicated region
    $region326: #{multimodal_forward.1} parent=1 // pred_check
      _
    $region327: #{multimodal_forward.1} parent=1 // pred_check_branch
      %641 = sbr.rel (0) target = $region329
    $region328: #{multimodal_forward.1} parent=1 // pred_region
      %642 = dma.done [#allocation56], 16
    $region329: #{multimodal_forward.1} parent=1 // pred_fallthru
      _
    // Predicated region
    $region330: #{multimodal_forward.1} parent=1 // pred_check
      _
    $region331: #{multimodal_forward.1} parent=1 // pred_check_branch
      %644 = sbr.rel (0) target = $region333
    $region332: #{multimodal_forward.1} parent=1 // pred_region
      %645 = dma.done [#allocation59], 16
    $region333: #{multimodal_forward.1} parent=1 // pred_fallthru
      _
    %v647 = vld [vmem:[%s1] sm:$0xf]
    %v648 = vld [vmem:[%s1 + $0x4] sm:$0xf]
    %v649 = vld [vmem:[%s5] sm:$0xff]
    %v650 = vld [vmem:[%s5 + $0x8] sm:$0xff]
    %v651 = vld [vmem:[%s5 + $0x10] sm:$0xff]
    %v652 = vld [vmem:[%s5 + $0x18] sm:$0xff]
    %v653 = vld [vmem:[%s5 + $0x20] sm:$0xff]
    %v654 = vld [vmem:[%s5 + $0x28] sm:$0xff]
    %v655 = vld [vmem:[%s5 + $0x30] sm:$0xff]
    %v656 = vld [vmem:[%s5 + $0x38] sm:$0xff]
    %v657 = vunpack.c.l.s8.bf16 %v649
    %v658 = vunpack.c.l.s8.bf16 %v650
    %v659 = vunpack.c.l.s8.bf16 %v651
    %v660 = vunpack.c.l.s8.bf16 %v652
    %v661 = vunpack.c.l.s8.bf16 %v653
    %v662 = vunpack.c.l.s8.bf16 %v654
    %v663 = vunpack.c.l.s8.bf16 %v655
    %v664 = vunpack.c.l.s8.bf16 %v656
    %v665 = vunpack.c.h.s8.bf16 %v649
    %v666 = vunpack.c.h.s8.bf16 %v650
    %v667 = vunpack.c.h.s8.bf16 %v651
    %v668 = vunpack.c.h.s8.bf16 %v652
    %v669 = vunpack.c.h.s8.bf16 %v653
    %v670 = vunpack.c.h.s8.bf16 %v654
    %v671 = vunpack.c.h.s8.bf16 %v655
    %v672 = vunpack.c.h.s8.bf16 %v656
    %v675 = vunpack.c.l.b16 %v647
    %v676 = vunpack.c.l.b16 %v648
    %v677 = vpack.c.b16 %v676, %v675
    %vm678 = vcmask 261120
    %v680 = vsel %vm678, %v677, 0
    %682 = vmatprep.subr.bf16.mxu0 0
    %683 = vmatpush1.bf16.msra.mxu0 0
    %684 = vmatprep.subr.bf16.mxu0 0
    %685 = vmatpush1.bf16.msra.mxu0 0
    %686 = vmatprep.subr.bf16.mxu0 0
    %687 = vmatpush1.bf16.msra.mxu0 0
    %688 = vmatprep.subr.bf16.mxu0 0
    %689 = vmatpush1.bf16.msra.mxu0 0
    %690 = vmatprep.subr.bf16.mxu0 0
    %691 = vmatpush1.bf16.msra.mxu0 0
    %692 = vmatprep.subr.bf16.mxu0 0
    %693 = vmatpush1.bf16.msra.mxu0 0
    %694 = vmatprep.subr.bf16.mxu0 %v666
    %695 = vmatpush1.bf16.msra.mxu0 %v665
    %696 = vmatprep.subr.bf16.mxu0 %v658
    %697 = vmatpush1.bf16.msra.mxu0 %v657
    %698 = vmatprep.subr.bf16.mxu0 0
    %699 = vmatpush2.bf16.msra.mxu0 0
    %700 = vmatprep.subr.bf16.mxu0 0
    %701 = vmatpush2.bf16.msra.mxu0 0
    %702 = vmatprep.subr.bf16.mxu0 0
    %703 = vmatpush2.bf16.msra.mxu0 0
    %704 = vmatprep.subr.bf16.mxu0 0
    %705 = vmatpush2.bf16.msra.mxu0 0
    %706 = vmatprep.subr.bf16.mxu0 0
    %707 = vmatpush2.bf16.msra.mxu0 0
    %708 = vmatprep.subr.bf16.mxu0 0
    %709 = vmatpush2.bf16.msra.mxu0 0
    %710 = vmatprep.subr.bf16.mxu0 0
    %711 = vmatpush2.bf16.msra.mxu0 0
    %712 = vmatprep.subr.bf16.mxu0 0
    %713 = vmatpush2.bf16.msra.mxu0 0
    %714 = vmatprep.mubr.bf16.mxu0 0
    %715 = vmatmul.mubr.bf16.gmra.mxu0 %v680
    %v716 = vpop.f32.mrf.mxu0
    %v717 = vadd.f32 0.0, %v716
    %v718 = vpop.f32.mrf.mxu0
    %v719 = vadd.f32 0.0, %v718
    %v720 = vpop.f32.mrf.mxu0
    %v721 = vadd.f32 0.0, %v720
    %v722 = vpop.f32.mrf.mxu0
    %v723 = vadd.f32 0.0, %v722
    %724 = vdwg.mxu0
    %725 = vmatprep.subr.bf16.mxu0 0
    %726 = vmatpush1.bf16.msra.mxu0 0
    %727 = vmatprep.subr.bf16.mxu0 0
    %728 = vmatpush1.bf16.msra.mxu0 0
    %729 = vmatprep.subr.bf16.mxu0 0
    %730 = vmatpush1.bf16.msra.mxu0 0
    %731 = vmatprep.subr.bf16.mxu0 0
    %732 = vmatpush1.bf16.msra.mxu0 0
    %733 = vmatprep.subr.bf16.mxu0 0
    %734 = vmatpush1.bf16.msra.mxu0 0
    %735 = vmatprep.subr.bf16.mxu0 0
    %736 = vmatpush1.bf16.msra.mxu0 0
    %737 = vmatprep.subr.bf16.mxu0 %v668
    %738 = vmatpush1.bf16.msra.mxu0 %v667
    %739 = vmatprep.subr.bf16.mxu0 %v660
    %740 = vmatpush1.bf16.msra.mxu0 %v659
    %741 = vmatprep.subr.bf16.mxu0 0
    %742 = vmatpush2.bf16.msra.mxu0 0
    %743 = vmatprep.subr.bf16.mxu0 0
    %744 = vmatpush2.bf16.msra.mxu0 0
    %745 = vmatprep.subr.bf16.mxu0 0
    %746 = vmatpush2.bf16.msra.mxu0 0
    %747 = vmatprep.subr.bf16.mxu0 0
    %748 = vmatpush2.bf16.msra.mxu0 0
    %749 = vmatprep.subr.bf16.mxu0 0
    %750 = vmatpush2.bf16.msra.mxu0 0
    %751 = vmatprep.subr.bf16.mxu0 0
    %752 = vmatpush2.bf16.msra.mxu0 0
    %753 = vmatprep.subr.bf16.mxu0 0
    %754 = vmatpush2.bf16.msra.mxu0 0
    %755 = vmatprep.subr.bf16.mxu0 0
    %756 = vmatpush2.bf16.msra.mxu0 0
    %757 = vmatprep.mubr.bf16.mxu0 0
    %758 = vmatmul.mubr.bf16.gmra.mxu0 %v680
    %v759 = vpop.f32.mrf.mxu0
    %v760 = vadd.f32 0.0, %v759
    %v761 = vpop.f32.mrf.mxu0
    %v762 = vadd.f32 0.0, %v761
    %v763 = vpop.f32.mrf.mxu0
    %v764 = vadd.f32 0.0, %v763
    %v765 = vpop.f32.mrf.mxu0
    %v766 = vadd.f32 0.0, %v765
    %767 = vdwg.mxu0
    %768 = vmatprep.subr.bf16.mxu0 0
    %769 = vmatpush1.bf16.msra.mxu0 0
    %770 = vmatprep.subr.bf16.mxu0 0
    %771 = vmatpush1.bf16.msra.mxu0 0
    %772 = vmatprep.subr.bf16.mxu0 0
    %773 = vmatpush1.bf16.msra.mxu0 0
    %774 = vmatprep.subr.bf16.mxu0 0
    %775 = vmatpush1.bf16.msra.mxu0 0
    %776 = vmatprep.subr.bf16.mxu0 0
    %777 = vmatpush1.bf16.msra.mxu0 0
    %778 = vmatprep.subr.bf16.mxu0 0
    %779 = vmatpush1.bf16.msra.mxu0 0
    %780 = vmatprep.subr.bf16.mxu0 %v670
    %781 = vmatpush1.bf16.msra.mxu0 %v669
    %782 = vmatprep.subr.bf16.mxu0 %v662
    %783 = vmatpush1.bf16.msra.mxu0 %v661
    %784 = vmatprep.subr.bf16.mxu0 0
    %785 = vmatpush2.bf16.msra.mxu0 0
    %786 = vmatprep.subr.bf16.mxu0 0
    %787 = vmatpush2.bf16.msra.mxu0 0
    %788 = vmatprep.subr.bf16.mxu0 0
    %789 = vmatpush2.bf16.msra.mxu0 0
    %790 = vmatprep.subr.bf16.mxu0 0
    %791 = vmatpush2.bf16.msra.mxu0 0
    %792 = vmatprep.subr.bf16.mxu0 0
    %793 = vmatpush2.bf16.msra.mxu0 0
    %794 = vmatprep.subr.bf16.mxu0 0
    %795 = vmatpush2.bf16.msra.mxu0 0
    %796 = vmatprep.subr.bf16.mxu0 0
    %797 = vmatpush2.bf16.msra.mxu0 0
    %798 = vmatprep.subr.bf16.mxu0 0
    %799 = vmatpush2.bf16.msra.mxu0 0
    %800 = vmatprep.mubr.bf16.mxu0 0
    %801 = vmatmul.mubr.bf16.gmra.mxu0 %v680
    %v802 = vpop.f32.mrf.mxu0
    %v803 = vadd.f32 0.0, %v802
    %v804 = vpop.f32.mrf.mxu0
    %v805 = vadd.f32 0.0, %v804
    %v806 = vpop.f32.mrf.mxu0
    %v807 = vadd.f32 0.0, %v806
    %v808 = vpop.f32.mrf.mxu0
    %v809 = vadd.f32 0.0, %v808
    %810 = vdwg.mxu0
    %811 = vmatprep.subr.bf16.mxu0 0
    %812 = vmatpush1.bf16.msra.mxu0 0
    %813 = vmatprep.subr.bf16.mxu0 0
    %814 = vmatpush1.bf16.msra.mxu0 0
    %815 = vmatprep.subr.bf16.mxu0 0
    %816 = vmatpush1.bf16.msra.mxu0 0
    %817 = vmatprep.subr.bf16.mxu0 0
    %818 = vmatpush1.bf16.msra.mxu0 0
    %819 = vmatprep.subr.bf16.mxu0 0
    %820 = vmatpush1.bf16.msra.mxu0 0
    %821 = vmatprep.subr.bf16.mxu0 0
    %822 = vmatpush1.bf16.msra.mxu0 0
    %823 = vmatprep.subr.bf16.mxu0 %v672
    %824 = vmatpush1.bf16.msra.mxu0 %v671
    %825 = vmatprep.subr.bf16.mxu0 %v664
    %826 = vmatpush1.bf16.msra.mxu0 %v663
    %827 = vmatprep.subr.bf16.mxu0 0
    %828 = vmatpush2.bf16.msra.mxu0 0
    %829 = vmatprep.subr.bf16.mxu0 0
    %830 = vmatpush2.bf16.msra.mxu0 0
    %831 = vmatprep.subr.bf16.mxu0 0
    %832 = vmatpush2.bf16.msra.mxu0 0
    %833 = vmatprep.subr.bf16.mxu0 0
    %834 = vmatpush2.bf16.msra.mxu0 0
    %835 = vmatprep.subr.bf16.mxu0 0
    %836 = vmatpush2.bf16.msra.mxu0 0
    %837 = vmatprep.subr.bf16.mxu0 0
    %838 = vmatpush2.bf16.msra.mxu0 0
    %839 = vmatprep.subr.bf16.mxu0 0
    %840 = vmatpush2.bf16.msra.mxu0 0
    %841 = vmatprep.subr.bf16.mxu0 0
    %842 = vmatpush2.bf16.msra.mxu0 0
    %843 = vmatprep.mubr.bf16.mxu0 0
    %844 = vmatmul.mubr.bf16.gmra.mxu0 %v680
    %v845 = vpop.f32.mrf.mxu0
    %v846 = vadd.f32 0.0, %v845
    %v847 = vpop.f32.mrf.mxu0
    %v848 = vadd.f32 0.0, %v847
    %v849 = vpop.f32.mrf.mxu0
    %v850 = vadd.f32 0.0, %v849
    %v851 = vpop.f32.mrf.mxu0
    %v852 = vadd.f32 0.0, %v851
    %853 = vdwg.mxu0
    %v854 = vld [vmem:[%s7] sm:$0xff]
    %v856 = vlaneseq
    %v857 = vshrl.u32 %v856, 7
    %v858 = vsub.s32 0, %v857
    %v859 = vrot.slane %v854, %v858
    %v860 = vlaneseq
    %v861 = vshrl.u32 %v860, 7
    %v862 = vsub.s32 1, %v861
    %v863 = vrot.slane %v854, %v862
    %v864 = vlaneseq
    %v865 = vshrl.u32 %v864, 7
    %v866 = vsub.s32 2, %v865
    %v867 = vrot.slane %v854, %v866
    %v868 = vlaneseq
    %v869 = vshrl.u32 %v868, 7
    %v870 = vsub.s32 3, %v869
    %v871 = vrot.slane %v854, %v870
    %v872 = vlaneseq
    %v873 = vshrl.u32 %v872, 7
    %v874 = vsub.s32 4, %v873
    %v875 = vrot.slane %v854, %v874
    %v876 = vlaneseq
    %v877 = vshrl.u32 %v876, 7
    %v878 = vsub.s32 5, %v877
    %v879 = vrot.slane %v854, %v878
    %v880 = vlaneseq
    %v881 = vshrl.u32 %v880, 7
    %v882 = vsub.s32 6, %v881
    %v883 = vrot.slane %v854, %v882
    %v884 = vlaneseq
    %v885 = vshrl.u32 %v884, 7
    %v886 = vsub.s32 7, %v885
    %v887 = vrot.slane %v854, %v886
    %v896 = vmul.f32 %v717, %v859
    %v897 = vmul.f32 %v719, %v863
    %v898 = vmul.f32 %v760, %v867
    %v899 = vmul.f32 %v762, %v871
    %v900 = vmul.f32 %v803, %v875
    %v901 = vmul.f32 %v805, %v879
    %v902 = vmul.f32 %v846, %v883
    %v903 = vmul.f32 %v848, %v887
    %v904 = vmul.f32 %v721, %v859
    %v905 = vmul.f32 %v723, %v863
    %v906 = vmul.f32 %v764, %v867
    %v907 = vmul.f32 %v766, %v871
    %v908 = vmul.f32 %v807, %v875
    %v909 = vmul.f32 %v809, %v879
    %v910 = vmul.f32 %v850, %v883
    %v911 = vmul.f32 %v852, %v887
    %v912 = vld [vmem:[#allocation2] sm:$0xff]
    %v914 = vlaneseq
    %v915 = vshrl.u32 %v914, 7
    %v916 = vsub.s32 0, %v915
    %v917 = vrot.slane %v912, %v916
    %v918 = vlaneseq
    %v919 = vshrl.u32 %v918, 7
    %v920 = vsub.s32 1, %v919
    %v921 = vrot.slane %v912, %v920
    %v922 = vlaneseq
    %v923 = vshrl.u32 %v922, 7
    %v924 = vsub.s32 2, %v923
    %v925 = vrot.slane %v912, %v924
    %v926 = vlaneseq
    %v927 = vshrl.u32 %v926, 7
    %v928 = vsub.s32 3, %v927
    %v929 = vrot.slane %v912, %v928
    %v930 = vlaneseq
    %v931 = vshrl.u32 %v930, 7
    %v932 = vsub.s32 4, %v931
    %v933 = vrot.slane %v912, %v932
    %v934 = vlaneseq
    %v935 = vshrl.u32 %v934, 7
    %v936 = vsub.s32 5, %v935
    %v937 = vrot.slane %v912, %v936
    %v938 = vlaneseq
    %v939 = vshrl.u32 %v938, 7
    %v940 = vsub.s32 6, %v939
    %v941 = vrot.slane %v912, %v940
    %v942 = vlaneseq
    %v943 = vshrl.u32 %v942, 7
    %v944 = vsub.s32 7, %v943
    %v945 = vrot.slane %v912, %v944
    %v954 = vadd.f32 %v896, %v917
    %v955 = vadd.f32 %v897, %v921
    %v956 = vadd.f32 %v898, %v925
    %v957 = vadd.f32 %v899, %v929
    %v958 = vadd.f32 %v900, %v933
    %v959 = vadd.f32 %v901, %v937
    %v960 = vadd.f32 %v902, %v941
    %v961 = vadd.f32 %v903, %v945
    %v962 = vadd.f32 %v904, %v917
    %v963 = vadd.f32 %v905, %v921
    %v964 = vadd.f32 %v906, %v925
    %v965 = vadd.f32 %v907, %v929
    %v966 = vadd.f32 %v908, %v933
    %v967 = vadd.f32 %v909, %v937
    %v968 = vadd.f32 %v910, %v941
    %v969 = vadd.f32 %v911, %v945
    %v970 = vpack.c.bf16 %v962, %v954
    %v971 = vpack.c.bf16 %v963, %v955
    %v972 = vpack.c.bf16 %v964, %v956
    %v973 = vpack.c.bf16 %v965, %v957
    %v974 = vpack.c.bf16 %v966, %v958
    %v975 = vpack.c.bf16 %v967, %v959
    %v976 = vpack.c.bf16 %v968, %v960
    %v977 = vpack.c.bf16 %v969, %v961
    %v978 = vld [vmem:[%s3] sm:$0xff]
    %v979 = vld [vmem:[%s3 + $0x8] sm:$0xff]
    %v980 = vld [vmem:[%s3 + $0x10] sm:$0xff]
    %v981 = vld [vmem:[%s3 + $0x18] sm:$0xff]
    %v982 = vld [vmem:[%s3 + $0x20] sm:$0xff]
    %v983 = vld [vmem:[%s3 + $0x28] sm:$0xff]
    %v984 = vld [vmem:[%s3 + $0x30] sm:$0xff]
    %v985 = vld [vmem:[%s3 + $0x38] sm:$0xff]
    %v986 = vld [vmem:[#allocation4] sm:$0xff]
    %v987 = vld [vmem:[#allocation4 + $0x8] sm:$0xff]
    %v988 = vld [vmem:[#allocation4 + $0x10] sm:$0xff]
    %v989 = vld [vmem:[#allocation4 + $0x18] sm:$0xff]
    %v990 = vld [vmem:[#allocation4 + $0x20] sm:$0xff]
    %v991 = vld [vmem:[#allocation4 + $0x28] sm:$0xff]
    %v992 = vld [vmem:[#allocation4 + $0x30] sm:$0xff]
    %v993 = vld [vmem:[#allocation4 + $0x38] sm:$0xff]
    %v994 = vld [vmem:[#allocation4 + $0x40] sm:$0xff]
    %v995 = vld [vmem:[#allocation4 + $0x48] sm:$0xff]
    %v996 = vld [vmem:[#allocation4 + $0x50] sm:$0xff]
    %v997 = vld [vmem:[#allocation4 + $0x58] sm:$0xff]
    %v998 = vld [vmem:[#allocation4 + $0x60] sm:$0xff]
    %v999 = vld [vmem:[#allocation4 + $0x68] sm:$0xff]
    %v1000 = vld [vmem:[#allocation4 + $0x70] sm:$0xff]
    %v1001 = vld [vmem:[#allocation4 + $0x78] sm:$0xff]
    %v1002 = vld [vmem:[#allocation4 + $0x80] sm:$0xff]
    %v1003 = vld [vmem:[#allocation4 + $0x88] sm:$0xff]
    %v1004 = vld [vmem:[#allocation4 + $0x90] sm:$0xff]
    %v1005 = vld [vmem:[#allocation4 + $0x98] sm:$0xff]
    %v1006 = vld [vmem:[#allocation4 + $0xa0] sm:$0xff]
    %v1007 = vld [vmem:[#allocation4 + $0xa8] sm:$0xff]
    %v1008 = vld [vmem:[#allocation4 + $0xb0] sm:$0xff]
    %v1009 = vld [vmem:[#allocation4 + $0xb8] sm:$0xff]
    %v1010 = vld [vmem:[#allocation4 + $0xc0] sm:$0xff]
    %v1011 = vld [vmem:[#allocation4 + $0xc8] sm:$0xff]
    %v1012 = vld [vmem:[#allocation4 + $0xd0] sm:$0xff]
    %v1013 = vld [vmem:[#allocation4 + $0xd8] sm:$0xff]
    %v1014 = vld [vmem:[#allocation4 + $0xe0] sm:$0xff]
    %v1015 = vld [vmem:[#allocation4 + $0xe8] sm:$0xff]
    %v1016 = vld [vmem:[#allocation4 + $0xf0] sm:$0xff]
    %v1017 = vld [vmem:[#allocation4 + $0xf8] sm:$0xff]
    %v1018 = vld [vmem:[#allocation4 + $0x100] sm:$0xff]
    %v1019 = vld [vmem:[#allocation4 + $0x108] sm:$0xff]
    %v1020 = vld [vmem:[#allocation4 + $0x110] sm:$0xff]
    %v1021 = vld [vmem:[#allocation4 + $0x118] sm:$0xff]
    %v1022 = vld [vmem:[#allocation4 + $0x120] sm:$0xff]
    %v1023 = vld [vmem:[#allocation4 + $0x128] sm:$0xff]
    %v1024 = vld [vmem:[#allocation4 + $0x130] sm:$0xff]
    %v1025 = vld [vmem:[#allocation4 + $0x138] sm:$0xff]
    %v1026 = vld [vmem:[#allocation4 + $0x140] sm:$0xff]
    %v1027 = vld [vmem:[#allocation4 + $0x148] sm:$0xff]
    %v1028 = vld [vmem:[#allocation4 + $0x150] sm:$0xff]
    %v1029 = vld [vmem:[#allocation4 + $0x158] sm:$0xff]
    %v1030 = vld [vmem:[#allocation4 + $0x160] sm:$0xff]
    %v1031 = vld [vmem:[#allocation4 + $0x168] sm:$0xff]
    %v1032 = vld [vmem:[#allocation4 + $0x170] sm:$0xff]
    %v1033 = vld [vmem:[#allocation4 + $0x178] sm:$0xff]
    %v1034 = vld [vmem:[#allocation4 + $0x180] sm:$0xff]
    %v1035 = vld [vmem:[#allocation4 + $0x188] sm:$0xff]
    %v1036 = vld [vmem:[#allocation4 + $0x190] sm:$0xff]
    %v1037 = vld [vmem:[#allocation4 + $0x198] sm:$0xff]
    %v1038 = vld [vmem:[#allocation4 + $0x1a0] sm:$0xff]
    %v1039 = vld [vmem:[#allocation4 + $0x1a8] sm:$0xff]
    %v1040 = vld [vmem:[#allocation4 + $0x1b0] sm:$0xff]
    %v1041 = vld [vmem:[#allocation4 + $0x1b8] sm:$0xff]
    %v1042 = vld [vmem:[#allocation4 + $0x1c0] sm:$0xff]
    %v1043 = vld [vmem:[#allocation4 + $0x1c8] sm:$0xff]
    %v1044 = vld [vmem:[#allocation4 + $0x1d0] sm:$0xff]
    %v1045 = vld [vmem:[#allocation4 + $0x1d8] sm:$0xff]
    %v1046 = vld [vmem:[#allocation4 + $0x1e0] sm:$0xff]
    %v1047 = vld [vmem:[#allocation4 + $0x1e8] sm:$0xff]
    %v1048 = vld [vmem:[#allocation4 + $0x1f0] sm:$0xff]
    %v1049 = vld [vmem:[#allocation4 + $0x1f8] sm:$0xff]
    %v1050 = vld [vmem:[#allocation4 + $0x200] sm:$0xff]
    %v1051 = vld [vmem:[#allocation4 + $0x208] sm:$0xff]
    %v1052 = vld [vmem:[#allocation4 + $0x210] sm:$0xff]
    %v1053 = vld [vmem:[#allocation4 + $0x218] sm:$0xff]
    %v1054 = vld [vmem:[#allocation4 + $0x220] sm:$0xff]
    %v1055 = vld [vmem:[#allocation4 + $0x228] sm:$0xff]
    %v1056 = vld [vmem:[#allocation4 + $0x230] sm:$0xff]
    %v1057 = vld [vmem:[#allocation4 + $0x238] sm:$0xff]
    %v1058 = vld [vmem:[#allocation4 + $0x240] sm:$0xff]
    %v1059 = vld [vmem:[#allocation4 + $0x248] sm:$0xff]
    %v1060 = vld [vmem:[#allocation4 + $0x250] sm:$0xff]
    %v1061 = vld [vmem:[#allocation4 + $0x258] sm:$0xff]
    %v1062 = vld [vmem:[#allocation4 + $0x260] sm:$0xff]
    %v1063 = vld [vmem:[#allocation4 + $0x268] sm:$0xff]
    %v1064 = vld [vmem:[#allocation4 + $0x270] sm:$0xff]
    %v1065 = vld [vmem:[#allocation4 + $0x278] sm:$0xff]
    %v1066 = vld [vmem:[#allocation4 + $0x280] sm:$0xff]
    %v1067 = vld [vmem:[#allocation4 + $0x288] sm:$0xff]
    %v1068 = vld [vmem:[#allocation4 + $0x290] sm:$0xff]
    %v1069 = vld [vmem:[#allocation4 + $0x298] sm:$0xff]
    %v1070 = vld [vmem:[#allocation4 + $0x2a0] sm:$0xff]
    %v1071 = vld [vmem:[#allocation4 + $0x2a8] sm:$0xff]
    %v1072 = vld [vmem:[#allocation4 + $0x2b0] sm:$0xff]
    %v1073 = vld [vmem:[#allocation4 + $0x2b8] sm:$0xff]
    %v1074 = vld [vmem:[#allocation4 + $0x2c0] sm:$0xff]
    %v1075 = vld [vmem:[#allocation4 + $0x2c8] sm:$0xff]
    %v1076 = vld [vmem:[#allocation4 + $0x2d0] sm:$0xff]
    %v1077 = vld [vmem:[#allocation4 + $0x2d8] sm:$0xff]
    %v1078 = vld [vmem:[#allocation4 + $0x2e0] sm:$0xff]
    %v1079 = vld [vmem:[#allocation4 + $0x2e8] sm:$0xff]
    %v1080 = vld [vmem:[#allocation4 + $0x2f0] sm:$0xff]
    %v1081 = vld [vmem:[#allocation4 + $0x2f8] sm:$0xff]
    %v1082 = vld [vmem:[#allocation4 + $0x300] sm:$0xff]
    %v1083 = vld [vmem:[#allocation4 + $0x308] sm:$0xff]
    %v1084 = vld [vmem:[#allocation4 + $0x310] sm:$0xff]
    %v1085 = vld [vmem:[#allocation4 + $0x318] sm:$0xff]
    %v1086 = vld [vmem:[#allocation4 + $0x320] sm:$0xff]
    %v1087 = vld [vmem:[#allocation4 + $0x328] sm:$0xff]
    %v1088 = vld [vmem:[#allocation4 + $0x330] sm:$0xff]
    %v1089 = vld [vmem:[#allocation4 + $0x338] sm:$0xff]
    %v1090 = vld [vmem:[#allocation4 + $0x340] sm:$0xff]
    %v1091 = vld [vmem:[#allocation4 + $0x348] sm:$0xff]
    %v1092 = vld [vmem:[#allocation4 + $0x350] sm:$0xff]
    %v1093 = vld [vmem:[#allocation4 + $0x358] sm:$0xff]
    %v1094 = vld [vmem:[#allocation4 + $0x360] sm:$0xff]
    %v1095 = vld [vmem:[#allocation4 + $0x368] sm:$0xff]
    %v1096 = vld [vmem:[#allocation4 + $0x370] sm:$0xff]
    %v1097 = vld [vmem:[#allocation4 + $0x378] sm:$0xff]
    %v1098 = vld [vmem:[#allocation4 + $0x380] sm:$0xff]
    %v1099 = vld [vmem:[#allocation4 + $0x388] sm:$0xff]
    %v1100 = vld [vmem:[#allocation4 + $0x390] sm:$0xff]
    %v1101 = vld [vmem:[#allocation4 + $0x398] sm:$0xff]
    %v1102 = vld [vmem:[#allocation4 + $0x3a0] sm:$0xff]
    %v1103 = vld [vmem:[#allocation4 + $0x3a8] sm:$0xff]
    %v1104 = vld [vmem:[#allocation4 + $0x3b0] sm:$0xff]
    %v1105 = vld [vmem:[#allocation4 + $0x3b8] sm:$0xff]
    %v1106 = vld [vmem:[#allocation4 + $0x3c0] sm:$0xff]
    %v1107 = vld [vmem:[#allocation4 + $0x3c8] sm:$0xff]
    %v1108 = vld [vmem:[#allocation4 + $0x3d0] sm:$0xff]
    %v1109 = vld [vmem:[#allocation4 + $0x3d8] sm:$0xff]
    %v1110 = vld [vmem:[#allocation4 + $0x3e0] sm:$0xff]
    %v1111 = vld [vmem:[#allocation4 + $0x3e8] sm:$0xff]
    %v1112 = vld [vmem:[#allocation4 + $0x3f0] sm:$0xff]
    %v1113 = vld [vmem:[#allocation4 + $0x3f8] sm:$0xff]
    %v1114 = vld [vmem:[#allocation4 + $0x400] sm:$0xff]
    %v1115 = vld [vmem:[#allocation4 + $0x408] sm:$0xff]
    %v1116 = vld [vmem:[#allocation4 + $0x410] sm:$0xff]
    %v1117 = vld [vmem:[#allocation4 + $0x418] sm:$0xff]
    %v1118 = vld [vmem:[#allocation4 + $0x420] sm:$0xff]
    %v1119 = vld [vmem:[#allocation4 + $0x428] sm:$0xff]
    %v1120 = vld [vmem:[#allocation4 + $0x430] sm:$0xff]
    %v1121 = vld [vmem:[#allocation4 + $0x438] sm:$0xff]
    %v1122 = vld [vmem:[#allocation4 + $0x440] sm:$0xff]
    %v1123 = vld [vmem:[#allocation4 + $0x448] sm:$0xff]
    %v1124 = vld [vmem:[#allocation4 + $0x450] sm:$0xff]
    %v1125 = vld [vmem:[#allocation4 + $0x458] sm:$0xff]
    %v1126 = vld [vmem:[#allocation4 + $0x460] sm:$0xff]
    %v1127 = vld [vmem:[#allocation4 + $0x468] sm:$0xff]
    %v1128 = vld [vmem:[#allocation4 + $0x470] sm:$0xff]
    %v1129 = vld [vmem:[#allocation4 + $0x478] sm:$0xff]
    %v1130 = vld [vmem:[#allocation4 + $0x480] sm:$0xff]
    %v1131 = vld [vmem:[#allocation4 + $0x488] sm:$0xff]
    %v1132 = vld [vmem:[#allocation4 + $0x490] sm:$0xff]
    %v1133 = vld [vmem:[#allocation4 + $0x498] sm:$0xff]
    %v1134 = vld [vmem:[#allocation4 + $0x4a0] sm:$0xff]
    %v1135 = vld [vmem:[#allocation4 + $0x4a8] sm:$0xff]
    %v1136 = vld [vmem:[#allocation4 + $0x4b0] sm:$0xff]
    %v1137 = vld [vmem:[#allocation4 + $0x4b8] sm:$0xff]
    %v1138 = vld [vmem:[#allocation4 + $0x4c0] sm:$0xff]
    %v1139 = vld [vmem:[#allocation4 + $0x4c8] sm:$0xff]
    %v1140 = vld [vmem:[#allocation4 + $0x4d0] sm:$0xff]
    %v1141 = vld [vmem:[#allocation4 + $0x4d8] sm:$0xff]
    %v1142 = vld [vmem:[#allocation4 + $0x4e0] sm:$0xff]
    %v1143 = vld [vmem:[#allocation4 + $0x4e8] sm:$0xff]
    %v1144 = vld [vmem:[#allocation4 + $0x4f0] sm:$0xff]
    %v1145 = vld [vmem:[#allocation4 + $0x4f8] sm:$0xff]
    %v1146 = vld [vmem:[#allocation4 + $0x500] sm:$0xff]
    %v1147 = vld [vmem:[#allocation4 + $0x508] sm:$0xff]
    %v1148 = vld [vmem:[#allocation4 + $0x510] sm:$0xff]
    %v1149 = vld [vmem:[#allocation4 + $0x518] sm:$0xff]
    %v1150 = vld [vmem:[#allocation4 + $0x520] sm:$0xff]
    %v1151 = vld [vmem:[#allocation4 + $0x528] sm:$0xff]
    %v1152 = vld [vmem:[#allocation4 + $0x530] sm:$0xff]
    %v1153 = vld [vmem:[#allocation4 + $0x538] sm:$0xff]
    %v1154 = vld [vmem:[#allocation4 + $0x540] sm:$0xff]
    %v1155 = vld [vmem:[#allocation4 + $0x548] sm:$0xff]
    %v1156 = vld [vmem:[#allocation4 + $0x550] sm:$0xff]
    %v1157 = vld [vmem:[#allocation4 + $0x558] sm:$0xff]
    %v1158 = vld [vmem:[#allocation4 + $0x560] sm:$0xff]
    %v1159 = vld [vmem:[#allocation4 + $0x568] sm:$0xff]
    %v1160 = vld [vmem:[#allocation4 + $0x570] sm:$0xff]
    %v1161 = vld [vmem:[#allocation4 + $0x578] sm:$0xff]
    %v1162 = vld [vmem:[#allocation4 + $0x580] sm:$0xff]
    %v1163 = vld [vmem:[#allocation4 + $0x588] sm:$0xff]
    %v1164 = vld [vmem:[#allocation4 + $0x590] sm:$0xff]
    %v1165 = vld [vmem:[#allocation4 + $0x598] sm:$0xff]
    %v1166 = vld [vmem:[#allocation4 + $0x5a0] sm:$0xff]
    %v1167 = vld [vmem:[#allocation4 + $0x5a8] sm:$0xff]
    %v1168 = vld [vmem:[#allocation4 + $0x5b0] sm:$0xff]
    %v1169 = vld [vmem:[#allocation4 + $0x5b8] sm:$0xff]
    %v1170 = vld [vmem:[#allocation4 + $0x5c0] sm:$0xff]
    %v1171 = vld [vmem:[#allocation4 + $0x5c8] sm:$0xff]
    %v1172 = vld [vmem:[#allocation4 + $0x5d0] sm:$0xff]
    %v1173 = vld [vmem:[#allocation4 + $0x5d8] sm:$0xff]
    %v1174 = vld [vmem:[#allocation4 + $0x5e0] sm:$0xff]
    %v1175 = vld [vmem:[#allocation4 + $0x5e8] sm:$0xff]
    %v1176 = vld [vmem:[#allocation4 + $0x5f0] sm:$0xff]
    %v1177 = vld [vmem:[#allocation4 + $0x5f8] sm:$0xff]
    %v1178 = vld [vmem:[#allocation4 + $0x600] sm:$0xff]
    %v1179 = vld [vmem:[#allocation4 + $0x608] sm:$0xff]
    %v1180 = vld [vmem:[#allocation4 + $0x610] sm:$0xff]
    %v1181 = vld [vmem:[#allocation4 + $0x618] sm:$0xff]
    %v1182 = vld [vmem:[#allocation4 + $0x620] sm:$0xff]
    %v1183 = vld [vmem:[#allocation4 + $0x628] sm:$0xff]
    %v1184 = vld [vmem:[#allocation4 + $0x630] sm:$0xff]
    %v1185 = vld [vmem:[#allocation4 + $0x638] sm:$0xff]
    %v1186 = vld [vmem:[#allocation4 + $0x640] sm:$0xff]
    %v1187 = vld [vmem:[#allocation4 + $0x648] sm:$0xff]
    %v1188 = vld [vmem:[#allocation4 + $0x650] sm:$0xff]
    %v1189 = vld [vmem:[#allocation4 + $0x658] sm:$0xff]
    %v1190 = vld [vmem:[#allocation4 + $0x660] sm:$0xff]
    %v1191 = vld [vmem:[#allocation4 + $0x668] sm:$0xff]
    %v1192 = vld [vmem:[#allocation4 + $0x670] sm:$0xff]
    %v1193 = vld [vmem:[#allocation4 + $0x678] sm:$0xff]
    %v1194 = vld [vmem:[#allocation4 + $0x680] sm:$0xff]
    %v1195 = vld [vmem:[#allocation4 + $0x688] sm:$0xff]
    %v1196 = vld [vmem:[#allocation4 + $0x690] sm:$0xff]
    %v1197 = vld [vmem:[#allocation4 + $0x698] sm:$0xff]
    %v1198 = vld [vmem:[#allocation4 + $0x6a0] sm:$0xff]
    %v1199 = vld [vmem:[#allocation4 + $0x6a8] sm:$0xff]
    %v1200 = vld [vmem:[#allocation4 + $0x6b0] sm:$0xff]
    %v1201 = vld [vmem:[#allocation4 + $0x6b8] sm:$0xff]
    %v1202 = vld [vmem:[#allocation4 + $0x6c0] sm:$0xff]
    %v1203 = vld [vmem:[#allocation4 + $0x6c8] sm:$0xff]
    %v1204 = vld [vmem:[#allocation4 + $0x6d0] sm:$0xff]
    %v1205 = vld [vmem:[#allocation4 + $0x6d8] sm:$0xff]
    %v1206 = vld [vmem:[#allocation4 + $0x6e0] sm:$0xff]
    %v1207 = vld [vmem:[#allocation4 + $0x6e8] sm:$0xff]
    %v1208 = vld [vmem:[#allocation4 + $0x6f0] sm:$0xff]
    %v1209 = vld [vmem:[#allocation4 + $0x6f8] sm:$0xff]
    %v1210 = vld [vmem:[#allocation4 + $0x700] sm:$0xff]
    %v1211 = vld [vmem:[#allocation4 + $0x708] sm:$0xff]
    %v1212 = vld [vmem:[#allocation4 + $0x710] sm:$0xff]
    %v1213 = vld [vmem:[#allocation4 + $0x718] sm:$0xff]
    %v1214 = vld [vmem:[#allocation4 + $0x720] sm:$0xff]
    %v1215 = vld [vmem:[#allocation4 + $0x728] sm:$0xff]
    %v1216 = vld [vmem:[#allocation4 + $0x730] sm:$0xff]
    %v1217 = vld [vmem:[#allocation4 + $0x738] sm:$0xff]
    %v1218 = vld [vmem:[#allocation4 + $0x740] sm:$0xff]
    %v1219 = vld [vmem:[#allocation4 + $0x748] sm:$0xff]
    %v1220 = vld [vmem:[#allocation4 + $0x750] sm:$0xff]
    %v1221 = vld [vmem:[#allocation4 + $0x758] sm:$0xff]
    %v1222 = vld [vmem:[#allocation4 + $0x760] sm:$0xff]
    %v1223 = vld [vmem:[#allocation4 + $0x768] sm:$0xff]
    %v1224 = vld [vmem:[#allocation4 + $0x770] sm:$0xff]
    %v1225 = vld [vmem:[#allocation4 + $0x778] sm:$0xff]
    %v1226 = vld [vmem:[#allocation4 + $0x780] sm:$0xff]
    %v1227 = vld [vmem:[#allocation4 + $0x788] sm:$0xff]
    %v1228 = vld [vmem:[#allocation4 + $0x790] sm:$0xff]
    %v1229 = vld [vmem:[#allocation4 + $0x798] sm:$0xff]
    %v1230 = vld [vmem:[#allocation4 + $0x7a0] sm:$0xff]
    %v1231 = vld [vmem:[#allocation4 + $0x7a8] sm:$0xff]
    %v1232 = vld [vmem:[#allocation4 + $0x7b0] sm:$0xff]
    %v1233 = vld [vmem:[#allocation4 + $0x7b8] sm:$0xff]
    %v1234 = vld [vmem:[#allocation4 + $0x7c0] sm:$0xff]
    %v1235 = vld [vmem:[#allocation4 + $0x7c8] sm:$0xff]
    %v1236 = vld [vmem:[#allocation4 + $0x7d0] sm:$0xff]
    %v1237 = vld [vmem:[#allocation4 + $0x7d8] sm:$0xff]
    %v1238 = vld [vmem:[#allocation4 + $0x7e0] sm:$0xff]
    %v1239 = vld [vmem:[#allocation4 + $0x7e8] sm:$0xff]
    %v1240 = vld [vmem:[#allocation4 + $0x7f0] sm:$0xff]
    %v1241 = vld [vmem:[#allocation4 + $0x7f8] sm:$0xff]
    %v1242 = vunpack.c.l.s8.bf16 %v986
    %v1243 = vunpack.c.l.s8.bf16 %v987
    %v1244 = vunpack.c.l.s8.bf16 %v988
    %v1245 = vunpack.c.l.s8.bf16 %v989
    %v1246 = vunpack.c.l.s8.bf16 %v990
    %v1247 = vunpack.c.l.s8.bf16 %v991
    %v1248 = vunpack.c.l.s8.bf16 %v992
    %v1249 = vunpack.c.l.s8.bf16 %v993
    %v1250 = vunpack.c.h.s8.bf16 %v986
    %v1251 = vunpack.c.h.s8.bf16 %v987
    %v1252 = vunpack.c.h.s8.bf16 %v988
    %v1253 = vunpack.c.h.s8.bf16 %v989
    %v1254 = vunpack.c.h.s8.bf16 %v990
    %v1255 = vunpack.c.h.s8.bf16 %v991
    %v1256 = vunpack.c.h.s8.bf16 %v992
    %v1257 = vunpack.c.h.s8.bf16 %v993
    %v1258 = vunpack.c.l.s8.bf16 %v994
    %v1259 = vunpack.c.l.s8.bf16 %v995
    %v1260 = vunpack.c.l.s8.bf16 %v996
    %v1261 = vunpack.c.l.s8.bf16 %v997
    %v1262 = vunpack.c.l.s8.bf16 %v998
    %v1263 = vunpack.c.l.s8.bf16 %v999
    %v1264 = vunpack.c.l.s8.bf16 %v1000
    %v1265 = vunpack.c.l.s8.bf16 %v1001
    %v1266 = vunpack.c.h.s8.bf16 %v994
    %v1267 = vunpack.c.h.s8.bf16 %v995
    %v1268 = vunpack.c.h.s8.bf16 %v996
    %v1269 = vunpack.c.h.s8.bf16 %v997
    %v1270 = vunpack.c.h.s8.bf16 %v998
    %v1271 = vunpack.c.h.s8.bf16 %v999
    %v1272 = vunpack.c.h.s8.bf16 %v1000
    %v1273 = vunpack.c.h.s8.bf16 %v1001
    %v1274 = vunpack.c.l.s8.bf16 %v1002
    %v1275 = vunpack.c.l.s8.bf16 %v1003
    %v1276 = vunpack.c.l.s8.bf16 %v1004
    %v1277 = vunpack.c.l.s8.bf16 %v1005
    %v1278 = vunpack.c.l.s8.bf16 %v1006
    %v1279 = vunpack.c.l.s8.bf16 %v1007
    %v1280 = vunpack.c.l.s8.bf16 %v1008
    %v1281 = vunpack.c.l.s8.bf16 %v1009
    %v1282 = vunpack.c.h.s8.bf16 %v1002
    %v1283 = vunpack.c.h.s8.bf16 %v1003
    %v1284 = vunpack.c.h.s8.bf16 %v1004
    %v1285 = vunpack.c.h.s8.bf16 %v1005
    %v1286 = vunpack.c.h.s8.bf16 %v1006
    %v1287 = vunpack.c.h.s8.bf16 %v1007
    %v1288 = vunpack.c.h.s8.bf16 %v1008
    %v1289 = vunpack.c.h.s8.bf16 %v1009
    %v1290 = vunpack.c.l.s8.bf16 %v1010
    %v1291 = vunpack.c.l.s8.bf16 %v1011
    %v1292 = vunpack.c.l.s8.bf16 %v1012
    %v1293 = vunpack.c.l.s8.bf16 %v1013
    %v1294 = vunpack.c.l.s8.bf16 %v1014
    %v1295 = vunpack.c.l.s8.bf16 %v1015
    %v1296 = vunpack.c.l.s8.bf16 %v1016
    %v1297 = vunpack.c.l.s8.bf16 %v1017
    %v1298 = vunpack.c.h.s8.bf16 %v1010
    %v1299 = vunpack.c.h.s8.bf16 %v1011
    %v1300 = vunpack.c.h.s8.bf16 %v1012
    %v1301 = vunpack.c.h.s8.bf16 %v1013
    %v1302 = vunpack.c.h.s8.bf16 %v1014
    %v1303 = vunpack.c.h.s8.bf16 %v1015
    %v1304 = vunpack.c.h.s8.bf16 %v1016
    %v1305 = vunpack.c.h.s8.bf16 %v1017
    %v1306 = vunpack.c.l.s8.bf16 %v1018
    %v1307 = vunpack.c.l.s8.bf16 %v1019
    %v1308 = vunpack.c.l.s8.bf16 %v1020
    %v1309 = vunpack.c.l.s8.bf16 %v1021
    %v1310 = vunpack.c.l.s8.bf16 %v1022
    %v1311 = vunpack.c.l.s8.bf16 %v1023
    %v1312 = vunpack.c.l.s8.bf16 %v1024
    %v1313 = vunpack.c.l.s8.bf16 %v1025
    %v1314 = vunpack.c.h.s8.bf16 %v1018
    %v1315 = vunpack.c.h.s8.bf16 %v1019
    %v1316 = vunpack.c.h.s8.bf16 %v1020
    %v1317 = vunpack.c.h.s8.bf16 %v1021
    %v1318 = vunpack.c.h.s8.bf16 %v1022
    %v1319 = vunpack.c.h.s8.bf16 %v1023
    %v1320 = vunpack.c.h.s8.bf16 %v1024
    %v1321 = vunpack.c.h.s8.bf16 %v1025
    %v1322 = vunpack.c.l.s8.bf16 %v1026
    %v1323 = vunpack.c.l.s8.bf16 %v1027
    %v1324 = vunpack.c.l.s8.bf16 %v1028
    %v1325 = vunpack.c.l.s8.bf16 %v1029
    %v1326 = vunpack.c.l.s8.bf16 %v1030
    %v1327 = vunpack.c.l.s8.bf16 %v1031
    %v1328 = vunpack.c.l.s8.bf16 %v1032
    %v1329 = vunpack.c.l.s8.bf16 %v1033
    %v1330 = vunpack.c.h.s8.bf16 %v1026
    %v1331 = vunpack.c.h.s8.bf16 %v1027
    %v1332 = vunpack.c.h.s8.bf16 %v1028
    %v1333 = vunpack.c.h.s8.bf16 %v1029
    %v1334 = vunpack.c.h.s8.bf16 %v1030
    %v1335 = vunpack.c.h.s8.bf16 %v1031
    %v1336 = vunpack.c.h.s8.bf16 %v1032
    %v1337 = vunpack.c.h.s8.bf16 %v1033
    %v1338 = vunpack.c.l.s8.bf16 %v1034
    %v1339 = vunpack.c.l.s8.bf16 %v1035
    %v1340 = vunpack.c.l.s8.bf16 %v1036
    %v1341 = vunpack.c.l.s8.bf16 %v1037
    %v1342 = vunpack.c.l.s8.bf16 %v1038
    %v1343 = vunpack.c.l.s8.bf16 %v1039
    %v1344 = vunpack.c.l.s8.bf16 %v1040
    %v1345 = vunpack.c.l.s8.bf16 %v1041
    %v1346 = vunpack.c.h.s8.bf16 %v1034
    %v1347 = vunpack.c.h.s8.bf16 %v1035
    %v1348 = vunpack.c.h.s8.bf16 %v1036
    %v1349 = vunpack.c.h.s8.bf16 %v1037
    %v1350 = vunpack.c.h.s8.bf16 %v1038
    %v1351 = vunpack.c.h.s8.bf16 %v1039
    %v1352 = vunpack.c.h.s8.bf16 %v1040
    %v1353 = vunpack.c.h.s8.bf16 %v1041
    %v1354 = vunpack.c.l.s8.bf16 %v1042
    %v1355 = vunpack.c.l.s8.bf16 %v1043
    %v1356 = vunpack.c.l.s8.bf16 %v1044
    %v1357 = vunpack.c.l.s8.bf16 %v1045
    %v1358 = vunpack.c.l.s8.bf16 %v1046
    %v1359 = vunpack.c.l.s8.bf16 %v1047
    %v1360 = vunpack.c.l.s8.bf16 %v1048
    %v1361 = vunpack.c.l.s8.bf16 %v1049
    %v1362 = vunpack.c.h.s8.bf16 %v1042
    %v1363 = vunpack.c.h.s8.bf16 %v1043
    %v1364 = vunpack.c.h.s8.bf16 %v1044
    %v1365 = vunpack.c.h.s8.bf16 %v1045
    %v1366 = vunpack.c.h.s8.bf16 %v1046
    %v1367 = vunpack.c.h.s8.bf16 %v1047
    %v1368 = vunpack.c.h.s8.bf16 %v1048
    %v1369 = vunpack.c.h.s8.bf16 %v1049
    %v1370 = vunpack.c.l.s8.bf16 %v1050
    %v1371 = vunpack.c.l.s8.bf16 %v1051
    %v1372 = vunpack.c.l.s8.bf16 %v1052
    %v1373 = vunpack.c.l.s8.bf16 %v1053
    %v1374 = vunpack.c.l.s8.bf16 %v1054
    %v1375 = vunpack.c.l.s8.bf16 %v1055
    %v1376 = vunpack.c.l.s8.bf16 %v1056
    %v1377 = vunpack.c.l.s8.bf16 %v1057
    %v1378 = vunpack.c.h.s8.bf16 %v1050
    %v1379 = vunpack.c.h.s8.bf16 %v1051
    %v1380 = vunpack.c.h.s8.bf16 %v1052
    %v1381 = vunpack.c.h.s8.bf16 %v1053
    %v1382 = vunpack.c.h.s8.bf16 %v1054
    %v1383 = vunpack.c.h.s8.bf16 %v1055
    %v1384 = vunpack.c.h.s8.bf16 %v1056
    %v1385 = vunpack.c.h.s8.bf16 %v1057
    %v1386 = vunpack.c.l.s8.bf16 %v1058
    %v1387 = vunpack.c.l.s8.bf16 %v1059
    %v1388 = vunpack.c.l.s8.bf16 %v1060
    %v1389 = vunpack.c.l.s8.bf16 %v1061
    %v1390 = vunpack.c.l.s8.bf16 %v1062
    %v1391 = vunpack.c.l.s8.bf16 %v1063
    %v1392 = vunpack.c.l.s8.bf16 %v1064
    %v1393 = vunpack.c.l.s8.bf16 %v1065
    %v1394 = vunpack.c.h.s8.bf16 %v1058
    %v1395 = vunpack.c.h.s8.bf16 %v1059
    %v1396 = vunpack.c.h.s8.bf16 %v1060
    %v1397 = vunpack.c.h.s8.bf16 %v1061
    %v1398 = vunpack.c.h.s8.bf16 %v1062
    %v1399 = vunpack.c.h.s8.bf16 %v1063
    %v1400 = vunpack.c.h.s8.bf16 %v1064
    %v1401 = vunpack.c.h.s8.bf16 %v1065
    %v1402 = vunpack.c.l.s8.bf16 %v1066
    %v1403 = vunpack.c.l.s8.bf16 %v1067
    %v1404 = vunpack.c.l.s8.bf16 %v1068
    %v1405 = vunpack.c.l.s8.bf16 %v1069
    %v1406 = vunpack.c.l.s8.bf16 %v1070
    %v1407 = vunpack.c.l.s8.bf16 %v1071
    %v1408 = vunpack.c.l.s8.bf16 %v1072
    %v1409 = vunpack.c.l.s8.bf16 %v1073
    %v1410 = vunpack.c.h.s8.bf16 %v1066
    %v1411 = vunpack.c.h.s8.bf16 %v1067
    %v1412 = vunpack.c.h.s8.bf16 %v1068
    %v1413 = vunpack.c.h.s8.bf16 %v1069
    %v1414 = vunpack.c.h.s8.bf16 %v1070
    %v1415 = vunpack.c.h.s8.bf16 %v1071
    %v1416 = vunpack.c.h.s8.bf16 %v1072
    %v1417 = vunpack.c.h.s8.bf16 %v1073
    %v1418 = vunpack.c.l.s8.bf16 %v1074
    %v1419 = vunpack.c.l.s8.bf16 %v1075
    %v1420 = vunpack.c.l.s8.bf16 %v1076
    %v1421 = vunpack.c.l.s8.bf16 %v1077
    %v1422 = vunpack.c.l.s8.bf16 %v1078
    %v1423 = vunpack.c.l.s8.bf16 %v1079
    %v1424 = vunpack.c.l.s8.bf16 %v1080
    %v1425 = vunpack.c.l.s8.bf16 %v1081
    %v1426 = vunpack.c.h.s8.bf16 %v1074
    %v1427 = vunpack.c.h.s8.bf16 %v1075
    %v1428 = vunpack.c.h.s8.bf16 %v1076
    %v1429 = vunpack.c.h.s8.bf16 %v1077
    %v1430 = vunpack.c.h.s8.bf16 %v1078
    %v1431 = vunpack.c.h.s8.bf16 %v1079
    %v1432 = vunpack.c.h.s8.bf16 %v1080
    %v1433 = vunpack.c.h.s8.bf16 %v1081
    %v1434 = vunpack.c.l.s8.bf16 %v1082
    %v1435 = vunpack.c.l.s8.bf16 %v1083
    %v1436 = vunpack.c.l.s8.bf16 %v1084
    %v1437 = vunpack.c.l.s8.bf16 %v1085
    %v1438 = vunpack.c.l.s8.bf16 %v1086
    %v1439 = vunpack.c.l.s8.bf16 %v1087
    %v1440 = vunpack.c.l.s8.bf16 %v1088
    %v1441 = vunpack.c.l.s8.bf16 %v1089
    %v1442 = vunpack.c.h.s8.bf16 %v1082
    %v1443 = vunpack.c.h.s8.bf16 %v1083
    %v1444 = vunpack.c.h.s8.bf16 %v1084
    %v1445 = vunpack.c.h.s8.bf16 %v1085
    %v1446 = vunpack.c.h.s8.bf16 %v1086
    %v1447 = vunpack.c.h.s8.bf16 %v1087
    %v1448 = vunpack.c.h.s8.bf16 %v1088
    %v1449 = vunpack.c.h.s8.bf16 %v1089
    %v1450 = vunpack.c.l.s8.bf16 %v1090
    %v1451 = vunpack.c.l.s8.bf16 %v1091
    %v1452 = vunpack.c.l.s8.bf16 %v1092
    %v1453 = vunpack.c.l.s8.bf16 %v1093
    %v1454 = vunpack.c.l.s8.bf16 %v1094
    %v1455 = vunpack.c.l.s8.bf16 %v1095
    %v1456 = vunpack.c.l.s8.bf16 %v1096
    %v1457 = vunpack.c.l.s8.bf16 %v1097
    %v1458 = vunpack.c.h.s8.bf16 %v1090
    %v1459 = vunpack.c.h.s8.bf16 %v1091
    %v1460 = vunpack.c.h.s8.bf16 %v1092
    %v1461 = vunpack.c.h.s8.bf16 %v1093
    %v1462 = vunpack.c.h.s8.bf16 %v1094
    %v1463 = vunpack.c.h.s8.bf16 %v1095
    %v1464 = vunpack.c.h.s8.bf16 %v1096
    %v1465 = vunpack.c.h.s8.bf16 %v1097
    %v1466 = vunpack.c.l.s8.bf16 %v1098
    %v1467 = vunpack.c.l.s8.bf16 %v1099
    %v1468 = vunpack.c.l.s8.bf16 %v1100
    %v1469 = vunpack.c.l.s8.bf16 %v1101
    %v1470 = vunpack.c.l.s8.bf16 %v1102
    %v1471 = vunpack.c.l.s8.bf16 %v1103
    %v1472 = vunpack.c.l.s8.bf16 %v1104
    %v1473 = vunpack.c.l.s8.bf16 %v1105
    %v1474 = vunpack.c.h.s8.bf16 %v1098
    %v1475 = vunpack.c.h.s8.bf16 %v1099
    %v1476 = vunpack.c.h.s8.bf16 %v1100
    %v1477 = vunpack.c.h.s8.bf16 %v1101
    %v1478 = vunpack.c.h.s8.bf16 %v1102
    %v1479 = vunpack.c.h.s8.bf16 %v1103
    %v1480 = vunpack.c.h.s8.bf16 %v1104
    %v1481 = vunpack.c.h.s8.bf16 %v1105
    %v1482 = vunpack.c.l.s8.bf16 %v1106
    %v1483 = vunpack.c.l.s8.bf16 %v1107
    %v1484 = vunpack.c.l.s8.bf16 %v1108
    %v1485 = vunpack.c.l.s8.bf16 %v1109
    %v1486 = vunpack.c.l.s8.bf16 %v1110
    %v1487 = vunpack.c.l.s8.bf16 %v1111
    %v1488 = vunpack.c.l.s8.bf16 %v1112
    %v1489 = vunpack.c.l.s8.bf16 %v1113
    %v1490 = vunpack.c.h.s8.bf16 %v1106
    %v1491 = vunpack.c.h.s8.bf16 %v1107
    %v1492 = vunpack.c.h.s8.bf16 %v1108
    %v1493 = vunpack.c.h.s8.bf16 %v1109
    %v1494 = vunpack.c.h.s8.bf16 %v1110
    %v1495 = vunpack.c.h.s8.bf16 %v1111
    %v1496 = vunpack.c.h.s8.bf16 %v1112
    %v1497 = vunpack.c.h.s8.bf16 %v1113
    %v1498 = vunpack.c.l.s8.bf16 %v1114
    %v1499 = vunpack.c.l.s8.bf16 %v1115
    %v1500 = vunpack.c.l.s8.bf16 %v1116
    %v1501 = vunpack.c.l.s8.bf16 %v1117
    %v1502 = vunpack.c.l.s8.bf16 %v1118
    %v1503 = vunpack.c.l.s8.bf16 %v1119
    %v1504 = vunpack.c.l.s8.bf16 %v1120
    %v1505 = vunpack.c.l.s8.bf16 %v1121
    %v1506 = vunpack.c.h.s8.bf16 %v1114
    %v1507 = vunpack.c.h.s8.bf16 %v1115
    %v1508 = vunpack.c.h.s8.bf16 %v1116
    %v1509 = vunpack.c.h.s8.bf16 %v1117
    %v1510 = vunpack.c.h.s8.bf16 %v1118
    %v1511 = vunpack.c.h.s8.bf16 %v1119
    %v1512 = vunpack.c.h.s8.bf16 %v1120
    %v1513 = vunpack.c.h.s8.bf16 %v1121
    %v1514 = vunpack.c.l.s8.bf16 %v1122
    %v1515 = vunpack.c.l.s8.bf16 %v1123
    %v1516 = vunpack.c.l.s8.bf16 %v1124
    %v1517 = vunpack.c.l.s8.bf16 %v1125
    %v1518 = vunpack.c.l.s8.bf16 %v1126
    %v1519 = vunpack.c.l.s8.bf16 %v1127
    %v1520 = vunpack.c.l.s8.bf16 %v1128
    %v1521 = vunpack.c.l.s8.bf16 %v1129
    %v1522 = vunpack.c.h.s8.bf16 %v1122
    %v1523 = vunpack.c.h.s8.bf16 %v1123
    %v1524 = vunpack.c.h.s8.bf16 %v1124
    %v1525 = vunpack.c.h.s8.bf16 %v1125
    %v1526 = vunpack.c.h.s8.bf16 %v1126
    %v1527 = vunpack.c.h.s8.bf16 %v1127
    %v1528 = vunpack.c.h.s8.bf16 %v1128
    %v1529 = vunpack.c.h.s8.bf16 %v1129
    %v1530 = vunpack.c.l.s8.bf16 %v1130
    %v1531 = vunpack.c.l.s8.bf16 %v1131
    %v1532 = vunpack.c.l.s8.bf16 %v1132
    %v1533 = vunpack.c.l.s8.bf16 %v1133
    %v1534 = vunpack.c.l.s8.bf16 %v1134
    %v1535 = vunpack.c.l.s8.bf16 %v1135
    %v1536 = vunpack.c.l.s8.bf16 %v1136
    %v1537 = vunpack.c.l.s8.bf16 %v1137
    %v1538 = vunpack.c.h.s8.bf16 %v1130
    %v1539 = vunpack.c.h.s8.bf16 %v1131
    %v1540 = vunpack.c.h.s8.bf16 %v1132
    %v1541 = vunpack.c.h.s8.bf16 %v1133
    %v1542 = vunpack.c.h.s8.bf16 %v1134
    %v1543 = vunpack.c.h.s8.bf16 %v1135
    %v1544 = vunpack.c.h.s8.bf16 %v1136
    %v1545 = vunpack.c.h.s8.bf16 %v1137
    %v1546 = vunpack.c.l.s8.bf16 %v1138
    %v1547 = vunpack.c.l.s8.bf16 %v1139
    %v1548 = vunpack.c.l.s8.bf16 %v1140
    %v1549 = vunpack.c.l.s8.bf16 %v1141
    %v1550 = vunpack.c.l.s8.bf16 %v1142
    %v1551 = vunpack.c.l.s8.bf16 %v1143
    %v1552 = vunpack.c.l.s8.bf16 %v1144
    %v1553 = vunpack.c.l.s8.bf16 %v1145
    %v1554 = vunpack.c.h.s8.bf16 %v1138
    %v1555 = vunpack.c.h.s8.bf16 %v1139
    %v1556 = vunpack.c.h.s8.bf16 %v1140
    %v1557 = vunpack.c.h.s8.bf16 %v1141
    %v1558 = vunpack.c.h.s8.bf16 %v1142
    %v1559 = vunpack.c.h.s8.bf16 %v1143
    %v1560 = vunpack.c.h.s8.bf16 %v1144
    %v1561 = vunpack.c.h.s8.bf16 %v1145
    %v1562 = vunpack.c.l.s8.bf16 %v1146
    %v1563 = vunpack.c.l.s8.bf16 %v1147
    %v1564 = vunpack.c.l.s8.bf16 %v1148
    %v1565 = vunpack.c.l.s8.bf16 %v1149
    %v1566 = vunpack.c.l.s8.bf16 %v1150
    %v1567 = vunpack.c.l.s8.bf16 %v1151
    %v1568 = vunpack.c.l.s8.bf16 %v1152
    %v1569 = vunpack.c.l.s8.bf16 %v1153
    %v1570 = vunpack.c.h.s8.bf16 %v1146
    %v1571 = vunpack.c.h.s8.bf16 %v1147
    %v1572 = vunpack.c.h.s8.bf16 %v1148
    %v1573 = vunpack.c.h.s8.bf16 %v1149
    %v1574 = vunpack.c.h.s8.bf16 %v1150
    %v1575 = vunpack.c.h.s8.bf16 %v1151
    %v1576 = vunpack.c.h.s8.bf16 %v1152
    %v1577 = vunpack.c.h.s8.bf16 %v1153
    %v1578 = vunpack.c.l.s8.bf16 %v1154
    %v1579 = vunpack.c.l.s8.bf16 %v1155
    %v1580 = vunpack.c.l.s8.bf16 %v1156
    %v1581 = vunpack.c.l.s8.bf16 %v1157
    %v1582 = vunpack.c.l.s8.bf16 %v1158
    %v1583 = vunpack.c.l.s8.bf16 %v1159
    %v1584 = vunpack.c.l.s8.bf16 %v1160
    %v1585 = vunpack.c.l.s8.bf16 %v1161
    %v1586 = vunpack.c.h.s8.bf16 %v1154
    %v1587 = vunpack.c.h.s8.bf16 %v1155
    %v1588 = vunpack.c.h.s8.bf16 %v1156
    %v1589 = vunpack.c.h.s8.bf16 %v1157
    %v1590 = vunpack.c.h.s8.bf16 %v1158
    %v1591 = vunpack.c.h.s8.bf16 %v1159
    %v1592 = vunpack.c.h.s8.bf16 %v1160
    %v1593 = vunpack.c.h.s8.bf16 %v1161
    %v1594 = vunpack.c.l.s8.bf16 %v1162
    %v1595 = vunpack.c.l.s8.bf16 %v1163
    %v1596 = vunpack.c.l.s8.bf16 %v1164
    %v1597 = vunpack.c.l.s8.bf16 %v1165
    %v1598 = vunpack.c.l.s8.bf16 %v1166
    %v1599 = vunpack.c.l.s8.bf16 %v1167
    %v1600 = vunpack.c.l.s8.bf16 %v1168
    %v1601 = vunpack.c.l.s8.bf16 %v1169
    %v1602 = vunpack.c.h.s8.bf16 %v1162
    %v1603 = vunpack.c.h.s8.bf16 %v1163
    %v1604 = vunpack.c.h.s8.bf16 %v1164
    %v1605 = vunpack.c.h.s8.bf16 %v1165
    %v1606 = vunpack.c.h.s8.bf16 %v1166
    %v1607 = vunpack.c.h.s8.bf16 %v1167
    %v1608 = vunpack.c.h.s8.bf16 %v1168
    %v1609 = vunpack.c.h.s8.bf16 %v1169
    %v1610 = vunpack.c.l.s8.bf16 %v1170
    %v1611 = vunpack.c.l.s8.bf16 %v1171
    %v1612 = vunpack.c.l.s8.bf16 %v1172
    %v1613 = vunpack.c.l.s8.bf16 %v1173
    %v1614 = vunpack.c.l.s8.bf16 %v1174
    %v1615 = vunpack.c.l.s8.bf16 %v1175
    %v1616 = vunpack.c.l.s8.bf16 %v1176
    %v1617 = vunpack.c.l.s8.bf16 %v1177
    %v1618 = vunpack.c.h.s8.bf16 %v1170
    %v1619 = vunpack.c.h.s8.bf16 %v1171
    %v1620 = vunpack.c.h.s8.bf16 %v1172
    %v1621 = vunpack.c.h.s8.bf16 %v1173
    %v1622 = vunpack.c.h.s8.bf16 %v1174
    %v1623 = vunpack.c.h.s8.bf16 %v1175
    %v1624 = vunpack.c.h.s8.bf16 %v1176
    %v1625 = vunpack.c.h.s8.bf16 %v1177
    %v1626 = vunpack.c.l.s8.bf16 %v1178
    %v1627 = vunpack.c.l.s8.bf16 %v1179
    %v1628 = vunpack.c.l.s8.bf16 %v1180
    %v1629 = vunpack.c.l.s8.bf16 %v1181
    %v1630 = vunpack.c.l.s8.bf16 %v1182
    %v1631 = vunpack.c.l.s8.bf16 %v1183
    %v1632 = vunpack.c.l.s8.bf16 %v1184
    %v1633 = vunpack.c.l.s8.bf16 %v1185
    %v1634 = vunpack.c.h.s8.bf16 %v1178
    %v1635 = vunpack.c.h.s8.bf16 %v1179
    %v1636 = vunpack.c.h.s8.bf16 %v1180
    %v1637 = vunpack.c.h.s8.bf16 %v1181
    %v1638 = vunpack.c.h.s8.bf16 %v1182
    %v1639 = vunpack.c.h.s8.bf16 %v1183
    %v1640 = vunpack.c.h.s8.bf16 %v1184
    %v1641 = vunpack.c.h.s8.bf16 %v1185
    %v1642 = vunpack.c.l.s8.bf16 %v1186
    %v1643 = vunpack.c.l.s8.bf16 %v1187
    %v1644 = vunpack.c.l.s8.bf16 %v1188
    %v1645 = vunpack.c.l.s8.bf16 %v1189
    %v1646 = vunpack.c.l.s8.bf16 %v1190
    %v1647 = vunpack.c.l.s8.bf16 %v1191
    %v1648 = vunpack.c.l.s8.bf16 %v1192
    %v1649 = vunpack.c.l.s8.bf16 %v1193
    %v1650 = vunpack.c.h.s8.bf16 %v1186
    %v1651 = vunpack.c.h.s8.bf16 %v1187
    %v1652 = vunpack.c.h.s8.bf16 %v1188
    %v1653 = vunpack.c.h.s8.bf16 %v1189
    %v1654 = vunpack.c.h.s8.bf16 %v1190
    %v1655 = vunpack.c.h.s8.bf16 %v1191
    %v1656 = vunpack.c.h.s8.bf16 %v1192
    %v1657 = vunpack.c.h.s8.bf16 %v1193
    %v1658 = vunpack.c.l.s8.bf16 %v1194
    %v1659 = vunpack.c.l.s8.bf16 %v1195
    %v1660 = vunpack.c.l.s8.bf16 %v1196
    %v1661 = vunpack.c.l.s8.bf16 %v1197
    %v1662 = vunpack.c.l.s8.bf16 %v1198
    %v1663 = vunpack.c.l.s8.bf16 %v1199
    %v1664 = vunpack.c.l.s8.bf16 %v1200
    %v1665 = vunpack.c.l.s8.bf16 %v1201
    %v1666 = vunpack.c.h.s8.bf16 %v1194
    %v1667 = vunpack.c.h.s8.bf16 %v1195
    %v1668 = vunpack.c.h.s8.bf16 %v1196
    %v1669 = vunpack.c.h.s8.bf16 %v1197
    %v1670 = vunpack.c.h.s8.bf16 %v1198
    %v1671 = vunpack.c.h.s8.bf16 %v1199
    %v1672 = vunpack.c.h.s8.bf16 %v1200
    %v1673 = vunpack.c.h.s8.bf16 %v1201
    %v1674 = vunpack.c.l.s8.bf16 %v1202
    %v1675 = vunpack.c.l.s8.bf16 %v1203
    %v1676 = vunpack.c.l.s8.bf16 %v1204
    %v1677 = vunpack.c.l.s8.bf16 %v1205
    %v1678 = vunpack.c.l.s8.bf16 %v1206
    %v1679 = vunpack.c.l.s8.bf16 %v1207
    %v1680 = vunpack.c.l.s8.bf16 %v1208
    %v1681 = vunpack.c.l.s8.bf16 %v1209
    %v1682 = vunpack.c.h.s8.bf16 %v1202
    %v1683 = vunpack.c.h.s8.bf16 %v1203
    %v1684 = vunpack.c.h.s8.bf16 %v1204
    %v1685 = vunpack.c.h.s8.bf16 %v1205
    %v1686 = vunpack.c.h.s8.bf16 %v1206
    %v1687 = vunpack.c.h.s8.bf16 %v1207
    %v1688 = vunpack.c.h.s8.bf16 %v1208
    %v1689 = vunpack.c.h.s8.bf16 %v1209
    %v1690 = vunpack.c.l.s8.bf16 %v1210
    %v1691 = vunpack.c.l.s8.bf16 %v1211
    %v1692 = vunpack.c.l.s8.bf16 %v1212
    %v1693 = vunpack.c.l.s8.bf16 %v1213
    %v1694 = vunpack.c.l.s8.bf16 %v1214
    %v1695 = vunpack.c.l.s8.bf16 %v1215
    %v1696 = vunpack.c.l.s8.bf16 %v1216
    %v1697 = vunpack.c.l.s8.bf16 %v1217
    %v1698 = vunpack.c.h.s8.bf16 %v1210
    %v1699 = vunpack.c.h.s8.bf16 %v1211
    %v1700 = vunpack.c.h.s8.bf16 %v1212
    %v1701 = vunpack.c.h.s8.bf16 %v1213
    %v1702 = vunpack.c.h.s8.bf16 %v1214
    %v1703 = vunpack.c.h.s8.bf16 %v1215
    %v1704 = vunpack.c.h.s8.bf16 %v1216
    %v1705 = vunpack.c.h.s8.bf16 %v1217
    %v1706 = vunpack.c.l.s8.bf16 %v1218
    %v1707 = vunpack.c.l.s8.bf16 %v1219
    %v1708 = vunpack.c.l.s8.bf16 %v1220
    %v1709 = vunpack.c.l.s8.bf16 %v1221
    %v1710 = vunpack.c.l.s8.bf16 %v1222
    %v1711 = vunpack.c.l.s8.bf16 %v1223
    %v1712 = vunpack.c.l.s8.bf16 %v1224
    %v1713 = vunpack.c.l.s8.bf16 %v1225
    %v1714 = vunpack.c.h.s8.bf16 %v1218
    %v1715 = vunpack.c.h.s8.bf16 %v1219
    %v1716 = vunpack.c.h.s8.bf16 %v1220
    %v1717 = vunpack.c.h.s8.bf16 %v1221
    %v1718 = vunpack.c.h.s8.bf16 %v1222
    %v1719 = vunpack.c.h.s8.bf16 %v1223
    %v1720 = vunpack.c.h.s8.bf16 %v1224
    %v1721 = vunpack.c.h.s8.bf16 %v1225
    %v1722 = vunpack.c.l.s8.bf16 %v1226
    %v1723 = vunpack.c.l.s8.bf16 %v1227
    %v1724 = vunpack.c.l.s8.bf16 %v1228
    %v1725 = vunpack.c.l.s8.bf16 %v1229
    %v1726 = vunpack.c.l.s8.bf16 %v1230
    %v1727 = vunpack.c.l.s8.bf16 %v1231
    %v1728 = vunpack.c.l.s8.bf16 %v1232
    %v1729 = vunpack.c.l.s8.bf16 %v1233
    %v1730 = vunpack.c.h.s8.bf16 %v1226
    %v1731 = vunpack.c.h.s8.bf16 %v1227
    %v1732 = vunpack.c.h.s8.bf16 %v1228
    %v1733 = vunpack.c.h.s8.bf16 %v1229
    %v1734 = vunpack.c.h.s8.bf16 %v1230
    %v1735 = vunpack.c.h.s8.bf16 %v1231
    %v1736 = vunpack.c.h.s8.bf16 %v1232
    %v1737 = vunpack.c.h.s8.bf16 %v1233
    %v1738 = vunpack.c.l.s8.bf16 %v1234
    %v1739 = vunpack.c.l.s8.bf16 %v1235
    %v1740 = vunpack.c.l.s8.bf16 %v1236
    %v1741 = vunpack.c.l.s8.bf16 %v1237
    %v1742 = vunpack.c.l.s8.bf16 %v1238
    %v1743 = vunpack.c.l.s8.bf16 %v1239
    %v1744 = vunpack.c.l.s8.bf16 %v1240
    %v1745 = vunpack.c.l.s8.bf16 %v1241
    %v1746 = vunpack.c.h.s8.bf16 %v1234
    %v1747 = vunpack.c.h.s8.bf16 %v1235
    %v1748 = vunpack.c.h.s8.bf16 %v1236
    %v1749 = vunpack.c.h.s8.bf16 %v1237
    %v1750 = vunpack.c.h.s8.bf16 %v1238
    %v1751 = vunpack.c.h.s8.bf16 %v1239
    %v1752 = vunpack.c.h.s8.bf16 %v1240
    %v1753 = vunpack.c.h.s8.bf16 %v1241
    %v1762 = vunpack.c.l.b16 %v978
    %v1763 = vunpack.c.h.b16 %v978
    %v1764 = vunpack.c.l.b16 %v979
    %v1765 = vunpack.c.h.b16 %v979
    %v1766 = vunpack.c.l.b16 %v980
    %v1767 = vunpack.c.h.b16 %v980
    %v1768 = vunpack.c.l.b16 %v981
    %v1769 = vunpack.c.h.b16 %v981
    %v1770 = vunpack.c.l.b16 %v982
    %v1771 = vunpack.c.h.b16 %v982
    %v1772 = vunpack.c.l.b16 %v983
    %v1773 = vunpack.c.h.b16 %v983
    %v1774 = vunpack.c.l.b16 %v984
    %v1775 = vunpack.c.h.b16 %v984
    %v1776 = vunpack.c.l.b16 %v985
    %v1777 = vunpack.c.h.b16 %v985
    %v1778 = vpack.c.b16 %v1770, %v1762
    %v1779 = vpack.c.b16 %v1771, %v1763
    %v1780 = vpack.c.b16 %v1772, %v1764
    %v1781 = vpack.c.b16 %v1773, %v1765
    %v1782 = vpack.c.b16 %v1774, %v1766
    %v1783 = vpack.c.b16 %v1775, %v1767
    %v1784 = vpack.c.b16 %v1776, %v1768
    %v1785 = vpack.c.b16 %v1777, %v1769
    %1794 = vmatprep.subr.bf16.mxu0 %v1299
    %1795 = vmatpush1.bf16.msra.mxu0 %v1298
    %1796 = vmatprep.subr.bf16.mxu0 %v1291
    %1797 = vmatpush1.bf16.msra.mxu0 %v1290
    %1798 = vmatprep.subr.bf16.mxu0 %v1283
    %1799 = vmatpush1.bf16.msra.mxu0 %v1282
    %1800 = vmatprep.subr.bf16.mxu0 %v1275
    %1801 = vmatpush1.bf16.msra.mxu0 %v1274
    %1802 = vmatprep.subr.bf16.mxu0 %v1267
    %1803 = vmatpush1.bf16.msra.mxu0 %v1266
    %1804 = vmatprep.subr.bf16.mxu0 %v1259
    %1805 = vmatpush1.bf16.msra.mxu0 %v1258
    %1806 = vmatprep.subr.bf16.mxu0 %v1251
    %1807 = vmatpush1.bf16.msra.mxu0 %v1250
    %1808 = vmatprep.subr.bf16.mxu0 %v1243
    %1809 = vmatpush1.bf16.msra.mxu0 %v1242
    %1810 = vmatprep.subr.bf16.mxu0 %v1363
    %1811 = vmatpush2.bf16.msra.mxu0 %v1362
    %1812 = vmatprep.subr.bf16.mxu0 %v1355
    %1813 = vmatpush2.bf16.msra.mxu0 %v1354
    %1814 = vmatprep.subr.bf16.mxu0 %v1347
    %1815 = vmatpush2.bf16.msra.mxu0 %v1346
    %1816 = vmatprep.subr.bf16.mxu0 %v1339
    %1817 = vmatpush2.bf16.msra.mxu0 %v1338
    %1818 = vmatprep.subr.bf16.mxu0 %v1331
    %1819 = vmatpush2.bf16.msra.mxu0 %v1330
    %1820 = vmatprep.subr.bf16.mxu0 %v1323
    %1821 = vmatpush2.bf16.msra.mxu0 %v1322
    %1822 = vmatprep.subr.bf16.mxu0 %v1315
    %1823 = vmatpush2.bf16.msra.mxu0 %v1314
    %1824 = vmatprep.subr.bf16.mxu0 %v1307
    %1825 = vmatpush2.bf16.msra.mxu0 %v1306
    %1826 = vmatprep.mubr.bf16.mxu0 %v1779
    %1827 = vmatmul.mubr.bf16.gmra.mxu0 %v1778
    %v1828 = vpop.f32.mrf.mxu0
    %v1829 = vadd.f32 0.0, %v1828
    %v1830 = vpop.f32.mrf.mxu0
    %v1831 = vadd.f32 0.0, %v1830
    %v1832 = vpop.f32.mrf.mxu0
    %v1833 = vadd.f32 0.0, %v1832
    %v1834 = vpop.f32.mrf.mxu0
    %v1835 = vadd.f32 0.0, %v1834
    %1836 = vdwg.mxu0
    %1837 = vmatprep.subr.bf16.mxu0 %v1427
    %1838 = vmatpush1.bf16.msra.mxu0 %v1426
    %1839 = vmatprep.subr.bf16.mxu0 %v1419
    %1840 = vmatpush1.bf16.msra.mxu0 %v1418
    %1841 = vmatprep.subr.bf16.mxu0 %v1411
    %1842 = vmatpush1.bf16.msra.mxu0 %v1410
    %1843 = vmatprep.subr.bf16.mxu0 %v1403
    %1844 = vmatpush1.bf16.msra.mxu0 %v1402
    %1845 = vmatprep.subr.bf16.mxu0 %v1395
    %1846 = vmatpush1.bf16.msra.mxu0 %v1394
    %1847 = vmatprep.subr.bf16.mxu0 %v1387
    %1848 = vmatpush1.bf16.msra.mxu0 %v1386
    %1849 = vmatprep.subr.bf16.mxu0 %v1379
    %1850 = vmatpush1.bf16.msra.mxu0 %v1378
    %1851 = vmatprep.subr.bf16.mxu0 %v1371
    %1852 = vmatpush1.bf16.msra.mxu0 %v1370
    %1853 = vmatprep.subr.bf16.mxu0 %v1491
    %1854 = vmatpush2.bf16.msra.mxu0 %v1490
    %1855 = vmatprep.subr.bf16.mxu0 %v1483
    %1856 = vmatpush2.bf16.msra.mxu0 %v1482
    %1857 = vmatprep.subr.bf16.mxu0 %v1475
    %1858 = vmatpush2.bf16.msra.mxu0 %v1474
    %1859 = vmatprep.subr.bf16.mxu0 %v1467
    %1860 = vmatpush2.bf16.msra.mxu0 %v1466
    %1861 = vmatprep.subr.bf16.mxu0 %v1459
    %1862 = vmatpush2.bf16.msra.mxu0 %v1458
    %1863 = vmatprep.subr.bf16.mxu0 %v1451
    %1864 = vmatpush2.bf16.msra.mxu0 %v1450
    %1865 = vmatprep.subr.bf16.mxu0 %v1443
    %1866 = vmatpush2.bf16.msra.mxu0 %v1442
    %1867 = vmatprep.subr.bf16.mxu0 %v1435
    %1868 = vmatpush2.bf16.msra.mxu0 %v1434
    %1869 = vmatprep.mubr.bf16.mxu0 %v1781
    %1870 = vmatmul.mubr.bf16.gmra.mxu0 %v1780
    %v1871 = vpop.f32.mrf.mxu0
    %v1872 = vadd.f32 %v1829, %v1871
    %v1873 = vpop.f32.mrf.mxu0
    %v1874 = vadd.f32 %v1831, %v1873
    %v1875 = vpop.f32.mrf.mxu0
    %v1876 = vadd.f32 %v1833, %v1875
    %v1877 = vpop.f32.mrf.mxu0
    %v1878 = vadd.f32 %v1835, %v1877
    %1879 = vdwg.mxu0
    %1880 = vmatprep.subr.bf16.mxu0 %v1555
    %1881 = vmatpush1.bf16.msra.mxu0 %v1554
    %1882 = vmatprep.subr.bf16.mxu0 %v1547
    %1883 = vmatpush1.bf16.msra.mxu0 %v1546
    %1884 = vmatprep.subr.bf16.mxu0 %v1539
    %1885 = vmatpush1.bf16.msra.mxu0 %v1538
    %1886 = vmatprep.subr.bf16.mxu0 %v1531
    %1887 = vmatpush1.bf16.msra.mxu0 %v1530
    %1888 = vmatprep.subr.bf16.mxu0 %v1523
    %1889 = vmatpush1.bf16.msra.mxu0 %v1522
    %1890 = vmatprep.subr.bf16.mxu0 %v1515
    %1891 = vmatpush1.bf16.msra.mxu0 %v1514
    %1892 = vmatprep.subr.bf16.mxu0 %v1507
    %1893 = vmatpush1.bf16.msra.mxu0 %v1506
    %1894 = vmatprep.subr.bf16.mxu0 %v1499
    %1895 = vmatpush1.bf16.msra.mxu0 %v1498
    %1896 = vmatprep.subr.bf16.mxu0 %v1619
    %1897 = vmatpush2.bf16.msra.mxu0 %v1618
    %1898 = vmatprep.subr.bf16.mxu0 %v1611
    %1899 = vmatpush2.bf16.msra.mxu0 %v1610
    %1900 = vmatprep.subr.bf16.mxu0 %v1603
    %1901 = vmatpush2.bf16.msra.mxu0 %v1602
    %1902 = vmatprep.subr.bf16.mxu0 %v1595
    %1903 = vmatpush2.bf16.msra.mxu0 %v1594
    %1904 = vmatprep.subr.bf16.mxu0 %v1587
    %1905 = vmatpush2.bf16.msra.mxu0 %v1586
    %1906 = vmatprep.subr.bf16.mxu0 %v1579
    %1907 = vmatpush2.bf16.msra.mxu0 %v1578
    %1908 = vmatprep.subr.bf16.mxu0 %v1571
    %1909 = vmatpush2.bf16.msra.mxu0 %v1570
    %1910 = vmatprep.subr.bf16.mxu0 %v1563
    %1911 = vmatpush2.bf16.msra.mxu0 %v1562
    %1912 = vmatprep.mubr.bf16.mxu0 %v1783
    %1913 = vmatmul.mubr.bf16.gmra.mxu0 %v1782
    %v1914 = vpop.f32.mrf.mxu0
    %v1915 = vadd.f32 %v1872, %v1914
    %v1916 = vpop.f32.mrf.mxu0
    %v1917 = vadd.f32 %v1874, %v1916
    %v1918 = vpop.f32.mrf.mxu0
    %v1919 = vadd.f32 %v1876, %v1918
    %v1920 = vpop.f32.mrf.mxu0
    %v1921 = vadd.f32 %v1878, %v1920
    %1922 = vdwg.mxu0
    %1923 = vmatprep.subr.bf16.mxu0 %v1683
    %1924 = vmatpush1.bf16.msra.mxu0 %v1682
    %1925 = vmatprep.subr.bf16.mxu0 %v1675
    %1926 = vmatpush1.bf16.msra.mxu0 %v1674
    %1927 = vmatprep.subr.bf16.mxu0 %v1667
    %1928 = vmatpush1.bf16.msra.mxu0 %v1666
    %1929 = vmatprep.subr.bf16.mxu0 %v1659
    %1930 = vmatpush1.bf16.msra.mxu0 %v1658
    %1931 = vmatprep.subr.bf16.mxu0 %v1651
    %1932 = vmatpush1.bf16.msra.mxu0 %v1650
    %1933 = vmatprep.subr.bf16.mxu0 %v1643
    %1934 = vmatpush1.bf16.msra.mxu0 %v1642
    %1935 = vmatprep.subr.bf16.mxu0 %v1635
    %1936 = vmatpush1.bf16.msra.mxu0 %v1634
    %1937 = vmatprep.subr.bf16.mxu0 %v1627
    %1938 = vmatpush1.bf16.msra.mxu0 %v1626
    %1939 = vmatprep.subr.bf16.mxu0 %v1747
    %1940 = vmatpush2.bf16.msra.mxu0 %v1746
    %1941 = vmatprep.subr.bf16.mxu0 %v1739
    %1942 = vmatpush2.bf16.msra.mxu0 %v1738
    %1943 = vmatprep.subr.bf16.mxu0 %v1731
    %1944 = vmatpush2.bf16.msra.mxu0 %v1730
    %1945 = vmatprep.subr.bf16.mxu0 %v1723
    %1946 = vmatpush2.bf16.msra.mxu0 %v1722
    %1947 = vmatprep.subr.bf16.mxu0 %v1715
    %1948 = vmatpush2.bf16.msra.mxu0 %v1714
    %1949 = vmatprep.subr.bf16.mxu0 %v1707
    %1950 = vmatpush2.bf16.msra.mxu0 %v1706
    %1951 = vmatprep.subr.bf16.mxu0 %v1699
    %1952 = vmatpush2.bf16.msra.mxu0 %v1698
    %1953 = vmatprep.subr.bf16.mxu0 %v1691
    %1954 = vmatpush2.bf16.msra.mxu0 %v1690
    %1955 = vmatprep.mubr.bf16.mxu0 %v1785
    %1956 = vmatmul.mubr.bf16.gmra.mxu0 %v1784
    %v1957 = vpop.f32.mrf.mxu0
    %v1958 = vadd.f32 %v1915, %v1957
    %v1959 = vpop.f32.mrf.mxu0
    %v1960 = vadd.f32 %v1917, %v1959
    %v1961 = vpop.f32.mrf.mxu0
    %v1962 = vadd.f32 %v1919, %v1961
    %v1963 = vpop.f32.mrf.mxu0
    %v1964 = vadd.f32 %v1921, %v1963
    %1965 = vdwg.mxu0
    %1966 = vmatprep.subr.bf16.mxu0 %v1301
    %1967 = vmatpush1.bf16.msra.mxu0 %v1300
    %1968 = vmatprep.subr.bf16.mxu0 %v1293
    %1969 = vmatpush1.bf16.msra.mxu0 %v1292
    %1970 = vmatprep.subr.bf16.mxu0 %v1285
    %1971 = vmatpush1.bf16.msra.mxu0 %v1284
    %1972 = vmatprep.subr.bf16.mxu0 %v1277
    %1973 = vmatpush1.bf16.msra.mxu0 %v1276
    %1974 = vmatprep.subr.bf16.mxu0 %v1269
    %1975 = vmatpush1.bf16.msra.mxu0 %v1268
    %1976 = vmatprep.subr.bf16.mxu0 %v1261
    %1977 = vmatpush1.bf16.msra.mxu0 %v1260
    %1978 = vmatprep.subr.bf16.mxu0 %v1253
    %1979 = vmatpush1.bf16.msra.mxu0 %v1252
    %1980 = vmatprep.subr.bf16.mxu0 %v1245
    %1981 = vmatpush1.bf16.msra.mxu0 %v1244
    %1982 = vmatprep.subr.bf16.mxu0 %v1365
    %1983 = vmatpush2.bf16.msra.mxu0 %v1364
    %1984 = vmatprep.subr.bf16.mxu0 %v1357
    %1985 = vmatpush2.bf16.msra.mxu0 %v1356
    %1986 = vmatprep.subr.bf16.mxu0 %v1349
    %1987 = vmatpush2.bf16.msra.mxu0 %v1348
    %1988 = vmatprep.subr.bf16.mxu0 %v1341
    %1989 = vmatpush2.bf16.msra.mxu0 %v1340
    %1990 = vmatprep.subr.bf16.mxu0 %v1333
    %1991 = vmatpush2.bf16.msra.mxu0 %v1332
    %1992 = vmatprep.subr.bf16.mxu0 %v1325
    %1993 = vmatpush2.bf16.msra.mxu0 %v1324
    %1994 = vmatprep.subr.bf16.mxu0 %v1317
    %1995 = vmatpush2.bf16.msra.mxu0 %v1316
    %1996 = vmatprep.subr.bf16.mxu0 %v1309
    %1997 = vmatpush2.bf16.msra.mxu0 %v1308
    %1998 = vmatprep.mubr.bf16.mxu0 %v1779
    %1999 = vmatmul.mubr.bf16.gmra.mxu0 %v1778
    %v2000 = vpop.f32.mrf.mxu0
    %v2001 = vadd.f32 0.0, %v2000
    %v2002 = vpop.f32.mrf.mxu0
    %v2003 = vadd.f32 0.0, %v2002
    %v2004 = vpop.f32.mrf.mxu0
    %v2005 = vadd.f32 0.0, %v2004
    %v2006 = vpop.f32.mrf.mxu0
    %v2007 = vadd.f32 0.0, %v2006
    %2008 = vdwg.mxu0
    %2009 = vmatprep.subr.bf16.mxu0 %v1429
    %2010 = vmatpush1.bf16.msra.mxu0 %v1428
    %2011 = vmatprep.subr.bf16.mxu0 %v1421
    %2012 = vmatpush1.bf16.msra.mxu0 %v1420
    %2013 = vmatprep.subr.bf16.mxu0 %v1413
    %2014 = vmatpush1.bf16.msra.mxu0 %v1412
    %2015 = vmatprep.subr.bf16.mxu0 %v1405
    %2016 = vmatpush1.bf16.msra.mxu0 %v1404
    %2017 = vmatprep.subr.bf16.mxu0 %v1397
    %2018 = vmatpush1.bf16.msra.mxu0 %v1396
    %2019 = vmatprep.subr.bf16.mxu0 %v1389
    %2020 = vmatpush1.bf16.msra.mxu0 %v1388
    %2021 = vmatprep.subr.bf16.mxu0 %v1381
    %2022 = vmatpush1.bf16.msra.mxu0 %v1380
    %2023 = vmatprep.subr.bf16.mxu0 %v1373
    %2024 = vmatpush1.bf16.msra.mxu0 %v1372
    %2025 = vmatprep.subr.bf16.mxu0 %v1493
    %2026 = vmatpush2.bf16.msra.mxu0 %v1492
    %2027 = vmatprep.subr.bf16.mxu0 %v1485
    %2028 = vmatpush2.bf16.msra.mxu0 %v1484
    %2029 = vmatprep.subr.bf16.mxu0 %v1477
    %2030 = vmatpush2.bf16.msra.mxu0 %v1476
    %2031 = vmatprep.subr.bf16.mxu0 %v1469
    %2032 = vmatpush2.bf16.msra.mxu0 %v1468
    %2033 = vmatprep.subr.bf16.mxu0 %v1461
    %2034 = vmatpush2.bf16.msra.mxu0 %v1460
    %2035 = vmatprep.subr.bf16.mxu0 %v1453
    %2036 = vmatpush2.bf16.msra.mxu0 %v1452
    %2037 = vmatprep.subr.bf16.mxu0 %v1445
    %2038 = vmatpush2.bf16.msra.mxu0 %v1444
    %2039 = vmatprep.subr.bf16.mxu0 %v1437
    %2040 = vmatpush2.bf16.msra.mxu0 %v1436
    %2041 = vmatprep.mubr.bf16.mxu0 %v1781
    %2042 = vmatmul.mubr.bf16.gmra.mxu0 %v1780
    %v2043 = vpop.f32.mrf.mxu0
    %v2044 = vadd.f32 %v2001, %v2043
    %v2045 = vpop.f32.mrf.mxu0
    %v2046 = vadd.f32 %v2003, %v2045
    %v2047 = vpop.f32.mrf.mxu0
    %v2048 = vadd.f32 %v2005, %v2047
    %v2049 = vpop.f32.mrf.mxu0
    %v2050 = vadd.f32 %v2007, %v2049
    %2051 = vdwg.mxu0
    %2052 = vmatprep.subr.bf16.mxu0 %v1557
    %2053 = vmatpush1.bf16.msra.mxu0 %v1556
    %2054 = vmatprep.subr.bf16.mxu0 %v1549
    %2055 = vmatpush1.bf16.msra.mxu0 %v1548
    %2056 = vmatprep.subr.bf16.mxu0 %v1541
    %2057 = vmatpush1.bf16.msra.mxu0 %v1540
    %2058 = vmatprep.subr.bf16.mxu0 %v1533
    %2059 = vmatpush1.bf16.msra.mxu0 %v1532
    %2060 = vmatprep.subr.bf16.mxu0 %v1525
    %2061 = vmatpush1.bf16.msra.mxu0 %v1524
    %2062 = vmatprep.subr.bf16.mxu0 %v1517
    %2063 = vmatpush1.bf16.msra.mxu0 %v1516
    %2064 = vmatprep.subr.bf16.mxu0 %v1509
    %2065 = vmatpush1.bf16.msra.mxu0 %v1508
    %2066 = vmatprep.subr.bf16.mxu0 %v1501
    %2067 = vmatpush1.bf16.msra.mxu0 %v1500
    %2068 = vmatprep.subr.bf16.mxu0 %v1621
    %2069 = vmatpush2.bf16.msra.mxu0 %v1620
    %2070 = vmatprep.subr.bf16.mxu0 %v1613
    %2071 = vmatpush2.bf16.msra.mxu0 %v1612
    %2072 = vmatprep.subr.bf16.mxu0 %v1605
    %2073 = vmatpush2.bf16.msra.mxu0 %v1604
    %2074 = vmatprep.subr.bf16.mxu0 %v1597
    %2075 = vmatpush2.bf16.msra.mxu0 %v1596
    %2076 = vmatprep.subr.bf16.mxu0 %v1589
    %2077 = vmatpush2.bf16.msra.mxu0 %v1588
    %2078 = vmatprep.subr.bf16.mxu0 %v1581
    %2079 = vmatpush2.bf16.msra.mxu0 %v1580
    %2080 = vmatprep.subr.bf16.mxu0 %v1573
    %2081 = vmatpush2.bf16.msra.mxu0 %v1572
    %2082 = vmatprep.subr.bf16.mxu0 %v1565
    %2083 = vmatpush2.bf16.msra.mxu0 %v1564
    %2084 = vmatprep.mubr.bf16.mxu0 %v1783
    %2085 = vmatmul.mubr.bf16.gmra.mxu0 %v1782
    %v2086 = vpop.f32.mrf.mxu0
    %v2087 = vadd.f32 %v2044, %v2086
    %v2088 = vpop.f32.mrf.mxu0
    %v2089 = vadd.f32 %v2046, %v2088
    %v2090 = vpop.f32.mrf.mxu0
    %v2091 = vadd.f32 %v2048, %v2090
    %v2092 = vpop.f32.mrf.mxu0
    %v2093 = vadd.f32 %v2050, %v2092
    %2094 = vdwg.mxu0
    %2095 = vmatprep.subr.bf16.mxu0 %v1685
    %2096 = vmatpush1.bf16.msra.mxu0 %v1684
    %2097 = vmatprep.subr.bf16.mxu0 %v1677
    %2098 = vmatpush1.bf16.msra.mxu0 %v1676
    %2099 = vmatprep.subr.bf16.mxu0 %v1669
    %2100 = vmatpush1.bf16.msra.mxu0 %v1668
    %2101 = vmatprep.subr.bf16.mxu0 %v1661
    %2102 = vmatpush1.bf16.msra.mxu0 %v1660
    %2103 = vmatprep.subr.bf16.mxu0 %v1653
    %2104 = vmatpush1.bf16.msra.mxu0 %v1652
    %2105 = vmatprep.subr.bf16.mxu0 %v1645
    %2106 = vmatpush1.bf16.msra.mxu0 %v1644
    %2107 = vmatprep.subr.bf16.mxu0 %v1637
    %2108 = vmatpush1.bf16.msra.mxu0 %v1636
    %2109 = vmatprep.subr.bf16.mxu0 %v1629
    %2110 = vmatpush1.bf16.msra.mxu0 %v1628
    %2111 = vmatprep.subr.bf16.mxu0 %v1749
    %2112 = vmatpush2.bf16.msra.mxu0 %v1748
    %2113 = vmatprep.subr.bf16.mxu0 %v1741
    %2114 = vmatpush2.bf16.msra.mxu0 %v1740
    %2115 = vmatprep.subr.bf16.mxu0 %v1733
    %2116 = vmatpush2.bf16.msra.mxu0 %v1732
    %2117 = vmatprep.subr.bf16.mxu0 %v1725
    %2118 = vmatpush2.bf16.msra.mxu0 %v1724
    %2119 = vmatprep.subr.bf16.mxu0 %v1717
    %2120 = vmatpush2.bf16.msra.mxu0 %v1716
    %2121 = vmatprep.subr.bf16.mxu0 %v1709
    %2122 = vmatpush2.bf16.msra.mxu0 %v1708
    %2123 = vmatprep.subr.bf16.mxu0 %v1701
    %2124 = vmatpush2.bf16.msra.mxu0 %v1700
    %2125 = vmatprep.subr.bf16.mxu0 %v1693
    %2126 = vmatpush2.bf16.msra.mxu0 %v1692
    %2127 = vmatprep.mubr.bf16.mxu0 %v1785
    %2128 = vmatmul.mubr.bf16.gmra.mxu0 %v1784
    %v2129 = vpop.f32.mrf.mxu0
    %v2130 = vadd.f32 %v2087, %v2129
    %v2131 = vpop.f32.mrf.mxu0
    %v2132 = vadd.f32 %v2089, %v2131
    %v2133 = vpop.f32.mrf.mxu0
    %v2134 = vadd.f32 %v2091, %v2133
    %v2135 = vpop.f32.mrf.mxu0
    %v2136 = vadd.f32 %v2093, %v2135
    %2137 = vdwg.mxu0
    %2138 = vmatprep.subr.bf16.mxu0 %v1303
    %2139 = vmatpush1.bf16.msra.mxu0 %v1302
    %2140 = vmatprep.subr.bf16.mxu0 %v1295
    %2141 = vmatpush1.bf16.msra.mxu0 %v1294
    %2142 = vmatprep.subr.bf16.mxu0 %v1287
    %2143 = vmatpush1.bf16.msra.mxu0 %v1286
    %2144 = vmatprep.subr.bf16.mxu0 %v1279
    %2145 = vmatpush1.bf16.msra.mxu0 %v1278
    %2146 = vmatprep.subr.bf16.mxu0 %v1271
    %2147 = vmatpush1.bf16.msra.mxu0 %v1270
    %2148 = vmatprep.subr.bf16.mxu0 %v1263
    %2149 = vmatpush1.bf16.msra.mxu0 %v1262
    %2150 = vmatprep.subr.bf16.mxu0 %v1255
    %2151 = vmatpush1.bf16.msra.mxu0 %v1254
    %2152 = vmatprep.subr.bf16.mxu0 %v1247
    %2153 = vmatpush1.bf16.msra.mxu0 %v1246
    %2154 = vmatprep.subr.bf16.mxu0 %v1367
    %2155 = vmatpush2.bf16.msra.mxu0 %v1366
    %2156 = vmatprep.subr.bf16.mxu0 %v1359
    %2157 = vmatpush2.bf16.msra.mxu0 %v1358
    %2158 = vmatprep.subr.bf16.mxu0 %v1351
    %2159 = vmatpush2.bf16.msra.mxu0 %v1350
    %2160 = vmatprep.subr.bf16.mxu0 %v1343
    %2161 = vmatpush2.bf16.msra.mxu0 %v1342
    %2162 = vmatprep.subr.bf16.mxu0 %v1335
    %2163 = vmatpush2.bf16.msra.mxu0 %v1334
    %2164 = vmatprep.subr.bf16.mxu0 %v1327
    %2165 = vmatpush2.bf16.msra.mxu0 %v1326
    %2166 = vmatprep.subr.bf16.mxu0 %v1319
    %2167 = vmatpush2.bf16.msra.mxu0 %v1318
    %2168 = vmatprep.subr.bf16.mxu0 %v1311
    %2169 = vmatpush2.bf16.msra.mxu0 %v1310
    %2170 = vmatprep.mubr.bf16.mxu0 %v1779
    %2171 = vmatmul.mubr.bf16.gmra.mxu0 %v1778
    %v2172 = vpop.f32.mrf.mxu0
    %v2173 = vadd.f32 0.0, %v2172
    %v2174 = vpop.f32.mrf.mxu0
    %v2175 = vadd.f32 0.0, %v2174
    %v2176 = vpop.f32.mrf.mxu0
    %v2177 = vadd.f32 0.0, %v2176
    %v2178 = vpop.f32.mrf.mxu0
    %v2179 = vadd.f32 0.0, %v2178
    %2180 = vdwg.mxu0
    %2181 = vmatprep.subr.bf16.mxu0 %v1431
    %2182 = vmatpush1.bf16.msra.mxu0 %v1430
    %2183 = vmatprep.subr.bf16.mxu0 %v1423
    %2184 = vmatpush1.bf16.msra.mxu0 %v1422
    %2185 = vmatprep.subr.bf16.mxu0 %v1415
    %2186 = vmatpush1.bf16.msra.mxu0 %v1414
    %2187 = vmatprep.subr.bf16.mxu0 %v1407
    %2188 = vmatpush1.bf16.msra.mxu0 %v1406
    %2189 = vmatprep.subr.bf16.mxu0 %v1399
    %2190 = vmatpush1.bf16.msra.mxu0 %v1398
    %2191 = vmatprep.subr.bf16.mxu0 %v1391
    %2192 = vmatpush1.bf16.msra.mxu0 %v1390
    %2193 = vmatprep.subr.bf16.mxu0 %v1383
    %2194 = vmatpush1.bf16.msra.mxu0 %v1382
    %2195 = vmatprep.subr.bf16.mxu0 %v1375
    %2196 = vmatpush1.bf16.msra.mxu0 %v1374
    %2197 = vmatprep.subr.bf16.mxu0 %v1495
    %2198 = vmatpush2.bf16.msra.mxu0 %v1494
    %2199 = vmatprep.subr.bf16.mxu0 %v1487
    %2200 = vmatpush2.bf16.msra.mxu0 %v1486
    %2201 = vmatprep.subr.bf16.mxu0 %v1479
    %2202 = vmatpush2.bf16.msra.mxu0 %v1478
    %2203 = vmatprep.subr.bf16.mxu0 %v1471
    %2204 = vmatpush2.bf16.msra.mxu0 %v1470
    %2205 = vmatprep.subr.bf16.mxu0 %v1463
    %2206 = vmatpush2.bf16.msra.mxu0 %v1462
    %2207 = vmatprep.subr.bf16.mxu0 %v1455
    %2208 = vmatpush2.bf16.msra.mxu0 %v1454
    %2209 = vmatprep.subr.bf16.mxu0 %v1447
    %2210 = vmatpush2.bf16.msra.mxu0 %v1446
    %2211 = vmatprep.subr.bf16.mxu0 %v1439
    %2212 = vmatpush2.bf16.msra.mxu0 %v1438
    %2213 = vmatprep.mubr.bf16.mxu0 %v1781
    %2214 = vmatmul.mubr.bf16.gmra.mxu0 %v1780
    %v2215 = vpop.f32.mrf.mxu0
    %v2216 = vadd.f32 %v2173, %v2215
    %v2217 = vpop.f32.mrf.mxu0
    %v2218 = vadd.f32 %v2175, %v2217
    %v2219 = vpop.f32.mrf.mxu0
    %v2220 = vadd.f32 %v2177, %v2219
    %v2221 = vpop.f32.mrf.mxu0
    %v2222 = vadd.f32 %v2179, %v2221
    %2223 = vdwg.mxu0
    %2224 = vmatprep.subr.bf16.mxu0 %v1559
    %2225 = vmatpush1.bf16.msra.mxu0 %v1558
    %2226 = vmatprep.subr.bf16.mxu0 %v1551
    %2227 = vmatpush1.bf16.msra.mxu0 %v1550
    %2228 = vmatprep.subr.bf16.mxu0 %v1543
    %2229 = vmatpush1.bf16.msra.mxu0 %v1542
    %2230 = vmatprep.subr.bf16.mxu0 %v1535
    %2231 = vmatpush1.bf16.msra.mxu0 %v1534
    %2232 = vmatprep.subr.bf16.mxu0 %v1527
    %2233 = vmatpush1.bf16.msra.mxu0 %v1526
    %2234 = vmatprep.subr.bf16.mxu0 %v1519
    %2235 = vmatpush1.bf16.msra.mxu0 %v1518
    %2236 = vmatprep.subr.bf16.mxu0 %v1511
    %2237 = vmatpush1.bf16.msra.mxu0 %v1510
    %2238 = vmatprep.subr.bf16.mxu0 %v1503
    %2239 = vmatpush1.bf16.msra.mxu0 %v1502
    %2240 = vmatprep.subr.bf16.mxu0 %v1623
    %2241 = vmatpush2.bf16.msra.mxu0 %v1622
    %2242 = vmatprep.subr.bf16.mxu0 %v1615
    %2243 = vmatpush2.bf16.msra.mxu0 %v1614
    %2244 = vmatprep.subr.bf16.mxu0 %v1607
    %2245 = vmatpush2.bf16.msra.mxu0 %v1606
    %2246 = vmatprep.subr.bf16.mxu0 %v1599
    %2247 = vmatpush2.bf16.msra.mxu0 %v1598
    %2248 = vmatprep.subr.bf16.mxu0 %v1591
    %2249 = vmatpush2.bf16.msra.mxu0 %v1590
    %2250 = vmatprep.subr.bf16.mxu0 %v1583
    %2251 = vmatpush2.bf16.msra.mxu0 %v1582
    %2252 = vmatprep.subr.bf16.mxu0 %v1575
    %2253 = vmatpush2.bf16.msra.mxu0 %v1574
    %2254 = vmatprep.subr.bf16.mxu0 %v1567
    %2255 = vmatpush2.bf16.msra.mxu0 %v1566
    %2256 = vmatprep.mubr.bf16.mxu0 %v1783
    %2257 = vmatmul.mubr.bf16.gmra.mxu0 %v1782
    %v2258 = vpop.f32.mrf.mxu0
    %v2259 = vadd.f32 %v2216, %v2258
    %v2260 = vpop.f32.mrf.mxu0
    %v2261 = vadd.f32 %v2218, %v2260
    %v2262 = vpop.f32.mrf.mxu0
    %v2263 = vadd.f32 %v2220, %v2262
    %v2264 = vpop.f32.mrf.mxu0
    %v2265 = vadd.f32 %v2222, %v2264
    %2266 = vdwg.mxu0
    %2267 = vmatprep.subr.bf16.mxu0 %v1687
    %2268 = vmatpush1.bf16.msra.mxu0 %v1686
    %2269 = vmatprep.subr.bf16.mxu0 %v1679
    %2270 = vmatpush1.bf16.msra.mxu0 %v1678
    %2271 = vmatprep.subr.bf16.mxu0 %v1671
    %2272 = vmatpush1.bf16.msra.mxu0 %v1670
    %2273 = vmatprep.subr.bf16.mxu0 %v1663
    %2274 = vmatpush1.bf16.msra.mxu0 %v1662
    %2275 = vmatprep.subr.bf16.mxu0 %v1655
    %2276 = vmatpush1.bf16.msra.mxu0 %v1654
    %2277 = vmatprep.subr.bf16.mxu0 %v1647
    %2278 = vmatpush1.bf16.msra.mxu0 %v1646
    %2279 = vmatprep.subr.bf16.mxu0 %v1639
    %2280 = vmatpush1.bf16.msra.mxu0 %v1638
    %2281 = vmatprep.subr.bf16.mxu0 %v1631
    %2282 = vmatpush1.bf16.msra.mxu0 %v1630
    %2283 = vmatprep.subr.bf16.mxu0 %v1751
    %2284 = vmatpush2.bf16.msra.mxu0 %v1750
    %2285 = vmatprep.subr.bf16.mxu0 %v1743
    %2286 = vmatpush2.bf16.msra.mxu0 %v1742
    %2287 = vmatprep.subr.bf16.mxu0 %v1735
    %2288 = vmatpush2.bf16.msra.mxu0 %v1734
    %2289 = vmatprep.subr.bf16.mxu0 %v1727
    %2290 = vmatpush2.bf16.msra.mxu0 %v1726
    %2291 = vmatprep.subr.bf16.mxu0 %v1719
    %2292 = vmatpush2.bf16.msra.mxu0 %v1718
    %2293 = vmatprep.subr.bf16.mxu0 %v1711
    %2294 = vmatpush2.bf16.msra.mxu0 %v1710
    %2295 = vmatprep.subr.bf16.mxu0 %v1703
    %2296 = vmatpush2.bf16.msra.mxu0 %v1702
    %2297 = vmatprep.subr.bf16.mxu0 %v1695
    %2298 = vmatpush2.bf16.msra.mxu0 %v1694
    %2299 = vmatprep.mubr.bf16.mxu0 %v1785
    %2300 = vmatmul.mubr.bf16.gmra.mxu0 %v1784
    %v2301 = vpop.f32.mrf.mxu0
    %v2302 = vadd.f32 %v2259, %v2301
    %v2303 = vpop.f32.mrf.mxu0
    %v2304 = vadd.f32 %v2261, %v2303
    %v2305 = vpop.f32.mrf.mxu0
    %v2306 = vadd.f32 %v2263, %v2305
    %v2307 = vpop.f32.mrf.mxu0
    %v2308 = vadd.f32 %v2265, %v2307
    %2309 = vdwg.mxu0
    %2310 = vmatprep.subr.bf16.mxu0 %v1305
    %2311 = vmatpush1.bf16.msra.mxu0 %v1304
    %2312 = vmatprep.subr.bf16.mxu0 %v1297
    %2313 = vmatpush1.bf16.msra.mxu0 %v1296
    %2314 = vmatprep.subr.bf16.mxu0 %v1289
    %2315 = vmatpush1.bf16.msra.mxu0 %v1288
    %2316 = vmatprep.subr.bf16.mxu0 %v1281
    %2317 = vmatpush1.bf16.msra.mxu0 %v1280
    %2318 = vmatprep.subr.bf16.mxu0 %v1273
    %2319 = vmatpush1.bf16.msra.mxu0 %v1272
    %2320 = vmatprep.subr.bf16.mxu0 %v1265
    %2321 = vmatpush1.bf16.msra.mxu0 %v1264
    %2322 = vmatprep.subr.bf16.mxu0 %v1257
    %2323 = vmatpush1.bf16.msra.mxu0 %v1256
    %2324 = vmatprep.subr.bf16.mxu0 %v1249
    %2325 = vmatpush1.bf16.msra.mxu0 %v1248
    %2326 = vmatprep.subr.bf16.mxu0 %v1369
    %2327 = vmatpush2.bf16.msra.mxu0 %v1368
    %2328 = vmatprep.subr.bf16.mxu0 %v1361
    %2329 = vmatpush2.bf16.msra.mxu0 %v1360
    %2330 = vmatprep.subr.bf16.mxu0 %v1353
    %2331 = vmatpush2.bf16.msra.mxu0 %v1352
    %2332 = vmatprep.subr.bf16.mxu0 %v1345
    %2333 = vmatpush2.bf16.msra.mxu0 %v1344
    %2334 = vmatprep.subr.bf16.mxu0 %v1337
    %2335 = vmatpush2.bf16.msra.mxu0 %v1336
    %2336 = vmatprep.subr.bf16.mxu0 %v1329
    %2337 = vmatpush2.bf16.msra.mxu0 %v1328
    %2338 = vmatprep.subr.bf16.mxu0 %v1321
    %2339 = vmatpush2.bf16.msra.mxu0 %v1320
    %2340 = vmatprep.subr.bf16.mxu0 %v1313
    %2341 = vmatpush2.bf16.msra.mxu0 %v1312
    %2342 = vmatprep.mubr.bf16.mxu0 %v1779
    %2343 = vmatmul.mubr.bf16.gmra.mxu0 %v1778
    %v2344 = vpop.f32.mrf.mxu0
    %v2345 = vadd.f32 0.0, %v2344
    %v2346 = vpop.f32.mrf.mxu0
    %v2347 = vadd.f32 0.0, %v2346
    %v2348 = vpop.f32.mrf.mxu0
    %v2349 = vadd.f32 0.0, %v2348
    %v2350 = vpop.f32.mrf.mxu0
    %v2351 = vadd.f32 0.0, %v2350
    %2352 = vdwg.mxu0
    %2353 = vmatprep.subr.bf16.mxu0 %v1433
    %2354 = vmatpush1.bf16.msra.mxu0 %v1432
    %2355 = vmatprep.subr.bf16.mxu0 %v1425
    %2356 = vmatpush1.bf16.msra.mxu0 %v1424
    %2357 = vmatprep.subr.bf16.mxu0 %v1417
    %2358 = vmatpush1.bf16.msra.mxu0 %v1416
    %2359 = vmatprep.subr.bf16.mxu0 %v1409
    %2360 = vmatpush1.bf16.msra.mxu0 %v1408
    %2361 = vmatprep.subr.bf16.mxu0 %v1401
    %2362 = vmatpush1.bf16.msra.mxu0 %v1400
    %2363 = vmatprep.subr.bf16.mxu0 %v1393
    %2364 = vmatpush1.bf16.msra.mxu0 %v1392
    %2365 = vmatprep.subr.bf16.mxu0 %v1385
    %2366 = vmatpush1.bf16.msra.mxu0 %v1384
    %2367 = vmatprep.subr.bf16.mxu0 %v1377
    %2368 = vmatpush1.bf16.msra.mxu0 %v1376
    %2369 = vmatprep.subr.bf16.mxu0 %v1497
    %2370 = vmatpush2.bf16.msra.mxu0 %v1496
    %2371 = vmatprep.subr.bf16.mxu0 %v1489
    %2372 = vmatpush2.bf16.msra.mxu0 %v1488
    %2373 = vmatprep.subr.bf16.mxu0 %v1481
    %2374 = vmatpush2.bf16.msra.mxu0 %v1480
    %2375 = vmatprep.subr.bf16.mxu0 %v1473
    %2376 = vmatpush2.bf16.msra.mxu0 %v1472
    %2377 = vmatprep.subr.bf16.mxu0 %v1465
    %2378 = vmatpush2.bf16.msra.mxu0 %v1464
    %2379 = vmatprep.subr.bf16.mxu0 %v1457
    %2380 = vmatpush2.bf16.msra.mxu0 %v1456
    %2381 = vmatprep.subr.bf16.mxu0 %v1449
    %2382 = vmatpush2.bf16.msra.mxu0 %v1448
    %2383 = vmatprep.subr.bf16.mxu0 %v1441
    %2384 = vmatpush2.bf16.msra.mxu0 %v1440
    %2385 = vmatprep.mubr.bf16.mxu0 %v1781
    %2386 = vmatmul.mubr.bf16.gmra.mxu0 %v1780
    %v2387 = vpop.f32.mrf.mxu0
    %v2388 = vadd.f32 %v2345, %v2387
    %v2389 = vpop.f32.mrf.mxu0
    %v2390 = vadd.f32 %v2347, %v2389
    %v2391 = vpop.f32.mrf.mxu0
    %v2392 = vadd.f32 %v2349, %v2391
    %v2393 = vpop.f32.mrf.mxu0
    %v2394 = vadd.f32 %v2351, %v2393
    %2395 = vdwg.mxu0
    %2396 = vmatprep.subr.bf16.mxu0 %v1561
    %2397 = vmatpush1.bf16.msra.mxu0 %v1560
    %2398 = vmatprep.subr.bf16.mxu0 %v1553
    %2399 = vmatpush1.bf16.msra.mxu0 %v1552
    %2400 = vmatprep.subr.bf16.mxu0 %v1545
    %2401 = vmatpush1.bf16.msra.mxu0 %v1544
    %2402 = vmatprep.subr.bf16.mxu0 %v1537
    %2403 = vmatpush1.bf16.msra.mxu0 %v1536
    %2404 = vmatprep.subr.bf16.mxu0 %v1529
    %2405 = vmatpush1.bf16.msra.mxu0 %v1528
    %2406 = vmatprep.subr.bf16.mxu0 %v1521
    %2407 = vmatpush1.bf16.msra.mxu0 %v1520
    %2408 = vmatprep.subr.bf16.mxu0 %v1513
    %2409 = vmatpush1.bf16.msra.mxu0 %v1512
    %2410 = vmatprep.subr.bf16.mxu0 %v1505
    %2411 = vmatpush1.bf16.msra.mxu0 %v1504
    %2412 = vmatprep.subr.bf16.mxu0 %v1625
    %2413 = vmatpush2.bf16.msra.mxu0 %v1624
    %2414 = vmatprep.subr.bf16.mxu0 %v1617
    %2415 = vmatpush2.bf16.msra.mxu0 %v1616
    %2416 = vmatprep.subr.bf16.mxu0 %v1609
    %2417 = vmatpush2.bf16.msra.mxu0 %v1608
    %2418 = vmatprep.subr.bf16.mxu0 %v1601
    %2419 = vmatpush2.bf16.msra.mxu0 %v1600
    %2420 = vmatprep.subr.bf16.mxu0 %v1593
    %2421 = vmatpush2.bf16.msra.mxu0 %v1592
    %2422 = vmatprep.subr.bf16.mxu0 %v1585
    %2423 = vmatpush2.bf16.msra.mxu0 %v1584
    %2424 = vmatprep.subr.bf16.mxu0 %v1577
    %2425 = vmatpush2.bf16.msra.mxu0 %v1576
    %2426 = vmatprep.subr.bf16.mxu0 %v1569
    %2427 = vmatpush2.bf16.msra.mxu0 %v1568
    %2428 = vmatprep.mubr.bf16.mxu0 %v1783
    %2429 = vmatmul.mubr.bf16.gmra.mxu0 %v1782
    %v2430 = vpop.f32.mrf.mxu0
    %v2431 = vadd.f32 %v2388, %v2430
    %v2432 = vpop.f32.mrf.mxu0
    %v2433 = vadd.f32 %v2390, %v2432
    %v2434 = vpop.f32.mrf.mxu0
    %v2435 = vadd.f32 %v2392, %v2434
    %v2436 = vpop.f32.mrf.mxu0
    %v2437 = vadd.f32 %v2394, %v2436
    %2438 = vdwg.mxu0
    %2439 = vmatprep.subr.bf16.mxu0 %v1689
    %2440 = vmatpush1.bf16.msra.mxu0 %v1688
    %2441 = vmatprep.subr.bf16.mxu0 %v1681
    %2442 = vmatpush1.bf16.msra.mxu0 %v1680
    %2443 = vmatprep.subr.bf16.mxu0 %v1673
    %2444 = vmatpush1.bf16.msra.mxu0 %v1672
    %2445 = vmatprep.subr.bf16.mxu0 %v1665
    %2446 = vmatpush1.bf16.msra.mxu0 %v1664
    %2447 = vmatprep.subr.bf16.mxu0 %v1657
    %2448 = vmatpush1.bf16.msra.mxu0 %v1656
    %2449 = vmatprep.subr.bf16.mxu0 %v1649
    %2450 = vmatpush1.bf16.msra.mxu0 %v1648
    %2451 = vmatprep.subr.bf16.mxu0 %v1641
    %2452 = vmatpush1.bf16.msra.mxu0 %v1640
    %2453 = vmatprep.subr.bf16.mxu0 %v1633
    %2454 = vmatpush1.bf16.msra.mxu0 %v1632
    %2455 = vmatprep.subr.bf16.mxu0 %v1753
    %2456 = vmatpush2.bf16.msra.mxu0 %v1752
    %2457 = vmatprep.subr.bf16.mxu0 %v1745
    %2458 = vmatpush2.bf16.msra.mxu0 %v1744
    %2459 = vmatprep.subr.bf16.mxu0 %v1737
    %2460 = vmatpush2.bf16.msra.mxu0 %v1736
    %2461 = vmatprep.subr.bf16.mxu0 %v1729
    %2462 = vmatpush2.bf16.msra.mxu0 %v1728
    %2463 = vmatprep.subr.bf16.mxu0 %v1721
    %2464 = vmatpush2.bf16.msra.mxu0 %v1720
    %2465 = vmatprep.subr.bf16.mxu0 %v1713
    %2466 = vmatpush2.bf16.msra.mxu0 %v1712
    %2467 = vmatprep.subr.bf16.mxu0 %v1705
    %2468 = vmatpush2.bf16.msra.mxu0 %v1704
    %2469 = vmatprep.subr.bf16.mxu0 %v1697
    %2470 = vmatpush2.bf16.msra.mxu0 %v1696
    %2471 = vmatprep.mubr.bf16.mxu0 %v1785
    %2472 = vmatmul.mubr.bf16.gmra.mxu0 %v1784
    %v2473 = vpop.f32.mrf.mxu0
    %v2474 = vadd.f32 %v2431, %v2473
    %v2475 = vpop.f32.mrf.mxu0
    %v2476 = vadd.f32 %v2433, %v2475
    %v2477 = vpop.f32.mrf.mxu0
    %v2478 = vadd.f32 %v2435, %v2477
    %v2479 = vpop.f32.mrf.mxu0
    %v2480 = vadd.f32 %v2437, %v2479
    %2481 = vdwg.mxu0
    %v2482 = vld [vmem:[#allocation6] sm:$0xff]
    %v2484 = vlaneseq
    %v2485 = vshrl.u32 %v2484, 7
    %v2486 = vsub.s32 0, %v2485
    %v2487 = vrot.slane %v2482, %v2486
    %v2488 = vlaneseq
    %v2489 = vshrl.u32 %v2488, 7
    %v2490 = vsub.s32 1, %v2489
    %v2491 = vrot.slane %v2482, %v2490
    %v2492 = vlaneseq
    %v2493 = vshrl.u32 %v2492, 7
    %v2494 = vsub.s32 2, %v2493
    %v2495 = vrot.slane %v2482, %v2494
    %v2496 = vlaneseq
    %v2497 = vshrl.u32 %v2496, 7
    %v2498 = vsub.s32 3, %v2497
    %v2499 = vrot.slane %v2482, %v2498
    %v2500 = vlaneseq
    %v2501 = vshrl.u32 %v2500, 7
    %v2502 = vsub.s32 4, %v2501
    %v2503 = vrot.slane %v2482, %v2502
    %v2504 = vlaneseq
    %v2505 = vshrl.u32 %v2504, 7
    %v2506 = vsub.s32 5, %v2505
    %v2507 = vrot.slane %v2482, %v2506
    %v2508 = vlaneseq
    %v2509 = vshrl.u32 %v2508, 7
    %v2510 = vsub.s32 6, %v2509
    %v2511 = vrot.slane %v2482, %v2510
    %v2512 = vlaneseq
    %v2513 = vshrl.u32 %v2512, 7
    %v2514 = vsub.s32 7, %v2513
    %v2515 = vrot.slane %v2482, %v2514
    %v2524 = vmul.f32 %v1958, %v2487
    %v2525 = vmul.f32 %v1960, %v2491
    %v2526 = vmul.f32 %v2130, %v2495
    %v2527 = vmul.f32 %v2132, %v2499
    %v2528 = vmul.f32 %v2302, %v2503
    %v2529 = vmul.f32 %v2304, %v2507
    %v2530 = vmul.f32 %v2474, %v2511
    %v2531 = vmul.f32 %v2476, %v2515
    %v2532 = vmul.f32 %v1962, %v2487
    %v2533 = vmul.f32 %v1964, %v2491
    %v2534 = vmul.f32 %v2134, %v2495
    %v2535 = vmul.f32 %v2136, %v2499
    %v2536 = vmul.f32 %v2306, %v2503
    %v2537 = vmul.f32 %v2308, %v2507
    %v2538 = vmul.f32 %v2478, %v2511
    %v2539 = vmul.f32 %v2480, %v2515
    %v2540 = vld [vmem:[#allocation7] sm:$0xff]
    %v2542 = vlaneseq
    %v2543 = vshrl.u32 %v2542, 7
    %v2544 = vsub.s32 0, %v2543
    %v2545 = vrot.slane %v2540, %v2544
    %v2546 = vlaneseq
    %v2547 = vshrl.u32 %v2546, 7
    %v2548 = vsub.s32 1, %v2547
    %v2549 = vrot.slane %v2540, %v2548
    %v2550 = vlaneseq
    %v2551 = vshrl.u32 %v2550, 7
    %v2552 = vsub.s32 2, %v2551
    %v2553 = vrot.slane %v2540, %v2552
    %v2554 = vlaneseq
    %v2555 = vshrl.u32 %v2554, 7
    %v2556 = vsub.s32 3, %v2555
    %v2557 = vrot.slane %v2540, %v2556
    %v2558 = vlaneseq
    %v2559 = vshrl.u32 %v2558, 7
    %v2560 = vsub.s32 4, %v2559
    %v2561 = vrot.slane %v2540, %v2560
    %v2562 = vlaneseq
    %v2563 = vshrl.u32 %v2562, 7
    %v2564 = vsub.s32 5, %v2563
    %v2565 = vrot.slane %v2540, %v2564
    %v2566 = vlaneseq
    %v2567 = vshrl.u32 %v2566, 7
    %v2568 = vsub.s32 6, %v2567
    %v2569 = vrot.slane %v2540, %v2568
    %v2570 = vlaneseq
    %v2571 = vshrl.u32 %v2570, 7
    %v2572 = vsub.s32 7, %v2571
    %v2573 = vrot.slane %v2540, %v2572
    %v2582 = vadd.f32 %v2524, %v2545
    %v2583 = vadd.f32 %v2525, %v2549
    %v2584 = vadd.f32 %v2526, %v2553
    %v2585 = vadd.f32 %v2527, %v2557
    %v2586 = vadd.f32 %v2528, %v2561
    %v2587 = vadd.f32 %v2529, %v2565
    %v2588 = vadd.f32 %v2530, %v2569
    %v2589 = vadd.f32 %v2531, %v2573
    %v2590 = vadd.f32 %v2532, %v2545
    %v2591 = vadd.f32 %v2533, %v2549
    %v2592 = vadd.f32 %v2534, %v2553
    %v2593 = vadd.f32 %v2535, %v2557
    %v2594 = vadd.f32 %v2536, %v2561
    %v2595 = vadd.f32 %v2537, %v2565
    %v2596 = vadd.f32 %v2538, %v2569
    %v2597 = vadd.f32 %v2539, %v2573
    %v2598 = vpack.c.bf16 %v2590, %v2582
    %v2599 = vpack.c.bf16 %v2591, %v2583
    %v2600 = vpack.c.bf16 %v2592, %v2584
    %v2601 = vpack.c.bf16 %v2593, %v2585
    %v2602 = vpack.c.bf16 %v2594, %v2586
    %v2603 = vpack.c.bf16 %v2595, %v2587
    %v2604 = vpack.c.bf16 %v2596, %v2588
    %v2605 = vpack.c.bf16 %v2597, %v2589
    %v2606 = vld [vmem:[#allocation9] sm:$0xff]
    %v2607 = vld [vmem:[#allocation9 + $0x8] sm:$0xff]
    %v2608 = vld [vmem:[#allocation9 + $0x10] sm:$0xff]
    %v2609 = vld [vmem:[#allocation9 + $0x18] sm:$0xff]
    %v2610 = vld [vmem:[#allocation9 + $0x20] sm:$0xff]
    %v2611 = vld [vmem:[#allocation9 + $0x28] sm:$0xff]
    %v2612 = vld [vmem:[#allocation9 + $0x30] sm:$0xff]
    %v2613 = vld [vmem:[#allocation9 + $0x38] sm:$0xff]
    %v2614 = vld [vmem:[#allocation9 + $0x40] sm:$0xff]
    %v2615 = vld [vmem:[#allocation9 + $0x48] sm:$0xff]
    %v2616 = vld [vmem:[#allocation9 + $0x50] sm:$0xff]
    %v2617 = vld [vmem:[#allocation9 + $0x58] sm:$0xff]
    %v2618 = vld [vmem:[#allocation9 + $0x60] sm:$0xff]
    %v2619 = vld [vmem:[#allocation9 + $0x68] sm:$0xff]
    %v2620 = vld [vmem:[#allocation9 + $0x70] sm:$0xff]
    %v2621 = vld [vmem:[#allocation9 + $0x78] sm:$0xff]
    %v2622 = vld [vmem:[#allocation9 + $0x80] sm:$0xff]
    %v2623 = vld [vmem:[#allocation9 + $0x88] sm:$0xff]
    %v2624 = vld [vmem:[#allocation9 + $0x90] sm:$0xff]
    %v2625 = vld [vmem:[#allocation9 + $0x98] sm:$0xff]
    %v2626 = vld [vmem:[#allocation9 + $0xa0] sm:$0xff]
    %v2627 = vld [vmem:[#allocation9 + $0xa8] sm:$0xff]
    %v2628 = vld [vmem:[#allocation9 + $0xb0] sm:$0xff]
    %v2629 = vld [vmem:[#allocation9 + $0xb8] sm:$0xff]
    %v2630 = vld [vmem:[#allocation9 + $0xc0] sm:$0xff]
    %v2631 = vld [vmem:[#allocation9 + $0xc8] sm:$0xff]
    %v2632 = vld [vmem:[#allocation9 + $0xd0] sm:$0xff]
    %v2633 = vld [vmem:[#allocation9 + $0xd8] sm:$0xff]
    %v2634 = vld [vmem:[#allocation9 + $0xe0] sm:$0xff]
    %v2635 = vld [vmem:[#allocation9 + $0xe8] sm:$0xff]
    %v2636 = vld [vmem:[#allocation9 + $0xf0] sm:$0xff]
    %v2637 = vld [vmem:[#allocation9 + $0xf8] sm:$0xff]
    %v2638 = vld [vmem:[#allocation9 + $0x100] sm:$0xff]
    %v2639 = vld [vmem:[#allocation9 + $0x108] sm:$0xff]
    %v2640 = vld [vmem:[#allocation9 + $0x110] sm:$0xff]
    %v2641 = vld [vmem:[#allocation9 + $0x118] sm:$0xff]
    %v2642 = vld [vmem:[#allocation9 + $0x120] sm:$0xff]
    %v2643 = vld [vmem:[#allocation9 + $0x128] sm:$0xff]
    %v2644 = vld [vmem:[#allocation9 + $0x130] sm:$0xff]
    %v2645 = vld [vmem:[#allocation9 + $0x138] sm:$0xff]
    %v2646 = vld [vmem:[#allocation9 + $0x140] sm:$0xff]
    %v2647 = vld [vmem:[#allocation9 + $0x148] sm:$0xff]
    %v2648 = vld [vmem:[#allocation9 + $0x150] sm:$0xff]
    %v2649 = vld [vmem:[#allocation9 + $0x158] sm:$0xff]
    %v2650 = vld [vmem:[#allocation9 + $0x160] sm:$0xff]
    %v2651 = vld [vmem:[#allocation9 + $0x168] sm:$0xff]
    %v2652 = vld [vmem:[#allocation9 + $0x170] sm:$0xff]
    %v2653 = vld [vmem:[#allocation9 + $0x178] sm:$0xff]
    %v2654 = vld [vmem:[#allocation9 + $0x180] sm:$0xff]
    %v2655 = vld [vmem:[#allocation9 + $0x188] sm:$0xff]
    %v2656 = vld [vmem:[#allocation9 + $0x190] sm:$0xff]
    %v2657 = vld [vmem:[#allocation9 + $0x198] sm:$0xff]
    %v2658 = vld [vmem:[#allocation9 + $0x1a0] sm:$0xff]
    %v2659 = vld [vmem:[#allocation9 + $0x1a8] sm:$0xff]
    %v2660 = vld [vmem:[#allocation9 + $0x1b0] sm:$0xff]
    %v2661 = vld [vmem:[#allocation9 + $0x1b8] sm:$0xff]
    %v2662 = vld [vmem:[#allocation9 + $0x1c0] sm:$0xff]
    %v2663 = vld [vmem:[#allocation9 + $0x1c8] sm:$0xff]
    %v2664 = vld [vmem:[#allocation9 + $0x1d0] sm:$0xff]
    %v2665 = vld [vmem:[#allocation9 + $0x1d8] sm:$0xff]
    %v2666 = vld [vmem:[#allocation9 + $0x1e0] sm:$0xff]
    %v2667 = vld [vmem:[#allocation9 + $0x1e8] sm:$0xff]
    %v2668 = vld [vmem:[#allocation9 + $0x1f0] sm:$0xff]
    %v2669 = vld [vmem:[#allocation9 + $0x1f8] sm:$0xff]
    %v2670 = vld [vmem:[#allocation9 + $0x200] sm:$0xff]
    %v2671 = vld [vmem:[#allocation9 + $0x208] sm:$0xff]
    %v2672 = vld [vmem:[#allocation9 + $0x210] sm:$0xff]
    %v2673 = vld [vmem:[#allocation9 + $0x218] sm:$0xff]
    %v2674 = vld [vmem:[#allocation9 + $0x220] sm:$0xff]
    %v2675 = vld [vmem:[#allocation9 + $0x228] sm:$0xff]
    %v2676 = vld [vmem:[#allocation9 + $0x230] sm:$0xff]
    %v2677 = vld [vmem:[#allocation9 + $0x238] sm:$0xff]
    %v2678 = vld [vmem:[#allocation9 + $0x240] sm:$0xff]
    %v2679 = vld [vmem:[#allocation9 + $0x248] sm:$0xff]
    %v2680 = vld [vmem:[#allocation9 + $0x250] sm:$0xff]
    %v2681 = vld [vmem:[#allocation9 + $0x258] sm:$0xff]
    %v2682 = vld [vmem:[#allocation9 + $0x260] sm:$0xff]
    %v2683 = vld [vmem:[#allocation9 + $0x268] sm:$0xff]
    %v2684 = vld [vmem:[#allocation9 + $0x270] sm:$0xff]
    %v2685 = vld [vmem:[#allocation9 + $0x278] sm:$0xff]
    %v2686 = vld [vmem:[#allocation9 + $0x280] sm:$0xff]
    %v2687 = vld [vmem:[#allocation9 + $0x288] sm:$0xff]
    %v2688 = vld [vmem:[#allocation9 + $0x290] sm:$0xff]
    %v2689 = vld [vmem:[#allocation9 + $0x298] sm:$0xff]
    %v2690 = vld [vmem:[#allocation9 + $0x2a0] sm:$0xff]
    %v2691 = vld [vmem:[#allocation9 + $0x2a8] sm:$0xff]
    %v2692 = vld [vmem:[#allocation9 + $0x2b0] sm:$0xff]
    %v2693 = vld [vmem:[#allocation9 + $0x2b8] sm:$0xff]
    %v2694 = vld [vmem:[#allocation9 + $0x2c0] sm:$0xff]
    %v2695 = vld [vmem:[#allocation9 + $0x2c8] sm:$0xff]
    %v2696 = vld [vmem:[#allocation9 + $0x2d0] sm:$0xff]
    %v2697 = vld [vmem:[#allocation9 + $0x2d8] sm:$0xff]
    %v2698 = vld [vmem:[#allocation9 + $0x2e0] sm:$0xff]
    %v2699 = vld [vmem:[#allocation9 + $0x2e8] sm:$0xff]
    %v2700 = vld [vmem:[#allocation9 + $0x2f0] sm:$0xff]
    %v2701 = vld [vmem:[#allocation9 + $0x2f8] sm:$0xff]
    %v2702 = vld [vmem:[#allocation9 + $0x300] sm:$0xff]
    %v2703 = vld [vmem:[#allocation9 + $0x308] sm:$0xff]
    %v2704 = vld [vmem:[#allocation9 + $0x310] sm:$0xff]
    %v2705 = vld [vmem:[#allocation9 + $0x318] sm:$0xff]
    %v2706 = vld [vmem:[#allocation9 + $0x320] sm:$0xff]
    %v2707 = vld [vmem:[#allocation9 + $0x328] sm:$0xff]
    %v2708 = vld [vmem:[#allocation9 + $0x330] sm:$0xff]
    %v2709 = vld [vmem:[#allocation9 + $0x338] sm:$0xff]
    %v2710 = vld [vmem:[#allocation9 + $0x340] sm:$0xff]
    %v2711 = vld [vmem:[#allocation9 + $0x348] sm:$0xff]
    %v2712 = vld [vmem:[#allocation9 + $0x350] sm:$0xff]
    %v2713 = vld [vmem:[#allocation9 + $0x358] sm:$0xff]
    %v2714 = vld [vmem:[#allocation9 + $0x360] sm:$0xff]
    %v2715 = vld [vmem:[#allocation9 + $0x368] sm:$0xff]
    %v2716 = vld [vmem:[#allocation9 + $0x370] sm:$0xff]
    %v2717 = vld [vmem:[#allocation9 + $0x378] sm:$0xff]
    %v2718 = vld [vmem:[#allocation9 + $0x380] sm:$0xff]
    %v2719 = vld [vmem:[#allocation9 + $0x388] sm:$0xff]
    %v2720 = vld [vmem:[#allocation9 + $0x390] sm:$0xff]
    %v2721 = vld [vmem:[#allocation9 + $0x398] sm:$0xff]
    %v2722 = vld [vmem:[#allocation9 + $0x3a0] sm:$0xff]
    %v2723 = vld [vmem:[#allocation9 + $0x3a8] sm:$0xff]
    %v2724 = vld [vmem:[#allocation9 + $0x3b0] sm:$0xff]
    %v2725 = vld [vmem:[#allocation9 + $0x3b8] sm:$0xff]
    %v2726 = vld [vmem:[#allocation9 + $0x3c0] sm:$0xff]
    %v2727 = vld [vmem:[#allocation9 + $0x3c8] sm:$0xff]
    %v2728 = vld [vmem:[#allocation9 + $0x3d0] sm:$0xff]
    %v2729 = vld [vmem:[#allocation9 + $0x3d8] sm:$0xff]
    %v2730 = vld [vmem:[#allocation9 + $0x3e0] sm:$0xff]
    %v2731 = vld [vmem:[#allocation9 + $0x3e8] sm:$0xff]
    %v2732 = vld [vmem:[#allocation9 + $0x3f0] sm:$0xff]
    %v2733 = vld [vmem:[#allocation9 + $0x3f8] sm:$0xff]
    %v2734 = vunpack.c.l.s8.bf16 %v2606
    %v2735 = vunpack.c.l.s8.bf16 %v2607
    %v2736 = vunpack.c.l.s8.bf16 %v2608
    %v2737 = vunpack.c.l.s8.bf16 %v2609
    %v2738 = vunpack.c.h.s8.bf16 %v2606
    %v2739 = vunpack.c.h.s8.bf16 %v2607
    %v2740 = vunpack.c.h.s8.bf16 %v2608
    %v2741 = vunpack.c.h.s8.bf16 %v2609
    %v2742 = vunpack.c.l.s8.bf16 %v2610
    %v2743 = vunpack.c.l.s8.bf16 %v2611
    %v2744 = vunpack.c.l.s8.bf16 %v2612
    %v2745 = vunpack.c.l.s8.bf16 %v2613
    %v2746 = vunpack.c.h.s8.bf16 %v2610
    %v2747 = vunpack.c.h.s8.bf16 %v2611
    %v2748 = vunpack.c.h.s8.bf16 %v2612
    %v2749 = vunpack.c.h.s8.bf16 %v2613
    %v2750 = vunpack.c.l.s8.bf16 %v2614
    %v2751 = vunpack.c.l.s8.bf16 %v2615
    %v2752 = vunpack.c.l.s8.bf16 %v2616
    %v2753 = vunpack.c.l.s8.bf16 %v2617
    %v2754 = vunpack.c.h.s8.bf16 %v2614
    %v2755 = vunpack.c.h.s8.bf16 %v2615
    %v2756 = vunpack.c.h.s8.bf16 %v2616
    %v2757 = vunpack.c.h.s8.bf16 %v2617
    %v2758 = vunpack.c.l.s8.bf16 %v2618
    %v2759 = vunpack.c.l.s8.bf16 %v2619
    %v2760 = vunpack.c.l.s8.bf16 %v2620
    %v2761 = vunpack.c.l.s8.bf16 %v2621
    %v2762 = vunpack.c.h.s8.bf16 %v2618
    %v2763 = vunpack.c.h.s8.bf16 %v2619
    %v2764 = vunpack.c.h.s8.bf16 %v2620
    %v2765 = vunpack.c.h.s8.bf16 %v2621
    %v2766 = vunpack.c.l.s8.bf16 %v2622
    %v2767 = vunpack.c.l.s8.bf16 %v2623
    %v2768 = vunpack.c.l.s8.bf16 %v2624
    %v2769 = vunpack.c.l.s8.bf16 %v2625
    %v2770 = vunpack.c.h.s8.bf16 %v2622
    %v2771 = vunpack.c.h.s8.bf16 %v2623
    %v2772 = vunpack.c.h.s8.bf16 %v2624
    %v2773 = vunpack.c.h.s8.bf16 %v2625
    %v2774 = vunpack.c.l.s8.bf16 %v2626
    %v2775 = vunpack.c.l.s8.bf16 %v2627
    %v2776 = vunpack.c.l.s8.bf16 %v2628
    %v2777 = vunpack.c.l.s8.bf16 %v2629
    %v2778 = vunpack.c.h.s8.bf16 %v2626
    %v2779 = vunpack.c.h.s8.bf16 %v2627
    %v2780 = vunpack.c.h.s8.bf16 %v2628
    %v2781 = vunpack.c.h.s8.bf16 %v2629
    %v2782 = vunpack.c.l.s8.bf16 %v2630
    %v2783 = vunpack.c.l.s8.bf16 %v2631
    %v2784 = vunpack.c.l.s8.bf16 %v2632
    %v2785 = vunpack.c.l.s8.bf16 %v2633
    %v2786 = vunpack.c.h.s8.bf16 %v2630
    %v2787 = vunpack.c.h.s8.bf16 %v2631
    %v2788 = vunpack.c.h.s8.bf16 %v2632
    %v2789 = vunpack.c.h.s8.bf16 %v2633
    %v2790 = vunpack.c.l.s8.bf16 %v2634
    %v2791 = vunpack.c.l.s8.bf16 %v2635
    %v2792 = vunpack.c.l.s8.bf16 %v2636
    %v2793 = vunpack.c.l.s8.bf16 %v2637
    %v2794 = vunpack.c.h.s8.bf16 %v2634
    %v2795 = vunpack.c.h.s8.bf16 %v2635
    %v2796 = vunpack.c.h.s8.bf16 %v2636
    %v2797 = vunpack.c.h.s8.bf16 %v2637
    %v2798 = vunpack.c.l.s8.bf16 %v2638
    %v2799 = vunpack.c.l.s8.bf16 %v2639
    %v2800 = vunpack.c.l.s8.bf16 %v2640
    %v2801 = vunpack.c.l.s8.bf16 %v2641
    %v2802 = vunpack.c.h.s8.bf16 %v2638
    %v2803 = vunpack.c.h.s8.bf16 %v2639
    %v2804 = vunpack.c.h.s8.bf16 %v2640
    %v2805 = vunpack.c.h.s8.bf16 %v2641
    %v2806 = vunpack.c.l.s8.bf16 %v2642
    %v2807 = vunpack.c.l.s8.bf16 %v2643
    %v2808 = vunpack.c.l.s8.bf16 %v2644
    %v2809 = vunpack.c.l.s8.bf16 %v2645
    %v2810 = vunpack.c.h.s8.bf16 %v2642
    %v2811 = vunpack.c.h.s8.bf16 %v2643
    %v2812 = vunpack.c.h.s8.bf16 %v2644
    %v2813 = vunpack.c.h.s8.bf16 %v2645
    %v2814 = vunpack.c.l.s8.bf16 %v2646
    %v2815 = vunpack.c.l.s8.bf16 %v2647
    %v2816 = vunpack.c.l.s8.bf16 %v2648
    %v2817 = vunpack.c.l.s8.bf16 %v2649
    %v2818 = vunpack.c.h.s8.bf16 %v2646
    %v2819 = vunpack.c.h.s8.bf16 %v2647
    %v2820 = vunpack.c.h.s8.bf16 %v2648
    %v2821 = vunpack.c.h.s8.bf16 %v2649
    %v2822 = vunpack.c.l.s8.bf16 %v2650
    %v2823 = vunpack.c.l.s8.bf16 %v2651
    %v2824 = vunpack.c.l.s8.bf16 %v2652
    %v2825 = vunpack.c.l.s8.bf16 %v2653
    %v2826 = vunpack.c.h.s8.bf16 %v2650
    %v2827 = vunpack.c.h.s8.bf16 %v2651
    %v2828 = vunpack.c.h.s8.bf16 %v2652
    %v2829 = vunpack.c.h.s8.bf16 %v2653
    %v2830 = vunpack.c.l.s8.bf16 %v2654
    %v2831 = vunpack.c.l.s8.bf16 %v2655
    %v2832 = vunpack.c.l.s8.bf16 %v2656
    %v2833 = vunpack.c.l.s8.bf16 %v2657
    %v2834 = vunpack.c.h.s8.bf16 %v2654
    %v2835 = vunpack.c.h.s8.bf16 %v2655
    %v2836 = vunpack.c.h.s8.bf16 %v2656
    %v2837 = vunpack.c.h.s8.bf16 %v2657
    %v2838 = vunpack.c.l.s8.bf16 %v2658
    %v2839 = vunpack.c.l.s8.bf16 %v2659
    %v2840 = vunpack.c.l.s8.bf16 %v2660
    %v2841 = vunpack.c.l.s8.bf16 %v2661
    %v2842 = vunpack.c.h.s8.bf16 %v2658
    %v2843 = vunpack.c.h.s8.bf16 %v2659
    %v2844 = vunpack.c.h.s8.bf16 %v2660
    %v2845 = vunpack.c.h.s8.bf16 %v2661
    %v2846 = vunpack.c.l.s8.bf16 %v2662
    %v2847 = vunpack.c.l.s8.bf16 %v2663
    %v2848 = vunpack.c.l.s8.bf16 %v2664
    %v2849 = vunpack.c.l.s8.bf16 %v2665
    %v2850 = vunpack.c.h.s8.bf16 %v2662
    %v2851 = vunpack.c.h.s8.bf16 %v2663
    %v2852 = vunpack.c.h.s8.bf16 %v2664
    %v2853 = vunpack.c.h.s8.bf16 %v2665
    %v2854 = vunpack.c.l.s8.bf16 %v2666
    %v2855 = vunpack.c.l.s8.bf16 %v2667
    %v2856 = vunpack.c.l.s8.bf16 %v2668
    %v2857 = vunpack.c.l.s8.bf16 %v2669
    %v2858 = vunpack.c.h.s8.bf16 %v2666
    %v2859 = vunpack.c.h.s8.bf16 %v2667
    %v2860 = vunpack.c.h.s8.bf16 %v2668
    %v2861 = vunpack.c.h.s8.bf16 %v2669
    %v2862 = vunpack.c.l.s8.bf16 %v2670
    %v2863 = vunpack.c.l.s8.bf16 %v2671
    %v2864 = vunpack.c.l.s8.bf16 %v2672
    %v2865 = vunpack.c.l.s8.bf16 %v2673
    %v2866 = vunpack.c.h.s8.bf16 %v2670
    %v2867 = vunpack.c.h.s8.bf16 %v2671
    %v2868 = vunpack.c.h.s8.bf16 %v2672
    %v2869 = vunpack.c.h.s8.bf16 %v2673
    %v2870 = vunpack.c.l.s8.bf16 %v2674
    %v2871 = vunpack.c.l.s8.bf16 %v2675
    %v2872 = vunpack.c.l.s8.bf16 %v2676
    %v2873 = vunpack.c.l.s8.bf16 %v2677
    %v2874 = vunpack.c.h.s8.bf16 %v2674
    %v2875 = vunpack.c.h.s8.bf16 %v2675
    %v2876 = vunpack.c.h.s8.bf16 %v2676
    %v2877 = vunpack.c.h.s8.bf16 %v2677
    %v2878 = vunpack.c.l.s8.bf16 %v2678
    %v2879 = vunpack.c.l.s8.bf16 %v2679
    %v2880 = vunpack.c.l.s8.bf16 %v2680
    %v2881 = vunpack.c.l.s8.bf16 %v2681
    %v2882 = vunpack.c.h.s8.bf16 %v2678
    %v2883 = vunpack.c.h.s8.bf16 %v2679
    %v2884 = vunpack.c.h.s8.bf16 %v2680
    %v2885 = vunpack.c.h.s8.bf16 %v2681
    %v2886 = vunpack.c.l.s8.bf16 %v2682
    %v2887 = vunpack.c.l.s8.bf16 %v2683
    %v2888 = vunpack.c.l.s8.bf16 %v2684
    %v2889 = vunpack.c.l.s8.bf16 %v2685
    %v2890 = vunpack.c.h.s8.bf16 %v2682
    %v2891 = vunpack.c.h.s8.bf16 %v2683
    %v2892 = vunpack.c.h.s8.bf16 %v2684
    %v2893 = vunpack.c.h.s8.bf16 %v2685
    %v2894 = vunpack.c.l.s8.bf16 %v2686
    %v2895 = vunpack.c.l.s8.bf16 %v2687
    %v2896 = vunpack.c.l.s8.bf16 %v2688
    %v2897 = vunpack.c.l.s8.bf16 %v2689
    %v2898 = vunpack.c.h.s8.bf16 %v2686
    %v2899 = vunpack.c.h.s8.bf16 %v2687
    %v2900 = vunpack.c.h.s8.bf16 %v2688
    %v2901 = vunpack.c.h.s8.bf16 %v2689
    %v2902 = vunpack.c.l.s8.bf16 %v2690
    %v2903 = vunpack.c.l.s8.bf16 %v2691
    %v2904 = vunpack.c.l.s8.bf16 %v2692
    %v2905 = vunpack.c.l.s8.bf16 %v2693
    %v2906 = vunpack.c.h.s8.bf16 %v2690
    %v2907 = vunpack.c.h.s8.bf16 %v2691
    %v2908 = vunpack.c.h.s8.bf16 %v2692
    %v2909 = vunpack.c.h.s8.bf16 %v2693
    %v2910 = vunpack.c.l.s8.bf16 %v2694
    %v2911 = vunpack.c.l.s8.bf16 %v2695
    %v2912 = vunpack.c.l.s8.bf16 %v2696
    %v2913 = vunpack.c.l.s8.bf16 %v2697
    %v2914 = vunpack.c.h.s8.bf16 %v2694
    %v2915 = vunpack.c.h.s8.bf16 %v2695
    %v2916 = vunpack.c.h.s8.bf16 %v2696
    %v2917 = vunpack.c.h.s8.bf16 %v2697
    %v2918 = vunpack.c.l.s8.bf16 %v2698
    %v2919 = vunpack.c.l.s8.bf16 %v2699
    %v2920 = vunpack.c.l.s8.bf16 %v2700
    %v2921 = vunpack.c.l.s8.bf16 %v2701
    %v2922 = vunpack.c.h.s8.bf16 %v2698
    %v2923 = vunpack.c.h.s8.bf16 %v2699
    %v2924 = vunpack.c.h.s8.bf16 %v2700
    %v2925 = vunpack.c.h.s8.bf16 %v2701
    %v2926 = vunpack.c.l.s8.bf16 %v2702
    %v2927 = vunpack.c.l.s8.bf16 %v2703
    %v2928 = vunpack.c.l.s8.bf16 %v2704
    %v2929 = vunpack.c.l.s8.bf16 %v2705
    %v2930 = vunpack.c.h.s8.bf16 %v2702
    %v2931 = vunpack.c.h.s8.bf16 %v2703
    %v2932 = vunpack.c.h.s8.bf16 %v2704
    %v2933 = vunpack.c.h.s8.bf16 %v2705
    %v2934 = vunpack.c.l.s8.bf16 %v2706
    %v2935 = vunpack.c.l.s8.bf16 %v2707
    %v2936 = vunpack.c.l.s8.bf16 %v2708
    %v2937 = vunpack.c.l.s8.bf16 %v2709
    %v2938 = vunpack.c.h.s8.bf16 %v2706
    %v2939 = vunpack.c.h.s8.bf16 %v2707
    %v2940 = vunpack.c.h.s8.bf16 %v2708
    %v2941 = vunpack.c.h.s8.bf16 %v2709
    %v2942 = vunpack.c.l.s8.bf16 %v2710
    %v2943 = vunpack.c.l.s8.bf16 %v2711
    %v2944 = vunpack.c.l.s8.bf16 %v2712
    %v2945 = vunpack.c.l.s8.bf16 %v2713
    %v2946 = vunpack.c.h.s8.bf16 %v2710
    %v2947 = vunpack.c.h.s8.bf16 %v2711
    %v2948 = vunpack.c.h.s8.bf16 %v2712
    %v2949 = vunpack.c.h.s8.bf16 %v2713
    %v2950 = vunpack.c.l.s8.bf16 %v2714
    %v2951 = vunpack.c.l.s8.bf16 %v2715
    %v2952 = vunpack.c.l.s8.bf16 %v2716
    %v2953 = vunpack.c.l.s8.bf16 %v2717
    %v2954 = vunpack.c.h.s8.bf16 %v2714
    %v2955 = vunpack.c.h.s8.bf16 %v2715
    %v2956 = vunpack.c.h.s8.bf16 %v2716
    %v2957 = vunpack.c.h.s8.bf16 %v2717
    %v2958 = vunpack.c.l.s8.bf16 %v2718
    %v2959 = vunpack.c.l.s8.bf16 %v2719
    %v2960 = vunpack.c.l.s8.bf16 %v2720
    %v2961 = vunpack.c.l.s8.bf16 %v2721
    %v2962 = vunpack.c.h.s8.bf16 %v2718
    %v2963 = vunpack.c.h.s8.bf16 %v2719
    %v2964 = vunpack.c.h.s8.bf16 %v2720
    %v2965 = vunpack.c.h.s8.bf16 %v2721
    %v2966 = vunpack.c.l.s8.bf16 %v2722
    %v2967 = vunpack.c.l.s8.bf16 %v2723
    %v2968 = vunpack.c.l.s8.bf16 %v2724
    %v2969 = vunpack.c.l.s8.bf16 %v2725
    %v2970 = vunpack.c.h.s8.bf16 %v2722
    %v2971 = vunpack.c.h.s8.bf16 %v2723
    %v2972 = vunpack.c.h.s8.bf16 %v2724
    %v2973 = vunpack.c.h.s8.bf16 %v2725
    %v2974 = vunpack.c.l.s8.bf16 %v2726
    %v2975 = vunpack.c.l.s8.bf16 %v2727
    %v2976 = vunpack.c.l.s8.bf16 %v2728
    %v2977 = vunpack.c.l.s8.bf16 %v2729
    %v2978 = vunpack.c.h.s8.bf16 %v2726
    %v2979 = vunpack.c.h.s8.bf16 %v2727
    %v2980 = vunpack.c.h.s8.bf16 %v2728
    %v2981 = vunpack.c.h.s8.bf16 %v2729
    %v2982 = vunpack.c.l.s8.bf16 %v2730
    %v2983 = vunpack.c.l.s8.bf16 %v2731
    %v2984 = vunpack.c.l.s8.bf16 %v2732
    %v2985 = vunpack.c.l.s8.bf16 %v2733
    %v2986 = vunpack.c.h.s8.bf16 %v2730
    %v2987 = vunpack.c.h.s8.bf16 %v2731
    %v2988 = vunpack.c.h.s8.bf16 %v2732
    %v2989 = vunpack.c.h.s8.bf16 %v2733
    %2990 = vmatprep.subr.bf16.mxu0 %v2763
    %2991 = vmatpush1.bf16.msra.mxu0 %v2762
    %2992 = vmatprep.subr.bf16.mxu0 %v2759
    %2993 = vmatpush1.bf16.msra.mxu0 %v2758
    %2994 = vmatprep.subr.bf16.mxu0 %v2755
    %2995 = vmatpush1.bf16.msra.mxu0 %v2754
    %2996 = vmatprep.subr.bf16.mxu0 %v2751
    %2997 = vmatpush1.bf16.msra.mxu0 %v2750
    %2998 = vmatprep.subr.bf16.mxu0 %v2747
    %2999 = vmatpush1.bf16.msra.mxu0 %v2746
    %3000 = vmatprep.subr.bf16.mxu0 %v2743
    %3001 = vmatpush1.bf16.msra.mxu0 %v2742
    %3002 = vmatprep.subr.bf16.mxu0 %v2739
    %3003 = vmatpush1.bf16.msra.mxu0 %v2738
    %3004 = vmatprep.subr.bf16.mxu0 %v2735
    %3005 = vmatpush1.bf16.msra.mxu0 %v2734
    %3006 = vmatprep.subr.bf16.mxu0 %v2795
    %3007 = vmatpush2.bf16.msra.mxu0 %v2794
    %3008 = vmatprep.subr.bf16.mxu0 %v2791
    %3009 = vmatpush2.bf16.msra.mxu0 %v2790
    %3010 = vmatprep.subr.bf16.mxu0 %v2787
    %3011 = vmatpush2.bf16.msra.mxu0 %v2786
    %3012 = vmatprep.subr.bf16.mxu0 %v2783
    %3013 = vmatpush2.bf16.msra.mxu0 %v2782
    %3014 = vmatprep.subr.bf16.mxu0 %v2779
    %3015 = vmatpush2.bf16.msra.mxu0 %v2778
    %3016 = vmatprep.subr.bf16.mxu0 %v2775
    %3017 = vmatpush2.bf16.msra.mxu0 %v2774
    %3018 = vmatprep.subr.bf16.mxu0 %v2771
    %3019 = vmatpush2.bf16.msra.mxu0 %v2770
    %3020 = vmatprep.subr.bf16.mxu0 %v2767
    %3021 = vmatpush2.bf16.msra.mxu0 %v2766
    %3022 = vmatprep.mubr.bf16.mxu0 %v971
    %3023 = vmatmul.mubr.bf16.gmra.mxu0 %v970
    %v3024 = vpop.f32.mrf.mxu0
    %v3025 = vadd.f32 0.0, %v3024
    %v3026 = vpop.f32.mrf.mxu0
    %v3027 = vadd.f32 0.0, %v3026
    %v3028 = vpop.f32.mrf.mxu0
    %v3029 = vadd.f32 0.0, %v3028
    %v3030 = vpop.f32.mrf.mxu0
    %v3031 = vadd.f32 0.0, %v3030
    %3032 = vdwg.mxu0
    %3033 = vmatprep.subr.bf16.mxu0 %v2827
    %3034 = vmatpush1.bf16.msra.mxu0 %v2826
    %3035 = vmatprep.subr.bf16.mxu0 %v2823
    %3036 = vmatpush1.bf16.msra.mxu0 %v2822
    %3037 = vmatprep.subr.bf16.mxu0 %v2819
    %3038 = vmatpush1.bf16.msra.mxu0 %v2818
    %3039 = vmatprep.subr.bf16.mxu0 %v2815
    %3040 = vmatpush1.bf16.msra.mxu0 %v2814
    %3041 = vmatprep.subr.bf16.mxu0 %v2811
    %3042 = vmatpush1.bf16.msra.mxu0 %v2810
    %3043 = vmatprep.subr.bf16.mxu0 %v2807
    %3044 = vmatpush1.bf16.msra.mxu0 %v2806
    %3045 = vmatprep.subr.bf16.mxu0 %v2803
    %3046 = vmatpush1.bf16.msra.mxu0 %v2802
    %3047 = vmatprep.subr.bf16.mxu0 %v2799
    %3048 = vmatpush1.bf16.msra.mxu0 %v2798
    %3049 = vmatprep.subr.bf16.mxu0 %v2859
    %3050 = vmatpush2.bf16.msra.mxu0 %v2858
    %3051 = vmatprep.subr.bf16.mxu0 %v2855
    %3052 = vmatpush2.bf16.msra.mxu0 %v2854
    %3053 = vmatprep.subr.bf16.mxu0 %v2851
    %3054 = vmatpush2.bf16.msra.mxu0 %v2850
    %3055 = vmatprep.subr.bf16.mxu0 %v2847
    %3056 = vmatpush2.bf16.msra.mxu0 %v2846
    %3057 = vmatprep.subr.bf16.mxu0 %v2843
    %3058 = vmatpush2.bf16.msra.mxu0 %v2842
    %3059 = vmatprep.subr.bf16.mxu0 %v2839
    %3060 = vmatpush2.bf16.msra.mxu0 %v2838
    %3061 = vmatprep.subr.bf16.mxu0 %v2835
    %3062 = vmatpush2.bf16.msra.mxu0 %v2834
    %3063 = vmatprep.subr.bf16.mxu0 %v2831
    %3064 = vmatpush2.bf16.msra.mxu0 %v2830
    %3065 = vmatprep.mubr.bf16.mxu0 %v973
    %3066 = vmatmul.mubr.bf16.gmra.mxu0 %v972
    %v3067 = vpop.f32.mrf.mxu0
    %v3068 = vadd.f32 %v3025, %v3067
    %v3069 = vpop.f32.mrf.mxu0
    %v3070 = vadd.f32 %v3027, %v3069
    %v3071 = vpop.f32.mrf.mxu0
    %v3072 = vadd.f32 %v3029, %v3071
    %v3073 = vpop.f32.mrf.mxu0
    %v3074 = vadd.f32 %v3031, %v3073
    %3075 = vdwg.mxu0
    %3076 = vmatprep.subr.bf16.mxu0 %v2891
    %3077 = vmatpush1.bf16.msra.mxu0 %v2890
    %3078 = vmatprep.subr.bf16.mxu0 %v2887
    %3079 = vmatpush1.bf16.msra.mxu0 %v2886
    %3080 = vmatprep.subr.bf16.mxu0 %v2883
    %3081 = vmatpush1.bf16.msra.mxu0 %v2882
    %3082 = vmatprep.subr.bf16.mxu0 %v2879
    %3083 = vmatpush1.bf16.msra.mxu0 %v2878
    %3084 = vmatprep.subr.bf16.mxu0 %v2875
    %3085 = vmatpush1.bf16.msra.mxu0 %v2874
    %3086 = vmatprep.subr.bf16.mxu0 %v2871
    %3087 = vmatpush1.bf16.msra.mxu0 %v2870
    %3088 = vmatprep.subr.bf16.mxu0 %v2867
    %3089 = vmatpush1.bf16.msra.mxu0 %v2866
    %3090 = vmatprep.subr.bf16.mxu0 %v2863
    %3091 = vmatpush1.bf16.msra.mxu0 %v2862
    %3092 = vmatprep.subr.bf16.mxu0 %v2923
    %3093 = vmatpush2.bf16.msra.mxu0 %v2922
    %3094 = vmatprep.subr.bf16.mxu0 %v2919
    %3095 = vmatpush2.bf16.msra.mxu0 %v2918
    %3096 = vmatprep.subr.bf16.mxu0 %v2915
    %3097 = vmatpush2.bf16.msra.mxu0 %v2914
    %3098 = vmatprep.subr.bf16.mxu0 %v2911
    %3099 = vmatpush2.bf16.msra.mxu0 %v2910
    %3100 = vmatprep.subr.bf16.mxu0 %v2907
    %3101 = vmatpush2.bf16.msra.mxu0 %v2906
    %3102 = vmatprep.subr.bf16.mxu0 %v2903
    %3103 = vmatpush2.bf16.msra.mxu0 %v2902
    %3104 = vmatprep.subr.bf16.mxu0 %v2899
    %3105 = vmatpush2.bf16.msra.mxu0 %v2898
    %3106 = vmatprep.subr.bf16.mxu0 %v2895
    %3107 = vmatpush2.bf16.msra.mxu0 %v2894
    %3108 = vmatprep.mubr.bf16.mxu0 %v975
    %3109 = vmatmul.mubr.bf16.gmra.mxu0 %v974
    %v3110 = vpop.f32.mrf.mxu0
    %v3111 = vadd.f32 %v3068, %v3110
    %v3112 = vpop.f32.mrf.mxu0
    %v3113 = vadd.f32 %v3070, %v3112
    %v3114 = vpop.f32.mrf.mxu0
    %v3115 = vadd.f32 %v3072, %v3114
    %v3116 = vpop.f32.mrf.mxu0
    %v3117 = vadd.f32 %v3074, %v3116
    %3118 = vdwg.mxu0
    %3119 = vmatprep.subr.bf16.mxu0 %v2955
    %3120 = vmatpush1.bf16.msra.mxu0 %v2954
    %3121 = vmatprep.subr.bf16.mxu0 %v2951
    %3122 = vmatpush1.bf16.msra.mxu0 %v2950
    %3123 = vmatprep.subr.bf16.mxu0 %v2947
    %3124 = vmatpush1.bf16.msra.mxu0 %v2946
    %3125 = vmatprep.subr.bf16.mxu0 %v2943
    %3126 = vmatpush1.bf16.msra.mxu0 %v2942
    %3127 = vmatprep.subr.bf16.mxu0 %v2939
    %3128 = vmatpush1.bf16.msra.mxu0 %v2938
    %3129 = vmatprep.subr.bf16.mxu0 %v2935
    %3130 = vmatpush1.bf16.msra.mxu0 %v2934
    %3131 = vmatprep.subr.bf16.mxu0 %v2931
    %3132 = vmatpush1.bf16.msra.mxu0 %v2930
    %3133 = vmatprep.subr.bf16.mxu0 %v2927
    %3134 = vmatpush1.bf16.msra.mxu0 %v2926
    %3135 = vmatprep.subr.bf16.mxu0 %v2987
    %3136 = vmatpush2.bf16.msra.mxu0 %v2986
    %3137 = vmatprep.subr.bf16.mxu0 %v2983
    %3138 = vmatpush2.bf16.msra.mxu0 %v2982
    %3139 = vmatprep.subr.bf16.mxu0 %v2979
    %3140 = vmatpush2.bf16.msra.mxu0 %v2978
    %3141 = vmatprep.subr.bf16.mxu0 %v2975
    %3142 = vmatpush2.bf16.msra.mxu0 %v2974
    %3143 = vmatprep.subr.bf16.mxu0 %v2971
    %3144 = vmatpush2.bf16.msra.mxu0 %v2970
    %3145 = vmatprep.subr.bf16.mxu0 %v2967
    %3146 = vmatpush2.bf16.msra.mxu0 %v2966
    %3147 = vmatprep.subr.bf16.mxu0 %v2963
    %3148 = vmatpush2.bf16.msra.mxu0 %v2962
    %3149 = vmatprep.subr.bf16.mxu0 %v2959
    %3150 = vmatpush2.bf16.msra.mxu0 %v2958
    %3151 = vmatprep.mubr.bf16.mxu0 %v977
    %3152 = vmatmul.mubr.bf16.gmra.mxu0 %v976
    %v3153 = vpop.f32.mrf.mxu0
    %v3154 = vadd.f32 %v3111, %v3153
    %v3155 = vpop.f32.mrf.mxu0
    %v3156 = vadd.f32 %v3113, %v3155
    %v3157 = vpop.f32.mrf.mxu0
    %v3158 = vadd.f32 %v3115, %v3157
    %v3159 = vpop.f32.mrf.mxu0
    %v3160 = vadd.f32 %v3117, %v3159
    %3161 = vdwg.mxu0
    %3162 = vmatprep.subr.bf16.mxu0 %v2765
    %3163 = vmatpush1.bf16.msra.mxu0 %v2764
    %3164 = vmatprep.subr.bf16.mxu0 %v2761
    %3165 = vmatpush1.bf16.msra.mxu0 %v2760
    %3166 = vmatprep.subr.bf16.mxu0 %v2757
    %3167 = vmatpush1.bf16.msra.mxu0 %v2756
    %3168 = vmatprep.subr.bf16.mxu0 %v2753
    %3169 = vmatpush1.bf16.msra.mxu0 %v2752
    %3170 = vmatprep.subr.bf16.mxu0 %v2749
    %3171 = vmatpush1.bf16.msra.mxu0 %v2748
    %3172 = vmatprep.subr.bf16.mxu0 %v2745
    %3173 = vmatpush1.bf16.msra.mxu0 %v2744
    %3174 = vmatprep.subr.bf16.mxu0 %v2741
    %3175 = vmatpush1.bf16.msra.mxu0 %v2740
    %3176 = vmatprep.subr.bf16.mxu0 %v2737
    %3177 = vmatpush1.bf16.msra.mxu0 %v2736
    %3178 = vmatprep.subr.bf16.mxu0 %v2797
    %3179 = vmatpush2.bf16.msra.mxu0 %v2796
    %3180 = vmatprep.subr.bf16.mxu0 %v2793
    %3181 = vmatpush2.bf16.msra.mxu0 %v2792
    %3182 = vmatprep.subr.bf16.mxu0 %v2789
    %3183 = vmatpush2.bf16.msra.mxu0 %v2788
    %3184 = vmatprep.subr.bf16.mxu0 %v2785
    %3185 = vmatpush2.bf16.msra.mxu0 %v2784
    %3186 = vmatprep.subr.bf16.mxu0 %v2781
    %3187 = vmatpush2.bf16.msra.mxu0 %v2780
    %3188 = vmatprep.subr.bf16.mxu0 %v2777
    %3189 = vmatpush2.bf16.msra.mxu0 %v2776
    %3190 = vmatprep.subr.bf16.mxu0 %v2773
    %3191 = vmatpush2.bf16.msra.mxu0 %v2772
    %3192 = vmatprep.subr.bf16.mxu0 %v2769
    %3193 = vmatpush2.bf16.msra.mxu0 %v2768
    %3194 = vmatprep.mubr.bf16.mxu0 %v971
    %3195 = vmatmul.mubr.bf16.gmra.mxu0 %v970
    %v3196 = vpop.f32.mrf.mxu0
    %v3197 = vadd.f32 0.0, %v3196
    %v3198 = vpop.f32.mrf.mxu0
    %v3199 = vadd.f32 0.0, %v3198
    %v3200 = vpop.f32.mrf.mxu0
    %v3201 = vadd.f32 0.0, %v3200
    %v3202 = vpop.f32.mrf.mxu0
    %v3203 = vadd.f32 0.0, %v3202
    %3204 = vdwg.mxu0
    %3205 = vmatprep.subr.bf16.mxu0 %v2829
    %3206 = vmatpush1.bf16.msra.mxu0 %v2828
    %3207 = vmatprep.subr.bf16.mxu0 %v2825
    %3208 = vmatpush1.bf16.msra.mxu0 %v2824
    %3209 = vmatprep.subr.bf16.mxu0 %v2821
    %3210 = vmatpush1.bf16.msra.mxu0 %v2820
    %3211 = vmatprep.subr.bf16.mxu0 %v2817
    %3212 = vmatpush1.bf16.msra.mxu0 %v2816
    %3213 = vmatprep.subr.bf16.mxu0 %v2813
    %3214 = vmatpush1.bf16.msra.mxu0 %v2812
    %3215 = vmatprep.subr.bf16.mxu0 %v2809
    %3216 = vmatpush1.bf16.msra.mxu0 %v2808
    %3217 = vmatprep.subr.bf16.mxu0 %v2805
    %3218 = vmatpush1.bf16.msra.mxu0 %v2804
    %3219 = vmatprep.subr.bf16.mxu0 %v2801
    %3220 = vmatpush1.bf16.msra.mxu0 %v2800
    %3221 = vmatprep.subr.bf16.mxu0 %v2861
    %3222 = vmatpush2.bf16.msra.mxu0 %v2860
    %3223 = vmatprep.subr.bf16.mxu0 %v2857
    %3224 = vmatpush2.bf16.msra.mxu0 %v2856
    %3225 = vmatprep.subr.bf16.mxu0 %v2853
    %3226 = vmatpush2.bf16.msra.mxu0 %v2852
    %3227 = vmatprep.subr.bf16.mxu0 %v2849
    %3228 = vmatpush2.bf16.msra.mxu0 %v2848
    %3229 = vmatprep.subr.bf16.mxu0 %v2845
    %3230 = vmatpush2.bf16.msra.mxu0 %v2844
    %3231 = vmatprep.subr.bf16.mxu0 %v2841
    %3232 = vmatpush2.bf16.msra.mxu0 %v2840
    %3233 = vmatprep.subr.bf16.mxu0 %v2837
    %3234 = vmatpush2.bf16.msra.mxu0 %v2836
    %3235 = vmatprep.subr.bf16.mxu0 %v2833
    %3236 = vmatpush2.bf16.msra.mxu0 %v2832
    %3237 = vmatprep.mubr.bf16.mxu0 %v973
    %3238 = vmatmul.mubr.bf16.gmra.mxu0 %v972
    %v3239 = vpop.f32.mrf.mxu0
    %v3240 = vadd.f32 %v3197, %v3239
    %v3241 = vpop.f32.mrf.mxu0
    %v3242 = vadd.f32 %v3199, %v3241
    %v3243 = vpop.f32.mrf.mxu0
    %v3244 = vadd.f32 %v3201, %v3243
    %v3245 = vpop.f32.mrf.mxu0
    %v3246 = vadd.f32 %v3203, %v3245
    %3247 = vdwg.mxu0
    %3248 = vmatprep.subr.bf16.mxu0 %v2893
    %3249 = vmatpush1.bf16.msra.mxu0 %v2892
    %3250 = vmatprep.subr.bf16.mxu0 %v2889
    %3251 = vmatpush1.bf16.msra.mxu0 %v2888
    %3252 = vmatprep.subr.bf16.mxu0 %v2885
    %3253 = vmatpush1.bf16.msra.mxu0 %v2884
    %3254 = vmatprep.subr.bf16.mxu0 %v2881
    %3255 = vmatpush1.bf16.msra.mxu0 %v2880
    %3256 = vmatprep.subr.bf16.mxu0 %v2877
    %3257 = vmatpush1.bf16.msra.mxu0 %v2876
    %3258 = vmatprep.subr.bf16.mxu0 %v2873
    %3259 = vmatpush1.bf16.msra.mxu0 %v2872
    %3260 = vmatprep.subr.bf16.mxu0 %v2869
    %3261 = vmatpush1.bf16.msra.mxu0 %v2868
    %3262 = vmatprep.subr.bf16.mxu0 %v2865
    %3263 = vmatpush1.bf16.msra.mxu0 %v2864
    %3264 = vmatprep.subr.bf16.mxu0 %v2925
    %3265 = vmatpush2.bf16.msra.mxu0 %v2924
    %3266 = vmatprep.subr.bf16.mxu0 %v2921
    %3267 = vmatpush2.bf16.msra.mxu0 %v2920
    %3268 = vmatprep.subr.bf16.mxu0 %v2917
    %3269 = vmatpush2.bf16.msra.mxu0 %v2916
    %3270 = vmatprep.subr.bf16.mxu0 %v2913
    %3271 = vmatpush2.bf16.msra.mxu0 %v2912
    %3272 = vmatprep.subr.bf16.mxu0 %v2909
    %3273 = vmatpush2.bf16.msra.mxu0 %v2908
    %3274 = vmatprep.subr.bf16.mxu0 %v2905
    %3275 = vmatpush2.bf16.msra.mxu0 %v2904
    %3276 = vmatprep.subr.bf16.mxu0 %v2901
    %3277 = vmatpush2.bf16.msra.mxu0 %v2900
    %3278 = vmatprep.subr.bf16.mxu0 %v2897
    %3279 = vmatpush2.bf16.msra.mxu0 %v2896
    %3280 = vmatprep.mubr.bf16.mxu0 %v975
    %3281 = vmatmul.mubr.bf16.gmra.mxu0 %v974
    %v3282 = vpop.f32.mrf.mxu0
    %v3283 = vadd.f32 %v3240, %v3282
    %v3284 = vpop.f32.mrf.mxu0
    %v3285 = vadd.f32 %v3242, %v3284
    %v3286 = vpop.f32.mrf.mxu0
    %v3287 = vadd.f32 %v3244, %v3286
    %v3288 = vpop.f32.mrf.mxu0
    %v3289 = vadd.f32 %v3246, %v3288
    %3290 = vdwg.mxu0
    %3291 = vmatprep.subr.bf16.mxu0 %v2957
    %3292 = vmatpush1.bf16.msra.mxu0 %v2956
    %3293 = vmatprep.subr.bf16.mxu0 %v2953
    %3294 = vmatpush1.bf16.msra.mxu0 %v2952
    %3295 = vmatprep.subr.bf16.mxu0 %v2949
    %3296 = vmatpush1.bf16.msra.mxu0 %v2948
    %3297 = vmatprep.subr.bf16.mxu0 %v2945
    %3298 = vmatpush1.bf16.msra.mxu0 %v2944
    %3299 = vmatprep.subr.bf16.mxu0 %v2941
    %3300 = vmatpush1.bf16.msra.mxu0 %v2940
    %3301 = vmatprep.subr.bf16.mxu0 %v2937
    %3302 = vmatpush1.bf16.msra.mxu0 %v2936
    %3303 = vmatprep.subr.bf16.mxu0 %v2933
    %3304 = vmatpush1.bf16.msra.mxu0 %v2932
    %3305 = vmatprep.subr.bf16.mxu0 %v2929
    %3306 = vmatpush1.bf16.msra.mxu0 %v2928
    %3307 = vmatprep.subr.bf16.mxu0 %v2989
    %3308 = vmatpush2.bf16.msra.mxu0 %v2988
    %3309 = vmatprep.subr.bf16.mxu0 %v2985
    %3310 = vmatpush2.bf16.msra.mxu0 %v2984
    %3311 = vmatprep.subr.bf16.mxu0 %v2981
    %3312 = vmatpush2.bf16.msra.mxu0 %v2980
    %3313 = vmatprep.subr.bf16.mxu0 %v2977
    %3314 = vmatpush2.bf16.msra.mxu0 %v2976
    %3315 = vmatprep.subr.bf16.mxu0 %v2973
    %3316 = vmatpush2.bf16.msra.mxu0 %v2972
    %3317 = vmatprep.subr.bf16.mxu0 %v2969
    %3318 = vmatpush2.bf16.msra.mxu0 %v2968
    %3319 = vmatprep.subr.bf16.mxu0 %v2965
    %3320 = vmatpush2.bf16.msra.mxu0 %v2964
    %3321 = vmatprep.subr.bf16.mxu0 %v2961
    %3322 = vmatpush2.bf16.msra.mxu0 %v2960
    %3323 = vmatprep.mubr.bf16.mxu0 %v977
    %3324 = vmatmul.mubr.bf16.gmra.mxu0 %v976
    %v3325 = vpop.f32.mrf.mxu0
    %v3326 = vadd.f32 %v3283, %v3325
    %v3327 = vpop.f32.mrf.mxu0
    %v3328 = vadd.f32 %v3285, %v3327
    %v3329 = vpop.f32.mrf.mxu0
    %v3330 = vadd.f32 %v3287, %v3329
    %v3331 = vpop.f32.mrf.mxu0
    %v3332 = vadd.f32 %v3289, %v3331
    %3333 = vdwg.mxu0
    %v3334 = vld [vmem:[#allocation10] sm:$0xf]
    %v3336 = vlaneseq
    %v3337 = vshrl.u32 %v3336, 7
    %v3338 = vsub.s32 0, %v3337
    %v3339 = vrot.slane %v3334, %v3338
    %v3340 = vlaneseq
    %v3341 = vshrl.u32 %v3340, 7
    %v3342 = vsub.s32 1, %v3341
    %v3343 = vrot.slane %v3334, %v3342
    %v3344 = vlaneseq
    %v3345 = vshrl.u32 %v3344, 7
    %v3346 = vsub.s32 2, %v3345
    %v3347 = vrot.slane %v3334, %v3346
    %v3348 = vlaneseq
    %v3349 = vshrl.u32 %v3348, 7
    %v3350 = vsub.s32 3, %v3349
    %v3351 = vrot.slane %v3334, %v3350
    %v3356 = vmul.f32 %v3154, %v3339
    %v3357 = vmul.f32 %v3156, %v3343
    %v3358 = vmul.f32 %v3326, %v3347
    %v3359 = vmul.f32 %v3328, %v3351
    %v3360 = vmul.f32 %v3158, %v3339
    %v3361 = vmul.f32 %v3160, %v3343
    %v3362 = vmul.f32 %v3330, %v3347
    %v3363 = vmul.f32 %v3332, %v3351
    %v3364 = vld [vmem:[#allocation12] sm:$0xf]
    %v3366 = vlaneseq
    %v3367 = vshrl.u32 %v3366, 7
    %v3368 = vsub.s32 0, %v3367
    %v3369 = vrot.slane %v3364, %v3368
    %v3370 = vlaneseq
    %v3371 = vshrl.u32 %v3370, 7
    %v3372 = vsub.s32 1, %v3371
    %v3373 = vrot.slane %v3364, %v3372
    %v3374 = vlaneseq
    %v3375 = vshrl.u32 %v3374, 7
    %v3376 = vsub.s32 2, %v3375
    %v3377 = vrot.slane %v3364, %v3376
    %v3378 = vlaneseq
    %v3379 = vshrl.u32 %v3378, 7
    %v3380 = vsub.s32 3, %v3379
    %v3381 = vrot.slane %v3364, %v3380
    %v3386 = vadd.f32 %v3356, %v3369
    %v3387 = vadd.f32 %v3357, %v3373
    %v3388 = vadd.f32 %v3358, %v3377
    %v3389 = vadd.f32 %v3359, %v3381
    %v3390 = vadd.f32 %v3360, %v3369
    %v3391 = vadd.f32 %v3361, %v3373
    %v3392 = vadd.f32 %v3362, %v3377
    %v3393 = vadd.f32 %v3363, %v3381
    %v3394 = vmax.f32 %v3386, 0.0
    %v3395 = vmax.f32 %v3387, 0.0
    %v3396 = vmax.f32 %v3388, 0.0
    %v3397 = vmax.f32 %v3389, 0.0
    %v3398 = vmax.f32 %v3390, 0.0
    %v3399 = vmax.f32 %v3391, 0.0
    %v3400 = vmax.f32 %v3392, 0.0
    %v3401 = vmax.f32 %v3393, 0.0
    %v3402 = vpack.c.bf16 %v3398, %v3394
    %v3403 = vpack.c.bf16 %v3399, %v3395
    %v3404 = vpack.c.bf16 %v3400, %v3396
    %v3405 = vpack.c.bf16 %v3401, %v3397
    %v3406 = vld [vmem:[%s23] sm:$0xff]
    %v3407 = vld [vmem:[%s23 + $0x8] sm:$0xff]
    %v3408 = vld [vmem:[%s23 + $0x10] sm:$0xff]
    %v3409 = vld [vmem:[%s23 + $0x18] sm:$0xff]
    %v3410 = vld [vmem:[%s23 + $0x20] sm:$0xff]
    %v3411 = vld [vmem:[%s23 + $0x28] sm:$0xff]
    %v3412 = vld [vmem:[%s23 + $0x30] sm:$0xff]
    %v3413 = vld [vmem:[%s23 + $0x38] sm:$0xff]
    %v3414 = vld [vmem:[%s23 + $0x40] sm:$0xff]
    %v3415 = vld [vmem:[%s23 + $0x48] sm:$0xff]
    %v3416 = vld [vmem:[%s23 + $0x50] sm:$0xff]
    %v3417 = vld [vmem:[%s23 + $0x58] sm:$0xff]
    %v3418 = vld [vmem:[%s23 + $0x60] sm:$0xff]
    %v3419 = vld [vmem:[%s23 + $0x68] sm:$0xff]
    %v3420 = vld [vmem:[%s23 + $0x70] sm:$0xff]
    %v3421 = vld [vmem:[%s23 + $0x78] sm:$0xff]
    %v3422 = vld [vmem:[%s23 + $0x80] sm:$0xff]
    %v3423 = vld [vmem:[%s23 + $0x88] sm:$0xff]
    %v3424 = vld [vmem:[%s23 + $0x90] sm:$0xff]
    %v3425 = vld [vmem:[%s23 + $0x98] sm:$0xff]
    %v3426 = vld [vmem:[%s23 + $0xa0] sm:$0xff]
    %v3427 = vld [vmem:[%s23 + $0xa8] sm:$0xff]
    %v3428 = vld [vmem:[%s23 + $0xb0] sm:$0xff]
    %v3429 = vld [vmem:[%s23 + $0xb8] sm:$0xff]
    %v3430 = vld [vmem:[%s23 + $0xc0] sm:$0xff]
    %v3431 = vld [vmem:[%s23 + $0xc8] sm:$0xff]
    %v3432 = vld [vmem:[%s23 + $0xd0] sm:$0xff]
    %v3433 = vld [vmem:[%s23 + $0xd8] sm:$0xff]
    %v3434 = vld [vmem:[%s23 + $0xe0] sm:$0xff]
    %v3435 = vld [vmem:[%s23 + $0xe8] sm:$0xff]
    %v3436 = vld [vmem:[%s23 + $0xf0] sm:$0xff]
    %v3437 = vld [vmem:[%s23 + $0xf8] sm:$0xff]
    %v3438 = vunpack.c.l.s8.bf16 %v3406
    %v3439 = vunpack.c.l.s8.bf16 %v3407
    %v3440 = vunpack.c.h.s8.bf16 %v3406
    %v3441 = vunpack.c.h.s8.bf16 %v3407
    %v3442 = vunpack.c.l.s8.bf16 %v3408
    %v3443 = vunpack.c.l.s8.bf16 %v3409
    %v3444 = vunpack.c.h.s8.bf16 %v3408
    %v3445 = vunpack.c.h.s8.bf16 %v3409
    %v3446 = vunpack.c.l.s8.bf16 %v3410
    %v3447 = vunpack.c.l.s8.bf16 %v3411
    %v3448 = vunpack.c.h.s8.bf16 %v3410
    %v3449 = vunpack.c.h.s8.bf16 %v3411
    %v3450 = vunpack.c.l.s8.bf16 %v3412
    %v3451 = vunpack.c.l.s8.bf16 %v3413
    %v3452 = vunpack.c.h.s8.bf16 %v3412
    %v3453 = vunpack.c.h.s8.bf16 %v3413
    %v3454 = vunpack.c.l.s8.bf16 %v3414
    %v3455 = vunpack.c.l.s8.bf16 %v3415
    %v3456 = vunpack.c.h.s8.bf16 %v3414
    %v3457 = vunpack.c.h.s8.bf16 %v3415
    %v3458 = vunpack.c.l.s8.bf16 %v3416
    %v3459 = vunpack.c.l.s8.bf16 %v3417
    %v3460 = vunpack.c.h.s8.bf16 %v3416
    %v3461 = vunpack.c.h.s8.bf16 %v3417
    %v3462 = vunpack.c.l.s8.bf16 %v3418
    %v3463 = vunpack.c.l.s8.bf16 %v3419
    %v3464 = vunpack.c.h.s8.bf16 %v3418
    %v3465 = vunpack.c.h.s8.bf16 %v3419
    %v3466 = vunpack.c.l.s8.bf16 %v3420
    %v3467 = vunpack.c.l.s8.bf16 %v3421
    %v3468 = vunpack.c.h.s8.bf16 %v3420
    %v3469 = vunpack.c.h.s8.bf16 %v3421
    %v3470 = vunpack.c.l.s8.bf16 %v3422
    %v3471 = vunpack.c.l.s8.bf16 %v3423
    %v3472 = vunpack.c.h.s8.bf16 %v3422
    %v3473 = vunpack.c.h.s8.bf16 %v3423
    %v3474 = vunpack.c.l.s8.bf16 %v3424
    %v3475 = vunpack.c.l.s8.bf16 %v3425
    %v3476 = vunpack.c.h.s8.bf16 %v3424
    %v3477 = vunpack.c.h.s8.bf16 %v3425
    %v3478 = vunpack.c.l.s8.bf16 %v3426
    %v3479 = vunpack.c.l.s8.bf16 %v3427
    %v3480 = vunpack.c.h.s8.bf16 %v3426
    %v3481 = vunpack.c.h.s8.bf16 %v3427
    %v3482 = vunpack.c.l.s8.bf16 %v3428
    %v3483 = vunpack.c.l.s8.bf16 %v3429
    %v3484 = vunpack.c.h.s8.bf16 %v3428
    %v3485 = vunpack.c.h.s8.bf16 %v3429
    %v3486 = vunpack.c.l.s8.bf16 %v3430
    %v3487 = vunpack.c.l.s8.bf16 %v3431
    %v3488 = vunpack.c.h.s8.bf16 %v3430
    %v3489 = vunpack.c.h.s8.bf16 %v3431
    %v3490 = vunpack.c.l.s8.bf16 %v3432
    %v3491 = vunpack.c.l.s8.bf16 %v3433
    %v3492 = vunpack.c.h.s8.bf16 %v3432
    %v3493 = vunpack.c.h.s8.bf16 %v3433
    %v3494 = vunpack.c.l.s8.bf16 %v3434
    %v3495 = vunpack.c.l.s8.bf16 %v3435
    %v3496 = vunpack.c.h.s8.bf16 %v3434
    %v3497 = vunpack.c.h.s8.bf16 %v3435
    %v3498 = vunpack.c.l.s8.bf16 %v3436
    %v3499 = vunpack.c.l.s8.bf16 %v3437
    %v3500 = vunpack.c.h.s8.bf16 %v3436
    %v3501 = vunpack.c.h.s8.bf16 %v3437
    %3502 = vmatprep.subr.bf16.mxu0 %v3453
    %3503 = vmatpush1.bf16.msra.mxu0 %v3452
    %3504 = vmatprep.subr.bf16.mxu0 %v3451
    %3505 = vmatpush1.bf16.msra.mxu0 %v3450
    %3506 = vmatprep.subr.bf16.mxu0 %v3449
    %3507 = vmatpush1.bf16.msra.mxu0 %v3448
    %3508 = vmatprep.subr.bf16.mxu0 %v3447
    %3509 = vmatpush1.bf16.msra.mxu0 %v3446
    %3510 = vmatprep.subr.bf16.mxu0 %v3445
    %3511 = vmatpush1.bf16.msra.mxu0 %v3444
    %3512 = vmatprep.subr.bf16.mxu0 %v3443
    %3513 = vmatpush1.bf16.msra.mxu0 %v3442
    %3514 = vmatprep.subr.bf16.mxu0 %v3441
    %3515 = vmatpush1.bf16.msra.mxu0 %v3440
    %3516 = vmatprep.subr.bf16.mxu0 %v3439
    %3517 = vmatpush1.bf16.msra.mxu0 %v3438
    %3518 = vmatprep.subr.bf16.mxu0 %v3469
    %3519 = vmatpush2.bf16.msra.mxu0 %v3468
    %3520 = vmatprep.subr.bf16.mxu0 %v3467
    %3521 = vmatpush2.bf16.msra.mxu0 %v3466
    %3522 = vmatprep.subr.bf16.mxu0 %v3465
    %3523 = vmatpush2.bf16.msra.mxu0 %v3464
    %3524 = vmatprep.subr.bf16.mxu0 %v3463
    %3525 = vmatpush2.bf16.msra.mxu0 %v3462
    %3526 = vmatprep.subr.bf16.mxu0 %v3461
    %3527 = vmatpush2.bf16.msra.mxu0 %v3460
    %3528 = vmatprep.subr.bf16.mxu0 %v3459
    %3529 = vmatpush2.bf16.msra.mxu0 %v3458
    %3530 = vmatprep.subr.bf16.mxu0 %v3457
    %3531 = vmatpush2.bf16.msra.mxu0 %v3456
    %3532 = vmatprep.subr.bf16.mxu0 %v3455
    %3533 = vmatpush2.bf16.msra.mxu0 %v3454
    %3534 = vmatprep.mubr.bf16.mxu0 %v3403
    %3535 = vmatmul.mubr.bf16.gmra.mxu0 %v3402
    %v3536 = vpop.f32.mrf.mxu0
    %v3537 = vadd.f32 0.0, %v3536
    %v3538 = vpop.f32.mrf.mxu0
    %v3539 = vadd.f32 0.0, %v3538
    %v3540 = vpop.f32.mrf.mxu0
    %v3541 = vadd.f32 0.0, %v3540
    %v3542 = vpop.f32.mrf.mxu0
    %v3543 = vadd.f32 0.0, %v3542
    %3544 = vdwg.mxu0
    %3545 = vmatprep.subr.bf16.mxu0 %v3485
    %3546 = vmatpush1.bf16.msra.mxu0 %v3484
    %3547 = vmatprep.subr.bf16.mxu0 %v3483
    %3548 = vmatpush1.bf16.msra.mxu0 %v3482
    %3549 = vmatprep.subr.bf16.mxu0 %v3481
    %3550 = vmatpush1.bf16.msra.mxu0 %v3480
    %3551 = vmatprep.subr.bf16.mxu0 %v3479
    %3552 = vmatpush1.bf16.msra.mxu0 %v3478
    %3553 = vmatprep.subr.bf16.mxu0 %v3477
    %3554 = vmatpush1.bf16.msra.mxu0 %v3476
    %3555 = vmatprep.subr.bf16.mxu0 %v3475
    %3556 = vmatpush1.bf16.msra.mxu0 %v3474
    %3557 = vmatprep.subr.bf16.mxu0 %v3473
    %3558 = vmatpush1.bf16.msra.mxu0 %v3472
    %3559 = vmatprep.subr.bf16.mxu0 %v3471
    %3560 = vmatpush1.bf16.msra.mxu0 %v3470
    %3561 = vmatprep.subr.bf16.mxu0 %v3501
    %3562 = vmatpush2.bf16.msra.mxu0 %v3500
    %3563 = vmatprep.subr.bf16.mxu0 %v3499
    %3564 = vmatpush2.bf16.msra.mxu0 %v3498
    %3565 = vmatprep.subr.bf16.mxu0 %v3497
    %3566 = vmatpush2.bf16.msra.mxu0 %v3496
    %3567 = vmatprep.subr.bf16.mxu0 %v3495
    %3568 = vmatpush2.bf16.msra.mxu0 %v3494
    %3569 = vmatprep.subr.bf16.mxu0 %v3493
    %3570 = vmatpush2.bf16.msra.mxu0 %v3492
    %3571 = vmatprep.subr.bf16.mxu0 %v3491
    %3572 = vmatpush2.bf16.msra.mxu0 %v3490
    %3573 = vmatprep.subr.bf16.mxu0 %v3489
    %3574 = vmatpush2.bf16.msra.mxu0 %v3488
    %3575 = vmatprep.subr.bf16.mxu0 %v3487
    %3576 = vmatpush2.bf16.msra.mxu0 %v3486
    %3577 = vmatprep.mubr.bf16.mxu0 %v3405
    %3578 = vmatmul.mubr.bf16.gmra.mxu0 %v3404
    %v3579 = vpop.f32.mrf.mxu0
    %v3580 = vadd.f32 %v3537, %v3579
    %v3581 = vpop.f32.mrf.mxu0
    %v3582 = vadd.f32 %v3539, %v3581
    %v3583 = vpop.f32.mrf.mxu0
    %v3584 = vadd.f32 %v3541, %v3583
    %v3585 = vpop.f32.mrf.mxu0
    %v3586 = vadd.f32 %v3543, %v3585
    %3587 = vdwg.mxu0
    %v3588 = vld [vmem:[#allocation13] sm:$0x3]
    %v3590 = vlaneseq
    %v3591 = vshrl.u32 %v3590, 7
    %v3592 = vsub.s32 0, %v3591
    %v3593 = vrot.slane %v3588, %v3592
    %v3594 = vlaneseq
    %v3595 = vshrl.u32 %v3594, 7
    %v3596 = vsub.s32 1, %v3595
    %v3597 = vrot.slane %v3588, %v3596
    %v3600 = vmul.f32 %v3580, %v3593
    %v3601 = vmul.f32 %v3582, %v3597
    %v3602 = vmul.f32 %v3584, %v3593
    %v3603 = vmul.f32 %v3586, %v3597
    %v3604 = vld [vmem:[#allocation15] sm:$0x3]
    %v3606 = vlaneseq
    %v3607 = vshrl.u32 %v3606, 7
    %v3608 = vsub.s32 0, %v3607
    %v3609 = vrot.slane %v3604, %v3608
    %v3610 = vlaneseq
    %v3611 = vshrl.u32 %v3610, 7
    %v3612 = vsub.s32 1, %v3611
    %v3613 = vrot.slane %v3604, %v3612
    %v3616 = vadd.f32 %v3600, %v3609
    %v3617 = vadd.f32 %v3601, %v3613
    %v3618 = vadd.f32 %v3602, %v3609
    %v3619 = vadd.f32 %v3603, %v3613
    %v3620 = vmax.f32 %v3616, 0.0
    %v3621 = vmax.f32 %v3617, 0.0
    %v3622 = vmax.f32 %v3618, 0.0
    %v3623 = vmax.f32 %v3619, 0.0
    %v3624 = vpack.c.bf16 %v3622, %v3620
    %v3625 = vpack.c.bf16 %v3623, %v3621
    %v3626 = vld [vmem:[%s29] sm:$0xff]
    %v3627 = vld [vmem:[%s29 + $0x8] sm:$0xff]
    %v3628 = vld [vmem:[%s29 + $0x10] sm:$0xff]
    %v3629 = vld [vmem:[%s29 + $0x18] sm:$0xff]
    %v3630 = vld [vmem:[%s29 + $0x20] sm:$0xff]
    %v3631 = vld [vmem:[%s29 + $0x28] sm:$0xff]
    %v3632 = vld [vmem:[%s29 + $0x30] sm:$0xff]
    %v3633 = vld [vmem:[%s29 + $0x38] sm:$0xff]
    %v3634 = vunpack.c.l.s8.bf16 %v3626
    %v3635 = vunpack.c.h.s8.bf16 %v3626
    %v3636 = vunpack.c.l.s8.bf16 %v3627
    %v3637 = vunpack.c.h.s8.bf16 %v3627
    %v3638 = vunpack.c.l.s8.bf16 %v3628
    %v3639 = vunpack.c.h.s8.bf16 %v3628
    %v3640 = vunpack.c.l.s8.bf16 %v3629
    %v3641 = vunpack.c.h.s8.bf16 %v3629
    %v3642 = vunpack.c.l.s8.bf16 %v3630
    %v3643 = vunpack.c.h.s8.bf16 %v3630
    %v3644 = vunpack.c.l.s8.bf16 %v3631
    %v3645 = vunpack.c.h.s8.bf16 %v3631
    %v3646 = vunpack.c.l.s8.bf16 %v3632
    %v3647 = vunpack.c.h.s8.bf16 %v3632
    %v3648 = vunpack.c.l.s8.bf16 %v3633
    %v3649 = vunpack.c.h.s8.bf16 %v3633
    %3650 = vmatprep.subr.bf16.mxu0 0
    %3651 = vmatpush1.bf16.msra.mxu0 %v3641
    %3652 = vmatprep.subr.bf16.mxu0 0
    %3653 = vmatpush1.bf16.msra.mxu0 %v3640
    %3654 = vmatprep.subr.bf16.mxu0 0
    %3655 = vmatpush1.bf16.msra.mxu0 %v3639
    %3656 = vmatprep.subr.bf16.mxu0 0
    %3657 = vmatpush1.bf16.msra.mxu0 %v3638
    %3658 = vmatprep.subr.bf16.mxu0 0
    %3659 = vmatpush1.bf16.msra.mxu0 %v3637
    %3660 = vmatprep.subr.bf16.mxu0 0
    %3661 = vmatpush1.bf16.msra.mxu0 %v3636
    %3662 = vmatprep.subr.bf16.mxu0 0
    %3663 = vmatpush1.bf16.msra.mxu0 %v3635
    %3664 = vmatprep.subr.bf16.mxu0 0
    %3665 = vmatpush1.bf16.msra.mxu0 %v3634
    %3666 = vmatprep.subr.bf16.mxu0 0
    %3667 = vmatpush2.bf16.msra.mxu0 %v3649
    %3668 = vmatprep.subr.bf16.mxu0 0
    %3669 = vmatpush2.bf16.msra.mxu0 %v3648
    %3670 = vmatprep.subr.bf16.mxu0 0
    %3671 = vmatpush2.bf16.msra.mxu0 %v3647
    %3672 = vmatprep.subr.bf16.mxu0 0
    %3673 = vmatpush2.bf16.msra.mxu0 %v3646
    %3674 = vmatprep.subr.bf16.mxu0 0
    %3675 = vmatpush2.bf16.msra.mxu0 %v3645
    %3676 = vmatprep.subr.bf16.mxu0 0
    %3677 = vmatpush2.bf16.msra.mxu0 %v3644
    %3678 = vmatprep.subr.bf16.mxu0 0
    %3679 = vmatpush2.bf16.msra.mxu0 %v3643
    %3680 = vmatprep.subr.bf16.mxu0 0
    %3681 = vmatpush2.bf16.msra.mxu0 %v3642
    %3682 = vmatprep.mubr.bf16.mxu0 %v3625
    %3683 = vmatmul.mubr.bf16.gmra.mxu0 %v3624
    %v3684 = vpop.f32.mrf.mxu0
    %v3685 = vadd.f32 0.0, %v3684
    %v3686 = vpop.f32.mrf.mxu0
    %v3687 = vpop.f32.mrf.mxu0
    %v3688 = vadd.f32 0.0, %v3687
    %v3689 = vpop.f32.mrf.mxu0
    %3690 = vdwg.mxu0
    %v3691 = vld [vmem:[#allocation16] sm:$0x1]
    %v3693 = vlaneseq
    %v3694 = vshrl.u32 %v3693, 7
    %v3695 = vsub.s32 0, %v3694
    %v3696 = vrot.slane %v3691, %v3695
    %v3698 = vmul.f32 %v3685, %v3696
    %v3699 = vmul.f32 %v3688, %v3696
    %v3700 = vld [vmem:[#allocation18] sm:$0x1]
    %v3702 = vlaneseq
    %v3703 = vshrl.u32 %v3702, 7
    %v3704 = vsub.s32 0, %v3703
    %v3705 = vrot.slane %v3700, %v3704
    %v3707 = vadd.f32 %v3698, %v3705
    %v3708 = vadd.f32 %v3699, %v3705
    %v3709 = vmax.f32 %v3707, 0.0
    %v3710 = vmax.f32 %v3708, 0.0
    %v3711 = vpack.c.bf16 %v3710, %v3709
    %v3712 = vld [vmem:[%s35] sm:$0xff]
    %v3713 = vld [vmem:[%s35 + $0x8] sm:$0xff]
    %v3714 = vld [vmem:[%s35 + $0x10] sm:$0xff]
    %v3715 = vld [vmem:[%s35 + $0x18] sm:$0xff]
    %v3716 = vunpack.c.l.s8.bf16 %v3712
    %v3717 = vunpack.c.h.s8.bf16 %v3712
    %v3718 = vunpack.c.l.s8.bf16 %v3713
    %v3719 = vunpack.c.h.s8.bf16 %v3713
    %v3720 = vunpack.c.l.s8.bf16 %v3714
    %v3721 = vunpack.c.h.s8.bf16 %v3714
    %v3722 = vunpack.c.l.s8.bf16 %v3715
    %v3723 = vunpack.c.h.s8.bf16 %v3715
    %3724 = vmatprep.subr.bf16.mxu0 0
    %3725 = vmatpush1.bf16.msra.mxu0 %v3723
    %3726 = vmatprep.subr.bf16.mxu0 0
    %3727 = vmatpush1.bf16.msra.mxu0 %v3722
    %3728 = vmatprep.subr.bf16.mxu0 0
    %3729 = vmatpush1.bf16.msra.mxu0 %v3721
    %3730 = vmatprep.subr.bf16.mxu0 0
    %3731 = vmatpush1.bf16.msra.mxu0 %v3720
    %3732 = vmatprep.subr.bf16.mxu0 0
    %3733 = vmatpush1.bf16.msra.mxu0 %v3719
    %3734 = vmatprep.subr.bf16.mxu0 0
    %3735 = vmatpush1.bf16.msra.mxu0 %v3718
    %3736 = vmatprep.subr.bf16.mxu0 0
    %3737 = vmatpush1.bf16.msra.mxu0 %v3717
    %3738 = vmatprep.subr.bf16.mxu0 0
    %3739 = vmatpush1.bf16.msra.mxu0 %v3716
    %3740 = vmatprep.subr.bf16.mxu0 0
    %3741 = vmatpush2.bf16.msra.mxu0 0
    %3742 = vmatprep.subr.bf16.mxu0 0
    %3743 = vmatpush2.bf16.msra.mxu0 0
    %3744 = vmatprep.subr.bf16.mxu0 0
    %3745 = vmatpush2.bf16.msra.mxu0 0
    %3746 = vmatprep.subr.bf16.mxu0 0
    %3747 = vmatpush2.bf16.msra.mxu0 0
    %3748 = vmatprep.subr.bf16.mxu0 0
    %3749 = vmatpush2.bf16.msra.mxu0 0
    %3750 = vmatprep.subr.bf16.mxu0 0
    %3751 = vmatpush2.bf16.msra.mxu0 0
    %3752 = vmatprep.subr.bf16.mxu0 0
    %3753 = vmatpush2.bf16.msra.mxu0 0
    %3754 = vmatprep.subr.bf16.mxu0 0
    %3755 = vmatpush2.bf16.msra.mxu0 0
    %3756 = vmatprep.mubr.bf16.mxu0 0
    %3757 = vmatmul.mubr.bf16.gmra.mxu0 %v3711
    %v3758 = vpop.f32.mrf.mxu0
    %v3759 = vadd.f32 0.0, %v3758
    %v3760 = vpop.f32.mrf.mxu0
    %v3761 = vpop.f32.mrf.mxu0
    %v3762 = vadd.f32 0.0, %v3761
    %v3763 = vpop.f32.mrf.mxu0
    %3764 = vdwg.mxu0
    %v3765 = vld [vmem:[#allocation19] sm:$0x1]
    %v3767 = vlaneseq
    %v3768 = vshrl.u32 %v3767, 7
    %v3769 = vsub.s32 0, %v3768
    %v3770 = vrot.slane %v3765, %v3769
    %v3772 = vmul.f32 %v3759, %v3770
    %v3773 = vmul.f32 %v3762, %v3770
    %v3774 = vld [vmem:[#allocation21] sm:$0x1]
    %v3776 = vlaneseq
    %v3777 = vshrl.u32 %v3776, 7
    %v3778 = vsub.s32 0, %v3777
    %v3779 = vrot.slane %v3774, %v3778
    %v3781 = vadd.f32 %v3772, %v3779
    %v3782 = vadd.f32 %v3773, %v3779
    %v3783 = vld [vmem:[#allocation22] sm:$0xff]
    %v3784 = vld [vmem:[#allocation22 + $0x8] sm:$0xff]
    %v3785 = vld [vmem:[#allocation22 + $0x10] sm:$0xff]
    %v3786 = vld [vmem:[#allocation22 + $0x18] sm:$0xff]
    %v3787 = vld [vmem:[#allocation22 + $0x20] sm:$0xff]
    %v3788 = vld [vmem:[#allocation22 + $0x28] sm:$0xff]
    %v3789 = vld [vmem:[#allocation22 + $0x30] sm:$0xff]
    %v3790 = vld [vmem:[#allocation22 + $0x38] sm:$0xff]
    %v3791 = vld [vmem:[#allocation22 + $0x40] sm:$0xff]
    %v3792 = vld [vmem:[#allocation22 + $0x48] sm:$0xff]
    %v3793 = vld [vmem:[#allocation22 + $0x50] sm:$0xff]
    %v3794 = vld [vmem:[#allocation22 + $0x58] sm:$0xff]
    %v3795 = vld [vmem:[#allocation22 + $0x60] sm:$0xff]
    %v3796 = vld [vmem:[#allocation22 + $0x68] sm:$0xff]
    %v3797 = vld [vmem:[#allocation22 + $0x70] sm:$0xff]
    %v3798 = vld [vmem:[#allocation22 + $0x78] sm:$0xff]
    %v3799 = vld [vmem:[#allocation22 + $0x80] sm:$0xff]
    %v3800 = vld [vmem:[#allocation22 + $0x88] sm:$0xff]
    %v3801 = vld [vmem:[#allocation22 + $0x90] sm:$0xff]
    %v3802 = vld [vmem:[#allocation22 + $0x98] sm:$0xff]
    %v3803 = vld [vmem:[#allocation22 + $0xa0] sm:$0xff]
    %v3804 = vld [vmem:[#allocation22 + $0xa8] sm:$0xff]
    %v3805 = vld [vmem:[#allocation22 + $0xb0] sm:$0xff]
    %v3806 = vld [vmem:[#allocation22 + $0xb8] sm:$0xff]
    %v3807 = vld [vmem:[#allocation22 + $0xc0] sm:$0xff]
    %v3808 = vld [vmem:[#allocation22 + $0xc8] sm:$0xff]
    %v3809 = vld [vmem:[#allocation22 + $0xd0] sm:$0xff]
    %v3810 = vld [vmem:[#allocation22 + $0xd8] sm:$0xff]
    %v3811 = vld [vmem:[#allocation22 + $0xe0] sm:$0xff]
    %v3812 = vld [vmem:[#allocation22 + $0xe8] sm:$0xff]
    %v3813 = vld [vmem:[#allocation22 + $0xf0] sm:$0xff]
    %v3814 = vld [vmem:[#allocation22 + $0xf8] sm:$0xff]
    %v3815 = vld [vmem:[#allocation22 + $0x100] sm:$0xff]
    %v3816 = vld [vmem:[#allocation22 + $0x108] sm:$0xff]
    %v3817 = vld [vmem:[#allocation22 + $0x110] sm:$0xff]
    %v3818 = vld [vmem:[#allocation22 + $0x118] sm:$0xff]
    %v3819 = vld [vmem:[#allocation22 + $0x120] sm:$0xff]
    %v3820 = vld [vmem:[#allocation22 + $0x128] sm:$0xff]
    %v3821 = vld [vmem:[#allocation22 + $0x130] sm:$0xff]
    %v3822 = vld [vmem:[#allocation22 + $0x138] sm:$0xff]
    %v3823 = vld [vmem:[#allocation22 + $0x140] sm:$0xff]
    %v3824 = vld [vmem:[#allocation22 + $0x148] sm:$0xff]
    %v3825 = vld [vmem:[#allocation22 + $0x150] sm:$0xff]
    %v3826 = vld [vmem:[#allocation22 + $0x158] sm:$0xff]
    %v3827 = vld [vmem:[#allocation22 + $0x160] sm:$0xff]
    %v3828 = vld [vmem:[#allocation22 + $0x168] sm:$0xff]
    %v3829 = vld [vmem:[#allocation22 + $0x170] sm:$0xff]
    %v3830 = vld [vmem:[#allocation22 + $0x178] sm:$0xff]
    %v3831 = vld [vmem:[#allocation22 + $0x180] sm:$0xff]
    %v3832 = vld [vmem:[#allocation22 + $0x188] sm:$0xff]
    %v3833 = vld [vmem:[#allocation22 + $0x190] sm:$0xff]
    %v3834 = vld [vmem:[#allocation22 + $0x198] sm:$0xff]
    %v3835 = vld [vmem:[#allocation22 + $0x1a0] sm:$0xff]
    %v3836 = vld [vmem:[#allocation22 + $0x1a8] sm:$0xff]
    %v3837 = vld [vmem:[#allocation22 + $0x1b0] sm:$0xff]
    %v3838 = vld [vmem:[#allocation22 + $0x1b8] sm:$0xff]
    %v3839 = vld [vmem:[#allocation22 + $0x1c0] sm:$0xff]
    %v3840 = vld [vmem:[#allocation22 + $0x1c8] sm:$0xff]
    %v3841 = vld [vmem:[#allocation22 + $0x1d0] sm:$0xff]
    %v3842 = vld [vmem:[#allocation22 + $0x1d8] sm:$0xff]
    %v3843 = vld [vmem:[#allocation22 + $0x1e0] sm:$0xff]
    %v3844 = vld [vmem:[#allocation22 + $0x1e8] sm:$0xff]
    %v3845 = vld [vmem:[#allocation22 + $0x1f0] sm:$0xff]
    %v3846 = vld [vmem:[#allocation22 + $0x1f8] sm:$0xff]
    %v3847 = vld [vmem:[#allocation22 + $0x200] sm:$0xff]
    %v3848 = vld [vmem:[#allocation22 + $0x208] sm:$0xff]
    %v3849 = vld [vmem:[#allocation22 + $0x210] sm:$0xff]
    %v3850 = vld [vmem:[#allocation22 + $0x218] sm:$0xff]
    %v3851 = vld [vmem:[#allocation22 + $0x220] sm:$0xff]
    %v3852 = vld [vmem:[#allocation22 + $0x228] sm:$0xff]
    %v3853 = vld [vmem:[#allocation22 + $0x230] sm:$0xff]
    %v3854 = vld [vmem:[#allocation22 + $0x238] sm:$0xff]
    %v3855 = vld [vmem:[#allocation22 + $0x240] sm:$0xff]
    %v3856 = vld [vmem:[#allocation22 + $0x248] sm:$0xff]
    %v3857 = vld [vmem:[#allocation22 + $0x250] sm:$0xff]
    %v3858 = vld [vmem:[#allocation22 + $0x258] sm:$0xff]
    %v3859 = vld [vmem:[#allocation22 + $0x260] sm:$0xff]
    %v3860 = vld [vmem:[#allocation22 + $0x268] sm:$0xff]
    %v3861 = vld [vmem:[#allocation22 + $0x270] sm:$0xff]
    %v3862 = vld [vmem:[#allocation22 + $0x278] sm:$0xff]
    %v3863 = vld [vmem:[#allocation22 + $0x280] sm:$0xff]
    %v3864 = vld [vmem:[#allocation22 + $0x288] sm:$0xff]
    %v3865 = vld [vmem:[#allocation22 + $0x290] sm:$0xff]
    %v3866 = vld [vmem:[#allocation22 + $0x298] sm:$0xff]
    %v3867 = vld [vmem:[#allocation22 + $0x2a0] sm:$0xff]
    %v3868 = vld [vmem:[#allocation22 + $0x2a8] sm:$0xff]
    %v3869 = vld [vmem:[#allocation22 + $0x2b0] sm:$0xff]
    %v3870 = vld [vmem:[#allocation22 + $0x2b8] sm:$0xff]
    %v3871 = vld [vmem:[#allocation22 + $0x2c0] sm:$0xff]
    %v3872 = vld [vmem:[#allocation22 + $0x2c8] sm:$0xff]
    %v3873 = vld [vmem:[#allocation22 + $0x2d0] sm:$0xff]
    %v3874 = vld [vmem:[#allocation22 + $0x2d8] sm:$0xff]
    %v3875 = vld [vmem:[#allocation22 + $0x2e0] sm:$0xff]
    %v3876 = vld [vmem:[#allocation22 + $0x2e8] sm:$0xff]
    %v3877 = vld [vmem:[#allocation22 + $0x2f0] sm:$0xff]
    %v3878 = vld [vmem:[#allocation22 + $0x2f8] sm:$0xff]
    %v3879 = vld [vmem:[#allocation22 + $0x300] sm:$0xff]
    %v3880 = vld [vmem:[#allocation22 + $0x308] sm:$0xff]
    %v3881 = vld [vmem:[#allocation22 + $0x310] sm:$0xff]
    %v3882 = vld [vmem:[#allocation22 + $0x318] sm:$0xff]
    %v3883 = vld [vmem:[#allocation22 + $0x320] sm:$0xff]
    %v3884 = vld [vmem:[#allocation22 + $0x328] sm:$0xff]
    %v3885 = vld [vmem:[#allocation22 + $0x330] sm:$0xff]
    %v3886 = vld [vmem:[#allocation22 + $0x338] sm:$0xff]
    %v3887 = vld [vmem:[#allocation22 + $0x340] sm:$0xff]
    %v3888 = vld [vmem:[#allocation22 + $0x348] sm:$0xff]
    %v3889 = vld [vmem:[#allocation22 + $0x350] sm:$0xff]
    %v3890 = vld [vmem:[#allocation22 + $0x358] sm:$0xff]
    %v3891 = vld [vmem:[#allocation22 + $0x360] sm:$0xff]
    %v3892 = vld [vmem:[#allocation22 + $0x368] sm:$0xff]
    %v3893 = vld [vmem:[#allocation22 + $0x370] sm:$0xff]
    %v3894 = vld [vmem:[#allocation22 + $0x378] sm:$0xff]
    %v3895 = vld [vmem:[#allocation22 + $0x380] sm:$0xff]
    %v3896 = vld [vmem:[#allocation22 + $0x388] sm:$0xff]
    %v3897 = vld [vmem:[#allocation22 + $0x390] sm:$0xff]
    %v3898 = vld [vmem:[#allocation22 + $0x398] sm:$0xff]
    %v3899 = vld [vmem:[#allocation22 + $0x3a0] sm:$0xff]
    %v3900 = vld [vmem:[#allocation22 + $0x3a8] sm:$0xff]
    %v3901 = vld [vmem:[#allocation22 + $0x3b0] sm:$0xff]
    %v3902 = vld [vmem:[#allocation22 + $0x3b8] sm:$0xff]
    %v3903 = vld [vmem:[#allocation22 + $0x3c0] sm:$0xff]
    %v3904 = vld [vmem:[#allocation22 + $0x3c8] sm:$0xff]
    %v3905 = vld [vmem:[#allocation22 + $0x3d0] sm:$0xff]
    %v3906 = vld [vmem:[#allocation22 + $0x3d8] sm:$0xff]
    %v3907 = vld [vmem:[#allocation22 + $0x3e0] sm:$0xff]
    %v3908 = vld [vmem:[#allocation22 + $0x3e8] sm:$0xff]
    %v3909 = vld [vmem:[#allocation22 + $0x3f0] sm:$0xff]
    %v3910 = vld [vmem:[#allocation22 + $0x3f8] sm:$0xff]
    %v3911 = vunpack.c.l.s8.bf16 %v3783
    %v3912 = vunpack.c.l.s8.bf16 %v3784
    %v3913 = vunpack.c.l.s8.bf16 %v3785
    %v3914 = vunpack.c.l.s8.bf16 %v3786
    %v3915 = vunpack.c.h.s8.bf16 %v3783
    %v3916 = vunpack.c.h.s8.bf16 %v3784
    %v3917 = vunpack.c.h.s8.bf16 %v3785
    %v3918 = vunpack.c.h.s8.bf16 %v3786
    %v3919 = vunpack.c.l.s8.bf16 %v3787
    %v3920 = vunpack.c.l.s8.bf16 %v3788
    %v3921 = vunpack.c.l.s8.bf16 %v3789
    %v3922 = vunpack.c.l.s8.bf16 %v3790
    %v3923 = vunpack.c.h.s8.bf16 %v3787
    %v3924 = vunpack.c.h.s8.bf16 %v3788
    %v3925 = vunpack.c.h.s8.bf16 %v3789
    %v3926 = vunpack.c.h.s8.bf16 %v3790
    %v3927 = vunpack.c.l.s8.bf16 %v3791
    %v3928 = vunpack.c.l.s8.bf16 %v3792
    %v3929 = vunpack.c.l.s8.bf16 %v3793
    %v3930 = vunpack.c.l.s8.bf16 %v3794
    %v3931 = vunpack.c.h.s8.bf16 %v3791
    %v3932 = vunpack.c.h.s8.bf16 %v3792
    %v3933 = vunpack.c.h.s8.bf16 %v3793
    %v3934 = vunpack.c.h.s8.bf16 %v3794
    %v3935 = vunpack.c.l.s8.bf16 %v3795
    %v3936 = vunpack.c.l.s8.bf16 %v3796
    %v3937 = vunpack.c.l.s8.bf16 %v3797
    %v3938 = vunpack.c.l.s8.bf16 %v3798
    %v3939 = vunpack.c.h.s8.bf16 %v3795
    %v3940 = vunpack.c.h.s8.bf16 %v3796
    %v3941 = vunpack.c.h.s8.bf16 %v3797
    %v3942 = vunpack.c.h.s8.bf16 %v3798
    %v3943 = vunpack.c.l.s8.bf16 %v3799
    %v3944 = vunpack.c.l.s8.bf16 %v3800
    %v3945 = vunpack.c.l.s8.bf16 %v3801
    %v3946 = vunpack.c.l.s8.bf16 %v3802
    %v3947 = vunpack.c.h.s8.bf16 %v3799
    %v3948 = vunpack.c.h.s8.bf16 %v3800
    %v3949 = vunpack.c.h.s8.bf16 %v3801
    %v3950 = vunpack.c.h.s8.bf16 %v3802
    %v3951 = vunpack.c.l.s8.bf16 %v3803
    %v3952 = vunpack.c.l.s8.bf16 %v3804
    %v3953 = vunpack.c.l.s8.bf16 %v3805
    %v3954 = vunpack.c.l.s8.bf16 %v3806
    %v3955 = vunpack.c.h.s8.bf16 %v3803
    %v3956 = vunpack.c.h.s8.bf16 %v3804
    %v3957 = vunpack.c.h.s8.bf16 %v3805
    %v3958 = vunpack.c.h.s8.bf16 %v3806
    %v3959 = vunpack.c.l.s8.bf16 %v3807
    %v3960 = vunpack.c.l.s8.bf16 %v3808
    %v3961 = vunpack.c.l.s8.bf16 %v3809
    %v3962 = vunpack.c.l.s8.bf16 %v3810
    %v3963 = vunpack.c.h.s8.bf16 %v3807
    %v3964 = vunpack.c.h.s8.bf16 %v3808
    %v3965 = vunpack.c.h.s8.bf16 %v3809
    %v3966 = vunpack.c.h.s8.bf16 %v3810
    %v3967 = vunpack.c.l.s8.bf16 %v3811
    %v3968 = vunpack.c.l.s8.bf16 %v3812
    %v3969 = vunpack.c.l.s8.bf16 %v3813
    %v3970 = vunpack.c.l.s8.bf16 %v3814
    %v3971 = vunpack.c.h.s8.bf16 %v3811
    %v3972 = vunpack.c.h.s8.bf16 %v3812
    %v3973 = vunpack.c.h.s8.bf16 %v3813
    %v3974 = vunpack.c.h.s8.bf16 %v3814
    %v3975 = vunpack.c.l.s8.bf16 %v3815
    %v3976 = vunpack.c.l.s8.bf16 %v3816
    %v3977 = vunpack.c.l.s8.bf16 %v3817
    %v3978 = vunpack.c.l.s8.bf16 %v3818
    %v3979 = vunpack.c.h.s8.bf16 %v3815
    %v3980 = vunpack.c.h.s8.bf16 %v3816
    %v3981 = vunpack.c.h.s8.bf16 %v3817
    %v3982 = vunpack.c.h.s8.bf16 %v3818
    %v3983 = vunpack.c.l.s8.bf16 %v3819
    %v3984 = vunpack.c.l.s8.bf16 %v3820
    %v3985 = vunpack.c.l.s8.bf16 %v3821
    %v3986 = vunpack.c.l.s8.bf16 %v3822
    %v3987 = vunpack.c.h.s8.bf16 %v3819
    %v3988 = vunpack.c.h.s8.bf16 %v3820
    %v3989 = vunpack.c.h.s8.bf16 %v3821
    %v3990 = vunpack.c.h.s8.bf16 %v3822
    %v3991 = vunpack.c.l.s8.bf16 %v3823
    %v3992 = vunpack.c.l.s8.bf16 %v3824
    %v3993 = vunpack.c.l.s8.bf16 %v3825
    %v3994 = vunpack.c.l.s8.bf16 %v3826
    %v3995 = vunpack.c.h.s8.bf16 %v3823
    %v3996 = vunpack.c.h.s8.bf16 %v3824
    %v3997 = vunpack.c.h.s8.bf16 %v3825
    %v3998 = vunpack.c.h.s8.bf16 %v3826
    %v3999 = vunpack.c.l.s8.bf16 %v3827
    %v4000 = vunpack.c.l.s8.bf16 %v3828
    %v4001 = vunpack.c.l.s8.bf16 %v3829
    %v4002 = vunpack.c.l.s8.bf16 %v3830
    %v4003 = vunpack.c.h.s8.bf16 %v3827
    %v4004 = vunpack.c.h.s8.bf16 %v3828
    %v4005 = vunpack.c.h.s8.bf16 %v3829
    %v4006 = vunpack.c.h.s8.bf16 %v3830
    %v4007 = vunpack.c.l.s8.bf16 %v3831
    %v4008 = vunpack.c.l.s8.bf16 %v3832
    %v4009 = vunpack.c.l.s8.bf16 %v3833
    %v4010 = vunpack.c.l.s8.bf16 %v3834
    %v4011 = vunpack.c.h.s8.bf16 %v3831
    %v4012 = vunpack.c.h.s8.bf16 %v3832
    %v4013 = vunpack.c.h.s8.bf16 %v3833
    %v4014 = vunpack.c.h.s8.bf16 %v3834
    %v4015 = vunpack.c.l.s8.bf16 %v3835
    %v4016 = vunpack.c.l.s8.bf16 %v3836
    %v4017 = vunpack.c.l.s8.bf16 %v3837
    %v4018 = vunpack.c.l.s8.bf16 %v3838
    %v4019 = vunpack.c.h.s8.bf16 %v3835
    %v4020 = vunpack.c.h.s8.bf16 %v3836
    %v4021 = vunpack.c.h.s8.bf16 %v3837
    %v4022 = vunpack.c.h.s8.bf16 %v3838
    %v4023 = vunpack.c.l.s8.bf16 %v3839
    %v4024 = vunpack.c.l.s8.bf16 %v3840
    %v4025 = vunpack.c.l.s8.bf16 %v3841
    %v4026 = vunpack.c.l.s8.bf16 %v3842
    %v4027 = vunpack.c.h.s8.bf16 %v3839
    %v4028 = vunpack.c.h.s8.bf16 %v3840
    %v4029 = vunpack.c.h.s8.bf16 %v3841
    %v4030 = vunpack.c.h.s8.bf16 %v3842
    %v4031 = vunpack.c.l.s8.bf16 %v3843
    %v4032 = vunpack.c.l.s8.bf16 %v3844
    %v4033 = vunpack.c.l.s8.bf16 %v3845
    %v4034 = vunpack.c.l.s8.bf16 %v3846
    %v4035 = vunpack.c.h.s8.bf16 %v3843
    %v4036 = vunpack.c.h.s8.bf16 %v3844
    %v4037 = vunpack.c.h.s8.bf16 %v3845
    %v4038 = vunpack.c.h.s8.bf16 %v3846
    %v4039 = vunpack.c.l.s8.bf16 %v3847
    %v4040 = vunpack.c.l.s8.bf16 %v3848
    %v4041 = vunpack.c.l.s8.bf16 %v3849
    %v4042 = vunpack.c.l.s8.bf16 %v3850
    %v4043 = vunpack.c.h.s8.bf16 %v3847
    %v4044 = vunpack.c.h.s8.bf16 %v3848
    %v4045 = vunpack.c.h.s8.bf16 %v3849
    %v4046 = vunpack.c.h.s8.bf16 %v3850
    %v4047 = vunpack.c.l.s8.bf16 %v3851
    %v4048 = vunpack.c.l.s8.bf16 %v3852
    %v4049 = vunpack.c.l.s8.bf16 %v3853
    %v4050 = vunpack.c.l.s8.bf16 %v3854
    %v4051 = vunpack.c.h.s8.bf16 %v3851
    %v4052 = vunpack.c.h.s8.bf16 %v3852
    %v4053 = vunpack.c.h.s8.bf16 %v3853
    %v4054 = vunpack.c.h.s8.bf16 %v3854
    %v4055 = vunpack.c.l.s8.bf16 %v3855
    %v4056 = vunpack.c.l.s8.bf16 %v3856
    %v4057 = vunpack.c.l.s8.bf16 %v3857
    %v4058 = vunpack.c.l.s8.bf16 %v3858
    %v4059 = vunpack.c.h.s8.bf16 %v3855
    %v4060 = vunpack.c.h.s8.bf16 %v3856
    %v4061 = vunpack.c.h.s8.bf16 %v3857
    %v4062 = vunpack.c.h.s8.bf16 %v3858
    %v4063 = vunpack.c.l.s8.bf16 %v3859
    %v4064 = vunpack.c.l.s8.bf16 %v3860
    %v4065 = vunpack.c.l.s8.bf16 %v3861
    %v4066 = vunpack.c.l.s8.bf16 %v3862
    %v4067 = vunpack.c.h.s8.bf16 %v3859
    %v4068 = vunpack.c.h.s8.bf16 %v3860
    %v4069 = vunpack.c.h.s8.bf16 %v3861
    %v4070 = vunpack.c.h.s8.bf16 %v3862
    %v4071 = vunpack.c.l.s8.bf16 %v3863
    %v4072 = vunpack.c.l.s8.bf16 %v3864
    %v4073 = vunpack.c.l.s8.bf16 %v3865
    %v4074 = vunpack.c.l.s8.bf16 %v3866
    %v4075 = vunpack.c.h.s8.bf16 %v3863
    %v4076 = vunpack.c.h.s8.bf16 %v3864
    %v4077 = vunpack.c.h.s8.bf16 %v3865
    %v4078 = vunpack.c.h.s8.bf16 %v3866
    %v4079 = vunpack.c.l.s8.bf16 %v3867
    %v4080 = vunpack.c.l.s8.bf16 %v3868
    %v4081 = vunpack.c.l.s8.bf16 %v3869
    %v4082 = vunpack.c.l.s8.bf16 %v3870
    %v4083 = vunpack.c.h.s8.bf16 %v3867
    %v4084 = vunpack.c.h.s8.bf16 %v3868
    %v4085 = vunpack.c.h.s8.bf16 %v3869
    %v4086 = vunpack.c.h.s8.bf16 %v3870
    %v4087 = vunpack.c.l.s8.bf16 %v3871
    %v4088 = vunpack.c.l.s8.bf16 %v3872
    %v4089 = vunpack.c.l.s8.bf16 %v3873
    %v4090 = vunpack.c.l.s8.bf16 %v3874
    %v4091 = vunpack.c.h.s8.bf16 %v3871
    %v4092 = vunpack.c.h.s8.bf16 %v3872
    %v4093 = vunpack.c.h.s8.bf16 %v3873
    %v4094 = vunpack.c.h.s8.bf16 %v3874
    %v4095 = vunpack.c.l.s8.bf16 %v3875
    %v4096 = vunpack.c.l.s8.bf16 %v3876
    %v4097 = vunpack.c.l.s8.bf16 %v3877
    %v4098 = vunpack.c.l.s8.bf16 %v3878
    %v4099 = vunpack.c.h.s8.bf16 %v3875
    %v4100 = vunpack.c.h.s8.bf16 %v3876
    %v4101 = vunpack.c.h.s8.bf16 %v3877
    %v4102 = vunpack.c.h.s8.bf16 %v3878
    %v4103 = vunpack.c.l.s8.bf16 %v3879
    %v4104 = vunpack.c.l.s8.bf16 %v3880
    %v4105 = vunpack.c.l.s8.bf16 %v3881
    %v4106 = vunpack.c.l.s8.bf16 %v3882
    %v4107 = vunpack.c.h.s8.bf16 %v3879
    %v4108 = vunpack.c.h.s8.bf16 %v3880
    %v4109 = vunpack.c.h.s8.bf16 %v3881
    %v4110 = vunpack.c.h.s8.bf16 %v3882
    %v4111 = vunpack.c.l.s8.bf16 %v3883
    %v4112 = vunpack.c.l.s8.bf16 %v3884
    %v4113 = vunpack.c.l.s8.bf16 %v3885
    %v4114 = vunpack.c.l.s8.bf16 %v3886
    %v4115 = vunpack.c.h.s8.bf16 %v3883
    %v4116 = vunpack.c.h.s8.bf16 %v3884
    %v4117 = vunpack.c.h.s8.bf16 %v3885
    %v4118 = vunpack.c.h.s8.bf16 %v3886
    %v4119 = vunpack.c.l.s8.bf16 %v3887
    %v4120 = vunpack.c.l.s8.bf16 %v3888
    %v4121 = vunpack.c.l.s8.bf16 %v3889
    %v4122 = vunpack.c.l.s8.bf16 %v3890
    %v4123 = vunpack.c.h.s8.bf16 %v3887
    %v4124 = vunpack.c.h.s8.bf16 %v3888
    %v4125 = vunpack.c.h.s8.bf16 %v3889
    %v4126 = vunpack.c.h.s8.bf16 %v3890
    %v4127 = vunpack.c.l.s8.bf16 %v3891
    %v4128 = vunpack.c.l.s8.bf16 %v3892
    %v4129 = vunpack.c.l.s8.bf16 %v3893
    %v4130 = vunpack.c.l.s8.bf16 %v3894
    %v4131 = vunpack.c.h.s8.bf16 %v3891
    %v4132 = vunpack.c.h.s8.bf16 %v3892
    %v4133 = vunpack.c.h.s8.bf16 %v3893
    %v4134 = vunpack.c.h.s8.bf16 %v3894
    %v4135 = vunpack.c.l.s8.bf16 %v3895
    %v4136 = vunpack.c.l.s8.bf16 %v3896
    %v4137 = vunpack.c.l.s8.bf16 %v3897
    %v4138 = vunpack.c.l.s8.bf16 %v3898
    %v4139 = vunpack.c.h.s8.bf16 %v3895
    %v4140 = vunpack.c.h.s8.bf16 %v3896
    %v4141 = vunpack.c.h.s8.bf16 %v3897
    %v4142 = vunpack.c.h.s8.bf16 %v3898
    %v4143 = vunpack.c.l.s8.bf16 %v3899
    %v4144 = vunpack.c.l.s8.bf16 %v3900
    %v4145 = vunpack.c.l.s8.bf16 %v3901
    %v4146 = vunpack.c.l.s8.bf16 %v3902
    %v4147 = vunpack.c.h.s8.bf16 %v3899
    %v4148 = vunpack.c.h.s8.bf16 %v3900
    %v4149 = vunpack.c.h.s8.bf16 %v3901
    %v4150 = vunpack.c.h.s8.bf16 %v3902
    %v4151 = vunpack.c.l.s8.bf16 %v3903
    %v4152 = vunpack.c.l.s8.bf16 %v3904
    %v4153 = vunpack.c.l.s8.bf16 %v3905
    %v4154 = vunpack.c.l.s8.bf16 %v3906
    %v4155 = vunpack.c.h.s8.bf16 %v3903
    %v4156 = vunpack.c.h.s8.bf16 %v3904
    %v4157 = vunpack.c.h.s8.bf16 %v3905
    %v4158 = vunpack.c.h.s8.bf16 %v3906
    %v4159 = vunpack.c.l.s8.bf16 %v3907
    %v4160 = vunpack.c.l.s8.bf16 %v3908
    %v4161 = vunpack.c.l.s8.bf16 %v3909
    %v4162 = vunpack.c.l.s8.bf16 %v3910
    %v4163 = vunpack.c.h.s8.bf16 %v3907
    %v4164 = vunpack.c.h.s8.bf16 %v3908
    %v4165 = vunpack.c.h.s8.bf16 %v3909
    %v4166 = vunpack.c.h.s8.bf16 %v3910
    %4167 = vmatprep.subr.bf16.mxu0 %v3940
    %4168 = vmatpush1.bf16.msra.mxu0 %v3939
    %4169 = vmatprep.subr.bf16.mxu0 %v3936
    %4170 = vmatpush1.bf16.msra.mxu0 %v3935
    %4171 = vmatprep.subr.bf16.mxu0 %v3932
    %4172 = vmatpush1.bf16.msra.mxu0 %v3931
    %4173 = vmatprep.subr.bf16.mxu0 %v3928
    %4174 = vmatpush1.bf16.msra.mxu0 %v3927
    %4175 = vmatprep.subr.bf16.mxu0 %v3924
    %4176 = vmatpush1.bf16.msra.mxu0 %v3923
    %4177 = vmatprep.subr.bf16.mxu0 %v3920
    %4178 = vmatpush1.bf16.msra.mxu0 %v3919
    %4179 = vmatprep.subr.bf16.mxu0 %v3916
    %4180 = vmatpush1.bf16.msra.mxu0 %v3915
    %4181 = vmatprep.subr.bf16.mxu0 %v3912
    %4182 = vmatpush1.bf16.msra.mxu0 %v3911
    %4183 = vmatprep.subr.bf16.mxu0 %v3972
    %4184 = vmatpush2.bf16.msra.mxu0 %v3971
    %4185 = vmatprep.subr.bf16.mxu0 %v3968
    %4186 = vmatpush2.bf16.msra.mxu0 %v3967
    %4187 = vmatprep.subr.bf16.mxu0 %v3964
    %4188 = vmatpush2.bf16.msra.mxu0 %v3963
    %4189 = vmatprep.subr.bf16.mxu0 %v3960
    %4190 = vmatpush2.bf16.msra.mxu0 %v3959
    %4191 = vmatprep.subr.bf16.mxu0 %v3956
    %4192 = vmatpush2.bf16.msra.mxu0 %v3955
    %4193 = vmatprep.subr.bf16.mxu0 %v3952
    %4194 = vmatpush2.bf16.msra.mxu0 %v3951
    %4195 = vmatprep.subr.bf16.mxu0 %v3948
    %4196 = vmatpush2.bf16.msra.mxu0 %v3947
    %4197 = vmatprep.subr.bf16.mxu0 %v3944
    %4198 = vmatpush2.bf16.msra.mxu0 %v3943
    %4199 = vmatprep.mubr.bf16.mxu0 %v2599
    %4200 = vmatmul.mubr.bf16.gmra.mxu0 %v2598
    %v4201 = vpop.f32.mrf.mxu0
    %v4202 = vadd.f32 0.0, %v4201
    %v4203 = vpop.f32.mrf.mxu0
    %v4204 = vadd.f32 0.0, %v4203
    %v4205 = vpop.f32.mrf.mxu0
    %v4206 = vadd.f32 0.0, %v4205
    %v4207 = vpop.f32.mrf.mxu0
    %v4208 = vadd.f32 0.0, %v4207
    %4209 = vdwg.mxu0
    %4210 = vmatprep.subr.bf16.mxu0 %v4004
    %4211 = vmatpush1.bf16.msra.mxu0 %v4003
    %4212 = vmatprep.subr.bf16.mxu0 %v4000
    %4213 = vmatpush1.bf16.msra.mxu0 %v3999
    %4214 = vmatprep.subr.bf16.mxu0 %v3996
    %4215 = vmatpush1.bf16.msra.mxu0 %v3995
    %4216 = vmatprep.subr.bf16.mxu0 %v3992
    %4217 = vmatpush1.bf16.msra.mxu0 %v3991
    %4218 = vmatprep.subr.bf16.mxu0 %v3988
    %4219 = vmatpush1.bf16.msra.mxu0 %v3987
    %4220 = vmatprep.subr.bf16.mxu0 %v3984
    %4221 = vmatpush1.bf16.msra.mxu0 %v3983
    %4222 = vmatprep.subr.bf16.mxu0 %v3980
    %4223 = vmatpush1.bf16.msra.mxu0 %v3979
    %4224 = vmatprep.subr.bf16.mxu0 %v3976
    %4225 = vmatpush1.bf16.msra.mxu0 %v3975
    %4226 = vmatprep.subr.bf16.mxu0 %v4036
    %4227 = vmatpush2.bf16.msra.mxu0 %v4035
    %4228 = vmatprep.subr.bf16.mxu0 %v4032
    %4229 = vmatpush2.bf16.msra.mxu0 %v4031
    %4230 = vmatprep.subr.bf16.mxu0 %v4028
    %4231 = vmatpush2.bf16.msra.mxu0 %v4027
    %4232 = vmatprep.subr.bf16.mxu0 %v4024
    %4233 = vmatpush2.bf16.msra.mxu0 %v4023
    %4234 = vmatprep.subr.bf16.mxu0 %v4020
    %4235 = vmatpush2.bf16.msra.mxu0 %v4019
    %4236 = vmatprep.subr.bf16.mxu0 %v4016
    %4237 = vmatpush2.bf16.msra.mxu0 %v4015
    %4238 = vmatprep.subr.bf16.mxu0 %v4012
    %4239 = vmatpush2.bf16.msra.mxu0 %v4011
    %4240 = vmatprep.subr.bf16.mxu0 %v4008
    %4241 = vmatpush2.bf16.msra.mxu0 %v4007
    %4242 = vmatprep.mubr.bf16.mxu0 %v2601
    %4243 = vmatmul.mubr.bf16.gmra.mxu0 %v2600
    %v4244 = vpop.f32.mrf.mxu0
    %v4245 = vadd.f32 %v4202, %v4244
    %v4246 = vpop.f32.mrf.mxu0
    %v4247 = vadd.f32 %v4204, %v4246
    %v4248 = vpop.f32.mrf.mxu0
    %v4249 = vadd.f32 %v4206, %v4248
    %v4250 = vpop.f32.mrf.mxu0
    %v4251 = vadd.f32 %v4208, %v4250
    %4252 = vdwg.mxu0
    %4253 = vmatprep.subr.bf16.mxu0 %v4068
    %4254 = vmatpush1.bf16.msra.mxu0 %v4067
    %4255 = vmatprep.subr.bf16.mxu0 %v4064
    %4256 = vmatpush1.bf16.msra.mxu0 %v4063
    %4257 = vmatprep.subr.bf16.mxu0 %v4060
    %4258 = vmatpush1.bf16.msra.mxu0 %v4059
    %4259 = vmatprep.subr.bf16.mxu0 %v4056
    %4260 = vmatpush1.bf16.msra.mxu0 %v4055
    %4261 = vmatprep.subr.bf16.mxu0 %v4052
    %4262 = vmatpush1.bf16.msra.mxu0 %v4051
    %4263 = vmatprep.subr.bf16.mxu0 %v4048
    %4264 = vmatpush1.bf16.msra.mxu0 %v4047
    %4265 = vmatprep.subr.bf16.mxu0 %v4044
    %4266 = vmatpush1.bf16.msra.mxu0 %v4043
    %4267 = vmatprep.subr.bf16.mxu0 %v4040
    %4268 = vmatpush1.bf16.msra.mxu0 %v4039
    %4269 = vmatprep.subr.bf16.mxu0 %v4100
    %4270 = vmatpush2.bf16.msra.mxu0 %v4099
    %4271 = vmatprep.subr.bf16.mxu0 %v4096
    %4272 = vmatpush2.bf16.msra.mxu0 %v4095
    %4273 = vmatprep.subr.bf16.mxu0 %v4092
    %4274 = vmatpush2.bf16.msra.mxu0 %v4091
    %4275 = vmatprep.subr.bf16.mxu0 %v4088
    %4276 = vmatpush2.bf16.msra.mxu0 %v4087
    %4277 = vmatprep.subr.bf16.mxu0 %v4084
    %4278 = vmatpush2.bf16.msra.mxu0 %v4083
    %4279 = vmatprep.subr.bf16.mxu0 %v4080
    %4280 = vmatpush2.bf16.msra.mxu0 %v4079
    %4281 = vmatprep.subr.bf16.mxu0 %v4076
    %4282 = vmatpush2.bf16.msra.mxu0 %v4075
    %4283 = vmatprep.subr.bf16.mxu0 %v4072
    %4284 = vmatpush2.bf16.msra.mxu0 %v4071
    %4285 = vmatprep.mubr.bf16.mxu0 %v2603
    %4286 = vmatmul.mubr.bf16.gmra.mxu0 %v2602
    %v4287 = vpop.f32.mrf.mxu0
    %v4288 = vadd.f32 %v4245, %v4287
    %v4289 = vpop.f32.mrf.mxu0
    %v4290 = vadd.f32 %v4247, %v4289
    %v4291 = vpop.f32.mrf.mxu0
    %v4292 = vadd.f32 %v4249, %v4291
    %v4293 = vpop.f32.mrf.mxu0
    %v4294 = vadd.f32 %v4251, %v4293
    %4295 = vdwg.mxu0
    %4296 = vmatprep.subr.bf16.mxu0 %v4132
    %4297 = vmatpush1.bf16.msra.mxu0 %v4131
    %4298 = vmatprep.subr.bf16.mxu0 %v4128
    %4299 = vmatpush1.bf16.msra.mxu0 %v4127
    %4300 = vmatprep.subr.bf16.mxu0 %v4124
    %4301 = vmatpush1.bf16.msra.mxu0 %v4123
    %4302 = vmatprep.subr.bf16.mxu0 %v4120
    %4303 = vmatpush1.bf16.msra.mxu0 %v4119
    %4304 = vmatprep.subr.bf16.mxu0 %v4116
    %4305 = vmatpush1.bf16.msra.mxu0 %v4115
    %4306 = vmatprep.subr.bf16.mxu0 %v4112
    %4307 = vmatpush1.bf16.msra.mxu0 %v4111
    %4308 = vmatprep.subr.bf16.mxu0 %v4108
    %4309 = vmatpush1.bf16.msra.mxu0 %v4107
    %4310 = vmatprep.subr.bf16.mxu0 %v4104
    %4311 = vmatpush1.bf16.msra.mxu0 %v4103
    %4312 = vmatprep.subr.bf16.mxu0 %v4164
    %4313 = vmatpush2.bf16.msra.mxu0 %v4163
    %4314 = vmatprep.subr.bf16.mxu0 %v4160
    %4315 = vmatpush2.bf16.msra.mxu0 %v4159
    %4316 = vmatprep.subr.bf16.mxu0 %v4156
    %4317 = vmatpush2.bf16.msra.mxu0 %v4155
    %4318 = vmatprep.subr.bf16.mxu0 %v4152
    %4319 = vmatpush2.bf16.msra.mxu0 %v4151
    %4320 = vmatprep.subr.bf16.mxu0 %v4148
    %4321 = vmatpush2.bf16.msra.mxu0 %v4147
    %4322 = vmatprep.subr.bf16.mxu0 %v4144
    %4323 = vmatpush2.bf16.msra.mxu0 %v4143
    %4324 = vmatprep.subr.bf16.mxu0 %v4140
    %4325 = vmatpush2.bf16.msra.mxu0 %v4139
    %4326 = vmatprep.subr.bf16.mxu0 %v4136
    %4327 = vmatpush2.bf16.msra.mxu0 %v4135
    %4328 = vmatprep.mubr.bf16.mxu0 %v2605
    %4329 = vmatmul.mubr.bf16.gmra.mxu0 %v2604
    %v4330 = vpop.f32.mrf.mxu0
    %v4331 = vadd.f32 %v4288, %v4330
    %v4332 = vpop.f32.mrf.mxu0
    %v4333 = vadd.f32 %v4290, %v4332
    %v4334 = vpop.f32.mrf.mxu0
    %v4335 = vadd.f32 %v4292, %v4334
    %v4336 = vpop.f32.mrf.mxu0
    %v4337 = vadd.f32 %v4294, %v4336
    %4338 = vdwg.mxu0
    %4339 = vmatprep.subr.bf16.mxu0 %v3942
    %4340 = vmatpush1.bf16.msra.mxu0 %v3941
    %4341 = vmatprep.subr.bf16.mxu0 %v3938
    %4342 = vmatpush1.bf16.msra.mxu0 %v3937
    %4343 = vmatprep.subr.bf16.mxu0 %v3934
    %4344 = vmatpush1.bf16.msra.mxu0 %v3933
    %4345 = vmatprep.subr.bf16.mxu0 %v3930
    %4346 = vmatpush1.bf16.msra.mxu0 %v3929
    %4347 = vmatprep.subr.bf16.mxu0 %v3926
    %4348 = vmatpush1.bf16.msra.mxu0 %v3925
    %4349 = vmatprep.subr.bf16.mxu0 %v3922
    %4350 = vmatpush1.bf16.msra.mxu0 %v3921
    %4351 = vmatprep.subr.bf16.mxu0 %v3918
    %4352 = vmatpush1.bf16.msra.mxu0 %v3917
    %4353 = vmatprep.subr.bf16.mxu0 %v3914
    %4354 = vmatpush1.bf16.msra.mxu0 %v3913
    %4355 = vmatprep.subr.bf16.mxu0 %v3974
    %4356 = vmatpush2.bf16.msra.mxu0 %v3973
    %4357 = vmatprep.subr.bf16.mxu0 %v3970
    %4358 = vmatpush2.bf16.msra.mxu0 %v3969
    %4359 = vmatprep.subr.bf16.mxu0 %v3966
    %4360 = vmatpush2.bf16.msra.mxu0 %v3965
    %4361 = vmatprep.subr.bf16.mxu0 %v3962
    %4362 = vmatpush2.bf16.msra.mxu0 %v3961
    %4363 = vmatprep.subr.bf16.mxu0 %v3958
    %4364 = vmatpush2.bf16.msra.mxu0 %v3957
    %4365 = vmatprep.subr.bf16.mxu0 %v3954
    %4366 = vmatpush2.bf16.msra.mxu0 %v3953
    %4367 = vmatprep.subr.bf16.mxu0 %v3950
    %4368 = vmatpush2.bf16.msra.mxu0 %v3949
    %4369 = vmatprep.subr.bf16.mxu0 %v3946
    %4370 = vmatpush2.bf16.msra.mxu0 %v3945
    %4371 = vmatprep.mubr.bf16.mxu0 %v2599
    %4372 = vmatmul.mubr.bf16.gmra.mxu0 %v2598
    %v4373 = vpop.f32.mrf.mxu0
    %v4374 = vadd.f32 0.0, %v4373
    %v4375 = vpop.f32.mrf.mxu0
    %v4376 = vadd.f32 0.0, %v4375
    %v4377 = vpop.f32.mrf.mxu0
    %v4378 = vadd.f32 0.0, %v4377
    %v4379 = vpop.f32.mrf.mxu0
    %v4380 = vadd.f32 0.0, %v4379
    %4381 = vdwg.mxu0
    %4382 = vmatprep.subr.bf16.mxu0 %v4006
    %4383 = vmatpush1.bf16.msra.mxu0 %v4005
    %4384 = vmatprep.subr.bf16.mxu0 %v4002
    %4385 = vmatpush1.bf16.msra.mxu0 %v4001
    %4386 = vmatprep.subr.bf16.mxu0 %v3998
    %4387 = vmatpush1.bf16.msra.mxu0 %v3997
    %4388 = vmatprep.subr.bf16.mxu0 %v3994
    %4389 = vmatpush1.bf16.msra.mxu0 %v3993
    %4390 = vmatprep.subr.bf16.mxu0 %v3990
    %4391 = vmatpush1.bf16.msra.mxu0 %v3989
    %4392 = vmatprep.subr.bf16.mxu0 %v3986
    %4393 = vmatpush1.bf16.msra.mxu0 %v3985
    %4394 = vmatprep.subr.bf16.mxu0 %v3982
    %4395 = vmatpush1.bf16.msra.mxu0 %v3981
    %4396 = vmatprep.subr.bf16.mxu0 %v3978
    %4397 = vmatpush1.bf16.msra.mxu0 %v3977
    %4398 = vmatprep.subr.bf16.mxu0 %v4038
    %4399 = vmatpush2.bf16.msra.mxu0 %v4037
    %4400 = vmatprep.subr.bf16.mxu0 %v4034
    %4401 = vmatpush2.bf16.msra.mxu0 %v4033
    %4402 = vmatprep.subr.bf16.mxu0 %v4030
    %4403 = vmatpush2.bf16.msra.mxu0 %v4029
    %4404 = vmatprep.subr.bf16.mxu0 %v4026
    %4405 = vmatpush2.bf16.msra.mxu0 %v4025
    %4406 = vmatprep.subr.bf16.mxu0 %v4022
    %4407 = vmatpush2.bf16.msra.mxu0 %v4021
    %4408 = vmatprep.subr.bf16.mxu0 %v4018
    %4409 = vmatpush2.bf16.msra.mxu0 %v4017
    %4410 = vmatprep.subr.bf16.mxu0 %v4014
    %4411 = vmatpush2.bf16.msra.mxu0 %v4013
    %4412 = vmatprep.subr.bf16.mxu0 %v4010
    %4413 = vmatpush2.bf16.msra.mxu0 %v4009
    %4414 = vmatprep.mubr.bf16.mxu0 %v2601
    %4415 = vmatmul.mubr.bf16.gmra.mxu0 %v2600
    %v4416 = vpop.f32.mrf.mxu0
    %v4417 = vadd.f32 %v4374, %v4416
    %v4418 = vpop.f32.mrf.mxu0
    %v4419 = vadd.f32 %v4376, %v4418
    %v4420 = vpop.f32.mrf.mxu0
    %v4421 = vadd.f32 %v4378, %v4420
    %v4422 = vpop.f32.mrf.mxu0
    %v4423 = vadd.f32 %v4380, %v4422
    %4424 = vdwg.mxu0
    %4425 = vmatprep.subr.bf16.mxu0 %v4070
    %4426 = vmatpush1.bf16.msra.mxu0 %v4069
    %4427 = vmatprep.subr.bf16.mxu0 %v4066
    %4428 = vmatpush1.bf16.msra.mxu0 %v4065
    %4429 = vmatprep.subr.bf16.mxu0 %v4062
    %4430 = vmatpush1.bf16.msra.mxu0 %v4061
    %4431 = vmatprep.subr.bf16.mxu0 %v4058
    %4432 = vmatpush1.bf16.msra.mxu0 %v4057
    %4433 = vmatprep.subr.bf16.mxu0 %v4054
    %4434 = vmatpush1.bf16.msra.mxu0 %v4053
    %4435 = vmatprep.subr.bf16.mxu0 %v4050
    %4436 = vmatpush1.bf16.msra.mxu0 %v4049
    %4437 = vmatprep.subr.bf16.mxu0 %v4046
    %4438 = vmatpush1.bf16.msra.mxu0 %v4045
    %4439 = vmatprep.subr.bf16.mxu0 %v4042
    %4440 = vmatpush1.bf16.msra.mxu0 %v4041
    %4441 = vmatprep.subr.bf16.mxu0 %v4102
    %4442 = vmatpush2.bf16.msra.mxu0 %v4101
    %4443 = vmatprep.subr.bf16.mxu0 %v4098
    %4444 = vmatpush2.bf16.msra.mxu0 %v4097
    %4445 = vmatprep.subr.bf16.mxu0 %v4094
    %4446 = vmatpush2.bf16.msra.mxu0 %v4093
    %4447 = vmatprep.subr.bf16.mxu0 %v4090
    %4448 = vmatpush2.bf16.msra.mxu0 %v4089
    %4449 = vmatprep.subr.bf16.mxu0 %v4086
    %4450 = vmatpush2.bf16.msra.mxu0 %v4085
    %4451 = vmatprep.subr.bf16.mxu0 %v4082
    %4452 = vmatpush2.bf16.msra.mxu0 %v4081
    %4453 = vmatprep.subr.bf16.mxu0 %v4078
    %4454 = vmatpush2.bf16.msra.mxu0 %v4077
    %4455 = vmatprep.subr.bf16.mxu0 %v4074
    %4456 = vmatpush2.bf16.msra.mxu0 %v4073
    %4457 = vmatprep.mubr.bf16.mxu0 %v2603
    %4458 = vmatmul.mubr.bf16.gmra.mxu0 %v2602
    %v4459 = vpop.f32.mrf.mxu0
    %v4460 = vadd.f32 %v4417, %v4459
    %v4461 = vpop.f32.mrf.mxu0
    %v4462 = vadd.f32 %v4419, %v4461
    %v4463 = vpop.f32.mrf.mxu0
    %v4464 = vadd.f32 %v4421, %v4463
    %v4465 = vpop.f32.mrf.mxu0
    %v4466 = vadd.f32 %v4423, %v4465
    %4467 = vdwg.mxu0
    %4468 = vmatprep.subr.bf16.mxu0 %v4134
    %4469 = vmatpush1.bf16.msra.mxu0 %v4133
    %4470 = vmatprep.subr.bf16.mxu0 %v4130
    %4471 = vmatpush1.bf16.msra.mxu0 %v4129
    %4472 = vmatprep.subr.bf16.mxu0 %v4126
    %4473 = vmatpush1.bf16.msra.mxu0 %v4125
    %4474 = vmatprep.subr.bf16.mxu0 %v4122
    %4475 = vmatpush1.bf16.msra.mxu0 %v4121
    %4476 = vmatprep.subr.bf16.mxu0 %v4118
    %4477 = vmatpush1.bf16.msra.mxu0 %v4117
    %4478 = vmatprep.subr.bf16.mxu0 %v4114
    %4479 = vmatpush1.bf16.msra.mxu0 %v4113
    %4480 = vmatprep.subr.bf16.mxu0 %v4110
    %4481 = vmatpush1.bf16.msra.mxu0 %v4109
    %4482 = vmatprep.subr.bf16.mxu0 %v4106
    %4483 = vmatpush1.bf16.msra.mxu0 %v4105
    %4484 = vmatprep.subr.bf16.mxu0 %v4166
    %4485 = vmatpush2.bf16.msra.mxu0 %v4165
    %4486 = vmatprep.subr.bf16.mxu0 %v4162
    %4487 = vmatpush2.bf16.msra.mxu0 %v4161
    %4488 = vmatprep.subr.bf16.mxu0 %v4158
    %4489 = vmatpush2.bf16.msra.mxu0 %v4157
    %4490 = vmatprep.subr.bf16.mxu0 %v4154
    %4491 = vmatpush2.bf16.msra.mxu0 %v4153
    %4492 = vmatprep.subr.bf16.mxu0 %v4150
    %4493 = vmatpush2.bf16.msra.mxu0 %v4149
    %4494 = vmatprep.subr.bf16.mxu0 %v4146
    %4495 = vmatpush2.bf16.msra.mxu0 %v4145
    %4496 = vmatprep.subr.bf16.mxu0 %v4142
    %4497 = vmatpush2.bf16.msra.mxu0 %v4141
    %4498 = vmatprep.subr.bf16.mxu0 %v4138
    %4499 = vmatpush2.bf16.msra.mxu0 %v4137
    %4500 = vmatprep.mubr.bf16.mxu0 %v2605
    %4501 = vmatmul.mubr.bf16.gmra.mxu0 %v2604
    %v4502 = vpop.f32.mrf.mxu0
    %v4503 = vadd.f32 %v4460, %v4502
    %v4504 = vpop.f32.mrf.mxu0
    %v4505 = vadd.f32 %v4462, %v4504
    %v4506 = vpop.f32.mrf.mxu0
    %v4507 = vadd.f32 %v4464, %v4506
    %v4508 = vpop.f32.mrf.mxu0
    %v4509 = vadd.f32 %v4466, %v4508
    %4510 = vdwg.mxu0
    %v4511 = vld [vmem:[#allocation24] sm:$0xf]
    %v4513 = vlaneseq
    %v4514 = vshrl.u32 %v4513, 7
    %v4515 = vsub.s32 0, %v4514
    %v4516 = vrot.slane %v4511, %v4515
    %v4517 = vlaneseq
    %v4518 = vshrl.u32 %v4517, 7
    %v4519 = vsub.s32 1, %v4518
    %v4520 = vrot.slane %v4511, %v4519
    %v4521 = vlaneseq
    %v4522 = vshrl.u32 %v4521, 7
    %v4523 = vsub.s32 2, %v4522
    %v4524 = vrot.slane %v4511, %v4523
    %v4525 = vlaneseq
    %v4526 = vshrl.u32 %v4525, 7
    %v4527 = vsub.s32 3, %v4526
    %v4528 = vrot.slane %v4511, %v4527
    %v4533 = vmul.f32 %v4331, %v4516
    %v4534 = vmul.f32 %v4333, %v4520
    %v4535 = vmul.f32 %v4503, %v4524
    %v4536 = vmul.f32 %v4505, %v4528
    %v4537 = vmul.f32 %v4335, %v4516
    %v4538 = vmul.f32 %v4337, %v4520
    %v4539 = vmul.f32 %v4507, %v4524
    %v4540 = vmul.f32 %v4509, %v4528
    %v4541 = vld [vmem:[#allocation25] sm:$0xf]
    %v4543 = vlaneseq
    %v4544 = vshrl.u32 %v4543, 7
    %v4545 = vsub.s32 0, %v4544
    %v4546 = vrot.slane %v4541, %v4545
    %v4547 = vlaneseq
    %v4548 = vshrl.u32 %v4547, 7
    %v4549 = vsub.s32 1, %v4548
    %v4550 = vrot.slane %v4541, %v4549
    %v4551 = vlaneseq
    %v4552 = vshrl.u32 %v4551, 7
    %v4553 = vsub.s32 2, %v4552
    %v4554 = vrot.slane %v4541, %v4553
    %v4555 = vlaneseq
    %v4556 = vshrl.u32 %v4555, 7
    %v4557 = vsub.s32 3, %v4556
    %v4558 = vrot.slane %v4541, %v4557
    %v4563 = vadd.f32 %v4533, %v4546
    %v4564 = vadd.f32 %v4534, %v4550
    %v4565 = vadd.f32 %v4535, %v4554
    %v4566 = vadd.f32 %v4536, %v4558
    %v4567 = vadd.f32 %v4537, %v4546
    %v4568 = vadd.f32 %v4538, %v4550
    %v4569 = vadd.f32 %v4539, %v4554
    %v4570 = vadd.f32 %v4540, %v4558
    %v4571 = vmax.f32 %v4563, 0.0
    %v4572 = vmax.f32 %v4564, 0.0
    %v4573 = vmax.f32 %v4565, 0.0
    %v4574 = vmax.f32 %v4566, 0.0
    %v4575 = vmax.f32 %v4567, 0.0
    %v4576 = vmax.f32 %v4568, 0.0
    %v4577 = vmax.f32 %v4569, 0.0
    %v4578 = vmax.f32 %v4570, 0.0
    %v4579 = vpack.c.bf16 %v4575, %v4571
    %v4580 = vpack.c.bf16 %v4576, %v4572
    %v4581 = vpack.c.bf16 %v4577, %v4573
    %v4582 = vpack.c.bf16 %v4578, %v4574
    %v4583 = vld [vmem:[#allocation27] sm:$0xff]
    %v4584 = vld [vmem:[#allocation27 + $0x8] sm:$0xff]
    %v4585 = vld [vmem:[#allocation27 + $0x10] sm:$0xff]
    %v4586 = vld [vmem:[#allocation27 + $0x18] sm:$0xff]
    %v4587 = vld [vmem:[#allocation27 + $0x20] sm:$0xff]
    %v4588 = vld [vmem:[#allocation27 + $0x28] sm:$0xff]
    %v4589 = vld [vmem:[#allocation27 + $0x30] sm:$0xff]
    %v4590 = vld [vmem:[#allocation27 + $0x38] sm:$0xff]
    %v4591 = vld [vmem:[#allocation27 + $0x40] sm:$0xff]
    %v4592 = vld [vmem:[#allocation27 + $0x48] sm:$0xff]
    %v4593 = vld [vmem:[#allocation27 + $0x50] sm:$0xff]
    %v4594 = vld [vmem:[#allocation27 + $0x58] sm:$0xff]
    %v4595 = vld [vmem:[#allocation27 + $0x60] sm:$0xff]
    %v4596 = vld [vmem:[#allocation27 + $0x68] sm:$0xff]
    %v4597 = vld [vmem:[#allocation27 + $0x70] sm:$0xff]
    %v4598 = vld [vmem:[#allocation27 + $0x78] sm:$0xff]
    %v4599 = vld [vmem:[#allocation27 + $0x80] sm:$0xff]
    %v4600 = vld [vmem:[#allocation27 + $0x88] sm:$0xff]
    %v4601 = vld [vmem:[#allocation27 + $0x90] sm:$0xff]
    %v4602 = vld [vmem:[#allocation27 + $0x98] sm:$0xff]
    %v4603 = vld [vmem:[#allocation27 + $0xa0] sm:$0xff]
    %v4604 = vld [vmem:[#allocation27 + $0xa8] sm:$0xff]
    %v4605 = vld [vmem:[#allocation27 + $0xb0] sm:$0xff]
    %v4606 = vld [vmem:[#allocation27 + $0xb8] sm:$0xff]
    %v4607 = vld [vmem:[#allocation27 + $0xc0] sm:$0xff]
    %v4608 = vld [vmem:[#allocation27 + $0xc8] sm:$0xff]
    %v4609 = vld [vmem:[#allocation27 + $0xd0] sm:$0xff]
    %v4610 = vld [vmem:[#allocation27 + $0xd8] sm:$0xff]
    %v4611 = vld [vmem:[#allocation27 + $0xe0] sm:$0xff]
    %v4612 = vld [vmem:[#allocation27 + $0xe8] sm:$0xff]
    %v4613 = vld [vmem:[#allocation27 + $0xf0] sm:$0xff]
    %v4614 = vld [vmem:[#allocation27 + $0xf8] sm:$0xff]
    %v4615 = vunpack.c.l.s8.bf16 %v4583
    %v4616 = vunpack.c.l.s8.bf16 %v4584
    %v4617 = vunpack.c.h.s8.bf16 %v4583
    %v4618 = vunpack.c.h.s8.bf16 %v4584
    %v4619 = vunpack.c.l.s8.bf16 %v4585
    %v4620 = vunpack.c.l.s8.bf16 %v4586
    %v4621 = vunpack.c.h.s8.bf16 %v4585
    %v4622 = vunpack.c.h.s8.bf16 %v4586
    %v4623 = vunpack.c.l.s8.bf16 %v4587
    %v4624 = vunpack.c.l.s8.bf16 %v4588
    %v4625 = vunpack.c.h.s8.bf16 %v4587
    %v4626 = vunpack.c.h.s8.bf16 %v4588
    %v4627 = vunpack.c.l.s8.bf16 %v4589
    %v4628 = vunpack.c.l.s8.bf16 %v4590
    %v4629 = vunpack.c.h.s8.bf16 %v4589
    %v4630 = vunpack.c.h.s8.bf16 %v4590
    %v4631 = vunpack.c.l.s8.bf16 %v4591
    %v4632 = vunpack.c.l.s8.bf16 %v4592
    %v4633 = vunpack.c.h.s8.bf16 %v4591
    %v4634 = vunpack.c.h.s8.bf16 %v4592
    %v4635 = vunpack.c.l.s8.bf16 %v4593
    %v4636 = vunpack.c.l.s8.bf16 %v4594
    %v4637 = vunpack.c.h.s8.bf16 %v4593
    %v4638 = vunpack.c.h.s8.bf16 %v4594
    %v4639 = vunpack.c.l.s8.bf16 %v4595
    %v4640 = vunpack.c.l.s8.bf16 %v4596
    %v4641 = vunpack.c.h.s8.bf16 %v4595
    %v4642 = vunpack.c.h.s8.bf16 %v4596
    %v4643 = vunpack.c.l.s8.bf16 %v4597
    %v4644 = vunpack.c.l.s8.bf16 %v4598
    %v4645 = vunpack.c.h.s8.bf16 %v4597
    %v4646 = vunpack.c.h.s8.bf16 %v4598
    %v4647 = vunpack.c.l.s8.bf16 %v4599
    %v4648 = vunpack.c.l.s8.bf16 %v4600
    %v4649 = vunpack.c.h.s8.bf16 %v4599
    %v4650 = vunpack.c.h.s8.bf16 %v4600
    %v4651 = vunpack.c.l.s8.bf16 %v4601
    %v4652 = vunpack.c.l.s8.bf16 %v4602
    %v4653 = vunpack.c.h.s8.bf16 %v4601
    %v4654 = vunpack.c.h.s8.bf16 %v4602
    %v4655 = vunpack.c.l.s8.bf16 %v4603
    %v4656 = vunpack.c.l.s8.bf16 %v4604
    %v4657 = vunpack.c.h.s8.bf16 %v4603
    %v4658 = vunpack.c.h.s8.bf16 %v4604
    %v4659 = vunpack.c.l.s8.bf16 %v4605
    %v4660 = vunpack.c.l.s8.bf16 %v4606
    %v4661 = vunpack.c.h.s8.bf16 %v4605
    %v4662 = vunpack.c.h.s8.bf16 %v4606
    %v4663 = vunpack.c.l.s8.bf16 %v4607
    %v4664 = vunpack.c.l.s8.bf16 %v4608
    %v4665 = vunpack.c.h.s8.bf16 %v4607
    %v4666 = vunpack.c.h.s8.bf16 %v4608
    %v4667 = vunpack.c.l.s8.bf16 %v4609
    %v4668 = vunpack.c.l.s8.bf16 %v4610
    %v4669 = vunpack.c.h.s8.bf16 %v4609
    %v4670 = vunpack.c.h.s8.bf16 %v4610
    %v4671 = vunpack.c.l.s8.bf16 %v4611
    %v4672 = vunpack.c.l.s8.bf16 %v4612
    %v4673 = vunpack.c.h.s8.bf16 %v4611
    %v4674 = vunpack.c.h.s8.bf16 %v4612
    %v4675 = vunpack.c.l.s8.bf16 %v4613
    %v4676 = vunpack.c.l.s8.bf16 %v4614
    %v4677 = vunpack.c.h.s8.bf16 %v4613
    %v4678 = vunpack.c.h.s8.bf16 %v4614
    %4679 = vmatprep.subr.bf16.mxu0 %v4630
    %4680 = vmatpush1.bf16.msra.mxu0 %v4629
    %4681 = vmatprep.subr.bf16.mxu0 %v4628
    %4682 = vmatpush1.bf16.msra.mxu0 %v4627
    %4683 = vmatprep.subr.bf16.mxu0 %v4626
    %4684 = vmatpush1.bf16.msra.mxu0 %v4625
    %4685 = vmatprep.subr.bf16.mxu0 %v4624
    %4686 = vmatpush1.bf16.msra.mxu0 %v4623
    %4687 = vmatprep.subr.bf16.mxu0 %v4622
    %4688 = vmatpush1.bf16.msra.mxu0 %v4621
    %4689 = vmatprep.subr.bf16.mxu0 %v4620
    %4690 = vmatpush1.bf16.msra.mxu0 %v4619
    %4691 = vmatprep.subr.bf16.mxu0 %v4618
    %4692 = vmatpush1.bf16.msra.mxu0 %v4617
    %4693 = vmatprep.subr.bf16.mxu0 %v4616
    %4694 = vmatpush1.bf16.msra.mxu0 %v4615
    %4695 = vmatprep.subr.bf16.mxu0 %v4646
    %4696 = vmatpush2.bf16.msra.mxu0 %v4645
    %4697 = vmatprep.subr.bf16.mxu0 %v4644
    %4698 = vmatpush2.bf16.msra.mxu0 %v4643
    %4699 = vmatprep.subr.bf16.mxu0 %v4642
    %4700 = vmatpush2.bf16.msra.mxu0 %v4641
    %4701 = vmatprep.subr.bf16.mxu0 %v4640
    %4702 = vmatpush2.bf16.msra.mxu0 %v4639
    %4703 = vmatprep.subr.bf16.mxu0 %v4638
    %4704 = vmatpush2.bf16.msra.mxu0 %v4637
    %4705 = vmatprep.subr.bf16.mxu0 %v4636
    %4706 = vmatpush2.bf16.msra.mxu0 %v4635
    %4707 = vmatprep.subr.bf16.mxu0 %v4634
    %4708 = vmatpush2.bf16.msra.mxu0 %v4633
    %4709 = vmatprep.subr.bf16.mxu0 %v4632
    %4710 = vmatpush2.bf16.msra.mxu0 %v4631
    %4711 = vmatprep.mubr.bf16.mxu0 %v4580
    %4712 = vmatmul.mubr.bf16.gmra.mxu0 %v4579
    %v4713 = vpop.f32.mrf.mxu0
    %v4714 = vadd.f32 0.0, %v4713
    %v4715 = vpop.f32.mrf.mxu0
    %v4716 = vadd.f32 0.0, %v4715
    %v4717 = vpop.f32.mrf.mxu0
    %v4718 = vadd.f32 0.0, %v4717
    %v4719 = vpop.f32.mrf.mxu0
    %v4720 = vadd.f32 0.0, %v4719
    %4721 = vdwg.mxu0
    %4722 = vmatprep.subr.bf16.mxu0 %v4662
    %4723 = vmatpush1.bf16.msra.mxu0 %v4661
    %4724 = vmatprep.subr.bf16.mxu0 %v4660
    %4725 = vmatpush1.bf16.msra.mxu0 %v4659
    %4726 = vmatprep.subr.bf16.mxu0 %v4658
    %4727 = vmatpush1.bf16.msra.mxu0 %v4657
    %4728 = vmatprep.subr.bf16.mxu0 %v4656
    %4729 = vmatpush1.bf16.msra.mxu0 %v4655
    %4730 = vmatprep.subr.bf16.mxu0 %v4654
    %4731 = vmatpush1.bf16.msra.mxu0 %v4653
    %4732 = vmatprep.subr.bf16.mxu0 %v4652
    %4733 = vmatpush1.bf16.msra.mxu0 %v4651
    %4734 = vmatprep.subr.bf16.mxu0 %v4650
    %4735 = vmatpush1.bf16.msra.mxu0 %v4649
    %4736 = vmatprep.subr.bf16.mxu0 %v4648
    %4737 = vmatpush1.bf16.msra.mxu0 %v4647
    %4738 = vmatprep.subr.bf16.mxu0 %v4678
    %4739 = vmatpush2.bf16.msra.mxu0 %v4677
    %4740 = vmatprep.subr.bf16.mxu0 %v4676
    %4741 = vmatpush2.bf16.msra.mxu0 %v4675
    %4742 = vmatprep.subr.bf16.mxu0 %v4674
    %4743 = vmatpush2.bf16.msra.mxu0 %v4673
    %4744 = vmatprep.subr.bf16.mxu0 %v4672
    %4745 = vmatpush2.bf16.msra.mxu0 %v4671
    %4746 = vmatprep.subr.bf16.mxu0 %v4670
    %4747 = vmatpush2.bf16.msra.mxu0 %v4669
    %4748 = vmatprep.subr.bf16.mxu0 %v4668
    %4749 = vmatpush2.bf16.msra.mxu0 %v4667
    %4750 = vmatprep.subr.bf16.mxu0 %v4666
    %4751 = vmatpush2.bf16.msra.mxu0 %v4665
    %4752 = vmatprep.subr.bf16.mxu0 %v4664
    %4753 = vmatpush2.bf16.msra.mxu0 %v4663
    %4754 = vmatprep.mubr.bf16.mxu0 %v4582
    %4755 = vmatmul.mubr.bf16.gmra.mxu0 %v4581
    %v4756 = vpop.f32.mrf.mxu0
    %v4757 = vadd.f32 %v4714, %v4756
    %v4758 = vpop.f32.mrf.mxu0
    %v4759 = vadd.f32 %v4716, %v4758
    %v4760 = vpop.f32.mrf.mxu0
    %v4761 = vadd.f32 %v4718, %v4760
    %v4762 = vpop.f32.mrf.mxu0
    %v4763 = vadd.f32 %v4720, %v4762
    %4764 = vdwg.mxu0
    %v4765 = vld [vmem:[#allocation28] sm:$0x3]
    %v4767 = vlaneseq
    %v4768 = vshrl.u32 %v4767, 7
    %v4769 = vsub.s32 0, %v4768
    %v4770 = vrot.slane %v4765, %v4769
    %v4771 = vlaneseq
    %v4772 = vshrl.u32 %v4771, 7
    %v4773 = vsub.s32 1, %v4772
    %v4774 = vrot.slane %v4765, %v4773
    %v4777 = vmul.f32 %v4757, %v4770
    %v4778 = vmul.f32 %v4759, %v4774
    %v4779 = vmul.f32 %v4761, %v4770
    %v4780 = vmul.f32 %v4763, %v4774
    %v4781 = vld [vmem:[#allocation30] sm:$0x3]
    %v4783 = vlaneseq
    %v4784 = vshrl.u32 %v4783, 7
    %v4785 = vsub.s32 0, %v4784
    %v4786 = vrot.slane %v4781, %v4785
    %v4787 = vlaneseq
    %v4788 = vshrl.u32 %v4787, 7
    %v4789 = vsub.s32 1, %v4788
    %v4790 = vrot.slane %v4781, %v4789
    %v4793 = vadd.f32 %v4777, %v4786
    %v4794 = vadd.f32 %v4778, %v4790
    %v4795 = vadd.f32 %v4779, %v4786
    %v4796 = vadd.f32 %v4780, %v4790
    %v4797 = vmax.f32 %v4793, 0.0
    %v4798 = vmax.f32 %v4794, 0.0
    %v4799 = vmax.f32 %v4795, 0.0
    %v4800 = vmax.f32 %v4796, 0.0
    %v4801 = vpack.c.bf16 %v4799, %v4797
    %v4802 = vpack.c.bf16 %v4800, %v4798
    %v4803 = vld [vmem:[#allocation31] sm:$0xff]
    %v4804 = vld [vmem:[#allocation31 + $0x8] sm:$0xff]
    %v4805 = vld [vmem:[#allocation31 + $0x10] sm:$0xff]
    %v4806 = vld [vmem:[#allocation31 + $0x18] sm:$0xff]
    %v4807 = vld [vmem:[#allocation31 + $0x20] sm:$0xff]
    %v4808 = vld [vmem:[#allocation31 + $0x28] sm:$0xff]
    %v4809 = vld [vmem:[#allocation31 + $0x30] sm:$0xff]
    %v4810 = vld [vmem:[#allocation31 + $0x38] sm:$0xff]
    %v4811 = vunpack.c.l.s8.bf16 %v4803
    %v4812 = vunpack.c.h.s8.bf16 %v4803
    %v4813 = vunpack.c.l.s8.bf16 %v4804
    %v4814 = vunpack.c.h.s8.bf16 %v4804
    %v4815 = vunpack.c.l.s8.bf16 %v4805
    %v4816 = vunpack.c.h.s8.bf16 %v4805
    %v4817 = vunpack.c.l.s8.bf16 %v4806
    %v4818 = vunpack.c.h.s8.bf16 %v4806
    %v4819 = vunpack.c.l.s8.bf16 %v4807
    %v4820 = vunpack.c.h.s8.bf16 %v4807
    %v4821 = vunpack.c.l.s8.bf16 %v4808
    %v4822 = vunpack.c.h.s8.bf16 %v4808
    %v4823 = vunpack.c.l.s8.bf16 %v4809
    %v4824 = vunpack.c.h.s8.bf16 %v4809
    %v4825 = vunpack.c.l.s8.bf16 %v4810
    %v4826 = vunpack.c.h.s8.bf16 %v4810
    %4827 = vmatprep.subr.bf16.mxu0 0
    %4828 = vmatpush1.bf16.msra.mxu0 %v4818
    %4829 = vmatprep.subr.bf16.mxu0 0
    %4830 = vmatpush1.bf16.msra.mxu0 %v4817
    %4831 = vmatprep.subr.bf16.mxu0 0
    %4832 = vmatpush1.bf16.msra.mxu0 %v4816
    %4833 = vmatprep.subr.bf16.mxu0 0
    %4834 = vmatpush1.bf16.msra.mxu0 %v4815
    %4835 = vmatprep.subr.bf16.mxu0 0
    %4836 = vmatpush1.bf16.msra.mxu0 %v4814
    %4837 = vmatprep.subr.bf16.mxu0 0
    %4838 = vmatpush1.bf16.msra.mxu0 %v4813
    %4839 = vmatprep.subr.bf16.mxu0 0
    %4840 = vmatpush1.bf16.msra.mxu0 %v4812
    %4841 = vmatprep.subr.bf16.mxu0 0
    %4842 = vmatpush1.bf16.msra.mxu0 %v4811
    %4843 = vmatprep.subr.bf16.mxu0 0
    %4844 = vmatpush2.bf16.msra.mxu0 %v4826
    %4845 = vmatprep.subr.bf16.mxu0 0
    %4846 = vmatpush2.bf16.msra.mxu0 %v4825
    %4847 = vmatprep.subr.bf16.mxu0 0
    %4848 = vmatpush2.bf16.msra.mxu0 %v4824
    %4849 = vmatprep.subr.bf16.mxu0 0
    %4850 = vmatpush2.bf16.msra.mxu0 %v4823
    %4851 = vmatprep.subr.bf16.mxu0 0
    %4852 = vmatpush2.bf16.msra.mxu0 %v4822
    %4853 = vmatprep.subr.bf16.mxu0 0
    %4854 = vmatpush2.bf16.msra.mxu0 %v4821
    %4855 = vmatprep.subr.bf16.mxu0 0
    %4856 = vmatpush2.bf16.msra.mxu0 %v4820
    %4857 = vmatprep.subr.bf16.mxu0 0
    %4858 = vmatpush2.bf16.msra.mxu0 %v4819
    %4859 = vmatprep.mubr.bf16.mxu0 %v4802
    %4860 = vmatmul.mubr.bf16.gmra.mxu0 %v4801
    %v4861 = vpop.f32.mrf.mxu0
    %v4862 = vadd.f32 0.0, %v4861
    %v4863 = vpop.f32.mrf.mxu0
    %v4864 = vpop.f32.mrf.mxu0
    %v4865 = vadd.f32 0.0, %v4864
    %v4866 = vpop.f32.mrf.mxu0
    %4867 = vdwg.mxu0
    %v4868 = vld [vmem:[#allocation33] sm:$0x1]
    %v4870 = vlaneseq
    %v4871 = vshrl.u32 %v4870, 7
    %v4872 = vsub.s32 0, %v4871
    %v4873 = vrot.slane %v4868, %v4872
    %v4875 = vmul.f32 %v4862, %v4873
    %v4876 = vmul.f32 %v4865, %v4873
    %v4877 = vld [vmem:[#allocation34] sm:$0x1]
    %v4879 = vlaneseq
    %v4880 = vshrl.u32 %v4879, 7
    %v4881 = vsub.s32 0, %v4880
    %v4882 = vrot.slane %v4877, %v4881
    %v4884 = vadd.f32 %v4875, %v4882
    %v4885 = vadd.f32 %v4876, %v4882
    %v4886 = vmax.f32 %v4884, 0.0
    %v4887 = vmax.f32 %v4885, 0.0
    %v4888 = vpack.c.bf16 %v4887, %v4886
    %v4889 = vld [vmem:[#allocation36] sm:$0xff]
    %v4890 = vld [vmem:[#allocation36 + $0x8] sm:$0xff]
    %v4891 = vld [vmem:[#allocation36 + $0x10] sm:$0xff]
    %v4892 = vld [vmem:[#allocation36 + $0x18] sm:$0xff]
    %v4893 = vunpack.c.l.s8.bf16 %v4889
    %v4894 = vunpack.c.h.s8.bf16 %v4889
    %v4895 = vunpack.c.l.s8.bf16 %v4890
    %v4896 = vunpack.c.h.s8.bf16 %v4890
    %v4897 = vunpack.c.l.s8.bf16 %v4891
    %v4898 = vunpack.c.h.s8.bf16 %v4891
    %v4899 = vunpack.c.l.s8.bf16 %v4892
    %v4900 = vunpack.c.h.s8.bf16 %v4892
    %4901 = vmatprep.subr.bf16.mxu0 0
    %4902 = vmatpush1.bf16.msra.mxu0 %v4900
    %4903 = vmatprep.subr.bf16.mxu0 0
    %4904 = vmatpush1.bf16.msra.mxu0 %v4899
    %4905 = vmatprep.subr.bf16.mxu0 0
    %4906 = vmatpush1.bf16.msra.mxu0 %v4898
    %4907 = vmatprep.subr.bf16.mxu0 0
    %4908 = vmatpush1.bf16.msra.mxu0 %v4897
    %4909 = vmatprep.subr.bf16.mxu0 0
    %4910 = vmatpush1.bf16.msra.mxu0 %v4896
    %4911 = vmatprep.subr.bf16.mxu0 0
    %4912 = vmatpush1.bf16.msra.mxu0 %v4895
    %4913 = vmatprep.subr.bf16.mxu0 0
    %4914 = vmatpush1.bf16.msra.mxu0 %v4894
    %4915 = vmatprep.subr.bf16.mxu0 0
    %4916 = vmatpush1.bf16.msra.mxu0 %v4893
    %4917 = vmatprep.subr.bf16.mxu0 0
    %4918 = vmatpush2.bf16.msra.mxu0 0
    %4919 = vmatprep.subr.bf16.mxu0 0
    %4920 = vmatpush2.bf16.msra.mxu0 0
    %4921 = vmatprep.subr.bf16.mxu0 0
    %4922 = vmatpush2.bf16.msra.mxu0 0
    %4923 = vmatprep.subr.bf16.mxu0 0
    %4924 = vmatpush2.bf16.msra.mxu0 0
    %4925 = vmatprep.subr.bf16.mxu0 0
    %4926 = vmatpush2.bf16.msra.mxu0 0
    %4927 = vmatprep.subr.bf16.mxu0 0
    %4928 = vmatpush2.bf16.msra.mxu0 0
    %4929 = vmatprep.subr.bf16.mxu0 0
    %4930 = vmatpush2.bf16.msra.mxu0 0
    %4931 = vmatprep.subr.bf16.mxu0 0
    %4932 = vmatpush2.bf16.msra.mxu0 0
    %4933 = vmatprep.mubr.bf16.mxu0 0
    %4934 = vmatmul.mubr.bf16.gmra.mxu0 %v4888
    %v4935 = vpop.f32.mrf.mxu0
    %v4936 = vadd.f32 0.0, %v4935
    %v4937 = vpop.f32.mrf.mxu0
    %v4938 = vpop.f32.mrf.mxu0
    %v4939 = vadd.f32 0.0, %v4938
    %v4940 = vpop.f32.mrf.mxu0
    %4941 = vdwg.mxu0
    %v4942 = vld [vmem:[#allocation37] sm:$0x1]
    %v4944 = vlaneseq
    %v4945 = vshrl.u32 %v4944, 7
    %v4946 = vsub.s32 0, %v4945
    %v4947 = vrot.slane %v4942, %v4946
    %v4949 = vmul.f32 %v4936, %v4947
    %v4950 = vmul.f32 %v4939, %v4947
    %v4951 = vld [vmem:[#allocation39] sm:$0x1]
    %v4953 = vlaneseq
    %v4954 = vshrl.u32 %v4953, 7
    %v4955 = vsub.s32 0, %v4954
    %v4956 = vrot.slane %v4951, %v4955
    %v4958 = vadd.f32 %v4949, %v4956
    %v4959 = vadd.f32 %v4950, %v4956
    %v4960 = vld [vmem:[#allocation40] sm:$0xff]
    %v4961 = vld [vmem:[#allocation40 + $0x8] sm:$0xff]
    %v4962 = vld [vmem:[#allocation40 + $0x10] sm:$0xff]
    %v4963 = vld [vmem:[#allocation40 + $0x18] sm:$0xff]
    %v4964 = vld [vmem:[#allocation40 + $0x20] sm:$0xff]
    %v4965 = vld [vmem:[#allocation40 + $0x28] sm:$0xff]
    %v4966 = vld [vmem:[#allocation40 + $0x30] sm:$0xff]
    %v4967 = vld [vmem:[#allocation40 + $0x38] sm:$0xff]
    %v4968 = vld [vmem:[#allocation40 + $0x40] sm:$0xff]
    %v4969 = vld [vmem:[#allocation40 + $0x48] sm:$0xff]
    %v4970 = vld [vmem:[#allocation40 + $0x50] sm:$0xff]
    %v4971 = vld [vmem:[#allocation40 + $0x58] sm:$0xff]
    %v4972 = vld [vmem:[#allocation40 + $0x60] sm:$0xff]
    %v4973 = vld [vmem:[#allocation40 + $0x68] sm:$0xff]
    %v4974 = vld [vmem:[#allocation40 + $0x70] sm:$0xff]
    %v4975 = vld [vmem:[#allocation40 + $0x78] sm:$0xff]
    %v4976 = vld [vmem:[#allocation40 + $0x80] sm:$0xff]
    %v4977 = vld [vmem:[#allocation40 + $0x88] sm:$0xff]
    %v4978 = vld [vmem:[#allocation40 + $0x90] sm:$0xff]
    %v4979 = vld [vmem:[#allocation40 + $0x98] sm:$0xff]
    %v4980 = vld [vmem:[#allocation40 + $0xa0] sm:$0xff]
    %v4981 = vld [vmem:[#allocation40 + $0xa8] sm:$0xff]
    %v4982 = vld [vmem:[#allocation40 + $0xb0] sm:$0xff]
    %v4983 = vld [vmem:[#allocation40 + $0xb8] sm:$0xff]
    %v4984 = vld [vmem:[#allocation40 + $0xc0] sm:$0xff]
    %v4985 = vld [vmem:[#allocation40 + $0xc8] sm:$0xff]
    %v4986 = vld [vmem:[#allocation40 + $0xd0] sm:$0xff]
    %v4987 = vld [vmem:[#allocation40 + $0xd8] sm:$0xff]
    %v4988 = vld [vmem:[#allocation40 + $0xe0] sm:$0xff]
    %v4989 = vld [vmem:[#allocation40 + $0xe8] sm:$0xff]
    %v4990 = vld [vmem:[#allocation40 + $0xf0] sm:$0xff]
    %v4991 = vld [vmem:[#allocation40 + $0xf8] sm:$0xff]
    %v4992 = vld [vmem:[#allocation40 + $0x100] sm:$0xff]
    %v4993 = vld [vmem:[#allocation40 + $0x108] sm:$0xff]
    %v4994 = vld [vmem:[#allocation40 + $0x110] sm:$0xff]
    %v4995 = vld [vmem:[#allocation40 + $0x118] sm:$0xff]
    %v4996 = vld [vmem:[#allocation40 + $0x120] sm:$0xff]
    %v4997 = vld [vmem:[#allocation40 + $0x128] sm:$0xff]
    %v4998 = vld [vmem:[#allocation40 + $0x130] sm:$0xff]
    %v4999 = vld [vmem:[#allocation40 + $0x138] sm:$0xff]
    %v5000 = vld [vmem:[#allocation40 + $0x140] sm:$0xff]
    %v5001 = vld [vmem:[#allocation40 + $0x148] sm:$0xff]
    %v5002 = vld [vmem:[#allocation40 + $0x150] sm:$0xff]
    %v5003 = vld [vmem:[#allocation40 + $0x158] sm:$0xff]
    %v5004 = vld [vmem:[#allocation40 + $0x160] sm:$0xff]
    %v5005 = vld [vmem:[#allocation40 + $0x168] sm:$0xff]
    %v5006 = vld [vmem:[#allocation40 + $0x170] sm:$0xff]
    %v5007 = vld [vmem:[#allocation40 + $0x178] sm:$0xff]
    %v5008 = vld [vmem:[#allocation40 + $0x180] sm:$0xff]
    %v5009 = vld [vmem:[#allocation40 + $0x188] sm:$0xff]
    %v5010 = vld [vmem:[#allocation40 + $0x190] sm:$0xff]
    %v5011 = vld [vmem:[#allocation40 + $0x198] sm:$0xff]
    %v5012 = vld [vmem:[#allocation40 + $0x1a0] sm:$0xff]
    %v5013 = vld [vmem:[#allocation40 + $0x1a8] sm:$0xff]
    %v5014 = vld [vmem:[#allocation40 + $0x1b0] sm:$0xff]
    %v5015 = vld [vmem:[#allocation40 + $0x1b8] sm:$0xff]
    %v5016 = vld [vmem:[#allocation40 + $0x1c0] sm:$0xff]
    %v5017 = vld [vmem:[#allocation40 + $0x1c8] sm:$0xff]
    %v5018 = vld [vmem:[#allocation40 + $0x1d0] sm:$0xff]
    %v5019 = vld [vmem:[#allocation40 + $0x1d8] sm:$0xff]
    %v5020 = vld [vmem:[#allocation40 + $0x1e0] sm:$0xff]
    %v5021 = vld [vmem:[#allocation40 + $0x1e8] sm:$0xff]
    %v5022 = vld [vmem:[#allocation40 + $0x1f0] sm:$0xff]
    %v5023 = vld [vmem:[#allocation40 + $0x1f8] sm:$0xff]
    %v5024 = vld [vmem:[#allocation40 + $0x200] sm:$0xff]
    %v5025 = vld [vmem:[#allocation40 + $0x208] sm:$0xff]
    %v5026 = vld [vmem:[#allocation40 + $0x210] sm:$0xff]
    %v5027 = vld [vmem:[#allocation40 + $0x218] sm:$0xff]
    %v5028 = vld [vmem:[#allocation40 + $0x220] sm:$0xff]
    %v5029 = vld [vmem:[#allocation40 + $0x228] sm:$0xff]
    %v5030 = vld [vmem:[#allocation40 + $0x230] sm:$0xff]
    %v5031 = vld [vmem:[#allocation40 + $0x238] sm:$0xff]
    %v5032 = vld [vmem:[#allocation40 + $0x240] sm:$0xff]
    %v5033 = vld [vmem:[#allocation40 + $0x248] sm:$0xff]
    %v5034 = vld [vmem:[#allocation40 + $0x250] sm:$0xff]
    %v5035 = vld [vmem:[#allocation40 + $0x258] sm:$0xff]
    %v5036 = vld [vmem:[#allocation40 + $0x260] sm:$0xff]
    %v5037 = vld [vmem:[#allocation40 + $0x268] sm:$0xff]
    %v5038 = vld [vmem:[#allocation40 + $0x270] sm:$0xff]
    %v5039 = vld [vmem:[#allocation40 + $0x278] sm:$0xff]
    %v5040 = vld [vmem:[#allocation40 + $0x280] sm:$0xff]
    %v5041 = vld [vmem:[#allocation40 + $0x288] sm:$0xff]
    %v5042 = vld [vmem:[#allocation40 + $0x290] sm:$0xff]
    %v5043 = vld [vmem:[#allocation40 + $0x298] sm:$0xff]
    %v5044 = vld [vmem:[#allocation40 + $0x2a0] sm:$0xff]
    %v5045 = vld [vmem:[#allocation40 + $0x2a8] sm:$0xff]
    %v5046 = vld [vmem:[#allocation40 + $0x2b0] sm:$0xff]
    %v5047 = vld [vmem:[#allocation40 + $0x2b8] sm:$0xff]
    %v5048 = vld [vmem:[#allocation40 + $0x2c0] sm:$0xff]
    %v5049 = vld [vmem:[#allocation40 + $0x2c8] sm:$0xff]
    %v5050 = vld [vmem:[#allocation40 + $0x2d0] sm:$0xff]
    %v5051 = vld [vmem:[#allocation40 + $0x2d8] sm:$0xff]
    %v5052 = vld [vmem:[#allocation40 + $0x2e0] sm:$0xff]
    %v5053 = vld [vmem:[#allocation40 + $0x2e8] sm:$0xff]
    %v5054 = vld [vmem:[#allocation40 + $0x2f0] sm:$0xff]
    %v5055 = vld [vmem:[#allocation40 + $0x2f8] sm:$0xff]
    %v5056 = vld [vmem:[#allocation40 + $0x300] sm:$0xff]
    %v5057 = vld [vmem:[#allocation40 + $0x308] sm:$0xff]
    %v5058 = vld [vmem:[#allocation40 + $0x310] sm:$0xff]
    %v5059 = vld [vmem:[#allocation40 + $0x318] sm:$0xff]
    %v5060 = vld [vmem:[#allocation40 + $0x320] sm:$0xff]
    %v5061 = vld [vmem:[#allocation40 + $0x328] sm:$0xff]
    %v5062 = vld [vmem:[#allocation40 + $0x330] sm:$0xff]
    %v5063 = vld [vmem:[#allocation40 + $0x338] sm:$0xff]
    %v5064 = vld [vmem:[#allocation40 + $0x340] sm:$0xff]
    %v5065 = vld [vmem:[#allocation40 + $0x348] sm:$0xff]
    %v5066 = vld [vmem:[#allocation40 + $0x350] sm:$0xff]
    %v5067 = vld [vmem:[#allocation40 + $0x358] sm:$0xff]
    %v5068 = vld [vmem:[#allocation40 + $0x360] sm:$0xff]
    %v5069 = vld [vmem:[#allocation40 + $0x368] sm:$0xff]
    %v5070 = vld [vmem:[#allocation40 + $0x370] sm:$0xff]
    %v5071 = vld [vmem:[#allocation40 + $0x378] sm:$0xff]
    %v5072 = vld [vmem:[#allocation40 + $0x380] sm:$0xff]
    %v5073 = vld [vmem:[#allocation40 + $0x388] sm:$0xff]
    %v5074 = vld [vmem:[#allocation40 + $0x390] sm:$0xff]
    %v5075 = vld [vmem:[#allocation40 + $0x398] sm:$0xff]
    %v5076 = vld [vmem:[#allocation40 + $0x3a0] sm:$0xff]
    %v5077 = vld [vmem:[#allocation40 + $0x3a8] sm:$0xff]
    %v5078 = vld [vmem:[#allocation40 + $0x3b0] sm:$0xff]
    %v5079 = vld [vmem:[#allocation40 + $0x3b8] sm:$0xff]
    %v5080 = vld [vmem:[#allocation40 + $0x3c0] sm:$0xff]
    %v5081 = vld [vmem:[#allocation40 + $0x3c8] sm:$0xff]
    %v5082 = vld [vmem:[#allocation40 + $0x3d0] sm:$0xff]
    %v5083 = vld [vmem:[#allocation40 + $0x3d8] sm:$0xff]
    %v5084 = vld [vmem:[#allocation40 + $0x3e0] sm:$0xff]
    %v5085 = vld [vmem:[#allocation40 + $0x3e8] sm:$0xff]
    %v5086 = vld [vmem:[#allocation40 + $0x3f0] sm:$0xff]
    %v5087 = vld [vmem:[#allocation40 + $0x3f8] sm:$0xff]
    %v5088 = vld [vmem:[#allocation40 + $0x400] sm:$0xff]
    %v5089 = vld [vmem:[#allocation40 + $0x408] sm:$0xff]
    %v5090 = vld [vmem:[#allocation40 + $0x410] sm:$0xff]
    %v5091 = vld [vmem:[#allocation40 + $0x418] sm:$0xff]
    %v5092 = vld [vmem:[#allocation40 + $0x420] sm:$0xff]
    %v5093 = vld [vmem:[#allocation40 + $0x428] sm:$0xff]
    %v5094 = vld [vmem:[#allocation40 + $0x430] sm:$0xff]
    %v5095 = vld [vmem:[#allocation40 + $0x438] sm:$0xff]
    %v5096 = vld [vmem:[#allocation40 + $0x440] sm:$0xff]
    %v5097 = vld [vmem:[#allocation40 + $0x448] sm:$0xff]
    %v5098 = vld [vmem:[#allocation40 + $0x450] sm:$0xff]
    %v5099 = vld [vmem:[#allocation40 + $0x458] sm:$0xff]
    %v5100 = vld [vmem:[#allocation40 + $0x460] sm:$0xff]
    %v5101 = vld [vmem:[#allocation40 + $0x468] sm:$0xff]
    %v5102 = vld [vmem:[#allocation40 + $0x470] sm:$0xff]
    %v5103 = vld [vmem:[#allocation40 + $0x478] sm:$0xff]
    %v5104 = vld [vmem:[#allocation40 + $0x480] sm:$0xff]
    %v5105 = vld [vmem:[#allocation40 + $0x488] sm:$0xff]
    %v5106 = vld [vmem:[#allocation40 + $0x490] sm:$0xff]
    %v5107 = vld [vmem:[#allocation40 + $0x498] sm:$0xff]
    %v5108 = vld [vmem:[#allocation40 + $0x4a0] sm:$0xff]
    %v5109 = vld [vmem:[#allocation40 + $0x4a8] sm:$0xff]
    %v5110 = vld [vmem:[#allocation40 + $0x4b0] sm:$0xff]
    %v5111 = vld [vmem:[#allocation40 + $0x4b8] sm:$0xff]
    %v5112 = vld [vmem:[#allocation40 + $0x4c0] sm:$0xff]
    %v5113 = vld [vmem:[#allocation40 + $0x4c8] sm:$0xff]
    %v5114 = vld [vmem:[#allocation40 + $0x4d0] sm:$0xff]
    %v5115 = vld [vmem:[#allocation40 + $0x4d8] sm:$0xff]
    %v5116 = vld [vmem:[#allocation40 + $0x4e0] sm:$0xff]
    %v5117 = vld [vmem:[#allocation40 + $0x4e8] sm:$0xff]
    %v5118 = vld [vmem:[#allocation40 + $0x4f0] sm:$0xff]
    %v5119 = vld [vmem:[#allocation40 + $0x4f8] sm:$0xff]
    %v5120 = vld [vmem:[#allocation40 + $0x500] sm:$0xff]
    %v5121 = vld [vmem:[#allocation40 + $0x508] sm:$0xff]
    %v5122 = vld [vmem:[#allocation40 + $0x510] sm:$0xff]
    %v5123 = vld [vmem:[#allocation40 + $0x518] sm:$0xff]
    %v5124 = vld [vmem:[#allocation40 + $0x520] sm:$0xff]
    %v5125 = vld [vmem:[#allocation40 + $0x528] sm:$0xff]
    %v5126 = vld [vmem:[#allocation40 + $0x530] sm:$0xff]
    %v5127 = vld [vmem:[#allocation40 + $0x538] sm:$0xff]
    %v5128 = vld [vmem:[#allocation40 + $0x540] sm:$0xff]
    %v5129 = vld [vmem:[#allocation40 + $0x548] sm:$0xff]
    %v5130 = vld [vmem:[#allocation40 + $0x550] sm:$0xff]
    %v5131 = vld [vmem:[#allocation40 + $0x558] sm:$0xff]
    %v5132 = vld [vmem:[#allocation40 + $0x560] sm:$0xff]
    %v5133 = vld [vmem:[#allocation40 + $0x568] sm:$0xff]
    %v5134 = vld [vmem:[#allocation40 + $0x570] sm:$0xff]
    %v5135 = vld [vmem:[#allocation40 + $0x578] sm:$0xff]
    %v5136 = vld [vmem:[#allocation40 + $0x580] sm:$0xff]
    %v5137 = vld [vmem:[#allocation40 + $0x588] sm:$0xff]
    %v5138 = vld [vmem:[#allocation40 + $0x590] sm:$0xff]
    %v5139 = vld [vmem:[#allocation40 + $0x598] sm:$0xff]
    %v5140 = vld [vmem:[#allocation40 + $0x5a0] sm:$0xff]
    %v5141 = vld [vmem:[#allocation40 + $0x5a8] sm:$0xff]
    %v5142 = vld [vmem:[#allocation40 + $0x5b0] sm:$0xff]
    %v5143 = vld [vmem:[#allocation40 + $0x5b8] sm:$0xff]
    %v5144 = vld [vmem:[#allocation40 + $0x5c0] sm:$0xff]
    %v5145 = vld [vmem:[#allocation40 + $0x5c8] sm:$0xff]
    %v5146 = vld [vmem:[#allocation40 + $0x5d0] sm:$0xff]
    %v5147 = vld [vmem:[#allocation40 + $0x5d8] sm:$0xff]
    %v5148 = vld [vmem:[#allocation40 + $0x5e0] sm:$0xff]
    %v5149 = vld [vmem:[#allocation40 + $0x5e8] sm:$0xff]
    %v5150 = vld [vmem:[#allocation40 + $0x5f0] sm:$0xff]
    %v5151 = vld [vmem:[#allocation40 + $0x5f8] sm:$0xff]
    %v5152 = vld [vmem:[#allocation40 + $0x600] sm:$0xff]
    %v5153 = vld [vmem:[#allocation40 + $0x608] sm:$0xff]
    %v5154 = vld [vmem:[#allocation40 + $0x610] sm:$0xff]
    %v5155 = vld [vmem:[#allocation40 + $0x618] sm:$0xff]
    %v5156 = vld [vmem:[#allocation40 + $0x620] sm:$0xff]
    %v5157 = vld [vmem:[#allocation40 + $0x628] sm:$0xff]
    %v5158 = vld [vmem:[#allocation40 + $0x630] sm:$0xff]
    %v5159 = vld [vmem:[#allocation40 + $0x638] sm:$0xff]
    %v5160 = vld [vmem:[#allocation40 + $0x640] sm:$0xff]
    %v5161 = vld [vmem:[#allocation40 + $0x648] sm:$0xff]
    %v5162 = vld [vmem:[#allocation40 + $0x650] sm:$0xff]
    %v5163 = vld [vmem:[#allocation40 + $0x658] sm:$0xff]
    %v5164 = vld [vmem:[#allocation40 + $0x660] sm:$0xff]
    %v5165 = vld [vmem:[#allocation40 + $0x668] sm:$0xff]
    %v5166 = vld [vmem:[#allocation40 + $0x670] sm:$0xff]
    %v5167 = vld [vmem:[#allocation40 + $0x678] sm:$0xff]
    %v5168 = vld [vmem:[#allocation40 + $0x680] sm:$0xff]
    %v5169 = vld [vmem:[#allocation40 + $0x688] sm:$0xff]
    %v5170 = vld [vmem:[#allocation40 + $0x690] sm:$0xff]
    %v5171 = vld [vmem:[#allocation40 + $0x698] sm:$0xff]
    %v5172 = vld [vmem:[#allocation40 + $0x6a0] sm:$0xff]
    %v5173 = vld [vmem:[#allocation40 + $0x6a8] sm:$0xff]
    %v5174 = vld [vmem:[#allocation40 + $0x6b0] sm:$0xff]
    %v5175 = vld [vmem:[#allocation40 + $0x6b8] sm:$0xff]
    %v5176 = vld [vmem:[#allocation40 + $0x6c0] sm:$0xff]
    %v5177 = vld [vmem:[#allocation40 + $0x6c8] sm:$0xff]
    %v5178 = vld [vmem:[#allocation40 + $0x6d0] sm:$0xff]
    %v5179 = vld [vmem:[#allocation40 + $0x6d8] sm:$0xff]
    %v5180 = vld [vmem:[#allocation40 + $0x6e0] sm:$0xff]
    %v5181 = vld [vmem:[#allocation40 + $0x6e8] sm:$0xff]
    %v5182 = vld [vmem:[#allocation40 + $0x6f0] sm:$0xff]
    %v5183 = vld [vmem:[#allocation40 + $0x6f8] sm:$0xff]
    %v5184 = vld [vmem:[#allocation40 + $0x700] sm:$0xff]
    %v5185 = vld [vmem:[#allocation40 + $0x708] sm:$0xff]
    %v5186 = vld [vmem:[#allocation40 + $0x710] sm:$0xff]
    %v5187 = vld [vmem:[#allocation40 + $0x718] sm:$0xff]
    %v5188 = vld [vmem:[#allocation40 + $0x720] sm:$0xff]
    %v5189 = vld [vmem:[#allocation40 + $0x728] sm:$0xff]
    %v5190 = vld [vmem:[#allocation40 + $0x730] sm:$0xff]
    %v5191 = vld [vmem:[#allocation40 + $0x738] sm:$0xff]
    %v5192 = vld [vmem:[#allocation40 + $0x740] sm:$0xff]
    %v5193 = vld [vmem:[#allocation40 + $0x748] sm:$0xff]
    %v5194 = vld [vmem:[#allocation40 + $0x750] sm:$0xff]
    %v5195 = vld [vmem:[#allocation40 + $0x758] sm:$0xff]
    %v5196 = vld [vmem:[#allocation40 + $0x760] sm:$0xff]
    %v5197 = vld [vmem:[#allocation40 + $0x768] sm:$0xff]
    %v5198 = vld [vmem:[#allocation40 + $0x770] sm:$0xff]
    %v5199 = vld [vmem:[#allocation40 + $0x778] sm:$0xff]
    %v5200 = vld [vmem:[#allocation40 + $0x780] sm:$0xff]
    %v5201 = vld [vmem:[#allocation40 + $0x788] sm:$0xff]
    %v5202 = vld [vmem:[#allocation40 + $0x790] sm:$0xff]
    %v5203 = vld [vmem:[#allocation40 + $0x798] sm:$0xff]
    %v5204 = vld [vmem:[#allocation40 + $0x7a0] sm:$0xff]
    %v5205 = vld [vmem:[#allocation40 + $0x7a8] sm:$0xff]
    %v5206 = vld [vmem:[#allocation40 + $0x7b0] sm:$0xff]
    %v5207 = vld [vmem:[#allocation40 + $0x7b8] sm:$0xff]
    %v5208 = vld [vmem:[#allocation40 + $0x7c0] sm:$0xff]
    %v5209 = vld [vmem:[#allocation40 + $0x7c8] sm:$0xff]
    %v5210 = vld [vmem:[#allocation40 + $0x7d0] sm:$0xff]
    %v5211 = vld [vmem:[#allocation40 + $0x7d8] sm:$0xff]
    %v5212 = vld [vmem:[#allocation40 + $0x7e0] sm:$0xff]
    %v5213 = vld [vmem:[#allocation40 + $0x7e8] sm:$0xff]
    %v5214 = vld [vmem:[#allocation40 + $0x7f0] sm:$0xff]
    %v5215 = vld [vmem:[#allocation40 + $0x7f8] sm:$0xff]
    %v5216 = vunpack.c.l.s8.bf16 %v4960
    %v5217 = vunpack.c.l.s8.bf16 %v4961
    %v5218 = vunpack.c.l.s8.bf16 %v4962
    %v5219 = vunpack.c.l.s8.bf16 %v4963
    %v5220 = vunpack.c.l.s8.bf16 %v4964
    %v5221 = vunpack.c.l.s8.bf16 %v4965
    %v5222 = vunpack.c.l.s8.bf16 %v4966
    %v5223 = vunpack.c.l.s8.bf16 %v4967
    %v5224 = vunpack.c.h.s8.bf16 %v4960
    %v5225 = vunpack.c.h.s8.bf16 %v4961
    %v5226 = vunpack.c.h.s8.bf16 %v4962
    %v5227 = vunpack.c.h.s8.bf16 %v4963
    %v5228 = vunpack.c.h.s8.bf16 %v4964
    %v5229 = vunpack.c.h.s8.bf16 %v4965
    %v5230 = vunpack.c.h.s8.bf16 %v4966
    %v5231 = vunpack.c.h.s8.bf16 %v4967
    %v5232 = vunpack.c.l.s8.bf16 %v4968
    %v5233 = vunpack.c.l.s8.bf16 %v4969
    %v5234 = vunpack.c.l.s8.bf16 %v4970
    %v5235 = vunpack.c.l.s8.bf16 %v4971
    %v5236 = vunpack.c.l.s8.bf16 %v4972
    %v5237 = vunpack.c.l.s8.bf16 %v4973
    %v5238 = vunpack.c.l.s8.bf16 %v4974
    %v5239 = vunpack.c.l.s8.bf16 %v4975
    %v5240 = vunpack.c.h.s8.bf16 %v4968
    %v5241 = vunpack.c.h.s8.bf16 %v4969
    %v5242 = vunpack.c.h.s8.bf16 %v4970
    %v5243 = vunpack.c.h.s8.bf16 %v4971
    %v5244 = vunpack.c.h.s8.bf16 %v4972
    %v5245 = vunpack.c.h.s8.bf16 %v4973
    %v5246 = vunpack.c.h.s8.bf16 %v4974
    %v5247 = vunpack.c.h.s8.bf16 %v4975
    %v5248 = vunpack.c.l.s8.bf16 %v4976
    %v5249 = vunpack.c.l.s8.bf16 %v4977
    %v5250 = vunpack.c.l.s8.bf16 %v4978
    %v5251 = vunpack.c.l.s8.bf16 %v4979
    %v5252 = vunpack.c.l.s8.bf16 %v4980
    %v5253 = vunpack.c.l.s8.bf16 %v4981
    %v5254 = vunpack.c.l.s8.bf16 %v4982
    %v5255 = vunpack.c.l.s8.bf16 %v4983
    %v5256 = vunpack.c.h.s8.bf16 %v4976
    %v5257 = vunpack.c.h.s8.bf16 %v4977
    %v5258 = vunpack.c.h.s8.bf16 %v4978
    %v5259 = vunpack.c.h.s8.bf16 %v4979
    %v5260 = vunpack.c.h.s8.bf16 %v4980
    %v5261 = vunpack.c.h.s8.bf16 %v4981
    %v5262 = vunpack.c.h.s8.bf16 %v4982
    %v5263 = vunpack.c.h.s8.bf16 %v4983
    %v5264 = vunpack.c.l.s8.bf16 %v4984
    %v5265 = vunpack.c.l.s8.bf16 %v4985
    %v5266 = vunpack.c.l.s8.bf16 %v4986
    %v5267 = vunpack.c.l.s8.bf16 %v4987
    %v5268 = vunpack.c.l.s8.bf16 %v4988
    %v5269 = vunpack.c.l.s8.bf16 %v4989
    %v5270 = vunpack.c.l.s8.bf16 %v4990
    %v5271 = vunpack.c.l.s8.bf16 %v4991
    %v5272 = vunpack.c.h.s8.bf16 %v4984
    %v5273 = vunpack.c.h.s8.bf16 %v4985
    %v5274 = vunpack.c.h.s8.bf16 %v4986
    %v5275 = vunpack.c.h.s8.bf16 %v4987
    %v5276 = vunpack.c.h.s8.bf16 %v4988
    %v5277 = vunpack.c.h.s8.bf16 %v4989
    %v5278 = vunpack.c.h.s8.bf16 %v4990
    %v5279 = vunpack.c.h.s8.bf16 %v4991
    %v5280 = vunpack.c.l.s8.bf16 %v4992
    %v5281 = vunpack.c.l.s8.bf16 %v4993
    %v5282 = vunpack.c.l.s8.bf16 %v4994
    %v5283 = vunpack.c.l.s8.bf16 %v4995
    %v5284 = vunpack.c.l.s8.bf16 %v4996
    %v5285 = vunpack.c.l.s8.bf16 %v4997
    %v5286 = vunpack.c.l.s8.bf16 %v4998
    %v5287 = vunpack.c.l.s8.bf16 %v4999
    %v5288 = vunpack.c.h.s8.bf16 %v4992
    %v5289 = vunpack.c.h.s8.bf16 %v4993
    %v5290 = vunpack.c.h.s8.bf16 %v4994
    %v5291 = vunpack.c.h.s8.bf16 %v4995
    %v5292 = vunpack.c.h.s8.bf16 %v4996
    %v5293 = vunpack.c.h.s8.bf16 %v4997
    %v5294 = vunpack.c.h.s8.bf16 %v4998
    %v5295 = vunpack.c.h.s8.bf16 %v4999
    %v5296 = vunpack.c.l.s8.bf16 %v5000
    %v5297 = vunpack.c.l.s8.bf16 %v5001
    %v5298 = vunpack.c.l.s8.bf16 %v5002
    %v5299 = vunpack.c.l.s8.bf16 %v5003
    %v5300 = vunpack.c.l.s8.bf16 %v5004
    %v5301 = vunpack.c.l.s8.bf16 %v5005
    %v5302 = vunpack.c.l.s8.bf16 %v5006
    %v5303 = vunpack.c.l.s8.bf16 %v5007
    %v5304 = vunpack.c.h.s8.bf16 %v5000
    %v5305 = vunpack.c.h.s8.bf16 %v5001
    %v5306 = vunpack.c.h.s8.bf16 %v5002
    %v5307 = vunpack.c.h.s8.bf16 %v5003
    %v5308 = vunpack.c.h.s8.bf16 %v5004
    %v5309 = vunpack.c.h.s8.bf16 %v5005
    %v5310 = vunpack.c.h.s8.bf16 %v5006
    %v5311 = vunpack.c.h.s8.bf16 %v5007
    %v5312 = vunpack.c.l.s8.bf16 %v5008
    %v5313 = vunpack.c.l.s8.bf16 %v5009
    %v5314 = vunpack.c.l.s8.bf16 %v5010
    %v5315 = vunpack.c.l.s8.bf16 %v5011
    %v5316 = vunpack.c.l.s8.bf16 %v5012
    %v5317 = vunpack.c.l.s8.bf16 %v5013
    %v5318 = vunpack.c.l.s8.bf16 %v5014
    %v5319 = vunpack.c.l.s8.bf16 %v5015
    %v5320 = vunpack.c.h.s8.bf16 %v5008
    %v5321 = vunpack.c.h.s8.bf16 %v5009
    %v5322 = vunpack.c.h.s8.bf16 %v5010
    %v5323 = vunpack.c.h.s8.bf16 %v5011
    %v5324 = vunpack.c.h.s8.bf16 %v5012
    %v5325 = vunpack.c.h.s8.bf16 %v5013
    %v5326 = vunpack.c.h.s8.bf16 %v5014
    %v5327 = vunpack.c.h.s8.bf16 %v5015
    %v5328 = vunpack.c.l.s8.bf16 %v5016
    %v5329 = vunpack.c.l.s8.bf16 %v5017
    %v5330 = vunpack.c.l.s8.bf16 %v5018
    %v5331 = vunpack.c.l.s8.bf16 %v5019
    %v5332 = vunpack.c.l.s8.bf16 %v5020
    %v5333 = vunpack.c.l.s8.bf16 %v5021
    %v5334 = vunpack.c.l.s8.bf16 %v5022
    %v5335 = vunpack.c.l.s8.bf16 %v5023
    %v5336 = vunpack.c.h.s8.bf16 %v5016
    %v5337 = vunpack.c.h.s8.bf16 %v5017
    %v5338 = vunpack.c.h.s8.bf16 %v5018
    %v5339 = vunpack.c.h.s8.bf16 %v5019
    %v5340 = vunpack.c.h.s8.bf16 %v5020
    %v5341 = vunpack.c.h.s8.bf16 %v5021
    %v5342 = vunpack.c.h.s8.bf16 %v5022
    %v5343 = vunpack.c.h.s8.bf16 %v5023
    %v5344 = vunpack.c.l.s8.bf16 %v5024
    %v5345 = vunpack.c.l.s8.bf16 %v5025
    %v5346 = vunpack.c.l.s8.bf16 %v5026
    %v5347 = vunpack.c.l.s8.bf16 %v5027
    %v5348 = vunpack.c.l.s8.bf16 %v5028
    %v5349 = vunpack.c.l.s8.bf16 %v5029
    %v5350 = vunpack.c.l.s8.bf16 %v5030
    %v5351 = vunpack.c.l.s8.bf16 %v5031
    %v5352 = vunpack.c.h.s8.bf16 %v5024
    %v5353 = vunpack.c.h.s8.bf16 %v5025
    %v5354 = vunpack.c.h.s8.bf16 %v5026
    %v5355 = vunpack.c.h.s8.bf16 %v5027
    %v5356 = vunpack.c.h.s8.bf16 %v5028
    %v5357 = vunpack.c.h.s8.bf16 %v5029
    %v5358 = vunpack.c.h.s8.bf16 %v5030
    %v5359 = vunpack.c.h.s8.bf16 %v5031
    %v5360 = vunpack.c.l.s8.bf16 %v5032
    %v5361 = vunpack.c.l.s8.bf16 %v5033
    %v5362 = vunpack.c.l.s8.bf16 %v5034
    %v5363 = vunpack.c.l.s8.bf16 %v5035
    %v5364 = vunpack.c.l.s8.bf16 %v5036
    %v5365 = vunpack.c.l.s8.bf16 %v5037
    %v5366 = vunpack.c.l.s8.bf16 %v5038
    %v5367 = vunpack.c.l.s8.bf16 %v5039
    %v5368 = vunpack.c.h.s8.bf16 %v5032
    %v5369 = vunpack.c.h.s8.bf16 %v5033
    %v5370 = vunpack.c.h.s8.bf16 %v5034
    %v5371 = vunpack.c.h.s8.bf16 %v5035
    %v5372 = vunpack.c.h.s8.bf16 %v5036
    %v5373 = vunpack.c.h.s8.bf16 %v5037
    %v5374 = vunpack.c.h.s8.bf16 %v5038
    %v5375 = vunpack.c.h.s8.bf16 %v5039
    %v5376 = vunpack.c.l.s8.bf16 %v5040
    %v5377 = vunpack.c.l.s8.bf16 %v5041
    %v5378 = vunpack.c.l.s8.bf16 %v5042
    %v5379 = vunpack.c.l.s8.bf16 %v5043
    %v5380 = vunpack.c.l.s8.bf16 %v5044
    %v5381 = vunpack.c.l.s8.bf16 %v5045
    %v5382 = vunpack.c.l.s8.bf16 %v5046
    %v5383 = vunpack.c.l.s8.bf16 %v5047
    %v5384 = vunpack.c.h.s8.bf16 %v5040
    %v5385 = vunpack.c.h.s8.bf16 %v5041
    %v5386 = vunpack.c.h.s8.bf16 %v5042
    %v5387 = vunpack.c.h.s8.bf16 %v5043
    %v5388 = vunpack.c.h.s8.bf16 %v5044
    %v5389 = vunpack.c.h.s8.bf16 %v5045
    %v5390 = vunpack.c.h.s8.bf16 %v5046
    %v5391 = vunpack.c.h.s8.bf16 %v5047
    %v5392 = vunpack.c.l.s8.bf16 %v5048
    %v5393 = vunpack.c.l.s8.bf16 %v5049
    %v5394 = vunpack.c.l.s8.bf16 %v5050
    %v5395 = vunpack.c.l.s8.bf16 %v5051
    %v5396 = vunpack.c.l.s8.bf16 %v5052
    %v5397 = vunpack.c.l.s8.bf16 %v5053
    %v5398 = vunpack.c.l.s8.bf16 %v5054
    %v5399 = vunpack.c.l.s8.bf16 %v5055
    %v5400 = vunpack.c.h.s8.bf16 %v5048
    %v5401 = vunpack.c.h.s8.bf16 %v5049
    %v5402 = vunpack.c.h.s8.bf16 %v5050
    %v5403 = vunpack.c.h.s8.bf16 %v5051
    %v5404 = vunpack.c.h.s8.bf16 %v5052
    %v5405 = vunpack.c.h.s8.bf16 %v5053
    %v5406 = vunpack.c.h.s8.bf16 %v5054
    %v5407 = vunpack.c.h.s8.bf16 %v5055
    %v5408 = vunpack.c.l.s8.bf16 %v5056
    %v5409 = vunpack.c.l.s8.bf16 %v5057
    %v5410 = vunpack.c.l.s8.bf16 %v5058
    %v5411 = vunpack.c.l.s8.bf16 %v5059
    %v5412 = vunpack.c.l.s8.bf16 %v5060
    %v5413 = vunpack.c.l.s8.bf16 %v5061
    %v5414 = vunpack.c.l.s8.bf16 %v5062
    %v5415 = vunpack.c.l.s8.bf16 %v5063
    %v5416 = vunpack.c.h.s8.bf16 %v5056
    %v5417 = vunpack.c.h.s8.bf16 %v5057
    %v5418 = vunpack.c.h.s8.bf16 %v5058
    %v5419 = vunpack.c.h.s8.bf16 %v5059
    %v5420 = vunpack.c.h.s8.bf16 %v5060
    %v5421 = vunpack.c.h.s8.bf16 %v5061
    %v5422 = vunpack.c.h.s8.bf16 %v5062
    %v5423 = vunpack.c.h.s8.bf16 %v5063
    %v5424 = vunpack.c.l.s8.bf16 %v5064
    %v5425 = vunpack.c.l.s8.bf16 %v5065
    %v5426 = vunpack.c.l.s8.bf16 %v5066
    %v5427 = vunpack.c.l.s8.bf16 %v5067
    %v5428 = vunpack.c.l.s8.bf16 %v5068
    %v5429 = vunpack.c.l.s8.bf16 %v5069
    %v5430 = vunpack.c.l.s8.bf16 %v5070
    %v5431 = vunpack.c.l.s8.bf16 %v5071
    %v5432 = vunpack.c.h.s8.bf16 %v5064
    %v5433 = vunpack.c.h.s8.bf16 %v5065
    %v5434 = vunpack.c.h.s8.bf16 %v5066
    %v5435 = vunpack.c.h.s8.bf16 %v5067
    %v5436 = vunpack.c.h.s8.bf16 %v5068
    %v5437 = vunpack.c.h.s8.bf16 %v5069
    %v5438 = vunpack.c.h.s8.bf16 %v5070
    %v5439 = vunpack.c.h.s8.bf16 %v5071
    %v5440 = vunpack.c.l.s8.bf16 %v5072
    %v5441 = vunpack.c.l.s8.bf16 %v5073
    %v5442 = vunpack.c.l.s8.bf16 %v5074
    %v5443 = vunpack.c.l.s8.bf16 %v5075
    %v5444 = vunpack.c.l.s8.bf16 %v5076
    %v5445 = vunpack.c.l.s8.bf16 %v5077
    %v5446 = vunpack.c.l.s8.bf16 %v5078
    %v5447 = vunpack.c.l.s8.bf16 %v5079
    %v5448 = vunpack.c.h.s8.bf16 %v5072
    %v5449 = vunpack.c.h.s8.bf16 %v5073
    %v5450 = vunpack.c.h.s8.bf16 %v5074
    %v5451 = vunpack.c.h.s8.bf16 %v5075
    %v5452 = vunpack.c.h.s8.bf16 %v5076
    %v5453 = vunpack.c.h.s8.bf16 %v5077
    %v5454 = vunpack.c.h.s8.bf16 %v5078
    %v5455 = vunpack.c.h.s8.bf16 %v5079
    %v5456 = vunpack.c.l.s8.bf16 %v5080
    %v5457 = vunpack.c.l.s8.bf16 %v5081
    %v5458 = vunpack.c.l.s8.bf16 %v5082
    %v5459 = vunpack.c.l.s8.bf16 %v5083
    %v5460 = vunpack.c.l.s8.bf16 %v5084
    %v5461 = vunpack.c.l.s8.bf16 %v5085
    %v5462 = vunpack.c.l.s8.bf16 %v5086
    %v5463 = vunpack.c.l.s8.bf16 %v5087
    %v5464 = vunpack.c.h.s8.bf16 %v5080
    %v5465 = vunpack.c.h.s8.bf16 %v5081
    %v5466 = vunpack.c.h.s8.bf16 %v5082
    %v5467 = vunpack.c.h.s8.bf16 %v5083
    %v5468 = vunpack.c.h.s8.bf16 %v5084
    %v5469 = vunpack.c.h.s8.bf16 %v5085
    %v5470 = vunpack.c.h.s8.bf16 %v5086
    %v5471 = vunpack.c.h.s8.bf16 %v5087
    %v5472 = vunpack.c.l.s8.bf16 %v5088
    %v5473 = vunpack.c.l.s8.bf16 %v5089
    %v5474 = vunpack.c.l.s8.bf16 %v5090
    %v5475 = vunpack.c.l.s8.bf16 %v5091
    %v5476 = vunpack.c.l.s8.bf16 %v5092
    %v5477 = vunpack.c.l.s8.bf16 %v5093
    %v5478 = vunpack.c.l.s8.bf16 %v5094
    %v5479 = vunpack.c.l.s8.bf16 %v5095
    %v5480 = vunpack.c.h.s8.bf16 %v5088
    %v5481 = vunpack.c.h.s8.bf16 %v5089
    %v5482 = vunpack.c.h.s8.bf16 %v5090
    %v5483 = vunpack.c.h.s8.bf16 %v5091
    %v5484 = vunpack.c.h.s8.bf16 %v5092
    %v5485 = vunpack.c.h.s8.bf16 %v5093
    %v5486 = vunpack.c.h.s8.bf16 %v5094
    %v5487 = vunpack.c.h.s8.bf16 %v5095
    %v5488 = vunpack.c.l.s8.bf16 %v5096
    %v5489 = vunpack.c.l.s8.bf16 %v5097
    %v5490 = vunpack.c.l.s8.bf16 %v5098
    %v5491 = vunpack.c.l.s8.bf16 %v5099
    %v5492 = vunpack.c.l.s8.bf16 %v5100
    %v5493 = vunpack.c.l.s8.bf16 %v5101
    %v5494 = vunpack.c.l.s8.bf16 %v5102
    %v5495 = vunpack.c.l.s8.bf16 %v5103
    %v5496 = vunpack.c.h.s8.bf16 %v5096
    %v5497 = vunpack.c.h.s8.bf16 %v5097
    %v5498 = vunpack.c.h.s8.bf16 %v5098
    %v5499 = vunpack.c.h.s8.bf16 %v5099
    %v5500 = vunpack.c.h.s8.bf16 %v5100
    %v5501 = vunpack.c.h.s8.bf16 %v5101
    %v5502 = vunpack.c.h.s8.bf16 %v5102
    %v5503 = vunpack.c.h.s8.bf16 %v5103
    %v5504 = vunpack.c.l.s8.bf16 %v5104
    %v5505 = vunpack.c.l.s8.bf16 %v5105
    %v5506 = vunpack.c.l.s8.bf16 %v5106
    %v5507 = vunpack.c.l.s8.bf16 %v5107
    %v5508 = vunpack.c.l.s8.bf16 %v5108
    %v5509 = vunpack.c.l.s8.bf16 %v5109
    %v5510 = vunpack.c.l.s8.bf16 %v5110
    %v5511 = vunpack.c.l.s8.bf16 %v5111
    %v5512 = vunpack.c.h.s8.bf16 %v5104
    %v5513 = vunpack.c.h.s8.bf16 %v5105
    %v5514 = vunpack.c.h.s8.bf16 %v5106
    %v5515 = vunpack.c.h.s8.bf16 %v5107
    %v5516 = vunpack.c.h.s8.bf16 %v5108
    %v5517 = vunpack.c.h.s8.bf16 %v5109
    %v5518 = vunpack.c.h.s8.bf16 %v5110
    %v5519 = vunpack.c.h.s8.bf16 %v5111
    %v5520 = vunpack.c.l.s8.bf16 %v5112
    %v5521 = vunpack.c.l.s8.bf16 %v5113
    %v5522 = vunpack.c.l.s8.bf16 %v5114
    %v5523 = vunpack.c.l.s8.bf16 %v5115
    %v5524 = vunpack.c.l.s8.bf16 %v5116
    %v5525 = vunpack.c.l.s8.bf16 %v5117
    %v5526 = vunpack.c.l.s8.bf16 %v5118
    %v5527 = vunpack.c.l.s8.bf16 %v5119
    %v5528 = vunpack.c.h.s8.bf16 %v5112
    %v5529 = vunpack.c.h.s8.bf16 %v5113
    %v5530 = vunpack.c.h.s8.bf16 %v5114
    %v5531 = vunpack.c.h.s8.bf16 %v5115
    %v5532 = vunpack.c.h.s8.bf16 %v5116
    %v5533 = vunpack.c.h.s8.bf16 %v5117
    %v5534 = vunpack.c.h.s8.bf16 %v5118
    %v5535 = vunpack.c.h.s8.bf16 %v5119
    %v5536 = vunpack.c.l.s8.bf16 %v5120
    %v5537 = vunpack.c.l.s8.bf16 %v5121
    %v5538 = vunpack.c.l.s8.bf16 %v5122
    %v5539 = vunpack.c.l.s8.bf16 %v5123
    %v5540 = vunpack.c.l.s8.bf16 %v5124
    %v5541 = vunpack.c.l.s8.bf16 %v5125
    %v5542 = vunpack.c.l.s8.bf16 %v5126
    %v5543 = vunpack.c.l.s8.bf16 %v5127
    %v5544 = vunpack.c.h.s8.bf16 %v5120
    %v5545 = vunpack.c.h.s8.bf16 %v5121
    %v5546 = vunpack.c.h.s8.bf16 %v5122
    %v5547 = vunpack.c.h.s8.bf16 %v5123
    %v5548 = vunpack.c.h.s8.bf16 %v5124
    %v5549 = vunpack.c.h.s8.bf16 %v5125
    %v5550 = vunpack.c.h.s8.bf16 %v5126
    %v5551 = vunpack.c.h.s8.bf16 %v5127
    %v5552 = vunpack.c.l.s8.bf16 %v5128
    %v5553 = vunpack.c.l.s8.bf16 %v5129
    %v5554 = vunpack.c.l.s8.bf16 %v5130
    %v5555 = vunpack.c.l.s8.bf16 %v5131
    %v5556 = vunpack.c.l.s8.bf16 %v5132
    %v5557 = vunpack.c.l.s8.bf16 %v5133
    %v5558 = vunpack.c.l.s8.bf16 %v5134
    %v5559 = vunpack.c.l.s8.bf16 %v5135
    %v5560 = vunpack.c.h.s8.bf16 %v5128
    %v5561 = vunpack.c.h.s8.bf16 %v5129
    %v5562 = vunpack.c.h.s8.bf16 %v5130
    %v5563 = vunpack.c.h.s8.bf16 %v5131
    %v5564 = vunpack.c.h.s8.bf16 %v5132
    %v5565 = vunpack.c.h.s8.bf16 %v5133
    %v5566 = vunpack.c.h.s8.bf16 %v5134
    %v5567 = vunpack.c.h.s8.bf16 %v5135
    %v5568 = vunpack.c.l.s8.bf16 %v5136
    %v5569 = vunpack.c.l.s8.bf16 %v5137
    %v5570 = vunpack.c.l.s8.bf16 %v5138
    %v5571 = vunpack.c.l.s8.bf16 %v5139
    %v5572 = vunpack.c.l.s8.bf16 %v5140
    %v5573 = vunpack.c.l.s8.bf16 %v5141
    %v5574 = vunpack.c.l.s8.bf16 %v5142
    %v5575 = vunpack.c.l.s8.bf16 %v5143
    %v5576 = vunpack.c.h.s8.bf16 %v5136
    %v5577 = vunpack.c.h.s8.bf16 %v5137
    %v5578 = vunpack.c.h.s8.bf16 %v5138
    %v5579 = vunpack.c.h.s8.bf16 %v5139
    %v5580 = vunpack.c.h.s8.bf16 %v5140
    %v5581 = vunpack.c.h.s8.bf16 %v5141
    %v5582 = vunpack.c.h.s8.bf16 %v5142
    %v5583 = vunpack.c.h.s8.bf16 %v5143
    %v5584 = vunpack.c.l.s8.bf16 %v5144
    %v5585 = vunpack.c.l.s8.bf16 %v5145
    %v5586 = vunpack.c.l.s8.bf16 %v5146
    %v5587 = vunpack.c.l.s8.bf16 %v5147
    %v5588 = vunpack.c.l.s8.bf16 %v5148
    %v5589 = vunpack.c.l.s8.bf16 %v5149
    %v5590 = vunpack.c.l.s8.bf16 %v5150
    %v5591 = vunpack.c.l.s8.bf16 %v5151
    %v5592 = vunpack.c.h.s8.bf16 %v5144
    %v5593 = vunpack.c.h.s8.bf16 %v5145
    %v5594 = vunpack.c.h.s8.bf16 %v5146
    %v5595 = vunpack.c.h.s8.bf16 %v5147
    %v5596 = vunpack.c.h.s8.bf16 %v5148
    %v5597 = vunpack.c.h.s8.bf16 %v5149
    %v5598 = vunpack.c.h.s8.bf16 %v5150
    %v5599 = vunpack.c.h.s8.bf16 %v5151
    %v5600 = vunpack.c.l.s8.bf16 %v5152
    %v5601 = vunpack.c.l.s8.bf16 %v5153
    %v5602 = vunpack.c.l.s8.bf16 %v5154
    %v5603 = vunpack.c.l.s8.bf16 %v5155
    %v5604 = vunpack.c.l.s8.bf16 %v5156
    %v5605 = vunpack.c.l.s8.bf16 %v5157
    %v5606 = vunpack.c.l.s8.bf16 %v5158
    %v5607 = vunpack.c.l.s8.bf16 %v5159
    %v5608 = vunpack.c.h.s8.bf16 %v5152
    %v5609 = vunpack.c.h.s8.bf16 %v5153
    %v5610 = vunpack.c.h.s8.bf16 %v5154
    %v5611 = vunpack.c.h.s8.bf16 %v5155
    %v5612 = vunpack.c.h.s8.bf16 %v5156
    %v5613 = vunpack.c.h.s8.bf16 %v5157
    %v5614 = vunpack.c.h.s8.bf16 %v5158
    %v5615 = vunpack.c.h.s8.bf16 %v5159
    %v5616 = vunpack.c.l.s8.bf16 %v5160
    %v5617 = vunpack.c.l.s8.bf16 %v5161
    %v5618 = vunpack.c.l.s8.bf16 %v5162
    %v5619 = vunpack.c.l.s8.bf16 %v5163
    %v5620 = vunpack.c.l.s8.bf16 %v5164
    %v5621 = vunpack.c.l.s8.bf16 %v5165
    %v5622 = vunpack.c.l.s8.bf16 %v5166
    %v5623 = vunpack.c.l.s8.bf16 %v5167
    %v5624 = vunpack.c.h.s8.bf16 %v5160
    %v5625 = vunpack.c.h.s8.bf16 %v5161
    %v5626 = vunpack.c.h.s8.bf16 %v5162
    %v5627 = vunpack.c.h.s8.bf16 %v5163
    %v5628 = vunpack.c.h.s8.bf16 %v5164
    %v5629 = vunpack.c.h.s8.bf16 %v5165
    %v5630 = vunpack.c.h.s8.bf16 %v5166
    %v5631 = vunpack.c.h.s8.bf16 %v5167
    %v5632 = vunpack.c.l.s8.bf16 %v5168
    %v5633 = vunpack.c.l.s8.bf16 %v5169
    %v5634 = vunpack.c.l.s8.bf16 %v5170
    %v5635 = vunpack.c.l.s8.bf16 %v5171
    %v5636 = vunpack.c.l.s8.bf16 %v5172
    %v5637 = vunpack.c.l.s8.bf16 %v5173
    %v5638 = vunpack.c.l.s8.bf16 %v5174
    %v5639 = vunpack.c.l.s8.bf16 %v5175
    %v5640 = vunpack.c.h.s8.bf16 %v5168
    %v5641 = vunpack.c.h.s8.bf16 %v5169
    %v5642 = vunpack.c.h.s8.bf16 %v5170
    %v5643 = vunpack.c.h.s8.bf16 %v5171
    %v5644 = vunpack.c.h.s8.bf16 %v5172
    %v5645 = vunpack.c.h.s8.bf16 %v5173
    %v5646 = vunpack.c.h.s8.bf16 %v5174
    %v5647 = vunpack.c.h.s8.bf16 %v5175
    %v5648 = vunpack.c.l.s8.bf16 %v5176
    %v5649 = vunpack.c.l.s8.bf16 %v5177
    %v5650 = vunpack.c.l.s8.bf16 %v5178
    %v5651 = vunpack.c.l.s8.bf16 %v5179
    %v5652 = vunpack.c.l.s8.bf16 %v5180
    %v5653 = vunpack.c.l.s8.bf16 %v5181
    %v5654 = vunpack.c.l.s8.bf16 %v5182
    %v5655 = vunpack.c.l.s8.bf16 %v5183
    %v5656 = vunpack.c.h.s8.bf16 %v5176
    %v5657 = vunpack.c.h.s8.bf16 %v5177
    %v5658 = vunpack.c.h.s8.bf16 %v5178
    %v5659 = vunpack.c.h.s8.bf16 %v5179
    %v5660 = vunpack.c.h.s8.bf16 %v5180
    %v5661 = vunpack.c.h.s8.bf16 %v5181
    %v5662 = vunpack.c.h.s8.bf16 %v5182
    %v5663 = vunpack.c.h.s8.bf16 %v5183
    %v5664 = vunpack.c.l.s8.bf16 %v5184
    %v5665 = vunpack.c.l.s8.bf16 %v5185
    %v5666 = vunpack.c.l.s8.bf16 %v5186
    %v5667 = vunpack.c.l.s8.bf16 %v5187
    %v5668 = vunpack.c.l.s8.bf16 %v5188
    %v5669 = vunpack.c.l.s8.bf16 %v5189
    %v5670 = vunpack.c.l.s8.bf16 %v5190
    %v5671 = vunpack.c.l.s8.bf16 %v5191
    %v5672 = vunpack.c.h.s8.bf16 %v5184
    %v5673 = vunpack.c.h.s8.bf16 %v5185
    %v5674 = vunpack.c.h.s8.bf16 %v5186
    %v5675 = vunpack.c.h.s8.bf16 %v5187
    %v5676 = vunpack.c.h.s8.bf16 %v5188
    %v5677 = vunpack.c.h.s8.bf16 %v5189
    %v5678 = vunpack.c.h.s8.bf16 %v5190
    %v5679 = vunpack.c.h.s8.bf16 %v5191
    %v5680 = vunpack.c.l.s8.bf16 %v5192
    %v5681 = vunpack.c.l.s8.bf16 %v5193
    %v5682 = vunpack.c.l.s8.bf16 %v5194
    %v5683 = vunpack.c.l.s8.bf16 %v5195
    %v5684 = vunpack.c.l.s8.bf16 %v5196
    %v5685 = vunpack.c.l.s8.bf16 %v5197
    %v5686 = vunpack.c.l.s8.bf16 %v5198
    %v5687 = vunpack.c.l.s8.bf16 %v5199
    %v5688 = vunpack.c.h.s8.bf16 %v5192
    %v5689 = vunpack.c.h.s8.bf16 %v5193
    %v5690 = vunpack.c.h.s8.bf16 %v5194
    %v5691 = vunpack.c.h.s8.bf16 %v5195
    %v5692 = vunpack.c.h.s8.bf16 %v5196
    %v5693 = vunpack.c.h.s8.bf16 %v5197
    %v5694 = vunpack.c.h.s8.bf16 %v5198
    %v5695 = vunpack.c.h.s8.bf16 %v5199
    %v5696 = vunpack.c.l.s8.bf16 %v5200
    %v5697 = vunpack.c.l.s8.bf16 %v5201
    %v5698 = vunpack.c.l.s8.bf16 %v5202
    %v5699 = vunpack.c.l.s8.bf16 %v5203
    %v5700 = vunpack.c.l.s8.bf16 %v5204
    %v5701 = vunpack.c.l.s8.bf16 %v5205
    %v5702 = vunpack.c.l.s8.bf16 %v5206
    %v5703 = vunpack.c.l.s8.bf16 %v5207
    %v5704 = vunpack.c.h.s8.bf16 %v5200
    %v5705 = vunpack.c.h.s8.bf16 %v5201
    %v5706 = vunpack.c.h.s8.bf16 %v5202
    %v5707 = vunpack.c.h.s8.bf16 %v5203
    %v5708 = vunpack.c.h.s8.bf16 %v5204
    %v5709 = vunpack.c.h.s8.bf16 %v5205
    %v5710 = vunpack.c.h.s8.bf16 %v5206
    %v5711 = vunpack.c.h.s8.bf16 %v5207
    %v5712 = vunpack.c.l.s8.bf16 %v5208
    %v5713 = vunpack.c.l.s8.bf16 %v5209
    %v5714 = vunpack.c.l.s8.bf16 %v5210
    %v5715 = vunpack.c.l.s8.bf16 %v5211
    %v5716 = vunpack.c.l.s8.bf16 %v5212
    %v5717 = vunpack.c.l.s8.bf16 %v5213
    %v5718 = vunpack.c.l.s8.bf16 %v5214
    %v5719 = vunpack.c.l.s8.bf16 %v5215
    %v5720 = vunpack.c.h.s8.bf16 %v5208
    %v5721 = vunpack.c.h.s8.bf16 %v5209
    %v5722 = vunpack.c.h.s8.bf16 %v5210
    %v5723 = vunpack.c.h.s8.bf16 %v5211
    %v5724 = vunpack.c.h.s8.bf16 %v5212
    %v5725 = vunpack.c.h.s8.bf16 %v5213
    %v5726 = vunpack.c.h.s8.bf16 %v5214
    %v5727 = vunpack.c.h.s8.bf16 %v5215
    %v5728 = vld [vmem:[#allocation42] sm:$0xff]
    %v5729 = vld [vmem:[#allocation42 + $0x8] sm:$0xff]
    %v5730 = vld [vmem:[#allocation42 + $0x10] sm:$0xff]
    %v5731 = vld [vmem:[#allocation42 + $0x18] sm:$0xff]
    %v5732 = vld [vmem:[#allocation42 + $0x20] sm:$0xff]
    %v5733 = vld [vmem:[#allocation42 + $0x28] sm:$0xff]
    %v5734 = vld [vmem:[#allocation42 + $0x30] sm:$0xff]
    %v5735 = vld [vmem:[#allocation42 + $0x38] sm:$0xff]
    %v5736 = vld [vmem:[#allocation42 + $0x40] sm:$0xff]
    %v5737 = vld [vmem:[#allocation42 + $0x48] sm:$0xff]
    %v5738 = vld [vmem:[#allocation42 + $0x50] sm:$0xff]
    %v5739 = vld [vmem:[#allocation42 + $0x58] sm:$0xff]
    %v5740 = vld [vmem:[#allocation42 + $0x60] sm:$0xff]
    %v5741 = vld [vmem:[#allocation42 + $0x68] sm:$0xff]
    %v5742 = vld [vmem:[#allocation42 + $0x70] sm:$0xff]
    %v5743 = vld [vmem:[#allocation42 + $0x78] sm:$0xff]
    %v5744 = vld [vmem:[#allocation42 + $0x80] sm:$0xff]
    %v5745 = vld [vmem:[#allocation42 + $0x88] sm:$0xff]
    %v5746 = vld [vmem:[#allocation42 + $0x90] sm:$0xff]
    %v5747 = vld [vmem:[#allocation42 + $0x98] sm:$0xff]
    %v5748 = vld [vmem:[#allocation42 + $0xa0] sm:$0xff]
    %v5749 = vld [vmem:[#allocation42 + $0xa8] sm:$0xff]
    %v5750 = vld [vmem:[#allocation42 + $0xb0] sm:$0xff]
    %v5751 = vld [vmem:[#allocation42 + $0xb8] sm:$0xff]
    %v5752 = vld [vmem:[#allocation42 + $0xc0] sm:$0xff]
    %v5753 = vld [vmem:[#allocation42 + $0xc8] sm:$0xff]
    %v5754 = vld [vmem:[#allocation42 + $0xd0] sm:$0xff]
    %v5755 = vld [vmem:[#allocation42 + $0xd8] sm:$0xff]
    %v5756 = vld [vmem:[#allocation42 + $0xe0] sm:$0xff]
    %v5757 = vld [vmem:[#allocation42 + $0xe8] sm:$0xff]
    %v5758 = vld [vmem:[#allocation42 + $0xf0] sm:$0xff]
    %v5759 = vld [vmem:[#allocation42 + $0xf8] sm:$0xff]
    %v5760 = vld [vmem:[#allocation42 + $0x100] sm:$0xff]
    %v5761 = vld [vmem:[#allocation42 + $0x108] sm:$0xff]
    %v5762 = vld [vmem:[#allocation42 + $0x110] sm:$0xff]
    %v5763 = vld [vmem:[#allocation42 + $0x118] sm:$0xff]
    %v5764 = vld [vmem:[#allocation42 + $0x120] sm:$0xff]
    %v5765 = vld [vmem:[#allocation42 + $0x128] sm:$0xff]
    %v5766 = vld [vmem:[#allocation42 + $0x130] sm:$0xff]
    %v5767 = vld [vmem:[#allocation42 + $0x138] sm:$0xff]
    %v5768 = vld [vmem:[#allocation42 + $0x140] sm:$0xff]
    %v5769 = vld [vmem:[#allocation42 + $0x148] sm:$0xff]
    %v5770 = vld [vmem:[#allocation42 + $0x150] sm:$0xff]
    %v5771 = vld [vmem:[#allocation42 + $0x158] sm:$0xff]
    %v5772 = vld [vmem:[#allocation42 + $0x160] sm:$0xff]
    %v5773 = vld [vmem:[#allocation42 + $0x168] sm:$0xff]
    %v5774 = vld [vmem:[#allocation42 + $0x170] sm:$0xff]
    %v5775 = vld [vmem:[#allocation42 + $0x178] sm:$0xff]
    %v5776 = vld [vmem:[#allocation42 + $0x180] sm:$0xff]
    %v5777 = vld [vmem:[#allocation42 + $0x188] sm:$0xff]
    %v5778 = vld [vmem:[#allocation42 + $0x190] sm:$0xff]
    %v5779 = vld [vmem:[#allocation42 + $0x198] sm:$0xff]
    %v5780 = vld [vmem:[#allocation42 + $0x1a0] sm:$0xff]
    %v5781 = vld [vmem:[#allocation42 + $0x1a8] sm:$0xff]
    %v5782 = vld [vmem:[#allocation42 + $0x1b0] sm:$0xff]
    %v5783 = vld [vmem:[#allocation42 + $0x1b8] sm:$0xff]
    %v5784 = vld [vmem:[#allocation42 + $0x1c0] sm:$0xff]
    %v5785 = vld [vmem:[#allocation42 + $0x1c8] sm:$0xff]
    %v5786 = vld [vmem:[#allocation42 + $0x1d0] sm:$0xff]
    %v5787 = vld [vmem:[#allocation42 + $0x1d8] sm:$0xff]
    %v5788 = vld [vmem:[#allocation42 + $0x1e0] sm:$0xff]
    %v5789 = vld [vmem:[#allocation42 + $0x1e8] sm:$0xff]
    %v5790 = vld [vmem:[#allocation42 + $0x1f0] sm:$0xff]
    %v5791 = vld [vmem:[#allocation42 + $0x1f8] sm:$0xff]
    %v5792 = vld [vmem:[#allocation42 + $0x200] sm:$0xff]
    %v5793 = vld [vmem:[#allocation42 + $0x208] sm:$0xff]
    %v5794 = vld [vmem:[#allocation42 + $0x210] sm:$0xff]
    %v5795 = vld [vmem:[#allocation42 + $0x218] sm:$0xff]
    %v5796 = vld [vmem:[#allocation42 + $0x220] sm:$0xff]
    %v5797 = vld [vmem:[#allocation42 + $0x228] sm:$0xff]
    %v5798 = vld [vmem:[#allocation42 + $0x230] sm:$0xff]
    %v5799 = vld [vmem:[#allocation42 + $0x238] sm:$0xff]
    %v5800 = vld [vmem:[#allocation42 + $0x240] sm:$0xff]
    %v5801 = vld [vmem:[#allocation42 + $0x248] sm:$0xff]
    %v5802 = vld [vmem:[#allocation42 + $0x250] sm:$0xff]
    %v5803 = vld [vmem:[#allocation42 + $0x258] sm:$0xff]
    %v5804 = vld [vmem:[#allocation42 + $0x260] sm:$0xff]
    %v5805 = vld [vmem:[#allocation42 + $0x268] sm:$0xff]
    %v5806 = vld [vmem:[#allocation42 + $0x270] sm:$0xff]
    %v5807 = vld [vmem:[#allocation42 + $0x278] sm:$0xff]
    %v5808 = vld [vmem:[#allocation42 + $0x280] sm:$0xff]
    %v5809 = vld [vmem:[#allocation42 + $0x288] sm:$0xff]
    %v5810 = vld [vmem:[#allocation42 + $0x290] sm:$0xff]
    %v5811 = vld [vmem:[#allocation42 + $0x298] sm:$0xff]
    %v5812 = vld [vmem:[#allocation42 + $0x2a0] sm:$0xff]
    %v5813 = vld [vmem:[#allocation42 + $0x2a8] sm:$0xff]
    %v5814 = vld [vmem:[#allocation42 + $0x2b0] sm:$0xff]
    %v5815 = vld [vmem:[#allocation42 + $0x2b8] sm:$0xff]
    %v5816 = vld [vmem:[#allocation42 + $0x2c0] sm:$0xff]
    %v5817 = vld [vmem:[#allocation42 + $0x2c8] sm:$0xff]
    %v5818 = vld [vmem:[#allocation42 + $0x2d0] sm:$0xff]
    %v5819 = vld [vmem:[#allocation42 + $0x2d8] sm:$0xff]
    %v5820 = vld [vmem:[#allocation42 + $0x2e0] sm:$0xff]
    %v5821 = vld [vmem:[#allocation42 + $0x2e8] sm:$0xff]
    %v5822 = vld [vmem:[#allocation42 + $0x2f0] sm:$0xff]
    %v5823 = vld [vmem:[#allocation42 + $0x2f8] sm:$0xff]
    %v5824 = vld [vmem:[#allocation42 + $0x300] sm:$0xff]
    %v5825 = vld [vmem:[#allocation42 + $0x308] sm:$0xff]
    %v5826 = vld [vmem:[#allocation42 + $0x310] sm:$0xff]
    %v5827 = vld [vmem:[#allocation42 + $0x318] sm:$0xff]
    %v5828 = vld [vmem:[#allocation42 + $0x320] sm:$0xff]
    %v5829 = vld [vmem:[#allocation42 + $0x328] sm:$0xff]
    %v5830 = vld [vmem:[#allocation42 + $0x330] sm:$0xff]
    %v5831 = vld [vmem:[#allocation42 + $0x338] sm:$0xff]
    %v5832 = vld [vmem:[#allocation42 + $0x340] sm:$0xff]
    %v5833 = vld [vmem:[#allocation42 + $0x348] sm:$0xff]
    %v5834 = vld [vmem:[#allocation42 + $0x350] sm:$0xff]
    %v5835 = vld [vmem:[#allocation42 + $0x358] sm:$0xff]
    %v5836 = vld [vmem:[#allocation42 + $0x360] sm:$0xff]
    %v5837 = vld [vmem:[#allocation42 + $0x368] sm:$0xff]
    %v5838 = vld [vmem:[#allocation42 + $0x370] sm:$0xff]
    %v5839 = vld [vmem:[#allocation42 + $0x378] sm:$0xff]
    %v5840 = vld [vmem:[#allocation42 + $0x380] sm:$0xff]
    %v5841 = vld [vmem:[#allocation42 + $0x388] sm:$0xff]
    %v5842 = vld [vmem:[#allocation42 + $0x390] sm:$0xff]
    %v5843 = vld [vmem:[#allocation42 + $0x398] sm:$0xff]
    %v5844 = vld [vmem:[#allocation42 + $0x3a0] sm:$0xff]
    %v5845 = vld [vmem:[#allocation42 + $0x3a8] sm:$0xff]
    %v5846 = vld [vmem:[#allocation42 + $0x3b0] sm:$0xff]
    %v5847 = vld [vmem:[#allocation42 + $0x3b8] sm:$0xff]
    %v5848 = vld [vmem:[#allocation42 + $0x3c0] sm:$0xff]
    %v5849 = vld [vmem:[#allocation42 + $0x3c8] sm:$0xff]
    %v5850 = vld [vmem:[#allocation42 + $0x3d0] sm:$0xff]
    %v5851 = vld [vmem:[#allocation42 + $0x3d8] sm:$0xff]
    %v5852 = vld [vmem:[#allocation42 + $0x3e0] sm:$0xff]
    %v5853 = vld [vmem:[#allocation42 + $0x3e8] sm:$0xff]
    %v5854 = vld [vmem:[#allocation42 + $0x3f0] sm:$0xff]
    %v5855 = vld [vmem:[#allocation42 + $0x3f8] sm:$0xff]
    %v5856 = vld [vmem:[#allocation42 + $0x400] sm:$0xff]
    %v5857 = vld [vmem:[#allocation42 + $0x408] sm:$0xff]
    %v5858 = vld [vmem:[#allocation42 + $0x410] sm:$0xff]
    %v5859 = vld [vmem:[#allocation42 + $0x418] sm:$0xff]
    %v5860 = vld [vmem:[#allocation42 + $0x420] sm:$0xff]
    %v5861 = vld [vmem:[#allocation42 + $0x428] sm:$0xff]
    %v5862 = vld [vmem:[#allocation42 + $0x430] sm:$0xff]
    %v5863 = vld [vmem:[#allocation42 + $0x438] sm:$0xff]
    %v5864 = vld [vmem:[#allocation42 + $0x440] sm:$0xff]
    %v5865 = vld [vmem:[#allocation42 + $0x448] sm:$0xff]
    %v5866 = vld [vmem:[#allocation42 + $0x450] sm:$0xff]
    %v5867 = vld [vmem:[#allocation42 + $0x458] sm:$0xff]
    %v5868 = vld [vmem:[#allocation42 + $0x460] sm:$0xff]
    %v5869 = vld [vmem:[#allocation42 + $0x468] sm:$0xff]
    %v5870 = vld [vmem:[#allocation42 + $0x470] sm:$0xff]
    %v5871 = vld [vmem:[#allocation42 + $0x478] sm:$0xff]
    %v5872 = vld [vmem:[#allocation42 + $0x480] sm:$0xff]
    %v5873 = vld [vmem:[#allocation42 + $0x488] sm:$0xff]
    %v5874 = vld [vmem:[#allocation42 + $0x490] sm:$0xff]
    %v5875 = vld [vmem:[#allocation42 + $0x498] sm:$0xff]
    %v5876 = vld [vmem:[#allocation42 + $0x4a0] sm:$0xff]
    %v5877 = vld [vmem:[#allocation42 + $0x4a8] sm:$0xff]
    %v5878 = vld [vmem:[#allocation42 + $0x4b0] sm:$0xff]
    %v5879 = vld [vmem:[#allocation42 + $0x4b8] sm:$0xff]
    %v5880 = vld [vmem:[#allocation42 + $0x4c0] sm:$0xff]
    %v5881 = vld [vmem:[#allocation42 + $0x4c8] sm:$0xff]
    %v5882 = vld [vmem:[#allocation42 + $0x4d0] sm:$0xff]
    %v5883 = vld [vmem:[#allocation42 + $0x4d8] sm:$0xff]
    %v5884 = vld [vmem:[#allocation42 + $0x4e0] sm:$0xff]
    %v5885 = vld [vmem:[#allocation42 + $0x4e8] sm:$0xff]
    %v5886 = vld [vmem:[#allocation42 + $0x4f0] sm:$0xff]
    %v5887 = vld [vmem:[#allocation42 + $0x4f8] sm:$0xff]
    %v5888 = vld [vmem:[#allocation42 + $0x500] sm:$0xff]
    %v5889 = vld [vmem:[#allocation42 + $0x508] sm:$0xff]
    %v5890 = vld [vmem:[#allocation42 + $0x510] sm:$0xff]
    %v5891 = vld [vmem:[#allocation42 + $0x518] sm:$0xff]
    %v5892 = vld [vmem:[#allocation42 + $0x520] sm:$0xff]
    %v5893 = vld [vmem:[#allocation42 + $0x528] sm:$0xff]
    %v5894 = vld [vmem:[#allocation42 + $0x530] sm:$0xff]
    %v5895 = vld [vmem:[#allocation42 + $0x538] sm:$0xff]
    %v5896 = vld [vmem:[#allocation42 + $0x540] sm:$0xff]
    %v5897 = vld [vmem:[#allocation42 + $0x548] sm:$0xff]
    %v5898 = vld [vmem:[#allocation42 + $0x550] sm:$0xff]
    %v5899 = vld [vmem:[#allocation42 + $0x558] sm:$0xff]
    %v5900 = vld [vmem:[#allocation42 + $0x560] sm:$0xff]
    %v5901 = vld [vmem:[#allocation42 + $0x568] sm:$0xff]
    %v5902 = vld [vmem:[#allocation42 + $0x570] sm:$0xff]
    %v5903 = vld [vmem:[#allocation42 + $0x578] sm:$0xff]
    %v5904 = vld [vmem:[#allocation42 + $0x580] sm:$0xff]
    %v5905 = vld [vmem:[#allocation42 + $0x588] sm:$0xff]
    %v5906 = vld [vmem:[#allocation42 + $0x590] sm:$0xff]
    %v5907 = vld [vmem:[#allocation42 + $0x598] sm:$0xff]
    %v5908 = vld [vmem:[#allocation42 + $0x5a0] sm:$0xff]
    %v5909 = vld [vmem:[#allocation42 + $0x5a8] sm:$0xff]
    %v5910 = vld [vmem:[#allocation42 + $0x5b0] sm:$0xff]
    %v5911 = vld [vmem:[#allocation42 + $0x5b8] sm:$0xff]
    %v5912 = vld [vmem:[#allocation42 + $0x5c0] sm:$0xff]
    %v5913 = vld [vmem:[#allocation42 + $0x5c8] sm:$0xff]
    %v5914 = vld [vmem:[#allocation42 + $0x5d0] sm:$0xff]
    %v5915 = vld [vmem:[#allocation42 + $0x5d8] sm:$0xff]
    %v5916 = vld [vmem:[#allocation42 + $0x5e0] sm:$0xff]
    %v5917 = vld [vmem:[#allocation42 + $0x5e8] sm:$0xff]
    %v5918 = vld [vmem:[#allocation42 + $0x5f0] sm:$0xff]
    %v5919 = vld [vmem:[#allocation42 + $0x5f8] sm:$0xff]
    %v5920 = vld [vmem:[#allocation42 + $0x600] sm:$0xff]
    %v5921 = vld [vmem:[#allocation42 + $0x608] sm:$0xff]
    %v5922 = vld [vmem:[#allocation42 + $0x610] sm:$0xff]
    %v5923 = vld [vmem:[#allocation42 + $0x618] sm:$0xff]
    %v5924 = vld [vmem:[#allocation42 + $0x620] sm:$0xff]
    %v5925 = vld [vmem:[#allocation42 + $0x628] sm:$0xff]
    %v5926 = vld [vmem:[#allocation42 + $0x630] sm:$0xff]
    %v5927 = vld [vmem:[#allocation42 + $0x638] sm:$0xff]
    %v5928 = vld [vmem:[#allocation42 + $0x640] sm:$0xff]
    %v5929 = vld [vmem:[#allocation42 + $0x648] sm:$0xff]
    %v5930 = vld [vmem:[#allocation42 + $0x650] sm:$0xff]
    %v5931 = vld [vmem:[#allocation42 + $0x658] sm:$0xff]
    %v5932 = vld [vmem:[#allocation42 + $0x660] sm:$0xff]
    %v5933 = vld [vmem:[#allocation42 + $0x668] sm:$0xff]
    %v5934 = vld [vmem:[#allocation42 + $0x670] sm:$0xff]
    %v5935 = vld [vmem:[#allocation42 + $0x678] sm:$0xff]
    %v5936 = vld [vmem:[#allocation42 + $0x680] sm:$0xff]
    %v5937 = vld [vmem:[#allocation42 + $0x688] sm:$0xff]
    %v5938 = vld [vmem:[#allocation42 + $0x690] sm:$0xff]
    %v5939 = vld [vmem:[#allocation42 + $0x698] sm:$0xff]
    %v5940 = vld [vmem:[#allocation42 + $0x6a0] sm:$0xff]
    %v5941 = vld [vmem:[#allocation42 + $0x6a8] sm:$0xff]
    %v5942 = vld [vmem:[#allocation42 + $0x6b0] sm:$0xff]
    %v5943 = vld [vmem:[#allocation42 + $0x6b8] sm:$0xff]
    %v5944 = vld [vmem:[#allocation42 + $0x6c0] sm:$0xff]
    %v5945 = vld [vmem:[#allocation42 + $0x6c8] sm:$0xff]
    %v5946 = vld [vmem:[#allocation42 + $0x6d0] sm:$0xff]
    %v5947 = vld [vmem:[#allocation42 + $0x6d8] sm:$0xff]
    %v5948 = vld [vmem:[#allocation42 + $0x6e0] sm:$0xff]
    %v5949 = vld [vmem:[#allocation42 + $0x6e8] sm:$0xff]
    %v5950 = vld [vmem:[#allocation42 + $0x6f0] sm:$0xff]
    %v5951 = vld [vmem:[#allocation42 + $0x6f8] sm:$0xff]
    %v5952 = vld [vmem:[#allocation42 + $0x700] sm:$0xff]
    %v5953 = vld [vmem:[#allocation42 + $0x708] sm:$0xff]
    %v5954 = vld [vmem:[#allocation42 + $0x710] sm:$0xff]
    %v5955 = vld [vmem:[#allocation42 + $0x718] sm:$0xff]
    %v5956 = vld [vmem:[#allocation42 + $0x720] sm:$0xff]
    %v5957 = vld [vmem:[#allocation42 + $0x728] sm:$0xff]
    %v5958 = vld [vmem:[#allocation42 + $0x730] sm:$0xff]
    %v5959 = vld [vmem:[#allocation42 + $0x738] sm:$0xff]
    %v5960 = vld [vmem:[#allocation42 + $0x740] sm:$0xff]
    %v5961 = vld [vmem:[#allocation42 + $0x748] sm:$0xff]
    %v5962 = vld [vmem:[#allocation42 + $0x750] sm:$0xff]
    %v5963 = vld [vmem:[#allocation42 + $0x758] sm:$0xff]
    %v5964 = vld [vmem:[#allocation42 + $0x760] sm:$0xff]
    %v5965 = vld [vmem:[#allocation42 + $0x768] sm:$0xff]
    %v5966 = vld [vmem:[#allocation42 + $0x770] sm:$0xff]
    %v5967 = vld [vmem:[#allocation42 + $0x778] sm:$0xff]
    %v5968 = vld [vmem:[#allocation42 + $0x780] sm:$0xff]
    %v5969 = vld [vmem:[#allocation42 + $0x788] sm:$0xff]
    %v5970 = vld [vmem:[#allocation42 + $0x790] sm:$0xff]
    %v5971 = vld [vmem:[#allocation42 + $0x798] sm:$0xff]
    %v5972 = vld [vmem:[#allocation42 + $0x7a0] sm:$0xff]
    %v5973 = vld [vmem:[#allocation42 + $0x7a8] sm:$0xff]
    %v5974 = vld [vmem:[#allocation42 + $0x7b0] sm:$0xff]
    %v5975 = vld [vmem:[#allocation42 + $0x7b8] sm:$0xff]
    %v5976 = vld [vmem:[#allocation42 + $0x7c0] sm:$0xff]
    %v5977 = vld [vmem:[#allocation42 + $0x7c8] sm:$0xff]
    %v5978 = vld [vmem:[#allocation42 + $0x7d0] sm:$0xff]
    %v5979 = vld [vmem:[#allocation42 + $0x7d8] sm:$0xff]
    %v5980 = vld [vmem:[#allocation42 + $0x7e0] sm:$0xff]
    %v5981 = vld [vmem:[#allocation42 + $0x7e8] sm:$0xff]
    %v5982 = vld [vmem:[#allocation42 + $0x7f0] sm:$0xff]
    %v5983 = vld [vmem:[#allocation42 + $0x7f8] sm:$0xff]
    %v5984 = vunpack.c.l.s8.bf16 %v5728
    %v5985 = vunpack.c.l.s8.bf16 %v5729
    %v5986 = vunpack.c.l.s8.bf16 %v5730
    %v5987 = vunpack.c.l.s8.bf16 %v5731
    %v5988 = vunpack.c.l.s8.bf16 %v5732
    %v5989 = vunpack.c.l.s8.bf16 %v5733
    %v5990 = vunpack.c.l.s8.bf16 %v5734
    %v5991 = vunpack.c.l.s8.bf16 %v5735
    %v5992 = vunpack.c.h.s8.bf16 %v5728
    %v5993 = vunpack.c.h.s8.bf16 %v5729
    %v5994 = vunpack.c.h.s8.bf16 %v5730
    %v5995 = vunpack.c.h.s8.bf16 %v5731
    %v5996 = vunpack.c.h.s8.bf16 %v5732
    %v5997 = vunpack.c.h.s8.bf16 %v5733
    %v5998 = vunpack.c.h.s8.bf16 %v5734
    %v5999 = vunpack.c.h.s8.bf16 %v5735
    %v6000 = vunpack.c.l.s8.bf16 %v5736
    %v6001 = vunpack.c.l.s8.bf16 %v5737
    %v6002 = vunpack.c.l.s8.bf16 %v5738
    %v6003 = vunpack.c.l.s8.bf16 %v5739
    %v6004 = vunpack.c.l.s8.bf16 %v5740
    %v6005 = vunpack.c.l.s8.bf16 %v5741
    %v6006 = vunpack.c.l.s8.bf16 %v5742
    %v6007 = vunpack.c.l.s8.bf16 %v5743
    %v6008 = vunpack.c.h.s8.bf16 %v5736
    %v6009 = vunpack.c.h.s8.bf16 %v5737
    %v6010 = vunpack.c.h.s8.bf16 %v5738
    %v6011 = vunpack.c.h.s8.bf16 %v5739
    %v6012 = vunpack.c.h.s8.bf16 %v5740
    %v6013 = vunpack.c.h.s8.bf16 %v5741
    %v6014 = vunpack.c.h.s8.bf16 %v5742
    %v6015 = vunpack.c.h.s8.bf16 %v5743
    %v6016 = vunpack.c.l.s8.bf16 %v5744
    %v6017 = vunpack.c.l.s8.bf16 %v5745
    %v6018 = vunpack.c.l.s8.bf16 %v5746
    %v6019 = vunpack.c.l.s8.bf16 %v5747
    %v6020 = vunpack.c.l.s8.bf16 %v5748
    %v6021 = vunpack.c.l.s8.bf16 %v5749
    %v6022 = vunpack.c.l.s8.bf16 %v5750
    %v6023 = vunpack.c.l.s8.bf16 %v5751
    %v6024 = vunpack.c.h.s8.bf16 %v5744
    %v6025 = vunpack.c.h.s8.bf16 %v5745
    %v6026 = vunpack.c.h.s8.bf16 %v5746
    %v6027 = vunpack.c.h.s8.bf16 %v5747
    %v6028 = vunpack.c.h.s8.bf16 %v5748
    %v6029 = vunpack.c.h.s8.bf16 %v5749
    %v6030 = vunpack.c.h.s8.bf16 %v5750
    %v6031 = vunpack.c.h.s8.bf16 %v5751
    %v6032 = vunpack.c.l.s8.bf16 %v5752
    %v6033 = vunpack.c.l.s8.bf16 %v5753
    %v6034 = vunpack.c.l.s8.bf16 %v5754
    %v6035 = vunpack.c.l.s8.bf16 %v5755
    %v6036 = vunpack.c.l.s8.bf16 %v5756
    %v6037 = vunpack.c.l.s8.bf16 %v5757
    %v6038 = vunpack.c.l.s8.bf16 %v5758
    %v6039 = vunpack.c.l.s8.bf16 %v5759
    %v6040 = vunpack.c.h.s8.bf16 %v5752
    %v6041 = vunpack.c.h.s8.bf16 %v5753
    %v6042 = vunpack.c.h.s8.bf16 %v5754
    %v6043 = vunpack.c.h.s8.bf16 %v5755
    %v6044 = vunpack.c.h.s8.bf16 %v5756
    %v6045 = vunpack.c.h.s8.bf16 %v5757
    %v6046 = vunpack.c.h.s8.bf16 %v5758
    %v6047 = vunpack.c.h.s8.bf16 %v5759
    %v6048 = vunpack.c.l.s8.bf16 %v5760
    %v6049 = vunpack.c.l.s8.bf16 %v5761
    %v6050 = vunpack.c.l.s8.bf16 %v5762
    %v6051 = vunpack.c.l.s8.bf16 %v5763
    %v6052 = vunpack.c.l.s8.bf16 %v5764
    %v6053 = vunpack.c.l.s8.bf16 %v5765
    %v6054 = vunpack.c.l.s8.bf16 %v5766
    %v6055 = vunpack.c.l.s8.bf16 %v5767
    %v6056 = vunpack.c.h.s8.bf16 %v5760
    %v6057 = vunpack.c.h.s8.bf16 %v5761
    %v6058 = vunpack.c.h.s8.bf16 %v5762
    %v6059 = vunpack.c.h.s8.bf16 %v5763
    %v6060 = vunpack.c.h.s8.bf16 %v5764
    %v6061 = vunpack.c.h.s8.bf16 %v5765
    %v6062 = vunpack.c.h.s8.bf16 %v5766
    %v6063 = vunpack.c.h.s8.bf16 %v5767
    %v6064 = vunpack.c.l.s8.bf16 %v5768
    %v6065 = vunpack.c.l.s8.bf16 %v5769
    %v6066 = vunpack.c.l.s8.bf16 %v5770
    %v6067 = vunpack.c.l.s8.bf16 %v5771
    %v6068 = vunpack.c.l.s8.bf16 %v5772
    %v6069 = vunpack.c.l.s8.bf16 %v5773
    %v6070 = vunpack.c.l.s8.bf16 %v5774
    %v6071 = vunpack.c.l.s8.bf16 %v5775
    %v6072 = vunpack.c.h.s8.bf16 %v5768
    %v6073 = vunpack.c.h.s8.bf16 %v5769
    %v6074 = vunpack.c.h.s8.bf16 %v5770
    %v6075 = vunpack.c.h.s8.bf16 %v5771
    %v6076 = vunpack.c.h.s8.bf16 %v5772
    %v6077 = vunpack.c.h.s8.bf16 %v5773
    %v6078 = vunpack.c.h.s8.bf16 %v5774
    %v6079 = vunpack.c.h.s8.bf16 %v5775
    %v6080 = vunpack.c.l.s8.bf16 %v5776
    %v6081 = vunpack.c.l.s8.bf16 %v5777
    %v6082 = vunpack.c.l.s8.bf16 %v5778
    %v6083 = vunpack.c.l.s8.bf16 %v5779
    %v6084 = vunpack.c.l.s8.bf16 %v5780
    %v6085 = vunpack.c.l.s8.bf16 %v5781
    %v6086 = vunpack.c.l.s8.bf16 %v5782
    %v6087 = vunpack.c.l.s8.bf16 %v5783
    %v6088 = vunpack.c.h.s8.bf16 %v5776
    %v6089 = vunpack.c.h.s8.bf16 %v5777
    %v6090 = vunpack.c.h.s8.bf16 %v5778
    %v6091 = vunpack.c.h.s8.bf16 %v5779
    %v6092 = vunpack.c.h.s8.bf16 %v5780
    %v6093 = vunpack.c.h.s8.bf16 %v5781
    %v6094 = vunpack.c.h.s8.bf16 %v5782
    %v6095 = vunpack.c.h.s8.bf16 %v5783
    %v6096 = vunpack.c.l.s8.bf16 %v5784
    %v6097 = vunpack.c.l.s8.bf16 %v5785
    %v6098 = vunpack.c.l.s8.bf16 %v5786
    %v6099 = vunpack.c.l.s8.bf16 %v5787
    %v6100 = vunpack.c.l.s8.bf16 %v5788
    %v6101 = vunpack.c.l.s8.bf16 %v5789
    %v6102 = vunpack.c.l.s8.bf16 %v5790
    %v6103 = vunpack.c.l.s8.bf16 %v5791
    %v6104 = vunpack.c.h.s8.bf16 %v5784
    %v6105 = vunpack.c.h.s8.bf16 %v5785
    %v6106 = vunpack.c.h.s8.bf16 %v5786
    %v6107 = vunpack.c.h.s8.bf16 %v5787
    %v6108 = vunpack.c.h.s8.bf16 %v5788
    %v6109 = vunpack.c.h.s8.bf16 %v5789
    %v6110 = vunpack.c.h.s8.bf16 %v5790
    %v6111 = vunpack.c.h.s8.bf16 %v5791
    %v6112 = vunpack.c.l.s8.bf16 %v5792
    %v6113 = vunpack.c.l.s8.bf16 %v5793
    %v6114 = vunpack.c.l.s8.bf16 %v5794
    %v6115 = vunpack.c.l.s8.bf16 %v5795
    %v6116 = vunpack.c.l.s8.bf16 %v5796
    %v6117 = vunpack.c.l.s8.bf16 %v5797
    %v6118 = vunpack.c.l.s8.bf16 %v5798
    %v6119 = vunpack.c.l.s8.bf16 %v5799
    %v6120 = vunpack.c.h.s8.bf16 %v5792
    %v6121 = vunpack.c.h.s8.bf16 %v5793
    %v6122 = vunpack.c.h.s8.bf16 %v5794
    %v6123 = vunpack.c.h.s8.bf16 %v5795
    %v6124 = vunpack.c.h.s8.bf16 %v5796
    %v6125 = vunpack.c.h.s8.bf16 %v5797
    %v6126 = vunpack.c.h.s8.bf16 %v5798
    %v6127 = vunpack.c.h.s8.bf16 %v5799
    %v6128 = vunpack.c.l.s8.bf16 %v5800
    %v6129 = vunpack.c.l.s8.bf16 %v5801
    %v6130 = vunpack.c.l.s8.bf16 %v5802
    %v6131 = vunpack.c.l.s8.bf16 %v5803
    %v6132 = vunpack.c.l.s8.bf16 %v5804
    %v6133 = vunpack.c.l.s8.bf16 %v5805
    %v6134 = vunpack.c.l.s8.bf16 %v5806
    %v6135 = vunpack.c.l.s8.bf16 %v5807
    %v6136 = vunpack.c.h.s8.bf16 %v5800
    %v6137 = vunpack.c.h.s8.bf16 %v5801
    %v6138 = vunpack.c.h.s8.bf16 %v5802
    %v6139 = vunpack.c.h.s8.bf16 %v5803
    %v6140 = vunpack.c.h.s8.bf16 %v5804
    %v6141 = vunpack.c.h.s8.bf16 %v5805
    %v6142 = vunpack.c.h.s8.bf16 %v5806
    %v6143 = vunpack.c.h.s8.bf16 %v5807
    %v6144 = vunpack.c.l.s8.bf16 %v5808
    %v6145 = vunpack.c.l.s8.bf16 %v5809
    %v6146 = vunpack.c.l.s8.bf16 %v5810
    %v6147 = vunpack.c.l.s8.bf16 %v5811
    %v6148 = vunpack.c.l.s8.bf16 %v5812
    %v6149 = vunpack.c.l.s8.bf16 %v5813
    %v6150 = vunpack.c.l.s8.bf16 %v5814
    %v6151 = vunpack.c.l.s8.bf16 %v5815
    %v6152 = vunpack.c.h.s8.bf16 %v5808
    %v6153 = vunpack.c.h.s8.bf16 %v5809
    %v6154 = vunpack.c.h.s8.bf16 %v5810
    %v6155 = vunpack.c.h.s8.bf16 %v5811
    %v6156 = vunpack.c.h.s8.bf16 %v5812
    %v6157 = vunpack.c.h.s8.bf16 %v5813
    %v6158 = vunpack.c.h.s8.bf16 %v5814
    %v6159 = vunpack.c.h.s8.bf16 %v5815
    %v6160 = vunpack.c.l.s8.bf16 %v5816
    %v6161 = vunpack.c.l.s8.bf16 %v5817
    %v6162 = vunpack.c.l.s8.bf16 %v5818
    %v6163 = vunpack.c.l.s8.bf16 %v5819
    %v6164 = vunpack.c.l.s8.bf16 %v5820
    %v6165 = vunpack.c.l.s8.bf16 %v5821
    %v6166 = vunpack.c.l.s8.bf16 %v5822
    %v6167 = vunpack.c.l.s8.bf16 %v5823
    %v6168 = vunpack.c.h.s8.bf16 %v5816
    %v6169 = vunpack.c.h.s8.bf16 %v5817
    %v6170 = vunpack.c.h.s8.bf16 %v5818
    %v6171 = vunpack.c.h.s8.bf16 %v5819
    %v6172 = vunpack.c.h.s8.bf16 %v5820
    %v6173 = vunpack.c.h.s8.bf16 %v5821
    %v6174 = vunpack.c.h.s8.bf16 %v5822
    %v6175 = vunpack.c.h.s8.bf16 %v5823
    %v6176 = vunpack.c.l.s8.bf16 %v5824
    %v6177 = vunpack.c.l.s8.bf16 %v5825
    %v6178 = vunpack.c.l.s8.bf16 %v5826
    %v6179 = vunpack.c.l.s8.bf16 %v5827
    %v6180 = vunpack.c.l.s8.bf16 %v5828
    %v6181 = vunpack.c.l.s8.bf16 %v5829
    %v6182 = vunpack.c.l.s8.bf16 %v5830
    %v6183 = vunpack.c.l.s8.bf16 %v5831
    %v6184 = vunpack.c.h.s8.bf16 %v5824
    %v6185 = vunpack.c.h.s8.bf16 %v5825
    %v6186 = vunpack.c.h.s8.bf16 %v5826
    %v6187 = vunpack.c.h.s8.bf16 %v5827
    %v6188 = vunpack.c.h.s8.bf16 %v5828
    %v6189 = vunpack.c.h.s8.bf16 %v5829
    %v6190 = vunpack.c.h.s8.bf16 %v5830
    %v6191 = vunpack.c.h.s8.bf16 %v5831
    %v6192 = vunpack.c.l.s8.bf16 %v5832
    %v6193 = vunpack.c.l.s8.bf16 %v5833
    %v6194 = vunpack.c.l.s8.bf16 %v5834
    %v6195 = vunpack.c.l.s8.bf16 %v5835
    %v6196 = vunpack.c.l.s8.bf16 %v5836
    %v6197 = vunpack.c.l.s8.bf16 %v5837
    %v6198 = vunpack.c.l.s8.bf16 %v5838
    %v6199 = vunpack.c.l.s8.bf16 %v5839
    %v6200 = vunpack.c.h.s8.bf16 %v5832
    %v6201 = vunpack.c.h.s8.bf16 %v5833
    %v6202 = vunpack.c.h.s8.bf16 %v5834
    %v6203 = vunpack.c.h.s8.bf16 %v5835
    %v6204 = vunpack.c.h.s8.bf16 %v5836
    %v6205 = vunpack.c.h.s8.bf16 %v5837
    %v6206 = vunpack.c.h.s8.bf16 %v5838
    %v6207 = vunpack.c.h.s8.bf16 %v5839
    %v6208 = vunpack.c.l.s8.bf16 %v5840
    %v6209 = vunpack.c.l.s8.bf16 %v5841
    %v6210 = vunpack.c.l.s8.bf16 %v5842
    %v6211 = vunpack.c.l.s8.bf16 %v5843
    %v6212 = vunpack.c.l.s8.bf16 %v5844
    %v6213 = vunpack.c.l.s8.bf16 %v5845
    %v6214 = vunpack.c.l.s8.bf16 %v5846
    %v6215 = vunpack.c.l.s8.bf16 %v5847
    %v6216 = vunpack.c.h.s8.bf16 %v5840
    %v6217 = vunpack.c.h.s8.bf16 %v5841
    %v6218 = vunpack.c.h.s8.bf16 %v5842
    %v6219 = vunpack.c.h.s8.bf16 %v5843
    %v6220 = vunpack.c.h.s8.bf16 %v5844
    %v6221 = vunpack.c.h.s8.bf16 %v5845
    %v6222 = vunpack.c.h.s8.bf16 %v5846
    %v6223 = vunpack.c.h.s8.bf16 %v5847
    %v6224 = vunpack.c.l.s8.bf16 %v5848
    %v6225 = vunpack.c.l.s8.bf16 %v5849
    %v6226 = vunpack.c.l.s8.bf16 %v5850
    %v6227 = vunpack.c.l.s8.bf16 %v5851
    %v6228 = vunpack.c.l.s8.bf16 %v5852
    %v6229 = vunpack.c.l.s8.bf16 %v5853
    %v6230 = vunpack.c.l.s8.bf16 %v5854
    %v6231 = vunpack.c.l.s8.bf16 %v5855
    %v6232 = vunpack.c.h.s8.bf16 %v5848
    %v6233 = vunpack.c.h.s8.bf16 %v5849
    %v6234 = vunpack.c.h.s8.bf16 %v5850
    %v6235 = vunpack.c.h.s8.bf16 %v5851
    %v6236 = vunpack.c.h.s8.bf16 %v5852
    %v6237 = vunpack.c.h.s8.bf16 %v5853
    %v6238 = vunpack.c.h.s8.bf16 %v5854
    %v6239 = vunpack.c.h.s8.bf16 %v5855
    %v6240 = vunpack.c.l.s8.bf16 %v5856
    %v6241 = vunpack.c.l.s8.bf16 %v5857
    %v6242 = vunpack.c.l.s8.bf16 %v5858
    %v6243 = vunpack.c.l.s8.bf16 %v5859
    %v6244 = vunpack.c.l.s8.bf16 %v5860
    %v6245 = vunpack.c.l.s8.bf16 %v5861
    %v6246 = vunpack.c.l.s8.bf16 %v5862
    %v6247 = vunpack.c.l.s8.bf16 %v5863
    %v6248 = vunpack.c.h.s8.bf16 %v5856
    %v6249 = vunpack.c.h.s8.bf16 %v5857
    %v6250 = vunpack.c.h.s8.bf16 %v5858
    %v6251 = vunpack.c.h.s8.bf16 %v5859
    %v6252 = vunpack.c.h.s8.bf16 %v5860
    %v6253 = vunpack.c.h.s8.bf16 %v5861
    %v6254 = vunpack.c.h.s8.bf16 %v5862
    %v6255 = vunpack.c.h.s8.bf16 %v5863
    %v6256 = vunpack.c.l.s8.bf16 %v5864
    %v6257 = vunpack.c.l.s8.bf16 %v5865
    %v6258 = vunpack.c.l.s8.bf16 %v5866
    %v6259 = vunpack.c.l.s8.bf16 %v5867
    %v6260 = vunpack.c.l.s8.bf16 %v5868
    %v6261 = vunpack.c.l.s8.bf16 %v5869
    %v6262 = vunpack.c.l.s8.bf16 %v5870
    %v6263 = vunpack.c.l.s8.bf16 %v5871
    %v6264 = vunpack.c.h.s8.bf16 %v5864
    %v6265 = vunpack.c.h.s8.bf16 %v5865
    %v6266 = vunpack.c.h.s8.bf16 %v5866
    %v6267 = vunpack.c.h.s8.bf16 %v5867
    %v6268 = vunpack.c.h.s8.bf16 %v5868
    %v6269 = vunpack.c.h.s8.bf16 %v5869
    %v6270 = vunpack.c.h.s8.bf16 %v5870
    %v6271 = vunpack.c.h.s8.bf16 %v5871
    %v6272 = vunpack.c.l.s8.bf16 %v5872
    %v6273 = vunpack.c.l.s8.bf16 %v5873
    %v6274 = vunpack.c.l.s8.bf16 %v5874
    %v6275 = vunpack.c.l.s8.bf16 %v5875
    %v6276 = vunpack.c.l.s8.bf16 %v5876
    %v6277 = vunpack.c.l.s8.bf16 %v5877
    %v6278 = vunpack.c.l.s8.bf16 %v5878
    %v6279 = vunpack.c.l.s8.bf16 %v5879
    %v6280 = vunpack.c.h.s8.bf16 %v5872
    %v6281 = vunpack.c.h.s8.bf16 %v5873
    %v6282 = vunpack.c.h.s8.bf16 %v5874
    %v6283 = vunpack.c.h.s8.bf16 %v5875
    %v6284 = vunpack.c.h.s8.bf16 %v5876
    %v6285 = vunpack.c.h.s8.bf16 %v5877
    %v6286 = vunpack.c.h.s8.bf16 %v5878
    %v6287 = vunpack.c.h.s8.bf16 %v5879
    %v6288 = vunpack.c.l.s8.bf16 %v5880
    %v6289 = vunpack.c.l.s8.bf16 %v5881
    %v6290 = vunpack.c.l.s8.bf16 %v5882
    %v6291 = vunpack.c.l.s8.bf16 %v5883
    %v6292 = vunpack.c.l.s8.bf16 %v5884
    %v6293 = vunpack.c.l.s8.bf16 %v5885
    %v6294 = vunpack.c.l.s8.bf16 %v5886
    %v6295 = vunpack.c.l.s8.bf16 %v5887
    %v6296 = vunpack.c.h.s8.bf16 %v5880
    %v6297 = vunpack.c.h.s8.bf16 %v5881
    %v6298 = vunpack.c.h.s8.bf16 %v5882
    %v6299 = vunpack.c.h.s8.bf16 %v5883
    %v6300 = vunpack.c.h.s8.bf16 %v5884
    %v6301 = vunpack.c.h.s8.bf16 %v5885
    %v6302 = vunpack.c.h.s8.bf16 %v5886
    %v6303 = vunpack.c.h.s8.bf16 %v5887
    %v6304 = vunpack.c.l.s8.bf16 %v5888
    %v6305 = vunpack.c.l.s8.bf16 %v5889
    %v6306 = vunpack.c.l.s8.bf16 %v5890
    %v6307 = vunpack.c.l.s8.bf16 %v5891
    %v6308 = vunpack.c.l.s8.bf16 %v5892
    %v6309 = vunpack.c.l.s8.bf16 %v5893
    %v6310 = vunpack.c.l.s8.bf16 %v5894
    %v6311 = vunpack.c.l.s8.bf16 %v5895
    %v6312 = vunpack.c.h.s8.bf16 %v5888
    %v6313 = vunpack.c.h.s8.bf16 %v5889
    %v6314 = vunpack.c.h.s8.bf16 %v5890
    %v6315 = vunpack.c.h.s8.bf16 %v5891
    %v6316 = vunpack.c.h.s8.bf16 %v5892
    %v6317 = vunpack.c.h.s8.bf16 %v5893
    %v6318 = vunpack.c.h.s8.bf16 %v5894
    %v6319 = vunpack.c.h.s8.bf16 %v5895
    %v6320 = vunpack.c.l.s8.bf16 %v5896
    %v6321 = vunpack.c.l.s8.bf16 %v5897
    %v6322 = vunpack.c.l.s8.bf16 %v5898
    %v6323 = vunpack.c.l.s8.bf16 %v5899
    %v6324 = vunpack.c.l.s8.bf16 %v5900
    %v6325 = vunpack.c.l.s8.bf16 %v5901
    %v6326 = vunpack.c.l.s8.bf16 %v5902
    %v6327 = vunpack.c.l.s8.bf16 %v5903
    %v6328 = vunpack.c.h.s8.bf16 %v5896
    %v6329 = vunpack.c.h.s8.bf16 %v5897
    %v6330 = vunpack.c.h.s8.bf16 %v5898
    %v6331 = vunpack.c.h.s8.bf16 %v5899
    %v6332 = vunpack.c.h.s8.bf16 %v5900
    %v6333 = vunpack.c.h.s8.bf16 %v5901
    %v6334 = vunpack.c.h.s8.bf16 %v5902
    %v6335 = vunpack.c.h.s8.bf16 %v5903
    %v6336 = vunpack.c.l.s8.bf16 %v5904
    %v6337 = vunpack.c.l.s8.bf16 %v5905
    %v6338 = vunpack.c.l.s8.bf16 %v5906
    %v6339 = vunpack.c.l.s8.bf16 %v5907
    %v6340 = vunpack.c.l.s8.bf16 %v5908
    %v6341 = vunpack.c.l.s8.bf16 %v5909
    %v6342 = vunpack.c.l.s8.bf16 %v5910
    %v6343 = vunpack.c.l.s8.bf16 %v5911
    %v6344 = vunpack.c.h.s8.bf16 %v5904
    %v6345 = vunpack.c.h.s8.bf16 %v5905
    %v6346 = vunpack.c.h.s8.bf16 %v5906
    %v6347 = vunpack.c.h.s8.bf16 %v5907
    %v6348 = vunpack.c.h.s8.bf16 %v5908
    %v6349 = vunpack.c.h.s8.bf16 %v5909
    %v6350 = vunpack.c.h.s8.bf16 %v5910
    %v6351 = vunpack.c.h.s8.bf16 %v5911
    %v6352 = vunpack.c.l.s8.bf16 %v5912
    %v6353 = vunpack.c.l.s8.bf16 %v5913
    %v6354 = vunpack.c.l.s8.bf16 %v5914
    %v6355 = vunpack.c.l.s8.bf16 %v5915
    %v6356 = vunpack.c.l.s8.bf16 %v5916
    %v6357 = vunpack.c.l.s8.bf16 %v5917
    %v6358 = vunpack.c.l.s8.bf16 %v5918
    %v6359 = vunpack.c.l.s8.bf16 %v5919
    %v6360 = vunpack.c.h.s8.bf16 %v5912
    %v6361 = vunpack.c.h.s8.bf16 %v5913
    %v6362 = vunpack.c.h.s8.bf16 %v5914
    %v6363 = vunpack.c.h.s8.bf16 %v5915
    %v6364 = vunpack.c.h.s8.bf16 %v5916
    %v6365 = vunpack.c.h.s8.bf16 %v5917
    %v6366 = vunpack.c.h.s8.bf16 %v5918
    %v6367 = vunpack.c.h.s8.bf16 %v5919
    %v6368 = vunpack.c.l.s8.bf16 %v5920
    %v6369 = vunpack.c.l.s8.bf16 %v5921
    %v6370 = vunpack.c.l.s8.bf16 %v5922
    %v6371 = vunpack.c.l.s8.bf16 %v5923
    %v6372 = vunpack.c.l.s8.bf16 %v5924
    %v6373 = vunpack.c.l.s8.bf16 %v5925
    %v6374 = vunpack.c.l.s8.bf16 %v5926
    %v6375 = vunpack.c.l.s8.bf16 %v5927
    %v6376 = vunpack.c.h.s8.bf16 %v5920
    %v6377 = vunpack.c.h.s8.bf16 %v5921
    %v6378 = vunpack.c.h.s8.bf16 %v5922
    %v6379 = vunpack.c.h.s8.bf16 %v5923
    %v6380 = vunpack.c.h.s8.bf16 %v5924
    %v6381 = vunpack.c.h.s8.bf16 %v5925
    %v6382 = vunpack.c.h.s8.bf16 %v5926
    %v6383 = vunpack.c.h.s8.bf16 %v5927
    %v6384 = vunpack.c.l.s8.bf16 %v5928
    %v6385 = vunpack.c.l.s8.bf16 %v5929
    %v6386 = vunpack.c.l.s8.bf16 %v5930
    %v6387 = vunpack.c.l.s8.bf16 %v5931
    %v6388 = vunpack.c.l.s8.bf16 %v5932
    %v6389 = vunpack.c.l.s8.bf16 %v5933
    %v6390 = vunpack.c.l.s8.bf16 %v5934
    %v6391 = vunpack.c.l.s8.bf16 %v5935
    %v6392 = vunpack.c.h.s8.bf16 %v5928
    %v6393 = vunpack.c.h.s8.bf16 %v5929
    %v6394 = vunpack.c.h.s8.bf16 %v5930
    %v6395 = vunpack.c.h.s8.bf16 %v5931
    %v6396 = vunpack.c.h.s8.bf16 %v5932
    %v6397 = vunpack.c.h.s8.bf16 %v5933
    %v6398 = vunpack.c.h.s8.bf16 %v5934
    %v6399 = vunpack.c.h.s8.bf16 %v5935
    %v6400 = vunpack.c.l.s8.bf16 %v5936
    %v6401 = vunpack.c.l.s8.bf16 %v5937
    %v6402 = vunpack.c.l.s8.bf16 %v5938
    %v6403 = vunpack.c.l.s8.bf16 %v5939
    %v6404 = vunpack.c.l.s8.bf16 %v5940
    %v6405 = vunpack.c.l.s8.bf16 %v5941
    %v6406 = vunpack.c.l.s8.bf16 %v5942
    %v6407 = vunpack.c.l.s8.bf16 %v5943
    %v6408 = vunpack.c.h.s8.bf16 %v5936
    %v6409 = vunpack.c.h.s8.bf16 %v5937
    %v6410 = vunpack.c.h.s8.bf16 %v5938
    %v6411 = vunpack.c.h.s8.bf16 %v5939
    %v6412 = vunpack.c.h.s8.bf16 %v5940
    %v6413 = vunpack.c.h.s8.bf16 %v5941
    %v6414 = vunpack.c.h.s8.bf16 %v5942
    %v6415 = vunpack.c.h.s8.bf16 %v5943
    %v6416 = vunpack.c.l.s8.bf16 %v5944
    %v6417 = vunpack.c.l.s8.bf16 %v5945
    %v6418 = vunpack.c.l.s8.bf16 %v5946
    %v6419 = vunpack.c.l.s8.bf16 %v5947
    %v6420 = vunpack.c.l.s8.bf16 %v5948
    %v6421 = vunpack.c.l.s8.bf16 %v5949
    %v6422 = vunpack.c.l.s8.bf16 %v5950
    %v6423 = vunpack.c.l.s8.bf16 %v5951
    %v6424 = vunpack.c.h.s8.bf16 %v5944
    %v6425 = vunpack.c.h.s8.bf16 %v5945
    %v6426 = vunpack.c.h.s8.bf16 %v5946
    %v6427 = vunpack.c.h.s8.bf16 %v5947
    %v6428 = vunpack.c.h.s8.bf16 %v5948
    %v6429 = vunpack.c.h.s8.bf16 %v5949
    %v6430 = vunpack.c.h.s8.bf16 %v5950
    %v6431 = vunpack.c.h.s8.bf16 %v5951
    %v6432 = vunpack.c.l.s8.bf16 %v5952
    %v6433 = vunpack.c.l.s8.bf16 %v5953
    %v6434 = vunpack.c.l.s8.bf16 %v5954
    %v6435 = vunpack.c.l.s8.bf16 %v5955
    %v6436 = vunpack.c.l.s8.bf16 %v5956
    %v6437 = vunpack.c.l.s8.bf16 %v5957
    %v6438 = vunpack.c.l.s8.bf16 %v5958
    %v6439 = vunpack.c.l.s8.bf16 %v5959
    %v6440 = vunpack.c.h.s8.bf16 %v5952
    %v6441 = vunpack.c.h.s8.bf16 %v5953
    %v6442 = vunpack.c.h.s8.bf16 %v5954
    %v6443 = vunpack.c.h.s8.bf16 %v5955
    %v6444 = vunpack.c.h.s8.bf16 %v5956
    %v6445 = vunpack.c.h.s8.bf16 %v5957
    %v6446 = vunpack.c.h.s8.bf16 %v5958
    %v6447 = vunpack.c.h.s8.bf16 %v5959
    %v6448 = vunpack.c.l.s8.bf16 %v5960
    %v6449 = vunpack.c.l.s8.bf16 %v5961
    %v6450 = vunpack.c.l.s8.bf16 %v5962
    %v6451 = vunpack.c.l.s8.bf16 %v5963
    %v6452 = vunpack.c.l.s8.bf16 %v5964
    %v6453 = vunpack.c.l.s8.bf16 %v5965
    %v6454 = vunpack.c.l.s8.bf16 %v5966
    %v6455 = vunpack.c.l.s8.bf16 %v5967
    %v6456 = vunpack.c.h.s8.bf16 %v5960
    %v6457 = vunpack.c.h.s8.bf16 %v5961
    %v6458 = vunpack.c.h.s8.bf16 %v5962
    %v6459 = vunpack.c.h.s8.bf16 %v5963
    %v6460 = vunpack.c.h.s8.bf16 %v5964
    %v6461 = vunpack.c.h.s8.bf16 %v5965
    %v6462 = vunpack.c.h.s8.bf16 %v5966
    %v6463 = vunpack.c.h.s8.bf16 %v5967
    %v6464 = vunpack.c.l.s8.bf16 %v5968
    %v6465 = vunpack.c.l.s8.bf16 %v5969
    %v6466 = vunpack.c.l.s8.bf16 %v5970
    %v6467 = vunpack.c.l.s8.bf16 %v5971
    %v6468 = vunpack.c.l.s8.bf16 %v5972
    %v6469 = vunpack.c.l.s8.bf16 %v5973
    %v6470 = vunpack.c.l.s8.bf16 %v5974
    %v6471 = vunpack.c.l.s8.bf16 %v5975
    %v6472 = vunpack.c.h.s8.bf16 %v5968
    %v6473 = vunpack.c.h.s8.bf16 %v5969
    %v6474 = vunpack.c.h.s8.bf16 %v5970
    %v6475 = vunpack.c.h.s8.bf16 %v5971
    %v6476 = vunpack.c.h.s8.bf16 %v5972
    %v6477 = vunpack.c.h.s8.bf16 %v5973
    %v6478 = vunpack.c.h.s8.bf16 %v5974
    %v6479 = vunpack.c.h.s8.bf16 %v5975
    %v6480 = vunpack.c.l.s8.bf16 %v5976
    %v6481 = vunpack.c.l.s8.bf16 %v5977
    %v6482 = vunpack.c.l.s8.bf16 %v5978
    %v6483 = vunpack.c.l.s8.bf16 %v5979
    %v6484 = vunpack.c.l.s8.bf16 %v5980
    %v6485 = vunpack.c.l.s8.bf16 %v5981
    %v6486 = vunpack.c.l.s8.bf16 %v5982
    %v6487 = vunpack.c.l.s8.bf16 %v5983
    %v6488 = vunpack.c.h.s8.bf16 %v5976
    %v6489 = vunpack.c.h.s8.bf16 %v5977
    %v6490 = vunpack.c.h.s8.bf16 %v5978
    %v6491 = vunpack.c.h.s8.bf16 %v5979
    %v6492 = vunpack.c.h.s8.bf16 %v5980
    %v6493 = vunpack.c.h.s8.bf16 %v5981
    %v6494 = vunpack.c.h.s8.bf16 %v5982
    %v6495 = vunpack.c.h.s8.bf16 %v5983
    %6496 = vmatprep.subr.bf16.mxu0 %v6041
    %6497 = vmatpush1.bf16.msra.mxu0 %v6040
    %6498 = vmatprep.subr.bf16.mxu0 %v6033
    %6499 = vmatpush1.bf16.msra.mxu0 %v6032
    %6500 = vmatprep.subr.bf16.mxu0 %v6025
    %6501 = vmatpush1.bf16.msra.mxu0 %v6024
    %6502 = vmatprep.subr.bf16.mxu0 %v6017
    %6503 = vmatpush1.bf16.msra.mxu0 %v6016
    %6504 = vmatprep.subr.bf16.mxu0 %v6009
    %6505 = vmatpush1.bf16.msra.mxu0 %v6008
    %6506 = vmatprep.subr.bf16.mxu0 %v6001
    %6507 = vmatpush1.bf16.msra.mxu0 %v6000
    %6508 = vmatprep.subr.bf16.mxu0 %v5993
    %6509 = vmatpush1.bf16.msra.mxu0 %v5992
    %6510 = vmatprep.subr.bf16.mxu0 %v5985
    %6511 = vmatpush1.bf16.msra.mxu0 %v5984
    %6512 = vmatprep.subr.bf16.mxu0 %v6105
    %6513 = vmatpush2.bf16.msra.mxu0 %v6104
    %6514 = vmatprep.subr.bf16.mxu0 %v6097
    %6515 = vmatpush2.bf16.msra.mxu0 %v6096
    %6516 = vmatprep.subr.bf16.mxu0 %v6089
    %6517 = vmatpush2.bf16.msra.mxu0 %v6088
    %6518 = vmatprep.subr.bf16.mxu0 %v6081
    %6519 = vmatpush2.bf16.msra.mxu0 %v6080
    %6520 = vmatprep.subr.bf16.mxu0 %v6073
    %6521 = vmatpush2.bf16.msra.mxu0 %v6072
    %6522 = vmatprep.subr.bf16.mxu0 %v6065
    %6523 = vmatpush2.bf16.msra.mxu0 %v6064
    %6524 = vmatprep.subr.bf16.mxu0 %v6057
    %6525 = vmatpush2.bf16.msra.mxu0 %v6056
    %6526 = vmatprep.subr.bf16.mxu0 %v6049
    %6527 = vmatpush2.bf16.msra.mxu0 %v6048
    %6528 = vmatprep.mubr.bf16.mxu0 %v2599
    %6529 = vmatmul.mubr.bf16.gmra.mxu0 %v2598
    %v6530 = vpop.f32.mrf.mxu0
    %v6531 = vadd.f32 0.0, %v6530
    %v6532 = vpop.f32.mrf.mxu0
    %v6533 = vadd.f32 0.0, %v6532
    %v6534 = vpop.f32.mrf.mxu0
    %v6535 = vadd.f32 0.0, %v6534
    %v6536 = vpop.f32.mrf.mxu0
    %v6537 = vadd.f32 0.0, %v6536
    %6538 = vdwg.mxu0
    %6539 = vmatprep.subr.bf16.mxu0 %v6169
    %6540 = vmatpush1.bf16.msra.mxu0 %v6168
    %6541 = vmatprep.subr.bf16.mxu0 %v6161
    %6542 = vmatpush1.bf16.msra.mxu0 %v6160
    %6543 = vmatprep.subr.bf16.mxu0 %v6153
    %6544 = vmatpush1.bf16.msra.mxu0 %v6152
    %6545 = vmatprep.subr.bf16.mxu0 %v6145
    %6546 = vmatpush1.bf16.msra.mxu0 %v6144
    %6547 = vmatprep.subr.bf16.mxu0 %v6137
    %6548 = vmatpush1.bf16.msra.mxu0 %v6136
    %6549 = vmatprep.subr.bf16.mxu0 %v6129
    %6550 = vmatpush1.bf16.msra.mxu0 %v6128
    %6551 = vmatprep.subr.bf16.mxu0 %v6121
    %6552 = vmatpush1.bf16.msra.mxu0 %v6120
    %6553 = vmatprep.subr.bf16.mxu0 %v6113
    %6554 = vmatpush1.bf16.msra.mxu0 %v6112
    %6555 = vmatprep.subr.bf16.mxu0 %v6233
    %6556 = vmatpush2.bf16.msra.mxu0 %v6232
    %6557 = vmatprep.subr.bf16.mxu0 %v6225
    %6558 = vmatpush2.bf16.msra.mxu0 %v6224
    %6559 = vmatprep.subr.bf16.mxu0 %v6217
    %6560 = vmatpush2.bf16.msra.mxu0 %v6216
    %6561 = vmatprep.subr.bf16.mxu0 %v6209
    %6562 = vmatpush2.bf16.msra.mxu0 %v6208
    %6563 = vmatprep.subr.bf16.mxu0 %v6201
    %6564 = vmatpush2.bf16.msra.mxu0 %v6200
    %6565 = vmatprep.subr.bf16.mxu0 %v6193
    %6566 = vmatpush2.bf16.msra.mxu0 %v6192
    %6567 = vmatprep.subr.bf16.mxu0 %v6185
    %6568 = vmatpush2.bf16.msra.mxu0 %v6184
    %6569 = vmatprep.subr.bf16.mxu0 %v6177
    %6570 = vmatpush2.bf16.msra.mxu0 %v6176
    %6571 = vmatprep.mubr.bf16.mxu0 %v2601
    %6572 = vmatmul.mubr.bf16.gmra.mxu0 %v2600
    %v6573 = vpop.f32.mrf.mxu0
    %v6574 = vadd.f32 %v6531, %v6573
    %v6575 = vpop.f32.mrf.mxu0
    %v6576 = vadd.f32 %v6533, %v6575
    %v6577 = vpop.f32.mrf.mxu0
    %v6578 = vadd.f32 %v6535, %v6577
    %v6579 = vpop.f32.mrf.mxu0
    %v6580 = vadd.f32 %v6537, %v6579
    %6581 = vdwg.mxu0
    %6582 = vmatprep.subr.bf16.mxu0 %v6297
    %6583 = vmatpush1.bf16.msra.mxu0 %v6296
    %6584 = vmatprep.subr.bf16.mxu0 %v6289
    %6585 = vmatpush1.bf16.msra.mxu0 %v6288
    %6586 = vmatprep.subr.bf16.mxu0 %v6281
    %6587 = vmatpush1.bf16.msra.mxu0 %v6280
    %6588 = vmatprep.subr.bf16.mxu0 %v6273
    %6589 = vmatpush1.bf16.msra.mxu0 %v6272
    %6590 = vmatprep.subr.bf16.mxu0 %v6265
    %6591 = vmatpush1.bf16.msra.mxu0 %v6264
    %6592 = vmatprep.subr.bf16.mxu0 %v6257
    %6593 = vmatpush1.bf16.msra.mxu0 %v6256
    %6594 = vmatprep.subr.bf16.mxu0 %v6249
    %6595 = vmatpush1.bf16.msra.mxu0 %v6248
    %6596 = vmatprep.subr.bf16.mxu0 %v6241
    %6597 = vmatpush1.bf16.msra.mxu0 %v6240
    %6598 = vmatprep.subr.bf16.mxu0 %v6361
    %6599 = vmatpush2.bf16.msra.mxu0 %v6360
    %6600 = vmatprep.subr.bf16.mxu0 %v6353
    %6601 = vmatpush2.bf16.msra.mxu0 %v6352
    %6602 = vmatprep.subr.bf16.mxu0 %v6345
    %6603 = vmatpush2.bf16.msra.mxu0 %v6344
    %6604 = vmatprep.subr.bf16.mxu0 %v6337
    %6605 = vmatpush2.bf16.msra.mxu0 %v6336
    %6606 = vmatprep.subr.bf16.mxu0 %v6329
    %6607 = vmatpush2.bf16.msra.mxu0 %v6328
    %6608 = vmatprep.subr.bf16.mxu0 %v6321
    %6609 = vmatpush2.bf16.msra.mxu0 %v6320
    %6610 = vmatprep.subr.bf16.mxu0 %v6313
    %6611 = vmatpush2.bf16.msra.mxu0 %v6312
    %6612 = vmatprep.subr.bf16.mxu0 %v6305
    %6613 = vmatpush2.bf16.msra.mxu0 %v6304
    %6614 = vmatprep.mubr.bf16.mxu0 %v2603
    %6615 = vmatmul.mubr.bf16.gmra.mxu0 %v2602
    %v6616 = vpop.f32.mrf.mxu0
    %v6617 = vadd.f32 %v6574, %v6616
    %v6618 = vpop.f32.mrf.mxu0
    %v6619 = vadd.f32 %v6576, %v6618
    %v6620 = vpop.f32.mrf.mxu0
    %v6621 = vadd.f32 %v6578, %v6620
    %v6622 = vpop.f32.mrf.mxu0
    %v6623 = vadd.f32 %v6580, %v6622
    %6624 = vdwg.mxu0
    %6625 = vmatprep.subr.bf16.mxu0 %v6425
    %6626 = vmatpush1.bf16.msra.mxu0 %v6424
    %6627 = vmatprep.subr.bf16.mxu0 %v6417
    %6628 = vmatpush1.bf16.msra.mxu0 %v6416
    %6629 = vmatprep.subr.bf16.mxu0 %v6409
    %6630 = vmatpush1.bf16.msra.mxu0 %v6408
    %6631 = vmatprep.subr.bf16.mxu0 %v6401
    %6632 = vmatpush1.bf16.msra.mxu0 %v6400
    %6633 = vmatprep.subr.bf16.mxu0 %v6393
    %6634 = vmatpush1.bf16.msra.mxu0 %v6392
    %6635 = vmatprep.subr.bf16.mxu0 %v6385
    %6636 = vmatpush1.bf16.msra.mxu0 %v6384
    %6637 = vmatprep.subr.bf16.mxu0 %v6377
    %6638 = vmatpush1.bf16.msra.mxu0 %v6376
    %6639 = vmatprep.subr.bf16.mxu0 %v6369
    %6640 = vmatpush1.bf16.msra.mxu0 %v6368
    %6641 = vmatprep.subr.bf16.mxu0 %v6489
    %6642 = vmatpush2.bf16.msra.mxu0 %v6488
    %6643 = vmatprep.subr.bf16.mxu0 %v6481
    %6644 = vmatpush2.bf16.msra.mxu0 %v6480
    %6645 = vmatprep.subr.bf16.mxu0 %v6473
    %6646 = vmatpush2.bf16.msra.mxu0 %v6472
    %6647 = vmatprep.subr.bf16.mxu0 %v6465
    %6648 = vmatpush2.bf16.msra.mxu0 %v6464
    %6649 = vmatprep.subr.bf16.mxu0 %v6457
    %6650 = vmatpush2.bf16.msra.mxu0 %v6456
    %6651 = vmatprep.subr.bf16.mxu0 %v6449
    %6652 = vmatpush2.bf16.msra.mxu0 %v6448
    %6653 = vmatprep.subr.bf16.mxu0 %v6441
    %6654 = vmatpush2.bf16.msra.mxu0 %v6440
    %6655 = vmatprep.subr.bf16.mxu0 %v6433
    %6656 = vmatpush2.bf16.msra.mxu0 %v6432
    %6657 = vmatprep.mubr.bf16.mxu0 %v2605
    %6658 = vmatmul.mubr.bf16.gmra.mxu0 %v2604
    %v6659 = vpop.f32.mrf.mxu0
    %v6660 = vadd.f32 %v6617, %v6659
    %v6661 = vpop.f32.mrf.mxu0
    %v6662 = vadd.f32 %v6619, %v6661
    %v6663 = vpop.f32.mrf.mxu0
    %v6664 = vadd.f32 %v6621, %v6663
    %v6665 = vpop.f32.mrf.mxu0
    %v6666 = vadd.f32 %v6623, %v6665
    %6667 = vdwg.mxu0
    %6668 = vmatprep.subr.bf16.mxu0 %v6043
    %6669 = vmatpush1.bf16.msra.mxu0 %v6042
    %6670 = vmatprep.subr.bf16.mxu0 %v6035
    %6671 = vmatpush1.bf16.msra.mxu0 %v6034
    %6672 = vmatprep.subr.bf16.mxu0 %v6027
    %6673 = vmatpush1.bf16.msra.mxu0 %v6026
    %6674 = vmatprep.subr.bf16.mxu0 %v6019
    %6675 = vmatpush1.bf16.msra.mxu0 %v6018
    %6676 = vmatprep.subr.bf16.mxu0 %v6011
    %6677 = vmatpush1.bf16.msra.mxu0 %v6010
    %6678 = vmatprep.subr.bf16.mxu0 %v6003
    %6679 = vmatpush1.bf16.msra.mxu0 %v6002
    %6680 = vmatprep.subr.bf16.mxu0 %v5995
    %6681 = vmatpush1.bf16.msra.mxu0 %v5994
    %6682 = vmatprep.subr.bf16.mxu0 %v5987
    %6683 = vmatpush1.bf16.msra.mxu0 %v5986
    %6684 = vmatprep.subr.bf16.mxu0 %v6107
    %6685 = vmatpush2.bf16.msra.mxu0 %v6106
    %6686 = vmatprep.subr.bf16.mxu0 %v6099
    %6687 = vmatpush2.bf16.msra.mxu0 %v6098
    %6688 = vmatprep.subr.bf16.mxu0 %v6091
    %6689 = vmatpush2.bf16.msra.mxu0 %v6090
    %6690 = vmatprep.subr.bf16.mxu0 %v6083
    %6691 = vmatpush2.bf16.msra.mxu0 %v6082
    %6692 = vmatprep.subr.bf16.mxu0 %v6075
    %6693 = vmatpush2.bf16.msra.mxu0 %v6074
    %6694 = vmatprep.subr.bf16.mxu0 %v6067
    %6695 = vmatpush2.bf16.msra.mxu0 %v6066
    %6696 = vmatprep.subr.bf16.mxu0 %v6059
    %6697 = vmatpush2.bf16.msra.mxu0 %v6058
    %6698 = vmatprep.subr.bf16.mxu0 %v6051
    %6699 = vmatpush2.bf16.msra.mxu0 %v6050
    %6700 = vmatprep.mubr.bf16.mxu0 %v2599
    %6701 = vmatmul.mubr.bf16.gmra.mxu0 %v2598
    %v6702 = vpop.f32.mrf.mxu0
    %v6703 = vadd.f32 0.0, %v6702
    %v6704 = vpop.f32.mrf.mxu0
    %v6705 = vadd.f32 0.0, %v6704
    %v6706 = vpop.f32.mrf.mxu0
    %v6707 = vadd.f32 0.0, %v6706
    %v6708 = vpop.f32.mrf.mxu0
    %v6709 = vadd.f32 0.0, %v6708
    %6710 = vdwg.mxu0
    %6711 = vmatprep.subr.bf16.mxu0 %v6171
    %6712 = vmatpush1.bf16.msra.mxu0 %v6170
    %6713 = vmatprep.subr.bf16.mxu0 %v6163
    %6714 = vmatpush1.bf16.msra.mxu0 %v6162
    %6715 = vmatprep.subr.bf16.mxu0 %v6155
    %6716 = vmatpush1.bf16.msra.mxu0 %v6154
    %6717 = vmatprep.subr.bf16.mxu0 %v6147
    %6718 = vmatpush1.bf16.msra.mxu0 %v6146
    %6719 = vmatprep.subr.bf16.mxu0 %v6139
    %6720 = vmatpush1.bf16.msra.mxu0 %v6138
    %6721 = vmatprep.subr.bf16.mxu0 %v6131
    %6722 = vmatpush1.bf16.msra.mxu0 %v6130
    %6723 = vmatprep.subr.bf16.mxu0 %v6123
    %6724 = vmatpush1.bf16.msra.mxu0 %v6122
    %6725 = vmatprep.subr.bf16.mxu0 %v6115
    %6726 = vmatpush1.bf16.msra.mxu0 %v6114
    %6727 = vmatprep.subr.bf16.mxu0 %v6235
    %6728 = vmatpush2.bf16.msra.mxu0 %v6234
    %6729 = vmatprep.subr.bf16.mxu0 %v6227
    %6730 = vmatpush2.bf16.msra.mxu0 %v6226
    %6731 = vmatprep.subr.bf16.mxu0 %v6219
    %6732 = vmatpush2.bf16.msra.mxu0 %v6218
    %6733 = vmatprep.subr.bf16.mxu0 %v6211
    %6734 = vmatpush2.bf16.msra.mxu0 %v6210
    %6735 = vmatprep.subr.bf16.mxu0 %v6203
    %6736 = vmatpush2.bf16.msra.mxu0 %v6202
    %6737 = vmatprep.subr.bf16.mxu0 %v6195
    %6738 = vmatpush2.bf16.msra.mxu0 %v6194
    %6739 = vmatprep.subr.bf16.mxu0 %v6187
    %6740 = vmatpush2.bf16.msra.mxu0 %v6186
    %6741 = vmatprep.subr.bf16.mxu0 %v6179
    %6742 = vmatpush2.bf16.msra.mxu0 %v6178
    %6743 = vmatprep.mubr.bf16.mxu0 %v2601
    %6744 = vmatmul.mubr.bf16.gmra.mxu0 %v2600
    %v6745 = vpop.f32.mrf.mxu0
    %v6746 = vadd.f32 %v6703, %v6745
    %v6747 = vpop.f32.mrf.mxu0
    %v6748 = vadd.f32 %v6705, %v6747
    %v6749 = vpop.f32.mrf.mxu0
    %v6750 = vadd.f32 %v6707, %v6749
    %v6751 = vpop.f32.mrf.mxu0
    %v6752 = vadd.f32 %v6709, %v6751
    %6753 = vdwg.mxu0
    %6754 = vmatprep.subr.bf16.mxu0 %v6299
    %6755 = vmatpush1.bf16.msra.mxu0 %v6298
    %6756 = vmatprep.subr.bf16.mxu0 %v6291
    %6757 = vmatpush1.bf16.msra.mxu0 %v6290
    %6758 = vmatprep.subr.bf16.mxu0 %v6283
    %6759 = vmatpush1.bf16.msra.mxu0 %v6282
    %6760 = vmatprep.subr.bf16.mxu0 %v6275
    %6761 = vmatpush1.bf16.msra.mxu0 %v6274
    %6762 = vmatprep.subr.bf16.mxu0 %v6267
    %6763 = vmatpush1.bf16.msra.mxu0 %v6266
    %6764 = vmatprep.subr.bf16.mxu0 %v6259
    %6765 = vmatpush1.bf16.msra.mxu0 %v6258
    %6766 = vmatprep.subr.bf16.mxu0 %v6251
    %6767 = vmatpush1.bf16.msra.mxu0 %v6250
    %6768 = vmatprep.subr.bf16.mxu0 %v6243
    %6769 = vmatpush1.bf16.msra.mxu0 %v6242
    %6770 = vmatprep.subr.bf16.mxu0 %v6363
    %6771 = vmatpush2.bf16.msra.mxu0 %v6362
    %6772 = vmatprep.subr.bf16.mxu0 %v6355
    %6773 = vmatpush2.bf16.msra.mxu0 %v6354
    %6774 = vmatprep.subr.bf16.mxu0 %v6347
    %6775 = vmatpush2.bf16.msra.mxu0 %v6346
    %6776 = vmatprep.subr.bf16.mxu0 %v6339
    %6777 = vmatpush2.bf16.msra.mxu0 %v6338
    %6778 = vmatprep.subr.bf16.mxu0 %v6331
    %6779 = vmatpush2.bf16.msra.mxu0 %v6330
    %6780 = vmatprep.subr.bf16.mxu0 %v6323
    %6781 = vmatpush2.bf16.msra.mxu0 %v6322
    %6782 = vmatprep.subr.bf16.mxu0 %v6315
    %6783 = vmatpush2.bf16.msra.mxu0 %v6314
    %6784 = vmatprep.subr.bf16.mxu0 %v6307
    %6785 = vmatpush2.bf16.msra.mxu0 %v6306
    %6786 = vmatprep.mubr.bf16.mxu0 %v2603
    %6787 = vmatmul.mubr.bf16.gmra.mxu0 %v2602
    %v6788 = vpop.f32.mrf.mxu0
    %v6789 = vadd.f32 %v6746, %v6788
    %v6790 = vpop.f32.mrf.mxu0
    %v6791 = vadd.f32 %v6748, %v6790
    %v6792 = vpop.f32.mrf.mxu0
    %v6793 = vadd.f32 %v6750, %v6792
    %v6794 = vpop.f32.mrf.mxu0
    %v6795 = vadd.f32 %v6752, %v6794
    %6796 = vdwg.mxu0
    %6797 = vmatprep.subr.bf16.mxu0 %v6427
    %6798 = vmatpush1.bf16.msra.mxu0 %v6426
    %6799 = vmatprep.subr.bf16.mxu0 %v6419
    %6800 = vmatpush1.bf16.msra.mxu0 %v6418
    %6801 = vmatprep.subr.bf16.mxu0 %v6411
    %6802 = vmatpush1.bf16.msra.mxu0 %v6410
    %6803 = vmatprep.subr.bf16.mxu0 %v6403
    %6804 = vmatpush1.bf16.msra.mxu0 %v6402
    %6805 = vmatprep.subr.bf16.mxu0 %v6395
    %6806 = vmatpush1.bf16.msra.mxu0 %v6394
    %6807 = vmatprep.subr.bf16.mxu0 %v6387
    %6808 = vmatpush1.bf16.msra.mxu0 %v6386
    %6809 = vmatprep.subr.bf16.mxu0 %v6379
    %6810 = vmatpush1.bf16.msra.mxu0 %v6378
    %6811 = vmatprep.subr.bf16.mxu0 %v6371
    %6812 = vmatpush1.bf16.msra.mxu0 %v6370
    %6813 = vmatprep.subr.bf16.mxu0 %v6491
    %6814 = vmatpush2.bf16.msra.mxu0 %v6490
    %6815 = vmatprep.subr.bf16.mxu0 %v6483
    %6816 = vmatpush2.bf16.msra.mxu0 %v6482
    %6817 = vmatprep.subr.bf16.mxu0 %v6475
    %6818 = vmatpush2.bf16.msra.mxu0 %v6474
    %6819 = vmatprep.subr.bf16.mxu0 %v6467
    %6820 = vmatpush2.bf16.msra.mxu0 %v6466
    %6821 = vmatprep.subr.bf16.mxu0 %v6459
    %6822 = vmatpush2.bf16.msra.mxu0 %v6458
    %6823 = vmatprep.subr.bf16.mxu0 %v6451
    %6824 = vmatpush2.bf16.msra.mxu0 %v6450
    %6825 = vmatprep.subr.bf16.mxu0 %v6443
    %6826 = vmatpush2.bf16.msra.mxu0 %v6442
    %6827 = vmatprep.subr.bf16.mxu0 %v6435
    %6828 = vmatpush2.bf16.msra.mxu0 %v6434
    %6829 = vmatprep.mubr.bf16.mxu0 %v2605
    %6830 = vmatmul.mubr.bf16.gmra.mxu0 %v2604
    %v6831 = vpop.f32.mrf.mxu0
    %v6832 = vadd.f32 %v6789, %v6831
    %v6833 = vpop.f32.mrf.mxu0
    %v6834 = vadd.f32 %v6791, %v6833
    %v6835 = vpop.f32.mrf.mxu0
    %v6836 = vadd.f32 %v6793, %v6835
    %v6837 = vpop.f32.mrf.mxu0
    %v6838 = vadd.f32 %v6795, %v6837
    %6839 = vdwg.mxu0
    %6840 = vmatprep.subr.bf16.mxu0 %v6045
    %6841 = vmatpush1.bf16.msra.mxu0 %v6044
    %6842 = vmatprep.subr.bf16.mxu0 %v6037
    %6843 = vmatpush1.bf16.msra.mxu0 %v6036
    %6844 = vmatprep.subr.bf16.mxu0 %v6029
    %6845 = vmatpush1.bf16.msra.mxu0 %v6028
    %6846 = vmatprep.subr.bf16.mxu0 %v6021
    %6847 = vmatpush1.bf16.msra.mxu0 %v6020
    %6848 = vmatprep.subr.bf16.mxu0 %v6013
    %6849 = vmatpush1.bf16.msra.mxu0 %v6012
    %6850 = vmatprep.subr.bf16.mxu0 %v6005
    %6851 = vmatpush1.bf16.msra.mxu0 %v6004
    %6852 = vmatprep.subr.bf16.mxu0 %v5997
    %6853 = vmatpush1.bf16.msra.mxu0 %v5996
    %6854 = vmatprep.subr.bf16.mxu0 %v5989
    %6855 = vmatpush1.bf16.msra.mxu0 %v5988
    %6856 = vmatprep.subr.bf16.mxu0 %v6109
    %6857 = vmatpush2.bf16.msra.mxu0 %v6108
    %6858 = vmatprep.subr.bf16.mxu0 %v6101
    %6859 = vmatpush2.bf16.msra.mxu0 %v6100
    %6860 = vmatprep.subr.bf16.mxu0 %v6093
    %6861 = vmatpush2.bf16.msra.mxu0 %v6092
    %6862 = vmatprep.subr.bf16.mxu0 %v6085
    %6863 = vmatpush2.bf16.msra.mxu0 %v6084
    %6864 = vmatprep.subr.bf16.mxu0 %v6077
    %6865 = vmatpush2.bf16.msra.mxu0 %v6076
    %6866 = vmatprep.subr.bf16.mxu0 %v6069
    %6867 = vmatpush2.bf16.msra.mxu0 %v6068
    %6868 = vmatprep.subr.bf16.mxu0 %v6061
    %6869 = vmatpush2.bf16.msra.mxu0 %v6060
    %6870 = vmatprep.subr.bf16.mxu0 %v6053
    %6871 = vmatpush2.bf16.msra.mxu0 %v6052
    %6872 = vmatprep.mubr.bf16.mxu0 %v2599
    %6873 = vmatmul.mubr.bf16.gmra.mxu0 %v2598
    %v6874 = vpop.f32.mrf.mxu0
    %v6875 = vadd.f32 0.0, %v6874
    %v6876 = vpop.f32.mrf.mxu0
    %v6877 = vadd.f32 0.0, %v6876
    %v6878 = vpop.f32.mrf.mxu0
    %v6879 = vadd.f32 0.0, %v6878
    %v6880 = vpop.f32.mrf.mxu0
    %v6881 = vadd.f32 0.0, %v6880
    %6882 = vdwg.mxu0
    %6883 = vmatprep.subr.bf16.mxu0 %v6173
    %6884 = vmatpush1.bf16.msra.mxu0 %v6172
    %6885 = vmatprep.subr.bf16.mxu0 %v6165
    %6886 = vmatpush1.bf16.msra.mxu0 %v6164
    %6887 = vmatprep.subr.bf16.mxu0 %v6157
    %6888 = vmatpush1.bf16.msra.mxu0 %v6156
    %6889 = vmatprep.subr.bf16.mxu0 %v6149
    %6890 = vmatpush1.bf16.msra.mxu0 %v6148
    %6891 = vmatprep.subr.bf16.mxu0 %v6141
    %6892 = vmatpush1.bf16.msra.mxu0 %v6140
    %6893 = vmatprep.subr.bf16.mxu0 %v6133
    %6894 = vmatpush1.bf16.msra.mxu0 %v6132
    %6895 = vmatprep.subr.bf16.mxu0 %v6125
    %6896 = vmatpush1.bf16.msra.mxu0 %v6124
    %6897 = vmatprep.subr.bf16.mxu0 %v6117
    %6898 = vmatpush1.bf16.msra.mxu0 %v6116
    %6899 = vmatprep.subr.bf16.mxu0 %v6237
    %6900 = vmatpush2.bf16.msra.mxu0 %v6236
    %6901 = vmatprep.subr.bf16.mxu0 %v6229
    %6902 = vmatpush2.bf16.msra.mxu0 %v6228
    %6903 = vmatprep.subr.bf16.mxu0 %v6221
    %6904 = vmatpush2.bf16.msra.mxu0 %v6220
    %6905 = vmatprep.subr.bf16.mxu0 %v6213
    %6906 = vmatpush2.bf16.msra.mxu0 %v6212
    %6907 = vmatprep.subr.bf16.mxu0 %v6205
    %6908 = vmatpush2.bf16.msra.mxu0 %v6204
    %6909 = vmatprep.subr.bf16.mxu0 %v6197
    %6910 = vmatpush2.bf16.msra.mxu0 %v6196
    %6911 = vmatprep.subr.bf16.mxu0 %v6189
    %6912 = vmatpush2.bf16.msra.mxu0 %v6188
    %6913 = vmatprep.subr.bf16.mxu0 %v6181
    %6914 = vmatpush2.bf16.msra.mxu0 %v6180
    %6915 = vmatprep.mubr.bf16.mxu0 %v2601
    %6916 = vmatmul.mubr.bf16.gmra.mxu0 %v2600
    %v6917 = vpop.f32.mrf.mxu0
    %v6918 = vadd.f32 %v6875, %v6917
    %v6919 = vpop.f32.mrf.mxu0
    %v6920 = vadd.f32 %v6877, %v6919
    %v6921 = vpop.f32.mrf.mxu0
    %v6922 = vadd.f32 %v6879, %v6921
    %v6923 = vpop.f32.mrf.mxu0
    %v6924 = vadd.f32 %v6881, %v6923
    %6925 = vdwg.mxu0
    %6926 = vmatprep.subr.bf16.mxu0 %v6301
    %6927 = vmatpush1.bf16.msra.mxu0 %v6300
    %6928 = vmatprep.subr.bf16.mxu0 %v6293
    %6929 = vmatpush1.bf16.msra.mxu0 %v6292
    %6930 = vmatprep.subr.bf16.mxu0 %v6285
    %6931 = vmatpush1.bf16.msra.mxu0 %v6284
    %6932 = vmatprep.subr.bf16.mxu0 %v6277
    %6933 = vmatpush1.bf16.msra.mxu0 %v6276
    %6934 = vmatprep.subr.bf16.mxu0 %v6269
    %6935 = vmatpush1.bf16.msra.mxu0 %v6268
    %6936 = vmatprep.subr.bf16.mxu0 %v6261
    %6937 = vmatpush1.bf16.msra.mxu0 %v6260
    %6938 = vmatprep.subr.bf16.mxu0 %v6253
    %6939 = vmatpush1.bf16.msra.mxu0 %v6252
    %6940 = vmatprep.subr.bf16.mxu0 %v6245
    %6941 = vmatpush1.bf16.msra.mxu0 %v6244
    %6942 = vmatprep.subr.bf16.mxu0 %v6365
    %6943 = vmatpush2.bf16.msra.mxu0 %v6364
    %6944 = vmatprep.subr.bf16.mxu0 %v6357
    %6945 = vmatpush2.bf16.msra.mxu0 %v6356
    %6946 = vmatprep.subr.bf16.mxu0 %v6349
    %6947 = vmatpush2.bf16.msra.mxu0 %v6348
    %6948 = vmatprep.subr.bf16.mxu0 %v6341
    %6949 = vmatpush2.bf16.msra.mxu0 %v6340
    %6950 = vmatprep.subr.bf16.mxu0 %v6333
    %6951 = vmatpush2.bf16.msra.mxu0 %v6332
    %6952 = vmatprep.subr.bf16.mxu0 %v6325
    %6953 = vmatpush2.bf16.msra.mxu0 %v6324
    %6954 = vmatprep.subr.bf16.mxu0 %v6317
    %6955 = vmatpush2.bf16.msra.mxu0 %v6316
    %6956 = vmatprep.subr.bf16.mxu0 %v6309
    %6957 = vmatpush2.bf16.msra.mxu0 %v6308
    %6958 = vmatprep.mubr.bf16.mxu0 %v2603
    %6959 = vmatmul.mubr.bf16.gmra.mxu0 %v2602
    %v6960 = vpop.f32.mrf.mxu0
    %v6961 = vadd.f32 %v6918, %v6960
    %v6962 = vpop.f32.mrf.mxu0
    %v6963 = vadd.f32 %v6920, %v6962
    %v6964 = vpop.f32.mrf.mxu0
    %v6965 = vadd.f32 %v6922, %v6964
    %v6966 = vpop.f32.mrf.mxu0
    %v6967 = vadd.f32 %v6924, %v6966
    %6968 = vdwg.mxu0
    %6969 = vmatprep.subr.bf16.mxu0 %v6429
    %6970 = vmatpush1.bf16.msra.mxu0 %v6428
    %6971 = vmatprep.subr.bf16.mxu0 %v6421
    %6972 = vmatpush1.bf16.msra.mxu0 %v6420
    %6973 = vmatprep.subr.bf16.mxu0 %v6413
    %6974 = vmatpush1.bf16.msra.mxu0 %v6412
    %6975 = vmatprep.subr.bf16.mxu0 %v6405
    %6976 = vmatpush1.bf16.msra.mxu0 %v6404
    %6977 = vmatprep.subr.bf16.mxu0 %v6397
    %6978 = vmatpush1.bf16.msra.mxu0 %v6396
    %6979 = vmatprep.subr.bf16.mxu0 %v6389
    %6980 = vmatpush1.bf16.msra.mxu0 %v6388
    %6981 = vmatprep.subr.bf16.mxu0 %v6381
    %6982 = vmatpush1.bf16.msra.mxu0 %v6380
    %6983 = vmatprep.subr.bf16.mxu0 %v6373
    %6984 = vmatpush1.bf16.msra.mxu0 %v6372
    %6985 = vmatprep.subr.bf16.mxu0 %v6493
    %6986 = vmatpush2.bf16.msra.mxu0 %v6492
    %6987 = vmatprep.subr.bf16.mxu0 %v6485
    %6988 = vmatpush2.bf16.msra.mxu0 %v6484
    %6989 = vmatprep.subr.bf16.mxu0 %v6477
    %6990 = vmatpush2.bf16.msra.mxu0 %v6476
    %6991 = vmatprep.subr.bf16.mxu0 %v6469
    %6992 = vmatpush2.bf16.msra.mxu0 %v6468
    %6993 = vmatprep.subr.bf16.mxu0 %v6461
    %6994 = vmatpush2.bf16.msra.mxu0 %v6460
    %6995 = vmatprep.subr.bf16.mxu0 %v6453
    %6996 = vmatpush2.bf16.msra.mxu0 %v6452
    %6997 = vmatprep.subr.bf16.mxu0 %v6445
    %6998 = vmatpush2.bf16.msra.mxu0 %v6444
    %6999 = vmatprep.subr.bf16.mxu0 %v6437
    %7000 = vmatpush2.bf16.msra.mxu0 %v6436
    %7001 = vmatprep.mubr.bf16.mxu0 %v2605
    %7002 = vmatmul.mubr.bf16.gmra.mxu0 %v2604
    %v7003 = vpop.f32.mrf.mxu0
    %v7004 = vadd.f32 %v6961, %v7003
    %v7005 = vpop.f32.mrf.mxu0
    %v7006 = vadd.f32 %v6963, %v7005
    %v7007 = vpop.f32.mrf.mxu0
    %v7008 = vadd.f32 %v6965, %v7007
    %v7009 = vpop.f32.mrf.mxu0
    %v7010 = vadd.f32 %v6967, %v7009
    %7011 = vdwg.mxu0
    %7012 = vmatprep.subr.bf16.mxu0 %v6047
    %7013 = vmatpush1.bf16.msra.mxu0 %v6046
    %7014 = vmatprep.subr.bf16.mxu0 %v6039
    %7015 = vmatpush1.bf16.msra.mxu0 %v6038
    %7016 = vmatprep.subr.bf16.mxu0 %v6031
    %7017 = vmatpush1.bf16.msra.mxu0 %v6030
    %7018 = vmatprep.subr.bf16.mxu0 %v6023
    %7019 = vmatpush1.bf16.msra.mxu0 %v6022
    %7020 = vmatprep.subr.bf16.mxu0 %v6015
    %7021 = vmatpush1.bf16.msra.mxu0 %v6014
    %7022 = vmatprep.subr.bf16.mxu0 %v6007
    %7023 = vmatpush1.bf16.msra.mxu0 %v6006
    %7024 = vmatprep.subr.bf16.mxu0 %v5999
    %7025 = vmatpush1.bf16.msra.mxu0 %v5998
    %7026 = vmatprep.subr.bf16.mxu0 %v5991
    %7027 = vmatpush1.bf16.msra.mxu0 %v5990
    %7028 = vmatprep.subr.bf16.mxu0 %v6111
    %7029 = vmatpush2.bf16.msra.mxu0 %v6110
    %7030 = vmatprep.subr.bf16.mxu0 %v6103
    %7031 = vmatpush2.bf16.msra.mxu0 %v6102
    %7032 = vmatprep.subr.bf16.mxu0 %v6095
    %7033 = vmatpush2.bf16.msra.mxu0 %v6094
    %7034 = vmatprep.subr.bf16.mxu0 %v6087
    %7035 = vmatpush2.bf16.msra.mxu0 %v6086
    %7036 = vmatprep.subr.bf16.mxu0 %v6079
    %7037 = vmatpush2.bf16.msra.mxu0 %v6078
    %7038 = vmatprep.subr.bf16.mxu0 %v6071
    %7039 = vmatpush2.bf16.msra.mxu0 %v6070
    %7040 = vmatprep.subr.bf16.mxu0 %v6063
    %7041 = vmatpush2.bf16.msra.mxu0 %v6062
    %7042 = vmatprep.subr.bf16.mxu0 %v6055
    %7043 = vmatpush2.bf16.msra.mxu0 %v6054
    %7044 = vmatprep.mubr.bf16.mxu0 %v2599
    %7045 = vmatmul.mubr.bf16.gmra.mxu0 %v2598
    %v7046 = vpop.f32.mrf.mxu0
    %v7047 = vadd.f32 0.0, %v7046
    %v7048 = vpop.f32.mrf.mxu0
    %v7049 = vadd.f32 0.0, %v7048
    %v7050 = vpop.f32.mrf.mxu0
    %v7051 = vadd.f32 0.0, %v7050
    %v7052 = vpop.f32.mrf.mxu0
    %v7053 = vadd.f32 0.0, %v7052
    %7054 = vdwg.mxu0
    %7055 = vmatprep.subr.bf16.mxu0 %v6175
    %7056 = vmatpush1.bf16.msra.mxu0 %v6174
    %7057 = vmatprep.subr.bf16.mxu0 %v6167
    %7058 = vmatpush1.bf16.msra.mxu0 %v6166
    %7059 = vmatprep.subr.bf16.mxu0 %v6159
    %7060 = vmatpush1.bf16.msra.mxu0 %v6158
    %7061 = vmatprep.subr.bf16.mxu0 %v6151
    %7062 = vmatpush1.bf16.msra.mxu0 %v6150
    %7063 = vmatprep.subr.bf16.mxu0 %v6143
    %7064 = vmatpush1.bf16.msra.mxu0 %v6142
    %7065 = vmatprep.subr.bf16.mxu0 %v6135
    %7066 = vmatpush1.bf16.msra.mxu0 %v6134
    %7067 = vmatprep.subr.bf16.mxu0 %v6127
    %7068 = vmatpush1.bf16.msra.mxu0 %v6126
    %7069 = vmatprep.subr.bf16.mxu0 %v6119
    %7070 = vmatpush1.bf16.msra.mxu0 %v6118
    %7071 = vmatprep.subr.bf16.mxu0 %v6239
    %7072 = vmatpush2.bf16.msra.mxu0 %v6238
    %7073 = vmatprep.subr.bf16.mxu0 %v6231
    %7074 = vmatpush2.bf16.msra.mxu0 %v6230
    %7075 = vmatprep.subr.bf16.mxu0 %v6223
    %7076 = vmatpush2.bf16.msra.mxu0 %v6222
    %7077 = vmatprep.subr.bf16.mxu0 %v6215
    %7078 = vmatpush2.bf16.msra.mxu0 %v6214
    %7079 = vmatprep.subr.bf16.mxu0 %v6207
    %7080 = vmatpush2.bf16.msra.mxu0 %v6206
    %7081 = vmatprep.subr.bf16.mxu0 %v6199
    %7082 = vmatpush2.bf16.msra.mxu0 %v6198
    %7083 = vmatprep.subr.bf16.mxu0 %v6191
    %7084 = vmatpush2.bf16.msra.mxu0 %v6190
    %7085 = vmatprep.subr.bf16.mxu0 %v6183
    %7086 = vmatpush2.bf16.msra.mxu0 %v6182
    %7087 = vmatprep.mubr.bf16.mxu0 %v2601
    %7088 = vmatmul.mubr.bf16.gmra.mxu0 %v2600
    %v7089 = vpop.f32.mrf.mxu0
    %v7090 = vadd.f32 %v7047, %v7089
    %v7091 = vpop.f32.mrf.mxu0
    %v7092 = vadd.f32 %v7049, %v7091
    %v7093 = vpop.f32.mrf.mxu0
    %v7094 = vadd.f32 %v7051, %v7093
    %v7095 = vpop.f32.mrf.mxu0
    %v7096 = vadd.f32 %v7053, %v7095
    %7097 = vdwg.mxu0
    %7098 = vmatprep.subr.bf16.mxu0 %v6303
    %7099 = vmatpush1.bf16.msra.mxu0 %v6302
    %7100 = vmatprep.subr.bf16.mxu0 %v6295
    %7101 = vmatpush1.bf16.msra.mxu0 %v6294
    %7102 = vmatprep.subr.bf16.mxu0 %v6287
    %7103 = vmatpush1.bf16.msra.mxu0 %v6286
    %7104 = vmatprep.subr.bf16.mxu0 %v6279
    %7105 = vmatpush1.bf16.msra.mxu0 %v6278
    %7106 = vmatprep.subr.bf16.mxu0 %v6271
    %7107 = vmatpush1.bf16.msra.mxu0 %v6270
    %7108 = vmatprep.subr.bf16.mxu0 %v6263
    %7109 = vmatpush1.bf16.msra.mxu0 %v6262
    %7110 = vmatprep.subr.bf16.mxu0 %v6255
    %7111 = vmatpush1.bf16.msra.mxu0 %v6254
    %7112 = vmatprep.subr.bf16.mxu0 %v6247
    %7113 = vmatpush1.bf16.msra.mxu0 %v6246
    %7114 = vmatprep.subr.bf16.mxu0 %v6367
    %7115 = vmatpush2.bf16.msra.mxu0 %v6366
    %7116 = vmatprep.subr.bf16.mxu0 %v6359
    %7117 = vmatpush2.bf16.msra.mxu0 %v6358
    %7118 = vmatprep.subr.bf16.mxu0 %v6351
    %7119 = vmatpush2.bf16.msra.mxu0 %v6350
    %7120 = vmatprep.subr.bf16.mxu0 %v6343
    %7121 = vmatpush2.bf16.msra.mxu0 %v6342
    %7122 = vmatprep.subr.bf16.mxu0 %v6335
    %7123 = vmatpush2.bf16.msra.mxu0 %v6334
    %7124 = vmatprep.subr.bf16.mxu0 %v6327
    %7125 = vmatpush2.bf16.msra.mxu0 %v6326
    %7126 = vmatprep.subr.bf16.mxu0 %v6319
    %7127 = vmatpush2.bf16.msra.mxu0 %v6318
    %7128 = vmatprep.subr.bf16.mxu0 %v6311
    %7129 = vmatpush2.bf16.msra.mxu0 %v6310
    %7130 = vmatprep.mubr.bf16.mxu0 %v2603
    %7131 = vmatmul.mubr.bf16.gmra.mxu0 %v2602
    %v7132 = vpop.f32.mrf.mxu0
    %v7133 = vadd.f32 %v7090, %v7132
    %v7134 = vpop.f32.mrf.mxu0
    %v7135 = vadd.f32 %v7092, %v7134
    %v7136 = vpop.f32.mrf.mxu0
    %v7137 = vadd.f32 %v7094, %v7136
    %v7138 = vpop.f32.mrf.mxu0
    %v7139 = vadd.f32 %v7096, %v7138
    %7140 = vdwg.mxu0
    %7141 = vmatprep.subr.bf16.mxu0 %v6431
    %7142 = vmatpush1.bf16.msra.mxu0 %v6430
    %7143 = vmatprep.subr.bf16.mxu0 %v6423
    %7144 = vmatpush1.bf16.msra.mxu0 %v6422
    %7145 = vmatprep.subr.bf16.mxu0 %v6415
    %7146 = vmatpush1.bf16.msra.mxu0 %v6414
    %7147 = vmatprep.subr.bf16.mxu0 %v6407
    %7148 = vmatpush1.bf16.msra.mxu0 %v6406
    %7149 = vmatprep.subr.bf16.mxu0 %v6399
    %7150 = vmatpush1.bf16.msra.mxu0 %v6398
    %7151 = vmatprep.subr.bf16.mxu0 %v6391
    %7152 = vmatpush1.bf16.msra.mxu0 %v6390
    %7153 = vmatprep.subr.bf16.mxu0 %v6383
    %7154 = vmatpush1.bf16.msra.mxu0 %v6382
    %7155 = vmatprep.subr.bf16.mxu0 %v6375
    %7156 = vmatpush1.bf16.msra.mxu0 %v6374
    %7157 = vmatprep.subr.bf16.mxu0 %v6495
    %7158 = vmatpush2.bf16.msra.mxu0 %v6494
    %7159 = vmatprep.subr.bf16.mxu0 %v6487
    %7160 = vmatpush2.bf16.msra.mxu0 %v6486
    %7161 = vmatprep.subr.bf16.mxu0 %v6479
    %7162 = vmatpush2.bf16.msra.mxu0 %v6478
    %7163 = vmatprep.subr.bf16.mxu0 %v6471
    %7164 = vmatpush2.bf16.msra.mxu0 %v6470
    %7165 = vmatprep.subr.bf16.mxu0 %v6463
    %7166 = vmatpush2.bf16.msra.mxu0 %v6462
    %7167 = vmatprep.subr.bf16.mxu0 %v6455
    %7168 = vmatpush2.bf16.msra.mxu0 %v6454
    %7169 = vmatprep.subr.bf16.mxu0 %v6447
    %7170 = vmatpush2.bf16.msra.mxu0 %v6446
    %7171 = vmatprep.subr.bf16.mxu0 %v6439
    %7172 = vmatpush2.bf16.msra.mxu0 %v6438
    %7173 = vmatprep.mubr.bf16.mxu0 %v2605
    %7174 = vmatmul.mubr.bf16.gmra.mxu0 %v2604
    %v7175 = vpop.f32.mrf.mxu0
    %v7176 = vadd.f32 %v7133, %v7175
    %v7177 = vpop.f32.mrf.mxu0
    %v7178 = vadd.f32 %v7135, %v7177
    %v7179 = vpop.f32.mrf.mxu0
    %v7180 = vadd.f32 %v7137, %v7179
    %v7181 = vpop.f32.mrf.mxu0
    %v7182 = vadd.f32 %v7139, %v7181
    %7183 = vdwg.mxu0
    %7184 = vmatprep.subr.bf16.mxu0 %v5273
    %7185 = vmatpush1.bf16.msra.mxu0 %v5272
    %7186 = vmatprep.subr.bf16.mxu0 %v5265
    %7187 = vmatpush1.bf16.msra.mxu0 %v5264
    %7188 = vmatprep.subr.bf16.mxu0 %v5257
    %7189 = vmatpush1.bf16.msra.mxu0 %v5256
    %7190 = vmatprep.subr.bf16.mxu0 %v5249
    %7191 = vmatpush1.bf16.msra.mxu0 %v5248
    %7192 = vmatprep.subr.bf16.mxu0 %v5241
    %7193 = vmatpush1.bf16.msra.mxu0 %v5240
    %7194 = vmatprep.subr.bf16.mxu0 %v5233
    %7195 = vmatpush1.bf16.msra.mxu0 %v5232
    %7196 = vmatprep.subr.bf16.mxu0 %v5225
    %7197 = vmatpush1.bf16.msra.mxu0 %v5224
    %7198 = vmatprep.subr.bf16.mxu0 %v5217
    %7199 = vmatpush1.bf16.msra.mxu0 %v5216
    %7200 = vmatprep.subr.bf16.mxu0 %v5337
    %7201 = vmatpush2.bf16.msra.mxu0 %v5336
    %7202 = vmatprep.subr.bf16.mxu0 %v5329
    %7203 = vmatpush2.bf16.msra.mxu0 %v5328
    %7204 = vmatprep.subr.bf16.mxu0 %v5321
    %7205 = vmatpush2.bf16.msra.mxu0 %v5320
    %7206 = vmatprep.subr.bf16.mxu0 %v5313
    %7207 = vmatpush2.bf16.msra.mxu0 %v5312
    %7208 = vmatprep.subr.bf16.mxu0 %v5305
    %7209 = vmatpush2.bf16.msra.mxu0 %v5304
    %7210 = vmatprep.subr.bf16.mxu0 %v5297
    %7211 = vmatpush2.bf16.msra.mxu0 %v5296
    %7212 = vmatprep.subr.bf16.mxu0 %v5289
    %7213 = vmatpush2.bf16.msra.mxu0 %v5288
    %7214 = vmatprep.subr.bf16.mxu0 %v5281
    %7215 = vmatpush2.bf16.msra.mxu0 %v5280
    %7216 = vmatprep.mubr.bf16.mxu0 %v971
    %7217 = vmatmul.mubr.bf16.gmra.mxu0 %v970
    %v7218 = vpop.f32.mrf.mxu0
    %v7219 = vadd.f32 %v6660, %v7218
    %v7220 = vpop.f32.mrf.mxu0
    %v7221 = vadd.f32 %v6662, %v7220
    %v7222 = vpop.f32.mrf.mxu0
    %v7223 = vadd.f32 %v6664, %v7222
    %v7224 = vpop.f32.mrf.mxu0
    %v7225 = vadd.f32 %v6666, %v7224
    %7226 = vdwg.mxu0
    %7227 = vmatprep.subr.bf16.mxu0 %v5401
    %7228 = vmatpush1.bf16.msra.mxu0 %v5400
    %7229 = vmatprep.subr.bf16.mxu0 %v5393
    %7230 = vmatpush1.bf16.msra.mxu0 %v5392
    %7231 = vmatprep.subr.bf16.mxu0 %v5385
    %7232 = vmatpush1.bf16.msra.mxu0 %v5384
    %7233 = vmatprep.subr.bf16.mxu0 %v5377
    %7234 = vmatpush1.bf16.msra.mxu0 %v5376
    %7235 = vmatprep.subr.bf16.mxu0 %v5369
    %7236 = vmatpush1.bf16.msra.mxu0 %v5368
    %7237 = vmatprep.subr.bf16.mxu0 %v5361
    %7238 = vmatpush1.bf16.msra.mxu0 %v5360
    %7239 = vmatprep.subr.bf16.mxu0 %v5353
    %7240 = vmatpush1.bf16.msra.mxu0 %v5352
    %7241 = vmatprep.subr.bf16.mxu0 %v5345
    %7242 = vmatpush1.bf16.msra.mxu0 %v5344
    %7243 = vmatprep.subr.bf16.mxu0 %v5465
    %7244 = vmatpush2.bf16.msra.mxu0 %v5464
    %7245 = vmatprep.subr.bf16.mxu0 %v5457
    %7246 = vmatpush2.bf16.msra.mxu0 %v5456
    %7247 = vmatprep.subr.bf16.mxu0 %v5449
    %7248 = vmatpush2.bf16.msra.mxu0 %v5448
    %7249 = vmatprep.subr.bf16.mxu0 %v5441
    %7250 = vmatpush2.bf16.msra.mxu0 %v5440
    %7251 = vmatprep.subr.bf16.mxu0 %v5433
    %7252 = vmatpush2.bf16.msra.mxu0 %v5432
    %7253 = vmatprep.subr.bf16.mxu0 %v5425
    %7254 = vmatpush2.bf16.msra.mxu0 %v5424
    %7255 = vmatprep.subr.bf16.mxu0 %v5417
    %7256 = vmatpush2.bf16.msra.mxu0 %v5416
    %7257 = vmatprep.subr.bf16.mxu0 %v5409
    %7258 = vmatpush2.bf16.msra.mxu0 %v5408
    %7259 = vmatprep.mubr.bf16.mxu0 %v973
    %7260 = vmatmul.mubr.bf16.gmra.mxu0 %v972
    %v7261 = vpop.f32.mrf.mxu0
    %v7262 = vadd.f32 %v7219, %v7261
    %v7263 = vpop.f32.mrf.mxu0
    %v7264 = vadd.f32 %v7221, %v7263
    %v7265 = vpop.f32.mrf.mxu0
    %v7266 = vadd.f32 %v7223, %v7265
    %v7267 = vpop.f32.mrf.mxu0
    %v7268 = vadd.f32 %v7225, %v7267
    %7269 = vdwg.mxu0
    %7270 = vmatprep.subr.bf16.mxu0 %v5529
    %7271 = vmatpush1.bf16.msra.mxu0 %v5528
    %7272 = vmatprep.subr.bf16.mxu0 %v5521
    %7273 = vmatpush1.bf16.msra.mxu0 %v5520
    %7274 = vmatprep.subr.bf16.mxu0 %v5513
    %7275 = vmatpush1.bf16.msra.mxu0 %v5512
    %7276 = vmatprep.subr.bf16.mxu0 %v5505
    %7277 = vmatpush1.bf16.msra.mxu0 %v5504
    %7278 = vmatprep.subr.bf16.mxu0 %v5497
    %7279 = vmatpush1.bf16.msra.mxu0 %v5496
    %7280 = vmatprep.subr.bf16.mxu0 %v5489
    %7281 = vmatpush1.bf16.msra.mxu0 %v5488
    %7282 = vmatprep.subr.bf16.mxu0 %v5481
    %7283 = vmatpush1.bf16.msra.mxu0 %v5480
    %7284 = vmatprep.subr.bf16.mxu0 %v5473
    %7285 = vmatpush1.bf16.msra.mxu0 %v5472
    %7286 = vmatprep.subr.bf16.mxu0 %v5593
    %7287 = vmatpush2.bf16.msra.mxu0 %v5592
    %7288 = vmatprep.subr.bf16.mxu0 %v5585
    %7289 = vmatpush2.bf16.msra.mxu0 %v5584
    %7290 = vmatprep.subr.bf16.mxu0 %v5577
    %7291 = vmatpush2.bf16.msra.mxu0 %v5576
    %7292 = vmatprep.subr.bf16.mxu0 %v5569
    %7293 = vmatpush2.bf16.msra.mxu0 %v5568
    %7294 = vmatprep.subr.bf16.mxu0 %v5561
    %7295 = vmatpush2.bf16.msra.mxu0 %v5560
    %7296 = vmatprep.subr.bf16.mxu0 %v5553
    %7297 = vmatpush2.bf16.msra.mxu0 %v5552
    %7298 = vmatprep.subr.bf16.mxu0 %v5545
    %7299 = vmatpush2.bf16.msra.mxu0 %v5544
    %7300 = vmatprep.subr.bf16.mxu0 %v5537
    %7301 = vmatpush2.bf16.msra.mxu0 %v5536
    %7302 = vmatprep.mubr.bf16.mxu0 %v975
    %7303 = vmatmul.mubr.bf16.gmra.mxu0 %v974
    %v7304 = vpop.f32.mrf.mxu0
    %v7305 = vadd.f32 %v7262, %v7304
    %v7306 = vpop.f32.mrf.mxu0
    %v7307 = vadd.f32 %v7264, %v7306
    %v7308 = vpop.f32.mrf.mxu0
    %v7309 = vadd.f32 %v7266, %v7308
    %v7310 = vpop.f32.mrf.mxu0
    %v7311 = vadd.f32 %v7268, %v7310
    %7312 = vdwg.mxu0
    %7313 = vmatprep.subr.bf16.mxu0 %v5657
    %7314 = vmatpush1.bf16.msra.mxu0 %v5656
    %7315 = vmatprep.subr.bf16.mxu0 %v5649
    %7316 = vmatpush1.bf16.msra.mxu0 %v5648
    %7317 = vmatprep.subr.bf16.mxu0 %v5641
    %7318 = vmatpush1.bf16.msra.mxu0 %v5640
    %7319 = vmatprep.subr.bf16.mxu0 %v5633
    %7320 = vmatpush1.bf16.msra.mxu0 %v5632
    %7321 = vmatprep.subr.bf16.mxu0 %v5625
    %7322 = vmatpush1.bf16.msra.mxu0 %v5624
    %7323 = vmatprep.subr.bf16.mxu0 %v5617
    %7324 = vmatpush1.bf16.msra.mxu0 %v5616
    %7325 = vmatprep.subr.bf16.mxu0 %v5609
    %7326 = vmatpush1.bf16.msra.mxu0 %v5608
    %7327 = vmatprep.subr.bf16.mxu0 %v5601
    %7328 = vmatpush1.bf16.msra.mxu0 %v5600
    %7329 = vmatprep.subr.bf16.mxu0 %v5721
    %7330 = vmatpush2.bf16.msra.mxu0 %v5720
    %7331 = vmatprep.subr.bf16.mxu0 %v5713
    %7332 = vmatpush2.bf16.msra.mxu0 %v5712
    %7333 = vmatprep.subr.bf16.mxu0 %v5705
    %7334 = vmatpush2.bf16.msra.mxu0 %v5704
    %7335 = vmatprep.subr.bf16.mxu0 %v5697
    %7336 = vmatpush2.bf16.msra.mxu0 %v5696
    %7337 = vmatprep.subr.bf16.mxu0 %v5689
    %7338 = vmatpush2.bf16.msra.mxu0 %v5688
    %7339 = vmatprep.subr.bf16.mxu0 %v5681
    %7340 = vmatpush2.bf16.msra.mxu0 %v5680
    %7341 = vmatprep.subr.bf16.mxu0 %v5673
    %7342 = vmatpush2.bf16.msra.mxu0 %v5672
    %7343 = vmatprep.subr.bf16.mxu0 %v5665
    %7344 = vmatpush2.bf16.msra.mxu0 %v5664
    %7345 = vmatprep.mubr.bf16.mxu0 %v977
    %7346 = vmatmul.mubr.bf16.gmra.mxu0 %v976
    %v7347 = vpop.f32.mrf.mxu0
    %v7348 = vadd.f32 %v7305, %v7347
    %v7349 = vpop.f32.mrf.mxu0
    %v7350 = vadd.f32 %v7307, %v7349
    %v7351 = vpop.f32.mrf.mxu0
    %v7352 = vadd.f32 %v7309, %v7351
    %v7353 = vpop.f32.mrf.mxu0
    %v7354 = vadd.f32 %v7311, %v7353
    %7355 = vdwg.mxu0
    %7356 = vmatprep.subr.bf16.mxu0 %v5275
    %7357 = vmatpush1.bf16.msra.mxu0 %v5274
    %7358 = vmatprep.subr.bf16.mxu0 %v5267
    %7359 = vmatpush1.bf16.msra.mxu0 %v5266
    %7360 = vmatprep.subr.bf16.mxu0 %v5259
    %7361 = vmatpush1.bf16.msra.mxu0 %v5258
    %7362 = vmatprep.subr.bf16.mxu0 %v5251
    %7363 = vmatpush1.bf16.msra.mxu0 %v5250
    %7364 = vmatprep.subr.bf16.mxu0 %v5243
    %7365 = vmatpush1.bf16.msra.mxu0 %v5242
    %7366 = vmatprep.subr.bf16.mxu0 %v5235
    %7367 = vmatpush1.bf16.msra.mxu0 %v5234
    %7368 = vmatprep.subr.bf16.mxu0 %v5227
    %7369 = vmatpush1.bf16.msra.mxu0 %v5226
    %7370 = vmatprep.subr.bf16.mxu0 %v5219
    %7371 = vmatpush1.bf16.msra.mxu0 %v5218
    %7372 = vmatprep.subr.bf16.mxu0 %v5339
    %7373 = vmatpush2.bf16.msra.mxu0 %v5338
    %7374 = vmatprep.subr.bf16.mxu0 %v5331
    %7375 = vmatpush2.bf16.msra.mxu0 %v5330
    %7376 = vmatprep.subr.bf16.mxu0 %v5323
    %7377 = vmatpush2.bf16.msra.mxu0 %v5322
    %7378 = vmatprep.subr.bf16.mxu0 %v5315
    %7379 = vmatpush2.bf16.msra.mxu0 %v5314
    %7380 = vmatprep.subr.bf16.mxu0 %v5307
    %7381 = vmatpush2.bf16.msra.mxu0 %v5306
    %7382 = vmatprep.subr.bf16.mxu0 %v5299
    %7383 = vmatpush2.bf16.msra.mxu0 %v5298
    %7384 = vmatprep.subr.bf16.mxu0 %v5291
    %7385 = vmatpush2.bf16.msra.mxu0 %v5290
    %7386 = vmatprep.subr.bf16.mxu0 %v5283
    %7387 = vmatpush2.bf16.msra.mxu0 %v5282
    %7388 = vmatprep.mubr.bf16.mxu0 %v971
    %7389 = vmatmul.mubr.bf16.gmra.mxu0 %v970
    %v7390 = vpop.f32.mrf.mxu0
    %v7391 = vadd.f32 %v6832, %v7390
    %v7392 = vpop.f32.mrf.mxu0
    %v7393 = vadd.f32 %v6834, %v7392
    %v7394 = vpop.f32.mrf.mxu0
    %v7395 = vadd.f32 %v6836, %v7394
    %v7396 = vpop.f32.mrf.mxu0
    %v7397 = vadd.f32 %v6838, %v7396
    %7398 = vdwg.mxu0
    %7399 = vmatprep.subr.bf16.mxu0 %v5403
    %7400 = vmatpush1.bf16.msra.mxu0 %v5402
    %7401 = vmatprep.subr.bf16.mxu0 %v5395
    %7402 = vmatpush1.bf16.msra.mxu0 %v5394
    %7403 = vmatprep.subr.bf16.mxu0 %v5387
    %7404 = vmatpush1.bf16.msra.mxu0 %v5386
    %7405 = vmatprep.subr.bf16.mxu0 %v5379
    %7406 = vmatpush1.bf16.msra.mxu0 %v5378
    %7407 = vmatprep.subr.bf16.mxu0 %v5371
    %7408 = vmatpush1.bf16.msra.mxu0 %v5370
    %7409 = vmatprep.subr.bf16.mxu0 %v5363
    %7410 = vmatpush1.bf16.msra.mxu0 %v5362
    %7411 = vmatprep.subr.bf16.mxu0 %v5355
    %7412 = vmatpush1.bf16.msra.mxu0 %v5354
    %7413 = vmatprep.subr.bf16.mxu0 %v5347
    %7414 = vmatpush1.bf16.msra.mxu0 %v5346
    %7415 = vmatprep.subr.bf16.mxu0 %v5467
    %7416 = vmatpush2.bf16.msra.mxu0 %v5466
    %7417 = vmatprep.subr.bf16.mxu0 %v5459
    %7418 = vmatpush2.bf16.msra.mxu0 %v5458
    %7419 = vmatprep.subr.bf16.mxu0 %v5451
    %7420 = vmatpush2.bf16.msra.mxu0 %v5450
    %7421 = vmatprep.subr.bf16.mxu0 %v5443
    %7422 = vmatpush2.bf16.msra.mxu0 %v5442
    %7423 = vmatprep.subr.bf16.mxu0 %v5435
    %7424 = vmatpush2.bf16.msra.mxu0 %v5434
    %7425 = vmatprep.subr.bf16.mxu0 %v5427
    %7426 = vmatpush2.bf16.msra.mxu0 %v5426
    %7427 = vmatprep.subr.bf16.mxu0 %v5419
    %7428 = vmatpush2.bf16.msra.mxu0 %v5418
    %7429 = vmatprep.subr.bf16.mxu0 %v5411
    %7430 = vmatpush2.bf16.msra.mxu0 %v5410
    %7431 = vmatprep.mubr.bf16.mxu0 %v973
    %7432 = vmatmul.mubr.bf16.gmra.mxu0 %v972
    %v7433 = vpop.f32.mrf.mxu0
    %v7434 = vadd.f32 %v7391, %v7433
    %v7435 = vpop.f32.mrf.mxu0
    %v7436 = vadd.f32 %v7393, %v7435
    %v7437 = vpop.f32.mrf.mxu0
    %v7438 = vadd.f32 %v7395, %v7437
    %v7439 = vpop.f32.mrf.mxu0
    %v7440 = vadd.f32 %v7397, %v7439
    %7441 = vdwg.mxu0
    %7442 = vmatprep.subr.bf16.mxu0 %v5531
    %7443 = vmatpush1.bf16.msra.mxu0 %v5530
    %7444 = vmatprep.subr.bf16.mxu0 %v5523
    %7445 = vmatpush1.bf16.msra.mxu0 %v5522
    %7446 = vmatprep.subr.bf16.mxu0 %v5515
    %7447 = vmatpush1.bf16.msra.mxu0 %v5514
    %7448 = vmatprep.subr.bf16.mxu0 %v5507
    %7449 = vmatpush1.bf16.msra.mxu0 %v5506
    %7450 = vmatprep.subr.bf16.mxu0 %v5499
    %7451 = vmatpush1.bf16.msra.mxu0 %v5498
    %7452 = vmatprep.subr.bf16.mxu0 %v5491
    %7453 = vmatpush1.bf16.msra.mxu0 %v5490
    %7454 = vmatprep.subr.bf16.mxu0 %v5483
    %7455 = vmatpush1.bf16.msra.mxu0 %v5482
    %7456 = vmatprep.subr.bf16.mxu0 %v5475
    %7457 = vmatpush1.bf16.msra.mxu0 %v5474
    %7458 = vmatprep.subr.bf16.mxu0 %v5595
    %7459 = vmatpush2.bf16.msra.mxu0 %v5594
    %7460 = vmatprep.subr.bf16.mxu0 %v5587
    %7461 = vmatpush2.bf16.msra.mxu0 %v5586
    %7462 = vmatprep.subr.bf16.mxu0 %v5579
    %7463 = vmatpush2.bf16.msra.mxu0 %v5578
    %7464 = vmatprep.subr.bf16.mxu0 %v5571
    %7465 = vmatpush2.bf16.msra.mxu0 %v5570
    %7466 = vmatprep.subr.bf16.mxu0 %v5563
    %7467 = vmatpush2.bf16.msra.mxu0 %v5562
    %7468 = vmatprep.subr.bf16.mxu0 %v5555
    %7469 = vmatpush2.bf16.msra.mxu0 %v5554
    %7470 = vmatprep.subr.bf16.mxu0 %v5547
    %7471 = vmatpush2.bf16.msra.mxu0 %v5546
    %7472 = vmatprep.subr.bf16.mxu0 %v5539
    %7473 = vmatpush2.bf16.msra.mxu0 %v5538
    %7474 = vmatprep.mubr.bf16.mxu0 %v975
    %7475 = vmatmul.mubr.bf16.gmra.mxu0 %v974
    %v7476 = vpop.f32.mrf.mxu0
    %v7477 = vadd.f32 %v7434, %v7476
    %v7478 = vpop.f32.mrf.mxu0
    %v7479 = vadd.f32 %v7436, %v7478
    %v7480 = vpop.f32.mrf.mxu0
    %v7481 = vadd.f32 %v7438, %v7480
    %v7482 = vpop.f32.mrf.mxu0
    %v7483 = vadd.f32 %v7440, %v7482
    %7484 = vdwg.mxu0
    %7485 = vmatprep.subr.bf16.mxu0 %v5659
    %7486 = vmatpush1.bf16.msra.mxu0 %v5658
    %7487 = vmatprep.subr.bf16.mxu0 %v5651
    %7488 = vmatpush1.bf16.msra.mxu0 %v5650
    %7489 = vmatprep.subr.bf16.mxu0 %v5643
    %7490 = vmatpush1.bf16.msra.mxu0 %v5642
    %7491 = vmatprep.subr.bf16.mxu0 %v5635
    %7492 = vmatpush1.bf16.msra.mxu0 %v5634
    %7493 = vmatprep.subr.bf16.mxu0 %v5627
    %7494 = vmatpush1.bf16.msra.mxu0 %v5626
    %7495 = vmatprep.subr.bf16.mxu0 %v5619
    %7496 = vmatpush1.bf16.msra.mxu0 %v5618
    %7497 = vmatprep.subr.bf16.mxu0 %v5611
    %7498 = vmatpush1.bf16.msra.mxu0 %v5610
    %7499 = vmatprep.subr.bf16.mxu0 %v5603
    %7500 = vmatpush1.bf16.msra.mxu0 %v5602
    %7501 = vmatprep.subr.bf16.mxu0 %v5723
    %7502 = vmatpush2.bf16.msra.mxu0 %v5722
    %7503 = vmatprep.subr.bf16.mxu0 %v5715
    %7504 = vmatpush2.bf16.msra.mxu0 %v5714
    %7505 = vmatprep.subr.bf16.mxu0 %v5707
    %7506 = vmatpush2.bf16.msra.mxu0 %v5706
    %7507 = vmatprep.subr.bf16.mxu0 %v5699
    %7508 = vmatpush2.bf16.msra.mxu0 %v5698
    %7509 = vmatprep.subr.bf16.mxu0 %v5691
    %7510 = vmatpush2.bf16.msra.mxu0 %v5690
    %7511 = vmatprep.subr.bf16.mxu0 %v5683
    %7512 = vmatpush2.bf16.msra.mxu0 %v5682
    %7513 = vmatprep.subr.bf16.mxu0 %v5675
    %7514 = vmatpush2.bf16.msra.mxu0 %v5674
    %7515 = vmatprep.subr.bf16.mxu0 %v5667
    %7516 = vmatpush2.bf16.msra.mxu0 %v5666
    %7517 = vmatprep.mubr.bf16.mxu0 %v977
    %7518 = vmatmul.mubr.bf16.gmra.mxu0 %v976
    %v7519 = vpop.f32.mrf.mxu0
    %v7520 = vadd.f32 %v7477, %v7519
    %v7521 = vpop.f32.mrf.mxu0
    %v7522 = vadd.f32 %v7479, %v7521
    %v7523 = vpop.f32.mrf.mxu0
    %v7524 = vadd.f32 %v7481, %v7523
    %v7525 = vpop.f32.mrf.mxu0
    %v7526 = vadd.f32 %v7483, %v7525
    %7527 = vdwg.mxu0
    %7528 = vmatprep.subr.bf16.mxu0 %v5277
    %7529 = vmatpush1.bf16.msra.mxu0 %v5276
    %7530 = vmatprep.subr.bf16.mxu0 %v5269
    %7531 = vmatpush1.bf16.msra.mxu0 %v5268
    %7532 = vmatprep.subr.bf16.mxu0 %v5261
    %7533 = vmatpush1.bf16.msra.mxu0 %v5260
    %7534 = vmatprep.subr.bf16.mxu0 %v5253
    %7535 = vmatpush1.bf16.msra.mxu0 %v5252
    %7536 = vmatprep.subr.bf16.mxu0 %v5245
    %7537 = vmatpush1.bf16.msra.mxu0 %v5244
    %7538 = vmatprep.subr.bf16.mxu0 %v5237
    %7539 = vmatpush1.bf16.msra.mxu0 %v5236
    %7540 = vmatprep.subr.bf16.mxu0 %v5229
    %7541 = vmatpush1.bf16.msra.mxu0 %v5228
    %7542 = vmatprep.subr.bf16.mxu0 %v5221
    %7543 = vmatpush1.bf16.msra.mxu0 %v5220
    %7544 = vmatprep.subr.bf16.mxu0 %v5341
    %7545 = vmatpush2.bf16.msra.mxu0 %v5340
    %7546 = vmatprep.subr.bf16.mxu0 %v5333
    %7547 = vmatpush2.bf16.msra.mxu0 %v5332
    %7548 = vmatprep.subr.bf16.mxu0 %v5325
    %7549 = vmatpush2.bf16.msra.mxu0 %v5324
    %7550 = vmatprep.subr.bf16.mxu0 %v5317
    %7551 = vmatpush2.bf16.msra.mxu0 %v5316
    %7552 = vmatprep.subr.bf16.mxu0 %v5309
    %7553 = vmatpush2.bf16.msra.mxu0 %v5308
    %7554 = vmatprep.subr.bf16.mxu0 %v5301
    %7555 = vmatpush2.bf16.msra.mxu0 %v5300
    %7556 = vmatprep.subr.bf16.mxu0 %v5293
    %7557 = vmatpush2.bf16.msra.mxu0 %v5292
    %7558 = vmatprep.subr.bf16.mxu0 %v5285
    %7559 = vmatpush2.bf16.msra.mxu0 %v5284
    %7560 = vmatprep.mubr.bf16.mxu0 %v971
    %7561 = vmatmul.mubr.bf16.gmra.mxu0 %v970
    %v7562 = vpop.f32.mrf.mxu0
    %v7563 = vadd.f32 %v7004, %v7562
    %v7564 = vpop.f32.mrf.mxu0
    %v7565 = vadd.f32 %v7006, %v7564
    %v7566 = vpop.f32.mrf.mxu0
    %v7567 = vadd.f32 %v7008, %v7566
    %v7568 = vpop.f32.mrf.mxu0
    %v7569 = vadd.f32 %v7010, %v7568
    %7570 = vdwg.mxu0
    %7571 = vmatprep.subr.bf16.mxu0 %v5405
    %7572 = vmatpush1.bf16.msra.mxu0 %v5404
    %7573 = vmatprep.subr.bf16.mxu0 %v5397
    %7574 = vmatpush1.bf16.msra.mxu0 %v5396
    %7575 = vmatprep.subr.bf16.mxu0 %v5389
    %7576 = vmatpush1.bf16.msra.mxu0 %v5388
    %7577 = vmatprep.subr.bf16.mxu0 %v5381
    %7578 = vmatpush1.bf16.msra.mxu0 %v5380
    %7579 = vmatprep.subr.bf16.mxu0 %v5373
    %7580 = vmatpush1.bf16.msra.mxu0 %v5372
    %7581 = vmatprep.subr.bf16.mxu0 %v5365
    %7582 = vmatpush1.bf16.msra.mxu0 %v5364
    %7583 = vmatprep.subr.bf16.mxu0 %v5357
    %7584 = vmatpush1.bf16.msra.mxu0 %v5356
    %7585 = vmatprep.subr.bf16.mxu0 %v5349
    %7586 = vmatpush1.bf16.msra.mxu0 %v5348
    %7587 = vmatprep.subr.bf16.mxu0 %v5469
    %7588 = vmatpush2.bf16.msra.mxu0 %v5468
    %7589 = vmatprep.subr.bf16.mxu0 %v5461
    %7590 = vmatpush2.bf16.msra.mxu0 %v5460
    %7591 = vmatprep.subr.bf16.mxu0 %v5453
    %7592 = vmatpush2.bf16.msra.mxu0 %v5452
    %7593 = vmatprep.subr.bf16.mxu0 %v5445
    %7594 = vmatpush2.bf16.msra.mxu0 %v5444
    %7595 = vmatprep.subr.bf16.mxu0 %v5437
    %7596 = vmatpush2.bf16.msra.mxu0 %v5436
    %7597 = vmatprep.subr.bf16.mxu0 %v5429
    %7598 = vmatpush2.bf16.msra.mxu0 %v5428
    %7599 = vmatprep.subr.bf16.mxu0 %v5421
    %7600 = vmatpush2.bf16.msra.mxu0 %v5420
    %7601 = vmatprep.subr.bf16.mxu0 %v5413
    %7602 = vmatpush2.bf16.msra.mxu0 %v5412
    %7603 = vmatprep.mubr.bf16.mxu0 %v973
    %7604 = vmatmul.mubr.bf16.gmra.mxu0 %v972
    %v7605 = vpop.f32.mrf.mxu0
    %v7606 = vadd.f32 %v7563, %v7605
    %v7607 = vpop.f32.mrf.mxu0
    %v7608 = vadd.f32 %v7565, %v7607
    %v7609 = vpop.f32.mrf.mxu0
    %v7610 = vadd.f32 %v7567, %v7609
    %v7611 = vpop.f32.mrf.mxu0
    %v7612 = vadd.f32 %v7569, %v7611
    %7613 = vdwg.mxu0
    %7614 = vmatprep.subr.bf16.mxu0 %v5533
    %7615 = vmatpush1.bf16.msra.mxu0 %v5532
    %7616 = vmatprep.subr.bf16.mxu0 %v5525
    %7617 = vmatpush1.bf16.msra.mxu0 %v5524
    %7618 = vmatprep.subr.bf16.mxu0 %v5517
    %7619 = vmatpush1.bf16.msra.mxu0 %v5516
    %7620 = vmatprep.subr.bf16.mxu0 %v5509
    %7621 = vmatpush1.bf16.msra.mxu0 %v5508
    %7622 = vmatprep.subr.bf16.mxu0 %v5501
    %7623 = vmatpush1.bf16.msra.mxu0 %v5500
    %7624 = vmatprep.subr.bf16.mxu0 %v5493
    %7625 = vmatpush1.bf16.msra.mxu0 %v5492
    %7626 = vmatprep.subr.bf16.mxu0 %v5485
    %7627 = vmatpush1.bf16.msra.mxu0 %v5484
    %7628 = vmatprep.subr.bf16.mxu0 %v5477
    %7629 = vmatpush1.bf16.msra.mxu0 %v5476
    %7630 = vmatprep.subr.bf16.mxu0 %v5597
    %7631 = vmatpush2.bf16.msra.mxu0 %v5596
    %7632 = vmatprep.subr.bf16.mxu0 %v5589
    %7633 = vmatpush2.bf16.msra.mxu0 %v5588
    %7634 = vmatprep.subr.bf16.mxu0 %v5581
    %7635 = vmatpush2.bf16.msra.mxu0 %v5580
    %7636 = vmatprep.subr.bf16.mxu0 %v5573
    %7637 = vmatpush2.bf16.msra.mxu0 %v5572
    %7638 = vmatprep.subr.bf16.mxu0 %v5565
    %7639 = vmatpush2.bf16.msra.mxu0 %v5564
    %7640 = vmatprep.subr.bf16.mxu0 %v5557
    %7641 = vmatpush2.bf16.msra.mxu0 %v5556
    %7642 = vmatprep.subr.bf16.mxu0 %v5549
    %7643 = vmatpush2.bf16.msra.mxu0 %v5548
    %7644 = vmatprep.subr.bf16.mxu0 %v5541
    %7645 = vmatpush2.bf16.msra.mxu0 %v5540
    %7646 = vmatprep.mubr.bf16.mxu0 %v975
    %7647 = vmatmul.mubr.bf16.gmra.mxu0 %v974
    %v7648 = vpop.f32.mrf.mxu0
    %v7649 = vadd.f32 %v7606, %v7648
    %v7650 = vpop.f32.mrf.mxu0
    %v7651 = vadd.f32 %v7608, %v7650
    %v7652 = vpop.f32.mrf.mxu0
    %v7653 = vadd.f32 %v7610, %v7652
    %v7654 = vpop.f32.mrf.mxu0
    %v7655 = vadd.f32 %v7612, %v7654
    %7656 = vdwg.mxu0
    %7657 = vmatprep.subr.bf16.mxu0 %v5661
    %7658 = vmatpush1.bf16.msra.mxu0 %v5660
    %7659 = vmatprep.subr.bf16.mxu0 %v5653
    %7660 = vmatpush1.bf16.msra.mxu0 %v5652
    %7661 = vmatprep.subr.bf16.mxu0 %v5645
    %7662 = vmatpush1.bf16.msra.mxu0 %v5644
    %7663 = vmatprep.subr.bf16.mxu0 %v5637
    %7664 = vmatpush1.bf16.msra.mxu0 %v5636
    %7665 = vmatprep.subr.bf16.mxu0 %v5629
    %7666 = vmatpush1.bf16.msra.mxu0 %v5628
    %7667 = vmatprep.subr.bf16.mxu0 %v5621
    %7668 = vmatpush1.bf16.msra.mxu0 %v5620
    %7669 = vmatprep.subr.bf16.mxu0 %v5613
    %7670 = vmatpush1.bf16.msra.mxu0 %v5612
    %7671 = vmatprep.subr.bf16.mxu0 %v5605
    %7672 = vmatpush1.bf16.msra.mxu0 %v5604
    %7673 = vmatprep.subr.bf16.mxu0 %v5725
    %7674 = vmatpush2.bf16.msra.mxu0 %v5724
    %7675 = vmatprep.subr.bf16.mxu0 %v5717
    %7676 = vmatpush2.bf16.msra.mxu0 %v5716
    %7677 = vmatprep.subr.bf16.mxu0 %v5709
    %7678 = vmatpush2.bf16.msra.mxu0 %v5708
    %7679 = vmatprep.subr.bf16.mxu0 %v5701
    %7680 = vmatpush2.bf16.msra.mxu0 %v5700
    %7681 = vmatprep.subr.bf16.mxu0 %v5693
    %7682 = vmatpush2.bf16.msra.mxu0 %v5692
    %7683 = vmatprep.subr.bf16.mxu0 %v5685
    %7684 = vmatpush2.bf16.msra.mxu0 %v5684
    %7685 = vmatprep.subr.bf16.mxu0 %v5677
    %7686 = vmatpush2.bf16.msra.mxu0 %v5676
    %7687 = vmatprep.subr.bf16.mxu0 %v5669
    %7688 = vmatpush2.bf16.msra.mxu0 %v5668
    %7689 = vmatprep.mubr.bf16.mxu0 %v977
    %7690 = vmatmul.mubr.bf16.gmra.mxu0 %v976
    %v7691 = vpop.f32.mrf.mxu0
    %v7692 = vadd.f32 %v7649, %v7691
    %v7693 = vpop.f32.mrf.mxu0
    %v7694 = vadd.f32 %v7651, %v7693
    %v7695 = vpop.f32.mrf.mxu0
    %v7696 = vadd.f32 %v7653, %v7695
    %v7697 = vpop.f32.mrf.mxu0
    %v7698 = vadd.f32 %v7655, %v7697
    %7699 = vdwg.mxu0
    %7700 = vmatprep.subr.bf16.mxu0 %v5279
    %7701 = vmatpush1.bf16.msra.mxu0 %v5278
    %7702 = vmatprep.subr.bf16.mxu0 %v5271
    %7703 = vmatpush1.bf16.msra.mxu0 %v5270
    %7704 = vmatprep.subr.bf16.mxu0 %v5263
    %7705 = vmatpush1.bf16.msra.mxu0 %v5262
    %7706 = vmatprep.subr.bf16.mxu0 %v5255
    %7707 = vmatpush1.bf16.msra.mxu0 %v5254
    %7708 = vmatprep.subr.bf16.mxu0 %v5247
    %7709 = vmatpush1.bf16.msra.mxu0 %v5246
    %7710 = vmatprep.subr.bf16.mxu0 %v5239
    %7711 = vmatpush1.bf16.msra.mxu0 %v5238
    %7712 = vmatprep.subr.bf16.mxu0 %v5231
    %7713 = vmatpush1.bf16.msra.mxu0 %v5230
    %7714 = vmatprep.subr.bf16.mxu0 %v5223
    %7715 = vmatpush1.bf16.msra.mxu0 %v5222
    %7716 = vmatprep.subr.bf16.mxu0 %v5343
    %7717 = vmatpush2.bf16.msra.mxu0 %v5342
    %7718 = vmatprep.subr.bf16.mxu0 %v5335
    %7719 = vmatpush2.bf16.msra.mxu0 %v5334
    %7720 = vmatprep.subr.bf16.mxu0 %v5327
    %7721 = vmatpush2.bf16.msra.mxu0 %v5326
    %7722 = vmatprep.subr.bf16.mxu0 %v5319
    %7723 = vmatpush2.bf16.msra.mxu0 %v5318
    %7724 = vmatprep.subr.bf16.mxu0 %v5311
    %7725 = vmatpush2.bf16.msra.mxu0 %v5310
    %7726 = vmatprep.subr.bf16.mxu0 %v5303
    %7727 = vmatpush2.bf16.msra.mxu0 %v5302
    %7728 = vmatprep.subr.bf16.mxu0 %v5295
    %7729 = vmatpush2.bf16.msra.mxu0 %v5294
    %7730 = vmatprep.subr.bf16.mxu0 %v5287
    %7731 = vmatpush2.bf16.msra.mxu0 %v5286
    %7732 = vmatprep.mubr.bf16.mxu0 %v971
    %7733 = vmatmul.mubr.bf16.gmra.mxu0 %v970
    %v7734 = vpop.f32.mrf.mxu0
    %v7735 = vadd.f32 %v7176, %v7734
    %v7736 = vpop.f32.mrf.mxu0
    %v7737 = vadd.f32 %v7178, %v7736
    %v7738 = vpop.f32.mrf.mxu0
    %v7739 = vadd.f32 %v7180, %v7738
    %v7740 = vpop.f32.mrf.mxu0
    %v7741 = vadd.f32 %v7182, %v7740
    %7742 = vdwg.mxu0
    %7743 = vmatprep.subr.bf16.mxu0 %v5407
    %7744 = vmatpush1.bf16.msra.mxu0 %v5406
    %7745 = vmatprep.subr.bf16.mxu0 %v5399
    %7746 = vmatpush1.bf16.msra.mxu0 %v5398
    %7747 = vmatprep.subr.bf16.mxu0 %v5391
    %7748 = vmatpush1.bf16.msra.mxu0 %v5390
    %7749 = vmatprep.subr.bf16.mxu0 %v5383
    %7750 = vmatpush1.bf16.msra.mxu0 %v5382
    %7751 = vmatprep.subr.bf16.mxu0 %v5375
    %7752 = vmatpush1.bf16.msra.mxu0 %v5374
    %7753 = vmatprep.subr.bf16.mxu0 %v5367
    %7754 = vmatpush1.bf16.msra.mxu0 %v5366
    %7755 = vmatprep.subr.bf16.mxu0 %v5359
    %7756 = vmatpush1.bf16.msra.mxu0 %v5358
    %7757 = vmatprep.subr.bf16.mxu0 %v5351
    %7758 = vmatpush1.bf16.msra.mxu0 %v5350
    %7759 = vmatprep.subr.bf16.mxu0 %v5471
    %7760 = vmatpush2.bf16.msra.mxu0 %v5470
    %7761 = vmatprep.subr.bf16.mxu0 %v5463
    %7762 = vmatpush2.bf16.msra.mxu0 %v5462
    %7763 = vmatprep.subr.bf16.mxu0 %v5455
    %7764 = vmatpush2.bf16.msra.mxu0 %v5454
    %7765 = vmatprep.subr.bf16.mxu0 %v5447
    %7766 = vmatpush2.bf16.msra.mxu0 %v5446
    %7767 = vmatprep.subr.bf16.mxu0 %v5439
    %7768 = vmatpush2.bf16.msra.mxu0 %v5438
    %7769 = vmatprep.subr.bf16.mxu0 %v5431
    %7770 = vmatpush2.bf16.msra.mxu0 %v5430
    %7771 = vmatprep.subr.bf16.mxu0 %v5423
    %7772 = vmatpush2.bf16.msra.mxu0 %v5422
    %7773 = vmatprep.subr.bf16.mxu0 %v5415
    %7774 = vmatpush2.bf16.msra.mxu0 %v5414
    %7775 = vmatprep.mubr.bf16.mxu0 %v973
    %7776 = vmatmul.mubr.bf16.gmra.mxu0 %v972
    %v7777 = vpop.f32.mrf.mxu0
    %v7778 = vadd.f32 %v7735, %v7777
    %v7779 = vpop.f32.mrf.mxu0
    %v7780 = vadd.f32 %v7737, %v7779
    %v7781 = vpop.f32.mrf.mxu0
    %v7782 = vadd.f32 %v7739, %v7781
    %v7783 = vpop.f32.mrf.mxu0
    %v7784 = vadd.f32 %v7741, %v7783
    %7785 = vdwg.mxu0
    %7786 = vmatprep.subr.bf16.mxu0 %v5535
    %7787 = vmatpush1.bf16.msra.mxu0 %v5534
    %7788 = vmatprep.subr.bf16.mxu0 %v5527
    %7789 = vmatpush1.bf16.msra.mxu0 %v5526
    %7790 = vmatprep.subr.bf16.mxu0 %v5519
    %7791 = vmatpush1.bf16.msra.mxu0 %v5518
    %7792 = vmatprep.subr.bf16.mxu0 %v5511
    %7793 = vmatpush1.bf16.msra.mxu0 %v5510
    %7794 = vmatprep.subr.bf16.mxu0 %v5503
    %7795 = vmatpush1.bf16.msra.mxu0 %v5502
    %7796 = vmatprep.subr.bf16.mxu0 %v5495
    %7797 = vmatpush1.bf16.msra.mxu0 %v5494
    %7798 = vmatprep.subr.bf16.mxu0 %v5487
    %7799 = vmatpush1.bf16.msra.mxu0 %v5486
    %7800 = vmatprep.subr.bf16.mxu0 %v5479
    %7801 = vmatpush1.bf16.msra.mxu0 %v5478
    %7802 = vmatprep.subr.bf16.mxu0 %v5599
    %7803 = vmatpush2.bf16.msra.mxu0 %v5598
    %7804 = vmatprep.subr.bf16.mxu0 %v5591
    %7805 = vmatpush2.bf16.msra.mxu0 %v5590
    %7806 = vmatprep.subr.bf16.mxu0 %v5583
    %7807 = vmatpush2.bf16.msra.mxu0 %v5582
    %7808 = vmatprep.subr.bf16.mxu0 %v5575
    %7809 = vmatpush2.bf16.msra.mxu0 %v5574
    %7810 = vmatprep.subr.bf16.mxu0 %v5567
    %7811 = vmatpush2.bf16.msra.mxu0 %v5566
    %7812 = vmatprep.subr.bf16.mxu0 %v5559
    %7813 = vmatpush2.bf16.msra.mxu0 %v5558
    %7814 = vmatprep.subr.bf16.mxu0 %v5551
    %7815 = vmatpush2.bf16.msra.mxu0 %v5550
    %7816 = vmatprep.subr.bf16.mxu0 %v5543
    %7817 = vmatpush2.bf16.msra.mxu0 %v5542
    %7818 = vmatprep.mubr.bf16.mxu0 %v975
    %7819 = vmatmul.mubr.bf16.gmra.mxu0 %v974
    %v7820 = vpop.f32.mrf.mxu0
    %v7821 = vadd.f32 %v7778, %v7820
    %v7822 = vpop.f32.mrf.mxu0
    %v7823 = vadd.f32 %v7780, %v7822
    %v7824 = vpop.f32.mrf.mxu0
    %v7825 = vadd.f32 %v7782, %v7824
    %v7826 = vpop.f32.mrf.mxu0
    %v7827 = vadd.f32 %v7784, %v7826
    %7828 = vdwg.mxu0
    %7829 = vmatprep.subr.bf16.mxu0 %v5663
    %7830 = vmatpush1.bf16.msra.mxu0 %v5662
    %7831 = vmatprep.subr.bf16.mxu0 %v5655
    %7832 = vmatpush1.bf16.msra.mxu0 %v5654
    %7833 = vmatprep.subr.bf16.mxu0 %v5647
    %7834 = vmatpush1.bf16.msra.mxu0 %v5646
    %7835 = vmatprep.subr.bf16.mxu0 %v5639
    %7836 = vmatpush1.bf16.msra.mxu0 %v5638
    %7837 = vmatprep.subr.bf16.mxu0 %v5631
    %7838 = vmatpush1.bf16.msra.mxu0 %v5630
    %7839 = vmatprep.subr.bf16.mxu0 %v5623
    %7840 = vmatpush1.bf16.msra.mxu0 %v5622
    %7841 = vmatprep.subr.bf16.mxu0 %v5615
    %7842 = vmatpush1.bf16.msra.mxu0 %v5614
    %7843 = vmatprep.subr.bf16.mxu0 %v5607
    %7844 = vmatpush1.bf16.msra.mxu0 %v5606
    %7845 = vmatprep.subr.bf16.mxu0 %v5727
    %7846 = vmatpush2.bf16.msra.mxu0 %v5726
    %7847 = vmatprep.subr.bf16.mxu0 %v5719
    %7848 = vmatpush2.bf16.msra.mxu0 %v5718
    %7849 = vmatprep.subr.bf16.mxu0 %v5711
    %7850 = vmatpush2.bf16.msra.mxu0 %v5710
    %7851 = vmatprep.subr.bf16.mxu0 %v5703
    %7852 = vmatpush2.bf16.msra.mxu0 %v5702
    %7853 = vmatprep.subr.bf16.mxu0 %v5695
    %7854 = vmatpush2.bf16.msra.mxu0 %v5694
    %7855 = vmatprep.subr.bf16.mxu0 %v5687
    %7856 = vmatpush2.bf16.msra.mxu0 %v5686
    %7857 = vmatprep.subr.bf16.mxu0 %v5679
    %7858 = vmatpush2.bf16.msra.mxu0 %v5678
    %7859 = vmatprep.subr.bf16.mxu0 %v5671
    %7860 = vmatpush2.bf16.msra.mxu0 %v5670
    %7861 = vmatprep.mubr.bf16.mxu0 %v977
    %7862 = vmatmul.mubr.bf16.gmra.mxu0 %v976
    %v7863 = vpop.f32.mrf.mxu0
    %v7864 = vadd.f32 %v7821, %v7863
    %v7865 = vpop.f32.mrf.mxu0
    %v7866 = vadd.f32 %v7823, %v7865
    %v7867 = vpop.f32.mrf.mxu0
    %v7868 = vadd.f32 %v7825, %v7867
    %v7869 = vpop.f32.mrf.mxu0
    %v7870 = vadd.f32 %v7827, %v7869
    %7871 = vdwg.mxu0
    %v7872 = vld [vmem:[#allocation43] sm:$0xff]
    %v7874 = vlaneseq
    %v7875 = vshrl.u32 %v7874, 7
    %v7876 = vsub.s32 0, %v7875
    %v7877 = vrot.slane %v7872, %v7876
    %v7878 = vlaneseq
    %v7879 = vshrl.u32 %v7878, 7
    %v7880 = vsub.s32 1, %v7879
    %v7881 = vrot.slane %v7872, %v7880
    %v7882 = vlaneseq
    %v7883 = vshrl.u32 %v7882, 7
    %v7884 = vsub.s32 2, %v7883
    %v7885 = vrot.slane %v7872, %v7884
    %v7886 = vlaneseq
    %v7887 = vshrl.u32 %v7886, 7
    %v7888 = vsub.s32 3, %v7887
    %v7889 = vrot.slane %v7872, %v7888
    %v7890 = vlaneseq
    %v7891 = vshrl.u32 %v7890, 7
    %v7892 = vsub.s32 4, %v7891
    %v7893 = vrot.slane %v7872, %v7892
    %v7894 = vlaneseq
    %v7895 = vshrl.u32 %v7894, 7
    %v7896 = vsub.s32 5, %v7895
    %v7897 = vrot.slane %v7872, %v7896
    %v7898 = vlaneseq
    %v7899 = vshrl.u32 %v7898, 7
    %v7900 = vsub.s32 6, %v7899
    %v7901 = vrot.slane %v7872, %v7900
    %v7902 = vlaneseq
    %v7903 = vshrl.u32 %v7902, 7
    %v7904 = vsub.s32 7, %v7903
    %v7905 = vrot.slane %v7872, %v7904
    %v7914 = vmul.f32 %v7348, %v7877
    %v7915 = vmul.f32 %v7350, %v7881
    %v7916 = vmul.f32 %v7520, %v7885
    %v7917 = vmul.f32 %v7522, %v7889
    %v7918 = vmul.f32 %v7692, %v7893
    %v7919 = vmul.f32 %v7694, %v7897
    %v7920 = vmul.f32 %v7864, %v7901
    %v7921 = vmul.f32 %v7866, %v7905
    %v7922 = vmul.f32 %v7352, %v7877
    %v7923 = vmul.f32 %v7354, %v7881
    %v7924 = vmul.f32 %v7524, %v7885
    %v7925 = vmul.f32 %v7526, %v7889
    %v7926 = vmul.f32 %v7696, %v7893
    %v7927 = vmul.f32 %v7698, %v7897
    %v7928 = vmul.f32 %v7868, %v7901
    %v7929 = vmul.f32 %v7870, %v7905
    %v7930 = vld [vmem:[#allocation45] sm:$0xff]
    %v7932 = vlaneseq
    %v7933 = vshrl.u32 %v7932, 7
    %v7934 = vsub.s32 0, %v7933
    %v7935 = vrot.slane %v7930, %v7934
    %v7936 = vlaneseq
    %v7937 = vshrl.u32 %v7936, 7
    %v7938 = vsub.s32 1, %v7937
    %v7939 = vrot.slane %v7930, %v7938
    %v7940 = vlaneseq
    %v7941 = vshrl.u32 %v7940, 7
    %v7942 = vsub.s32 2, %v7941
    %v7943 = vrot.slane %v7930, %v7942
    %v7944 = vlaneseq
    %v7945 = vshrl.u32 %v7944, 7
    %v7946 = vsub.s32 3, %v7945
    %v7947 = vrot.slane %v7930, %v7946
    %v7948 = vlaneseq
    %v7949 = vshrl.u32 %v7948, 7
    %v7950 = vsub.s32 4, %v7949
    %v7951 = vrot.slane %v7930, %v7950
    %v7952 = vlaneseq
    %v7953 = vshrl.u32 %v7952, 7
    %v7954 = vsub.s32 5, %v7953
    %v7955 = vrot.slane %v7930, %v7954
    %v7956 = vlaneseq
    %v7957 = vshrl.u32 %v7956, 7
    %v7958 = vsub.s32 6, %v7957
    %v7959 = vrot.slane %v7930, %v7958
    %v7960 = vlaneseq
    %v7961 = vshrl.u32 %v7960, 7
    %v7962 = vsub.s32 7, %v7961
    %v7963 = vrot.slane %v7930, %v7962
    %v7972 = vadd.f32 %v7914, %v7935
    %v7973 = vadd.f32 %v7915, %v7939
    %v7974 = vadd.f32 %v7916, %v7943
    %v7975 = vadd.f32 %v7917, %v7947
    %v7976 = vadd.f32 %v7918, %v7951
    %v7977 = vadd.f32 %v7919, %v7955
    %v7978 = vadd.f32 %v7920, %v7959
    %v7979 = vadd.f32 %v7921, %v7963
    %v7980 = vadd.f32 %v7922, %v7935
    %v7981 = vadd.f32 %v7923, %v7939
    %v7982 = vadd.f32 %v7924, %v7943
    %v7983 = vadd.f32 %v7925, %v7947
    %v7984 = vadd.f32 %v7926, %v7951
    %v7985 = vadd.f32 %v7927, %v7955
    %v7986 = vadd.f32 %v7928, %v7959
    %v7987 = vadd.f32 %v7929, %v7963
    %v7988 = vmax.f32 %v7972, 0.0
    %v7989 = vmax.f32 %v7973, 0.0
    %v7990 = vmax.f32 %v7974, 0.0
    %v7991 = vmax.f32 %v7975, 0.0
    %v7992 = vmax.f32 %v7976, 0.0
    %v7993 = vmax.f32 %v7977, 0.0
    %v7994 = vmax.f32 %v7978, 0.0
    %v7995 = vmax.f32 %v7979, 0.0
    %v7996 = vmax.f32 %v7980, 0.0
    %v7997 = vmax.f32 %v7981, 0.0
    %v7998 = vmax.f32 %v7982, 0.0
    %v7999 = vmax.f32 %v7983, 0.0
    %v8000 = vmax.f32 %v7984, 0.0
    %v8001 = vmax.f32 %v7985, 0.0
    %v8002 = vmax.f32 %v7986, 0.0
    %v8003 = vmax.f32 %v7987, 0.0
    %v8004 = vpack.c.bf16 %v7996, %v7988
    %v8005 = vpack.c.bf16 %v7997, %v7989
    %v8006 = vpack.c.bf16 %v7998, %v7990
    %v8007 = vpack.c.bf16 %v7999, %v7991
    %v8008 = vpack.c.bf16 %v8000, %v7992
    %v8009 = vpack.c.bf16 %v8001, %v7993
    %v8010 = vpack.c.bf16 %v8002, %v7994
    %v8011 = vpack.c.bf16 %v8003, %v7995
    %v8012 = vld [vmem:[#allocation46] sm:$0xff]
    %v8013 = vld [vmem:[#allocation46 + $0x8] sm:$0xff]
    %v8014 = vld [vmem:[#allocation46 + $0x10] sm:$0xff]
    %v8015 = vld [vmem:[#allocation46 + $0x18] sm:$0xff]
    %v8016 = vld [vmem:[#allocation46 + $0x20] sm:$0xff]
    %v8017 = vld [vmem:[#allocation46 + $0x28] sm:$0xff]
    %v8018 = vld [vmem:[#allocation46 + $0x30] sm:$0xff]
    %v8019 = vld [vmem:[#allocation46 + $0x38] sm:$0xff]
    %v8020 = vld [vmem:[#allocation46 + $0x40] sm:$0xff]
    %v8021 = vld [vmem:[#allocation46 + $0x48] sm:$0xff]
    %v8022 = vld [vmem:[#allocation46 + $0x50] sm:$0xff]
    %v8023 = vld [vmem:[#allocation46 + $0x58] sm:$0xff]
    %v8024 = vld [vmem:[#allocation46 + $0x60] sm:$0xff]
    %v8025 = vld [vmem:[#allocation46 + $0x68] sm:$0xff]
    %v8026 = vld [vmem:[#allocation46 + $0x70] sm:$0xff]
    %v8027 = vld [vmem:[#allocation46 + $0x78] sm:$0xff]
    %v8028 = vld [vmem:[#allocation46 + $0x80] sm:$0xff]
    %v8029 = vld [vmem:[#allocation46 + $0x88] sm:$0xff]
    %v8030 = vld [vmem:[#allocation46 + $0x90] sm:$0xff]
    %v8031 = vld [vmem:[#allocation46 + $0x98] sm:$0xff]
    %v8032 = vld [vmem:[#allocation46 + $0xa0] sm:$0xff]
    %v8033 = vld [vmem:[#allocation46 + $0xa8] sm:$0xff]
    %v8034 = vld [vmem:[#allocation46 + $0xb0] sm:$0xff]
    %v8035 = vld [vmem:[#allocation46 + $0xb8] sm:$0xff]
    %v8036 = vld [vmem:[#allocation46 + $0xc0] sm:$0xff]
    %v8037 = vld [vmem:[#allocation46 + $0xc8] sm:$0xff]
    %v8038 = vld [vmem:[#allocation46 + $0xd0] sm:$0xff]
    %v8039 = vld [vmem:[#allocation46 + $0xd8] sm:$0xff]
    %v8040 = vld [vmem:[#allocation46 + $0xe0] sm:$0xff]
    %v8041 = vld [vmem:[#allocation46 + $0xe8] sm:$0xff]
    %v8042 = vld [vmem:[#allocation46 + $0xf0] sm:$0xff]
    %v8043 = vld [vmem:[#allocation46 + $0xf8] sm:$0xff]
    %v8044 = vld [vmem:[#allocation46 + $0x100] sm:$0xff]
    %v8045 = vld [vmem:[#allocation46 + $0x108] sm:$0xff]
    %v8046 = vld [vmem:[#allocation46 + $0x110] sm:$0xff]
    %v8047 = vld [vmem:[#allocation46 + $0x118] sm:$0xff]
    %v8048 = vld [vmem:[#allocation46 + $0x120] sm:$0xff]
    %v8049 = vld [vmem:[#allocation46 + $0x128] sm:$0xff]
    %v8050 = vld [vmem:[#allocation46 + $0x130] sm:$0xff]
    %v8051 = vld [vmem:[#allocation46 + $0x138] sm:$0xff]
    %v8052 = vld [vmem:[#allocation46 + $0x140] sm:$0xff]
    %v8053 = vld [vmem:[#allocation46 + $0x148] sm:$0xff]
    %v8054 = vld [vmem:[#allocation46 + $0x150] sm:$0xff]
    %v8055 = vld [vmem:[#allocation46 + $0x158] sm:$0xff]
    %v8056 = vld [vmem:[#allocation46 + $0x160] sm:$0xff]
    %v8057 = vld [vmem:[#allocation46 + $0x168] sm:$0xff]
    %v8058 = vld [vmem:[#allocation46 + $0x170] sm:$0xff]
    %v8059 = vld [vmem:[#allocation46 + $0x178] sm:$0xff]
    %v8060 = vld [vmem:[#allocation46 + $0x180] sm:$0xff]
    %v8061 = vld [vmem:[#allocation46 + $0x188] sm:$0xff]
    %v8062 = vld [vmem:[#allocation46 + $0x190] sm:$0xff]
    %v8063 = vld [vmem:[#allocation46 + $0x198] sm:$0xff]
    %v8064 = vld [vmem:[#allocation46 + $0x1a0] sm:$0xff]
    %v8065 = vld [vmem:[#allocation46 + $0x1a8] sm:$0xff]
    %v8066 = vld [vmem:[#allocation46 + $0x1b0] sm:$0xff]
    %v8067 = vld [vmem:[#allocation46 + $0x1b8] sm:$0xff]
    %v8068 = vld [vmem:[#allocation46 + $0x1c0] sm:$0xff]
    %v8069 = vld [vmem:[#allocation46 + $0x1c8] sm:$0xff]
    %v8070 = vld [vmem:[#allocation46 + $0x1d0] sm:$0xff]
    %v8071 = vld [vmem:[#allocation46 + $0x1d8] sm:$0xff]
    %v8072 = vld [vmem:[#allocation46 + $0x1e0] sm:$0xff]
    %v8073 = vld [vmem:[#allocation46 + $0x1e8] sm:$0xff]
    %v8074 = vld [vmem:[#allocation46 + $0x1f0] sm:$0xff]
    %v8075 = vld [vmem:[#allocation46 + $0x1f8] sm:$0xff]
    %v8076 = vunpack.c.l.s8.bf16 %v8012
    %v8077 = vunpack.c.l.s8.bf16 %v8013
    %v8078 = vunpack.c.h.s8.bf16 %v8012
    %v8079 = vunpack.c.h.s8.bf16 %v8013
    %v8080 = vunpack.c.l.s8.bf16 %v8014
    %v8081 = vunpack.c.l.s8.bf16 %v8015
    %v8082 = vunpack.c.h.s8.bf16 %v8014
    %v8083 = vunpack.c.h.s8.bf16 %v8015
    %v8084 = vunpack.c.l.s8.bf16 %v8016
    %v8085 = vunpack.c.l.s8.bf16 %v8017
    %v8086 = vunpack.c.h.s8.bf16 %v8016
    %v8087 = vunpack.c.h.s8.bf16 %v8017
    %v8088 = vunpack.c.l.s8.bf16 %v8018
    %v8089 = vunpack.c.l.s8.bf16 %v8019
    %v8090 = vunpack.c.h.s8.bf16 %v8018
    %v8091 = vunpack.c.h.s8.bf16 %v8019
    %v8092 = vunpack.c.l.s8.bf16 %v8020
    %v8093 = vunpack.c.l.s8.bf16 %v8021
    %v8094 = vunpack.c.h.s8.bf16 %v8020
    %v8095 = vunpack.c.h.s8.bf16 %v8021
    %v8096 = vunpack.c.l.s8.bf16 %v8022
    %v8097 = vunpack.c.l.s8.bf16 %v8023
    %v8098 = vunpack.c.h.s8.bf16 %v8022
    %v8099 = vunpack.c.h.s8.bf16 %v8023
    %v8100 = vunpack.c.l.s8.bf16 %v8024
    %v8101 = vunpack.c.l.s8.bf16 %v8025
    %v8102 = vunpack.c.h.s8.bf16 %v8024
    %v8103 = vunpack.c.h.s8.bf16 %v8025
    %v8104 = vunpack.c.l.s8.bf16 %v8026
    %v8105 = vunpack.c.l.s8.bf16 %v8027
    %v8106 = vunpack.c.h.s8.bf16 %v8026
    %v8107 = vunpack.c.h.s8.bf16 %v8027
    %v8108 = vunpack.c.l.s8.bf16 %v8028
    %v8109 = vunpack.c.l.s8.bf16 %v8029
    %v8110 = vunpack.c.h.s8.bf16 %v8028
    %v8111 = vunpack.c.h.s8.bf16 %v8029
    %v8112 = vunpack.c.l.s8.bf16 %v8030
    %v8113 = vunpack.c.l.s8.bf16 %v8031
    %v8114 = vunpack.c.h.s8.bf16 %v8030
    %v8115 = vunpack.c.h.s8.bf16 %v8031
    %v8116 = vunpack.c.l.s8.bf16 %v8032
    %v8117 = vunpack.c.l.s8.bf16 %v8033
    %v8118 = vunpack.c.h.s8.bf16 %v8032
    %v8119 = vunpack.c.h.s8.bf16 %v8033
    %v8120 = vunpack.c.l.s8.bf16 %v8034
    %v8121 = vunpack.c.l.s8.bf16 %v8035
    %v8122 = vunpack.c.h.s8.bf16 %v8034
    %v8123 = vunpack.c.h.s8.bf16 %v8035
    %v8124 = vunpack.c.l.s8.bf16 %v8036
    %v8125 = vunpack.c.l.s8.bf16 %v8037
    %v8126 = vunpack.c.h.s8.bf16 %v8036
    %v8127 = vunpack.c.h.s8.bf16 %v8037
    %v8128 = vunpack.c.l.s8.bf16 %v8038
    %v8129 = vunpack.c.l.s8.bf16 %v8039
    %v8130 = vunpack.c.h.s8.bf16 %v8038
    %v8131 = vunpack.c.h.s8.bf16 %v8039
    %v8132 = vunpack.c.l.s8.bf16 %v8040
    %v8133 = vunpack.c.l.s8.bf16 %v8041
    %v8134 = vunpack.c.h.s8.bf16 %v8040
    %v8135 = vunpack.c.h.s8.bf16 %v8041
    %v8136 = vunpack.c.l.s8.bf16 %v8042
    %v8137 = vunpack.c.l.s8.bf16 %v8043
    %v8138 = vunpack.c.h.s8.bf16 %v8042
    %v8139 = vunpack.c.h.s8.bf16 %v8043
    %v8140 = vunpack.c.l.s8.bf16 %v8044
    %v8141 = vunpack.c.l.s8.bf16 %v8045
    %v8142 = vunpack.c.h.s8.bf16 %v8044
    %v8143 = vunpack.c.h.s8.bf16 %v8045
    %v8144 = vunpack.c.l.s8.bf16 %v8046
    %v8145 = vunpack.c.l.s8.bf16 %v8047
    %v8146 = vunpack.c.h.s8.bf16 %v8046
    %v8147 = vunpack.c.h.s8.bf16 %v8047
    %v8148 = vunpack.c.l.s8.bf16 %v8048
    %v8149 = vunpack.c.l.s8.bf16 %v8049
    %v8150 = vunpack.c.h.s8.bf16 %v8048
    %v8151 = vunpack.c.h.s8.bf16 %v8049
    %v8152 = vunpack.c.l.s8.bf16 %v8050
    %v8153 = vunpack.c.l.s8.bf16 %v8051
    %v8154 = vunpack.c.h.s8.bf16 %v8050
    %v8155 = vunpack.c.h.s8.bf16 %v8051
    %v8156 = vunpack.c.l.s8.bf16 %v8052
    %v8157 = vunpack.c.l.s8.bf16 %v8053
    %v8158 = vunpack.c.h.s8.bf16 %v8052
    %v8159 = vunpack.c.h.s8.bf16 %v8053
    %v8160 = vunpack.c.l.s8.bf16 %v8054
    %v8161 = vunpack.c.l.s8.bf16 %v8055
    %v8162 = vunpack.c.h.s8.bf16 %v8054
    %v8163 = vunpack.c.h.s8.bf16 %v8055
    %v8164 = vunpack.c.l.s8.bf16 %v8056
    %v8165 = vunpack.c.l.s8.bf16 %v8057
    %v8166 = vunpack.c.h.s8.bf16 %v8056
    %v8167 = vunpack.c.h.s8.bf16 %v8057
    %v8168 = vunpack.c.l.s8.bf16 %v8058
    %v8169 = vunpack.c.l.s8.bf16 %v8059
    %v8170 = vunpack.c.h.s8.bf16 %v8058
    %v8171 = vunpack.c.h.s8.bf16 %v8059
    %v8172 = vunpack.c.l.s8.bf16 %v8060
    %v8173 = vunpack.c.l.s8.bf16 %v8061
    %v8174 = vunpack.c.h.s8.bf16 %v8060
    %v8175 = vunpack.c.h.s8.bf16 %v8061
    %v8176 = vunpack.c.l.s8.bf16 %v8062
    %v8177 = vunpack.c.l.s8.bf16 %v8063
    %v8178 = vunpack.c.h.s8.bf16 %v8062
    %v8179 = vunpack.c.h.s8.bf16 %v8063
    %v8180 = vunpack.c.l.s8.bf16 %v8064
    %v8181 = vunpack.c.l.s8.bf16 %v8065
    %v8182 = vunpack.c.h.s8.bf16 %v8064
    %v8183 = vunpack.c.h.s8.bf16 %v8065
    %v8184 = vunpack.c.l.s8.bf16 %v8066
    %v8185 = vunpack.c.l.s8.bf16 %v8067
    %v8186 = vunpack.c.h.s8.bf16 %v8066
    %v8187 = vunpack.c.h.s8.bf16 %v8067
    %v8188 = vunpack.c.l.s8.bf16 %v8068
    %v8189 = vunpack.c.l.s8.bf16 %v8069
    %v8190 = vunpack.c.h.s8.bf16 %v8068
    %v8191 = vunpack.c.h.s8.bf16 %v8069
    %v8192 = vunpack.c.l.s8.bf16 %v8070
    %v8193 = vunpack.c.l.s8.bf16 %v8071
    %v8194 = vunpack.c.h.s8.bf16 %v8070
    %v8195 = vunpack.c.h.s8.bf16 %v8071
    %v8196 = vunpack.c.l.s8.bf16 %v8072
    %v8197 = vunpack.c.l.s8.bf16 %v8073
    %v8198 = vunpack.c.h.s8.bf16 %v8072
    %v8199 = vunpack.c.h.s8.bf16 %v8073
    %v8200 = vunpack.c.l.s8.bf16 %v8074
    %v8201 = vunpack.c.l.s8.bf16 %v8075
    %v8202 = vunpack.c.h.s8.bf16 %v8074
    %v8203 = vunpack.c.h.s8.bf16 %v8075
    %8204 = vmatprep.subr.bf16.mxu0 %v8091
    %8205 = vmatpush1.bf16.msra.mxu0 %v8090
    %8206 = vmatprep.subr.bf16.mxu0 %v8089
    %8207 = vmatpush1.bf16.msra.mxu0 %v8088
    %8208 = vmatprep.subr.bf16.mxu0 %v8087
    %8209 = vmatpush1.bf16.msra.mxu0 %v8086
    %8210 = vmatprep.subr.bf16.mxu0 %v8085
    %8211 = vmatpush1.bf16.msra.mxu0 %v8084
    %8212 = vmatprep.subr.bf16.mxu0 %v8083
    %8213 = vmatpush1.bf16.msra.mxu0 %v8082
    %8214 = vmatprep.subr.bf16.mxu0 %v8081
    %8215 = vmatpush1.bf16.msra.mxu0 %v8080
    %8216 = vmatprep.subr.bf16.mxu0 %v8079
    %8217 = vmatpush1.bf16.msra.mxu0 %v8078
    %8218 = vmatprep.subr.bf16.mxu0 %v8077
    %8219 = vmatpush1.bf16.msra.mxu0 %v8076
    %8220 = vmatprep.subr.bf16.mxu0 %v8107
    %8221 = vmatpush2.bf16.msra.mxu0 %v8106
    %8222 = vmatprep.subr.bf16.mxu0 %v8105
    %8223 = vmatpush2.bf16.msra.mxu0 %v8104
    %8224 = vmatprep.subr.bf16.mxu0 %v8103
    %8225 = vmatpush2.bf16.msra.mxu0 %v8102
    %8226 = vmatprep.subr.bf16.mxu0 %v8101
    %8227 = vmatpush2.bf16.msra.mxu0 %v8100
    %8228 = vmatprep.subr.bf16.mxu0 %v8099
    %8229 = vmatpush2.bf16.msra.mxu0 %v8098
    %8230 = vmatprep.subr.bf16.mxu0 %v8097
    %8231 = vmatpush2.bf16.msra.mxu0 %v8096
    %8232 = vmatprep.subr.bf16.mxu0 %v8095
    %8233 = vmatpush2.bf16.msra.mxu0 %v8094
    %8234 = vmatprep.subr.bf16.mxu0 %v8093
    %8235 = vmatpush2.bf16.msra.mxu0 %v8092
    %8236 = vmatprep.mubr.bf16.mxu0 %v8005
    %8237 = vmatmul.mubr.bf16.gmra.mxu0 %v8004
    %v8238 = vpop.f32.mrf.mxu0
    %v8239 = vadd.f32 0.0, %v8238
    %v8240 = vpop.f32.mrf.mxu0
    %v8241 = vadd.f32 0.0, %v8240
    %v8242 = vpop.f32.mrf.mxu0
    %v8243 = vadd.f32 0.0, %v8242
    %v8244 = vpop.f32.mrf.mxu0
    %v8245 = vadd.f32 0.0, %v8244
    %8246 = vdwg.mxu0
    %8247 = vmatprep.subr.bf16.mxu0 %v8123
    %8248 = vmatpush1.bf16.msra.mxu0 %v8122
    %8249 = vmatprep.subr.bf16.mxu0 %v8121
    %8250 = vmatpush1.bf16.msra.mxu0 %v8120
    %8251 = vmatprep.subr.bf16.mxu0 %v8119
    %8252 = vmatpush1.bf16.msra.mxu0 %v8118
    %8253 = vmatprep.subr.bf16.mxu0 %v8117
    %8254 = vmatpush1.bf16.msra.mxu0 %v8116
    %8255 = vmatprep.subr.bf16.mxu0 %v8115
    %8256 = vmatpush1.bf16.msra.mxu0 %v8114
    %8257 = vmatprep.subr.bf16.mxu0 %v8113
    %8258 = vmatpush1.bf16.msra.mxu0 %v8112
    %8259 = vmatprep.subr.bf16.mxu0 %v8111
    %8260 = vmatpush1.bf16.msra.mxu0 %v8110
    %8261 = vmatprep.subr.bf16.mxu0 %v8109
    %8262 = vmatpush1.bf16.msra.mxu0 %v8108
    %8263 = vmatprep.subr.bf16.mxu0 %v8139
    %8264 = vmatpush2.bf16.msra.mxu0 %v8138
    %8265 = vmatprep.subr.bf16.mxu0 %v8137
    %8266 = vmatpush2.bf16.msra.mxu0 %v8136
    %8267 = vmatprep.subr.bf16.mxu0 %v8135
    %8268 = vmatpush2.bf16.msra.mxu0 %v8134
    %8269 = vmatprep.subr.bf16.mxu0 %v8133
    %8270 = vmatpush2.bf16.msra.mxu0 %v8132
    %8271 = vmatprep.subr.bf16.mxu0 %v8131
    %8272 = vmatpush2.bf16.msra.mxu0 %v8130
    %8273 = vmatprep.subr.bf16.mxu0 %v8129
    %8274 = vmatpush2.bf16.msra.mxu0 %v8128
    %8275 = vmatprep.subr.bf16.mxu0 %v8127
    %8276 = vmatpush2.bf16.msra.mxu0 %v8126
    %8277 = vmatprep.subr.bf16.mxu0 %v8125
    %8278 = vmatpush2.bf16.msra.mxu0 %v8124
    %8279 = vmatprep.mubr.bf16.mxu0 %v8007
    %8280 = vmatmul.mubr.bf16.gmra.mxu0 %v8006
    %v8281 = vpop.f32.mrf.mxu0
    %v8282 = vadd.f32 %v8239, %v8281
    %v8283 = vpop.f32.mrf.mxu0
    %v8284 = vadd.f32 %v8241, %v8283
    %v8285 = vpop.f32.mrf.mxu0
    %v8286 = vadd.f32 %v8243, %v8285
    %v8287 = vpop.f32.mrf.mxu0
    %v8288 = vadd.f32 %v8245, %v8287
    %8289 = vdwg.mxu0
    %8290 = vmatprep.subr.bf16.mxu0 %v8155
    %8291 = vmatpush1.bf16.msra.mxu0 %v8154
    %8292 = vmatprep.subr.bf16.mxu0 %v8153
    %8293 = vmatpush1.bf16.msra.mxu0 %v8152
    %8294 = vmatprep.subr.bf16.mxu0 %v8151
    %8295 = vmatpush1.bf16.msra.mxu0 %v8150
    %8296 = vmatprep.subr.bf16.mxu0 %v8149
    %8297 = vmatpush1.bf16.msra.mxu0 %v8148
    %8298 = vmatprep.subr.bf16.mxu0 %v8147
    %8299 = vmatpush1.bf16.msra.mxu0 %v8146
    %8300 = vmatprep.subr.bf16.mxu0 %v8145
    %8301 = vmatpush1.bf16.msra.mxu0 %v8144
    %8302 = vmatprep.subr.bf16.mxu0 %v8143
    %8303 = vmatpush1.bf16.msra.mxu0 %v8142
    %8304 = vmatprep.subr.bf16.mxu0 %v8141
    %8305 = vmatpush1.bf16.msra.mxu0 %v8140
    %8306 = vmatprep.subr.bf16.mxu0 %v8171
    %8307 = vmatpush2.bf16.msra.mxu0 %v8170
    %8308 = vmatprep.subr.bf16.mxu0 %v8169
    %8309 = vmatpush2.bf16.msra.mxu0 %v8168
    %8310 = vmatprep.subr.bf16.mxu0 %v8167
    %8311 = vmatpush2.bf16.msra.mxu0 %v8166
    %8312 = vmatprep.subr.bf16.mxu0 %v8165
    %8313 = vmatpush2.bf16.msra.mxu0 %v8164
    %8314 = vmatprep.subr.bf16.mxu0 %v8163
    %8315 = vmatpush2.bf16.msra.mxu0 %v8162
    %8316 = vmatprep.subr.bf16.mxu0 %v8161
    %8317 = vmatpush2.bf16.msra.mxu0 %v8160
    %8318 = vmatprep.subr.bf16.mxu0 %v8159
    %8319 = vmatpush2.bf16.msra.mxu0 %v8158
    %8320 = vmatprep.subr.bf16.mxu0 %v8157
    %8321 = vmatpush2.bf16.msra.mxu0 %v8156
    %8322 = vmatprep.mubr.bf16.mxu0 %v8009
    %8323 = vmatmul.mubr.bf16.gmra.mxu0 %v8008
    %v8324 = vpop.f32.mrf.mxu0
    %v8325 = vadd.f32 %v8282, %v8324
    %v8326 = vpop.f32.mrf.mxu0
    %v8327 = vadd.f32 %v8284, %v8326
    %v8328 = vpop.f32.mrf.mxu0
    %v8329 = vadd.f32 %v8286, %v8328
    %v8330 = vpop.f32.mrf.mxu0
    %v8331 = vadd.f32 %v8288, %v8330
    %8332 = vdwg.mxu0
    %8333 = vmatprep.subr.bf16.mxu0 %v8187
    %8334 = vmatpush1.bf16.msra.mxu0 %v8186
    %8335 = vmatprep.subr.bf16.mxu0 %v8185
    %8336 = vmatpush1.bf16.msra.mxu0 %v8184
    %8337 = vmatprep.subr.bf16.mxu0 %v8183
    %8338 = vmatpush1.bf16.msra.mxu0 %v8182
    %8339 = vmatprep.subr.bf16.mxu0 %v8181
    %8340 = vmatpush1.bf16.msra.mxu0 %v8180
    %8341 = vmatprep.subr.bf16.mxu0 %v8179
    %8342 = vmatpush1.bf16.msra.mxu0 %v8178
    %8343 = vmatprep.subr.bf16.mxu0 %v8177
    %8344 = vmatpush1.bf16.msra.mxu0 %v8176
    %8345 = vmatprep.subr.bf16.mxu0 %v8175
    %8346 = vmatpush1.bf16.msra.mxu0 %v8174
    %8347 = vmatprep.subr.bf16.mxu0 %v8173
    %8348 = vmatpush1.bf16.msra.mxu0 %v8172
    %8349 = vmatprep.subr.bf16.mxu0 %v8203
    %8350 = vmatpush2.bf16.msra.mxu0 %v8202
    %8351 = vmatprep.subr.bf16.mxu0 %v8201
    %8352 = vmatpush2.bf16.msra.mxu0 %v8200
    %8353 = vmatprep.subr.bf16.mxu0 %v8199
    %8354 = vmatpush2.bf16.msra.mxu0 %v8198
    %8355 = vmatprep.subr.bf16.mxu0 %v8197
    %8356 = vmatpush2.bf16.msra.mxu0 %v8196
    %8357 = vmatprep.subr.bf16.mxu0 %v8195
    %8358 = vmatpush2.bf16.msra.mxu0 %v8194
    %8359 = vmatprep.subr.bf16.mxu0 %v8193
    %8360 = vmatpush2.bf16.msra.mxu0 %v8192
    %8361 = vmatprep.subr.bf16.mxu0 %v8191
    %8362 = vmatpush2.bf16.msra.mxu0 %v8190
    %8363 = vmatprep.subr.bf16.mxu0 %v8189
    %8364 = vmatpush2.bf16.msra.mxu0 %v8188
    %8365 = vmatprep.mubr.bf16.mxu0 %v8011
    %8366 = vmatmul.mubr.bf16.gmra.mxu0 %v8010
    %v8367 = vpop.f32.mrf.mxu0
    %v8368 = vadd.f32 %v8325, %v8367
    %v8369 = vpop.f32.mrf.mxu0
    %v8370 = vadd.f32 %v8327, %v8369
    %v8371 = vpop.f32.mrf.mxu0
    %v8372 = vadd.f32 %v8329, %v8371
    %v8373 = vpop.f32.mrf.mxu0
    %v8374 = vadd.f32 %v8331, %v8373
    %8375 = vdwg.mxu0
    %v8376 = vld [vmem:[#allocation48] sm:$0x3]
    %v8378 = vlaneseq
    %v8379 = vshrl.u32 %v8378, 7
    %v8380 = vsub.s32 0, %v8379
    %v8381 = vrot.slane %v8376, %v8380
    %v8382 = vlaneseq
    %v8383 = vshrl.u32 %v8382, 7
    %v8384 = vsub.s32 1, %v8383
    %v8385 = vrot.slane %v8376, %v8384
    %v8388 = vmul.f32 %v8368, %v8381
    %v8389 = vmul.f32 %v8370, %v8385
    %v8390 = vmul.f32 %v8372, %v8381
    %v8391 = vmul.f32 %v8374, %v8385
    %v8392 = vld [vmem:[#allocation49] sm:$0x3]
    %v8394 = vlaneseq
    %v8395 = vshrl.u32 %v8394, 7
    %v8396 = vsub.s32 0, %v8395
    %v8397 = vrot.slane %v8392, %v8396
    %v8398 = vlaneseq
    %v8399 = vshrl.u32 %v8398, 7
    %v8400 = vsub.s32 1, %v8399
    %v8401 = vrot.slane %v8392, %v8400
    %v8404 = vadd.f32 %v8388, %v8397
    %v8405 = vadd.f32 %v8389, %v8401
    %v8406 = vadd.f32 %v8390, %v8397
    %v8407 = vadd.f32 %v8391, %v8401
    %v8408 = vmax.f32 %v8404, 0.0
    %v8409 = vmax.f32 %v8405, 0.0
    %v8410 = vmax.f32 %v8406, 0.0
    %v8411 = vmax.f32 %v8407, 0.0
    %v8412 = vpack.c.bf16 %v8410, %v8408
    %v8413 = vpack.c.bf16 %v8411, %v8409
    %v8414 = vld [vmem:[#allocation51] sm:$0xff]
    %v8415 = vld [vmem:[#allocation51 + $0x8] sm:$0xff]
    %v8416 = vld [vmem:[#allocation51 + $0x10] sm:$0xff]
    %v8417 = vld [vmem:[#allocation51 + $0x18] sm:$0xff]
    %v8418 = vld [vmem:[#allocation51 + $0x20] sm:$0xff]
    %v8419 = vld [vmem:[#allocation51 + $0x28] sm:$0xff]
    %v8420 = vld [vmem:[#allocation51 + $0x30] sm:$0xff]
    %v8421 = vld [vmem:[#allocation51 + $0x38] sm:$0xff]
    %v8422 = vunpack.c.l.s8.bf16 %v8414
    %v8423 = vunpack.c.h.s8.bf16 %v8414
    %v8424 = vunpack.c.l.s8.bf16 %v8415
    %v8425 = vunpack.c.h.s8.bf16 %v8415
    %v8426 = vunpack.c.l.s8.bf16 %v8416
    %v8427 = vunpack.c.h.s8.bf16 %v8416
    %v8428 = vunpack.c.l.s8.bf16 %v8417
    %v8429 = vunpack.c.h.s8.bf16 %v8417
    %v8430 = vunpack.c.l.s8.bf16 %v8418
    %v8431 = vunpack.c.h.s8.bf16 %v8418
    %v8432 = vunpack.c.l.s8.bf16 %v8419
    %v8433 = vunpack.c.h.s8.bf16 %v8419
    %v8434 = vunpack.c.l.s8.bf16 %v8420
    %v8435 = vunpack.c.h.s8.bf16 %v8420
    %v8436 = vunpack.c.l.s8.bf16 %v8421
    %v8437 = vunpack.c.h.s8.bf16 %v8421
    %8438 = vmatprep.subr.bf16.mxu0 0
    %8439 = vmatpush1.bf16.msra.mxu0 %v8429
    %8440 = vmatprep.subr.bf16.mxu0 0
    %8441 = vmatpush1.bf16.msra.mxu0 %v8428
    %8442 = vmatprep.subr.bf16.mxu0 0
    %8443 = vmatpush1.bf16.msra.mxu0 %v8427
    %8444 = vmatprep.subr.bf16.mxu0 0
    %8445 = vmatpush1.bf16.msra.mxu0 %v8426
    %8446 = vmatprep.subr.bf16.mxu0 0
    %8447 = vmatpush1.bf16.msra.mxu0 %v8425
    %8448 = vmatprep.subr.bf16.mxu0 0
    %8449 = vmatpush1.bf16.msra.mxu0 %v8424
    %8450 = vmatprep.subr.bf16.mxu0 0
    %8451 = vmatpush1.bf16.msra.mxu0 %v8423
    %8452 = vmatprep.subr.bf16.mxu0 0
    %8453 = vmatpush1.bf16.msra.mxu0 %v8422
    %8454 = vmatprep.subr.bf16.mxu0 0
    %8455 = vmatpush2.bf16.msra.mxu0 %v8437
    %8456 = vmatprep.subr.bf16.mxu0 0
    %8457 = vmatpush2.bf16.msra.mxu0 %v8436
    %8458 = vmatprep.subr.bf16.mxu0 0
    %8459 = vmatpush2.bf16.msra.mxu0 %v8435
    %8460 = vmatprep.subr.bf16.mxu0 0
    %8461 = vmatpush2.bf16.msra.mxu0 %v8434
    %8462 = vmatprep.subr.bf16.mxu0 0
    %8463 = vmatpush2.bf16.msra.mxu0 %v8433
    %8464 = vmatprep.subr.bf16.mxu0 0
    %8465 = vmatpush2.bf16.msra.mxu0 %v8432
    %8466 = vmatprep.subr.bf16.mxu0 0
    %8467 = vmatpush2.bf16.msra.mxu0 %v8431
    %8468 = vmatprep.subr.bf16.mxu0 0
    %8469 = vmatpush2.bf16.msra.mxu0 %v8430
    %8470 = vmatprep.mubr.bf16.mxu0 %v8413
    %8471 = vmatmul.mubr.bf16.gmra.mxu0 %v8412
    %v8472 = vpop.f32.mrf.mxu0
    %v8473 = vadd.f32 0.0, %v8472
    %v8474 = vpop.f32.mrf.mxu0
    %v8475 = vpop.f32.mrf.mxu0
    %v8476 = vadd.f32 0.0, %v8475
    %v8477 = vpop.f32.mrf.mxu0
    %8478 = vdwg.mxu0
    %v8479 = vld [vmem:[#allocation52] sm:$0x1]
    %v8481 = vlaneseq
    %v8482 = vshrl.u32 %v8481, 7
    %v8483 = vsub.s32 0, %v8482
    %v8484 = vrot.slane %v8479, %v8483
    %v8486 = vmul.f32 %v8473, %v8484
    %v8487 = vmul.f32 %v8476, %v8484
    %v8488 = vld [vmem:[#allocation54] sm:$0x1]
    %v8490 = vlaneseq
    %v8491 = vshrl.u32 %v8490, 7
    %v8492 = vsub.s32 0, %v8491
    %v8493 = vrot.slane %v8488, %v8492
    %v8495 = vadd.f32 %v8486, %v8493
    %v8496 = vadd.f32 %v8487, %v8493
    %v8497 = vmax.f32 %v8495, 0.0
    %v8498 = vmax.f32 %v8496, 0.0
    %v8499 = vpack.c.bf16 %v8498, %v8497
    %v8500 = vld [vmem:[#allocation55] sm:$0xff]
    %v8501 = vld [vmem:[#allocation55 + $0x8] sm:$0xff]
    %v8502 = vld [vmem:[#allocation55 + $0x10] sm:$0xff]
    %v8503 = vld [vmem:[#allocation55 + $0x18] sm:$0xff]
    %v8504 = vunpack.c.l.s8.bf16 %v8500
    %v8505 = vunpack.c.h.s8.bf16 %v8500
    %v8506 = vunpack.c.l.s8.bf16 %v8501
    %v8507 = vunpack.c.h.s8.bf16 %v8501
    %v8508 = vunpack.c.l.s8.bf16 %v8502
    %v8509 = vunpack.c.h.s8.bf16 %v8502
    %v8510 = vunpack.c.l.s8.bf16 %v8503
    %v8511 = vunpack.c.h.s8.bf16 %v8503
    %8512 = vmatprep.subr.bf16.mxu0 0
    %8513 = vmatpush1.bf16.msra.mxu0 %v8511
    %8514 = vmatprep.subr.bf16.mxu0 0
    %8515 = vmatpush1.bf16.msra.mxu0 %v8510
    %8516 = vmatprep.subr.bf16.mxu0 0
    %8517 = vmatpush1.bf16.msra.mxu0 %v8509
    %8518 = vmatprep.subr.bf16.mxu0 0
    %8519 = vmatpush1.bf16.msra.mxu0 %v8508
    %8520 = vmatprep.subr.bf16.mxu0 0
    %8521 = vmatpush1.bf16.msra.mxu0 %v8507
    %8522 = vmatprep.subr.bf16.mxu0 0
    %8523 = vmatpush1.bf16.msra.mxu0 %v8506
    %8524 = vmatprep.subr.bf16.mxu0 0
    %8525 = vmatpush1.bf16.msra.mxu0 %v8505
    %8526 = vmatprep.subr.bf16.mxu0 0
    %8527 = vmatpush1.bf16.msra.mxu0 %v8504
    %8528 = vmatprep.subr.bf16.mxu0 0
    %8529 = vmatpush2.bf16.msra.mxu0 0
    %8530 = vmatprep.subr.bf16.mxu0 0
    %8531 = vmatpush2.bf16.msra.mxu0 0
    %8532 = vmatprep.subr.bf16.mxu0 0
    %8533 = vmatpush2.bf16.msra.mxu0 0
    %8534 = vmatprep.subr.bf16.mxu0 0
    %8535 = vmatpush2.bf16.msra.mxu0 0
    %8536 = vmatprep.subr.bf16.mxu0 0
    %8537 = vmatpush2.bf16.msra.mxu0 0
    %8538 = vmatprep.subr.bf16.mxu0 0
    %8539 = vmatpush2.bf16.msra.mxu0 0
    %8540 = vmatprep.subr.bf16.mxu0 0
    %8541 = vmatpush2.bf16.msra.mxu0 0
    %8542 = vmatprep.subr.bf16.mxu0 0
    %8543 = vmatpush2.bf16.msra.mxu0 0
    %8544 = vmatprep.mubr.bf16.mxu0 0
    %8545 = vmatmul.mubr.bf16.gmra.mxu0 %v8499
    %v8546 = vpop.f32.mrf.mxu0
    %v8547 = vadd.f32 0.0, %v8546
    %v8548 = vpop.f32.mrf.mxu0
    %v8549 = vpop.f32.mrf.mxu0
    %v8550 = vadd.f32 0.0, %v8549
    %v8551 = vpop.f32.mrf.mxu0
    %8552 = vdwg.mxu0
    %v8553 = vld [vmem:[#allocation57] sm:$0x1]
    %v8555 = vlaneseq
    %v8556 = vshrl.u32 %v8555, 7
    %v8557 = vsub.s32 0, %v8556
    %v8558 = vrot.slane %v8553, %v8557
    %v8560 = vmul.f32 %v8547, %v8558
    %v8561 = vmul.f32 %v8550, %v8558
    %v8562 = vld [vmem:[#allocation58] sm:$0x1]
    %v8564 = vlaneseq
    %v8565 = vshrl.u32 %v8564, 7
    %v8566 = vsub.s32 0, %v8565
    %v8567 = vrot.slane %v8562, %v8566
    %v8569 = vadd.f32 %v8560, %v8567
    %v8570 = vadd.f32 %v8561, %v8567
    %8571 = vst [vmem:[%s91] sm:$0xff] %v3781
    %8572 = vst [vmem:[%s91 + $0x18] sm:$0xff] %v3782
    %8573 = vst [vmem:[%s91 + $0x8] sm:$0xff] %v4958
    %8574 = vst [vmem:[%s91 + $0x20] sm:$0xff] %v4959
    %8575 = vst [vmem:[%s91 + $0x10] sm:$0xff] %v8569
    %8576 = vst [vmem:[%s91 + $0x28] sm:$0xff] %v8570
    // Predicated region
    $region334: #{multimodal_forward.1} parent=1 // pred_check
      _
    $region335: #{multimodal_forward.1} parent=1 // pred_check_branch
      %8578 = sbr.rel (0) target = $region337
    $region336: #{multimodal_forward.1} parent=1 // pred_region
      _
    $region337: #{multimodal_forward.1} parent=1 // pred_fallthru
      _
    // Predicated region
    $region338: #{multimodal_forward.1} parent=1 // pred_check
      _
    $region339: #{multimodal_forward.1} parent=1 // pred_check_branch
      %8580 = sbr.rel (0) target = $region341
    $region340: #{multimodal_forward.1} parent=1 // pred_region
      _
    $region341: #{multimodal_forward.1} parent=1 // pred_fallthru
      _
    %8581 = vsyncpa [#allocation3], 1
    %8582 = vsyncpa [#allocation5], 1
    %8583 = vsyncpa [#allocation8], 1
    %8584 = vsyncpa [#allocation11], 1
    %8585 = vsyncpa [#allocation14], 1
    %8586 = vsyncpa [#allocation17], 1
    %8587 = vsyncpa [#allocation20], 1
    %8588 = vsyncpa [#allocation23], 1
    %8589 = vsyncpa [#allocation26], 1
    %8590 = vsyncpa [#allocation29], 1
    %8591 = vsyncpa [#allocation32], 1
    %8592 = vsyncpa [#allocation35], 1
    %8593 = vsyncpa [#allocation38], 1
    %8594 = vsyncpa [#allocation41], 1
    %8595 = vsyncpa [#allocation44], 1
    %8596 = vsyncpa [#allocation47], 1
    %8597 = vsyncpa [#allocation50], 1
    %8598 = vsyncpa [#allocation53], 1
    %8599 = vsyncpa [#allocation56], 1
    %8600 = vsyncpa [#allocation59], 1

</llo_original>
